<compile_context>
chip_gen: v5e
topology: v5e:2x2
jax: 0.10.0
libtpu: 0.0.40
codegen_flags: <defaults>
</compile_context>

<pallas_src>
import functools
import math

import jax
import jax.numpy as jnp
from jax import lax
from jax.experimental import pallas as pl
from jax.experimental.pallas import tpu as pltpu


C_PAD = 128                 # lane-dense width of conv outputs / RPN head packing
HID_PAD = 128               # padded hidden width of the ROI box head
OUT_PAD = 128               # packed (cls + box) output width of the ROI head
C_IN_PAD = 8                # input image channels padded 3 -> 8 (sublane align)
_COL_OFF = 8                # interior column offset in the halo scratch (aligned)
VMEM_LIMIT = 32 * 1024 * 1024
_BBOX_XFORM_CLIP = math.log(1000.0 / 16.0)


def _round_up(x, m):
    return ((x + m - 1) // m) * m


# --------------------------------------------------------------------------
# Parameter padding / packing helpers (all pad lanes are ZERO so they can
# never leak through bias / ReLU into later stages)
# --------------------------------------------------------------------------
def _pad_axis(x, axis, target):
    pad = target - x.shape[axis]
    if pad <= 0:
        return x
    widths = [(0, 0)] * x.ndim
    widths[axis] = (0, pad)
    return jnp.pad(x, widths)


def _pad2(w, rows, cols):
    return _pad_axis(_pad_axis(w, 0, rows), 1, cols)


def _conv_w_taps(w, cin_pad, cout_pad):
    """(3,3,Cin,Cout) -> per-tap weights (9, cin_pad, cout_pad) bf16."""
    w = _pad_axis(w, 2, cin_pad)
    w = _pad_axis(w, 3, cout_pad)
    return w.reshape(9, cin_pad, cout_pad).astype(jnp.bfloat16)


def _bias_row(b, pad):
    return _pad_axis(b.reshape(1, -1), 1, pad).astype(jnp.float32)


# --------------------------------------------------------------------------
# Pallas kernels
# --------------------------------------------------------------------------
def _zero_halo_border(pad_ref, H, W):
    """Zero only the halo ring actually read by the 3x3 taps (borders persist;
    the interior is fully overwritten before every conv)."""
    Wh, c = pad_ref.shape[1], pad_ref.shape[2]
    zc = jnp.zeros((H + 2, _COL_OFF, c), pad_ref.dtype)
    pad_ref[:, 0:_COL_OFF, :] = zc
    pad_ref[:, _COL_OFF + W:Wh, :] = jnp.zeros(
        (H + 2, Wh - _COL_OFF - W, c), pad_ref.dtype)
    zr = jnp.zeros((1, Wh, c), pad_ref.dtype)
    pad_ref[0:1, :, :] = zr
    pad_ref[H + 1:H + 2, :, :] = zr


def _store_interior(pad_ref, val, H, W):
    c = val.shape[-1]
    pad_ref[1:H + 1, _COL_OFF:_COL_OFF + W, :c] = val


def _conv3x3_taps(pad_ref, w_ref, b_ref, H, W, relu=True):
    """3x3 'same' conv as 9 per-tap MXU matmuls over the REAL input channels,
    accumulated in f32.  w_ref: (9, Cin, 128) bf16; returns f32 (H*W, 128)."""
    cin = w_ref.shape[1]
    cout = w_ref.shape[2]
    col0 = _COL_OFF - 1
    acc = jnp.zeros((H * W, cout), jnp.float32)
    for dy in range(3):
        for dx in range(3):
            tap = pad_ref[dy:dy + H, col0 + dx:col0 + dx + W, :cin]
            tap = tap.reshape(H * W, cin).astype(jnp.bfloat16)
            acc = acc + jnp.dot(tap, w_ref[dy * 3 + dx],
                                preferred_element_type=jnp.float32)
    acc = acc + b_ref[...]
    if relu:
        acc = jnp.maximum(acc, 0.0)
    return acc


def _backbone_rpn_kernel(x_ref, w1_ref, b1_ref, w2_ref, b2_ref,
                         wr_ref, br_ref, wh_ref, bh_ref,
                         feat_ref, head_ref, pad_ref, *, H, W):
    """Fused backbone (2x conv3x3) + RPN conv3x3 + fused RPN 1x1 heads."""
    c_mid = w2_ref.shape[1]       # real backbone mid channels (16)
    c_out = wr_ref.shape[1]       # real backbone out channels (32)

    _zero_halo_border(pad_ref, H, W)

    # backbone conv1 + relu  (Cin = 8 zero-padded image channels)
    _store_interior(pad_ref, x_ref[0], H, W)
    f1 = _conv3x3_taps(pad_ref, w1_ref, b1_ref, H, W, relu=True)

    # backbone conv2 + relu -> features (real channels only, bf16 writeback)
    _store_interior(pad_ref, f1[:, :c_mid].reshape(H, W, c_mid), H, W)
    f2 = _conv3x3_taps(pad_ref, w2_ref, b2_ref, H, W, relu=True)
    feat_ref[0] = f2[:, :c_out].reshape(H, W, c_out).astype(feat_ref.dtype)

    # RPN 3x3 conv + relu, then cls+box heads fused as one (K=32) matmul
    _store_interior(pad_ref, f2[:, :c_out].reshape(H, W, c_out), H, W)
    t = _conv3x3_taps(pad_ref, wr_ref, br_ref, H, W, relu=True)
    heads = jnp.dot(t[:, :c_out].astype(jnp.bfloat16), wh_ref[...],
                    preferred_element_type=jnp.float32) + bh_ref[...]
    head_ref[0] = heads.astype(head_ref.dtype)


def backbone_rpn(x, w1, b1, w2, b2, wr, br, wh, bh):
    """x: (N,H,W,8) f32 -> (features (N,H,W,32) bf16, rpn heads (N,H*W,128) bf16)."""
    N, H, W, c_in = x.shape
    c_out = wr.shape[1]
    c_scr = max(c_in, w2.shape[1], c_out)
    kernel = functools.partial(_backbone_rpn_kernel, H=H, W=W)

    def wspec(shape):
        return pl.BlockSpec(shape, lambda n, s=len(shape): (0,) * s)

    feat, heads = pl.pallas_call(
        kernel,
        out_shape=(jax.ShapeDtypeStruct((N, H, W, c_out), jnp.bfloat16),
                   jax.ShapeDtypeStruct((N, H * W, C_PAD), jnp.bfloat16)),
        grid=(N,),
        in_specs=[
            pl.BlockSpec((1, H, W, c_in), lambda n: (n, 0, 0, 0)),
            wspec(w1.shape), wspec(b1.shape),
            wspec(w2.shape), wspec(b2.shape),
            wspec(wr.shape), wspec(br.shape),
            wspec(wh.shape), wspec(bh.shape),
        ],
        out_specs=(pl.BlockSpec((1, H, W, c_out), lambda n: (n, 0, 0, 0)),
                   pl.BlockSpec((1, H * W, C_PAD), lambda n: (n, 0, 0))),
        scratch_shapes=[
            pltpu.VMEM((H + 2, W + 2 * _COL_OFF, c_scr), jnp.float32)],
        compiler_params=pltpu.CompilerParams(
            dimension_semantics=("parallel",),
            vmem_limit_bytes=VMEM_LIMIT),
    )(x, w1, b1, w2, b2, wr, br, wh, bh)
    return feat, heads


def _roi_head_kernel(x_ref, w1_ref, b1_ref, w2_ref, b2_ref, wh_ref, bh_ref,
                     o_ref):
    """Fused ROI box head: fc1 -> relu -> fc2 -> relu -> packed cls/box heads."""
    x = x_ref[...]                                           # already bf16
    h1 = jnp.dot(x, w1_ref[...], preferred_element_type=jnp.float32) + b1_ref[...]
    h1 = jnp.maximum(h1, 0.0)
    h2 = jnp.dot(h1.astype(jnp.bfloat16), w2_ref[...],
                 preferred_element_type=jnp.float32) + b2_ref[...]
    h2 = jnp.maximum(h2, 0.0)
    out = jnp.dot(h2.astype(jnp.bfloat16), wh_ref[...],
                  preferred_element_type=jnp.float32) + bh_ref[...]
    o_ref[...] = out.astype(o_ref.dtype)


def roi_box_head(flat, w1, b1, w2, b2, wh, bh, *, block_m=256):
    """flat: (M, P*P*32) bf16 -> (M, OUT_PAD) f32 packed [cls | box | zeros].

    block_m=256 keeps the v6e/v7x 256-deep MXU fed; 128 is already native on
    v5e. Constant-index weight blocks are fetched once (index map never moves).
    """
    M, Kin = flat.shape
    bm = min(block_m, _round_up(M, 8))
    Mpad = _round_up(M, bm)
    if Mpad != M:
        flat = jnp.pad(flat, ((0, Mpad - M), (0, 0)))

    def wspec(shape):
        return pl.BlockSpec(shape, lambda i: (0, 0))

    out = pl.pallas_call(
        _roi_head_kernel,
        out_shape=jax.ShapeDtypeStruct((Mpad, OUT_PAD), jnp.float32),
        grid=(Mpad // bm,),
        in_specs=[
            pl.BlockSpec((bm, Kin), lambda i: (i, 0)),
            wspec(w1.shape), wspec(b1.shape),
            wspec(w2.shape), wspec(b2.shape),
            wspec(wh.shape), wspec(bh.shape),
        ],
        out_specs=pl.BlockSpec((bm, OUT_PAD), lambda i: (i, 0)),
        compiler_params=pltpu.CompilerParams(
            dimension_semantics=("parallel",),
            vmem_limit_bytes=VMEM_LIMIT),
    )(flat, w1, b1, w2, b2, wh, bh)
    return out[:M]


# --------------------------------------------------------------------------
# Plain-JAX glue (box decode, top-k proposals, ROI pooling)
# --------------------------------------------------------------------------
def decode_boxes(boxes, deltas, H, W):
    x1, y1, x2, y2 = (boxes[..., i] for i in range(4))
    w = jnp.maximum(x2 - x1, 1e-3)
    h = jnp.maximum(y2 - y1, 1e-3)
    cx = x1 + 0.5 * w
    cy = y1 + 0.5 * h
    dx, dy, dw, dh = (deltas[..., i] for i in range(4))
    dw = jnp.clip(dw, -_BBOX_XFORM_CLIP, _BBOX_XFORM_CLIP)
    dh = jnp.clip(dh, -_BBOX_XFORM_CLIP, _BBOX_XFORM_CLIP)
    ncx = cx + dx * w
    ncy = cy + dy * h
    nw = w * jnp.exp(dw)
    nh = h * jnp.exp(dh)
    nx1 = jnp.clip(ncx - 0.5 * nw, 0.0, float(W))
    ny1 = jnp.clip(ncy - 0.5 * nh, 0.0, float(H))
    nx2 = jnp.clip(ncx + 0.5 * nw, 0.0, float(W))
    ny2 = jnp.clip(ncy + 0.5 * nh, 0.0, float(H))
    return jnp.stack([nx1, ny1, nx2, ny2], axis=-1)


def make_anchors(H, W, sizes):
    ys = jnp.arange(H, dtype=jnp.float32) + 0.5
    xs = jnp.arange(W, dtype=jnp.float32) + 0.5
    cy = jnp.broadcast_to(ys[:, None, None], (H, W, sizes.shape[0]))
    cx = jnp.broadcast_to(xs[None, :, None], (H, W, sizes.shape[0]))
    sz = jnp.broadcast_to(sizes[None, None, :], (H, W, sizes.shape[0]))
    half = 0.5 * sz
    return jnp.stack([cx - half, cy - half, cx + half, cy + half], axis=-1)


def roi_pool_nearest(feats, boxes, pool):
    """feats: (N,H,W,C); boxes: (N,K,4) xyxy in feature coords -> (N,K,P,P,C)."""
    # TODO(synk): data-dependent gather; a Pallas version needs manual DMA
    #             gather (memory_space=pl.ANY + make_async_copy), kept as glue.
    N, H, W, C = feats.shape

    def per_image(f, bx):
        x1, y1, x2, y2 = bx[:, 0], bx[:, 1], bx[:, 2], bx[:, 3]
        bw = jnp.maximum(x2 - x1, 1.0)
        bh = jnp.maximum(y2 - y1, 1.0)
        grid = (jnp.arange(pool, dtype=jnp.float32) + 0.5) / pool
        sx = x1[:, None] + grid[None, :] * bw[:, None]       # (K,P)
        sy = y1[:, None] + grid[None, :] * bh[:, None]       # (K,P)
        ix = jnp.clip(jnp.floor(sx), 0, W - 1).astype(jnp.int32)
        iy = jnp.clip(jnp.floor(sy), 0, H - 1).astype(jnp.int32)
        flat = iy[:, :, None] * W + ix[:, None, :]            # (K,P,P)
        pooled = jnp.take(f.reshape(H * W, C), flat.reshape(-1), axis=0)
        return pooled.reshape(bx.shape[0], pool, pool, C)

    return jax.vmap(per_image)(feats, boxes)


# --------------------------------------------------------------------------
# Parameter init (deterministic, synthetic)
# --------------------------------------------------------------------------
def _init_conv(key, cin, cout, k=3):
    kw, kb = jax.random.split(key)
    scale = 1.0 / jnp.sqrt(cin * k * k)
    w = jax.random.uniform(kw, (k, k, cin, cout), jnp.float32, -scale, scale)
    b = jax.random.uniform(kb, (cout,), jnp.float32, -scale, scale)
    return w, b


def _init_fc(key, fan_in, fan_out):
    kw, kb = jax.random.split(key)
    scale = 1.0 / jnp.sqrt(fan_in)
    w = jax.random.uniform(kw, (fan_in, fan_out), jnp.float32, -scale, scale)
    b = jax.random.uniform(kb, (fan_out,), jnp.float32, -scale, scale)
    return w, b


# --------------------------------------------------------------------------
# GeneralizedRCNN: backbone -> rpn -> roi_heads (inference path)
# --------------------------------------------------------------------------
class GeneralizedRCNNPallas:
    def __init__(self, key, in_channels=3, mid_channels=16, out_channels=32,
                 num_anchors=3, num_classes=5, pool=4, top_n=8, hidden=64):
        self.out_channels = out_channels
        self.num_anchors = num_anchors
        self.num_classes = num_classes
        self.pool = pool
        self.top_n = top_n
        self.anchor_sizes = jnp.array([4.0, 8.0, 16.0], jnp.float32)

        ks = jax.random.split(key, 8)
        # backbone (feature extractor)
        bb1_w, bb1_b = _init_conv(ks[0], in_channels, mid_channels)
        bb2_w, bb2_b = _init_conv(ks[1], mid_channels, out_channels)
        # rpn head
        rpn_w, rpn_b = _init_conv(ks[2], out_channels, out_channels)
        rpn_cls_w, rpn_cls_b = _init_fc(ks[3], out_channels, num_anchors)
        rpn_box_w, rpn_box_b = _init_fc(ks[4], out_channels, num_anchors * 4)
        # roi box head
        fc_in = pool * pool * out_channels
        fc1_w, fc1_b = _init_fc(ks[5], fc_in, hidden)
        fc2_w, fc2_b = _init_fc(ks[6], hidden, hidden)
        kcls, kbox = jax.random.split(ks[7])
        cls_w, cls_b = _init_fc(kcls, hidden, num_classes)
        box_w, box_b = _init_fc(kbox, hidden, num_classes * 4)

        # ---- pack params for the Pallas kernels (real K, zero-padded N) -----
        self.w1_p = _conv_w_taps(bb1_w, C_IN_PAD, C_PAD)        # (9,  8, 128)
        self.b1_p = _bias_row(bb1_b, C_PAD)
        self.w2_p = _conv_w_taps(bb2_w, mid_channels, C_PAD)    # (9, 16, 128)
        self.b2_p = _bias_row(bb2_b, C_PAD)
        self.wr_p = _conv_w_taps(rpn_w, out_channels, C_PAD)    # (9, 32, 128)
        self.br_p = _bias_row(rpn_b, C_PAD)
        # RPN cls + box heads fused into one (32 -> 128) matmul
        rpn_head_w = jnp.concatenate([rpn_cls_w, rpn_box_w], axis=1)   # (32, 5A)
        rpn_head_b = jnp.concatenate([rpn_cls_b, rpn_box_b])
        self.rpn_head_w_p = _pad_axis(rpn_head_w, 1, C_PAD).astype(jnp.bfloat16)
        self.rpn_head_b_p = _bias_row(rpn_head_b, C_PAD)
        # ROI box head: fc1 contracts over the REAL pooled layout (P*P*32)
        self.fc1_w_p = _pad_axis(fc1_w, 1, HID_PAD).astype(jnp.bfloat16)  # (512,128)
        self.fc1_b_p = _bias_row(fc1_b, HID_PAD)
        self.fc2_w_p = _pad2(fc2_w, HID_PAD, HID_PAD).astype(jnp.bfloat16)
        self.fc2_b_p = _bias_row(fc2_b, HID_PAD)
        det_w = jnp.concatenate([cls_w, box_w], axis=1)                # (h, 5*nc)
        det_b = jnp.concatenate([cls_b, box_b])
        self.det_head_w_p = _pad2(det_w, HID_PAD, OUT_PAD).astype(jnp.bfloat16)
        self.det_head_b_p = _bias_row(det_b, OUT_PAD)

    def forward(self, images_nchw, targets=None):
        # to_image_list + NCHW -> NHWC; channels padded only 3 -> 8 (not 128)
        x = jnp.transpose(images_nchw, (0, 2, 3, 1)).astype(jnp.float32)
        x = _pad_axis(x, 3, C_IN_PAD)                           # (N,H,W,8)
        N, H, W, _ = x.shape
        A, K, P = self.num_anchors, self.top_n, self.pool
        nc = self.num_classes

        # ---- backbone + rpn: single fused pallas_call ------------------------
        features, rpn_out = backbone_rpn(
            x, self.w1_p, self.b1_p, self.w2_p, self.b2_p,
            self.wr_p, self.br_p, self.rpn_head_w_p, self.rpn_head_b_p)
        rpn_f = rpn_out.astype(jnp.float32)                     # (N,H*W,128)
        objectness = rpn_f[:, :, :A]                            # (N,H*W,A)
        deltas = rpn_f[:, :, A:5 * A].reshape(N, H * W, A, 4)

        anchors = make_anchors(H, W, self.anchor_sizes).reshape(H * W, A, 4)
        prop_all = decode_boxes(jnp.broadcast_to(anchors, (N, H * W, A, 4)),
                                deltas, H, W).reshape(N, H * W * A, 4)
        scores_all = jax.nn.sigmoid(objectness).reshape(N, H * W * A)

        # TODO(synk): NMS skipped; plain top-k proposal selection instead.
        _, top_idx = lax.top_k(scores_all, K)
        proposals = jnp.take_along_axis(prop_all, top_idx[..., None], axis=1)

        # ---- roi_heads (box head): single fused pallas_call -------------------
        pooled = roi_pool_nearest(features, proposals, P)       # (N,K,P,P,32) bf16
        flat = pooled.reshape(N * K, P * P * self.out_channels) # (N*K, 512) bf16
        head_out = roi_box_head(flat, self.fc1_w_p, self.fc1_b_p,
                                self.fc2_w_p, self.fc2_b_p,
                                self.det_head_w_p, self.det_head_b_p)
        cls_logits = head_out[:, :nc]                           # (N*K, nc)
        box_reg = head_out[:, nc:nc + 4 * nc]                   # (N*K, nc*4)

        probs = jax.nn.softmax(cls_logits, axis=-1)
        fg = probs[:, 1:]
        labels = jnp.argmax(fg, axis=-1).astype(jnp.int32) + 1  # (N*K,)
        det_scores = jnp.max(fg, axis=-1)

        box_reg = box_reg.reshape(N * K, nc, 4)
        chosen = jnp.take_along_axis(
            box_reg, labels[:, None, None].astype(jnp.int32), axis=1)[:, 0, :]
        det_boxes = decode_boxes(proposals.reshape(N * K, 4), chosen, H, W)

        return {
            "boxes": det_boxes.reshape(N, K, 4),
            "scores": det_scores.reshape(N, K),
            "labels": labels.reshape(N, K),
        }


if __name__ == "__main__":
    key = jax.random.PRNGKey(0)
    pkey, xkey = jax.random.split(key)
    model = GeneralizedRCNNPallas(pkey)
    # PyTorch convention: images are NCHW
    images = jax.random.normal(xkey, (2, 3, 16, 16), jnp.float32)
    result = jax.jit(model.forward)(images)
    jax.block_until_ready(result)
    assert result["boxes"].shape == (2, 8, 4)
    assert result["scores"].shape == (2, 8)
    assert result["labels"].shape == (2, 8)
    print("KERNEL_OK")
</pallas_src>

<mosaic_0001>
module attributes {stable_mosaic.version = 11 : i64} {
  func.func @_backbone_rpn_kernel(%arg0: i32, %arg1: memref<1x16x16x8xf32, #tpu.memory_space<vmem>>, %arg2: memref<9x8x128xbf16, #tpu.memory_space<vmem>>, %arg3: memref<1x128xf32, #tpu.memory_space<vmem>>, %arg4: memref<9x16x128xbf16, #tpu.memory_space<vmem>>, %arg5: memref<1x128xf32, #tpu.memory_space<vmem>>, %arg6: memref<9x32x128xbf16, #tpu.memory_space<vmem>>, %arg7: memref<1x128xf32, #tpu.memory_space<vmem>>, %arg8: memref<32x128xbf16, #tpu.memory_space<vmem>>, %arg9: memref<1x128xf32, #tpu.memory_space<vmem>>, %arg10: memref<1x16x16x32xbf16, #tpu.memory_space<vmem>>, %arg11: memref<1x256x128xbf16, #tpu.memory_space<vmem>>, %arg12: memref<18x32x32xf32, #tpu.memory_space<vmem>>) attributes {dimension_semantics = [#tpu.dimension_semantics<parallel>], iteration_bounds = array<i64: 2>, scalar_prefetch = 0 : i64, scratch_operands = 1 : i64, tpu.core_type = #tpu.core_type<tc>, window_params = [{transform_indices = @transform_0, window_bounds = array<i64: 1, 16, 16, 8>}, {pipeline_mode = #tpu.pipeline_mode<synchronous>, transform_indices = @transform_1, window_bounds = array<i64: 9, 8, 128>}, {pipeline_mode = #tpu.pipeline_mode<synchronous>, transform_indices = @transform_2, window_bounds = array<i64: 1, 128>}, {pipeline_mode = #tpu.pipeline_mode<synchronous>, transform_indices = @transform_3, window_bounds = array<i64: 9, 16, 128>}, {pipeline_mode = #tpu.pipeline_mode<synchronous>, transform_indices = @transform_4, window_bounds = array<i64: 1, 128>}, {pipeline_mode = #tpu.pipeline_mode<synchronous>, transform_indices = @transform_5, window_bounds = array<i64: 9, 32, 128>}, {pipeline_mode = #tpu.pipeline_mode<synchronous>, transform_indices = @transform_6, window_bounds = array<i64: 1, 128>}, {pipeline_mode = #tpu.pipeline_mode<synchronous>, transform_indices = @transform_7, window_bounds = array<i64: 32, 128>}, {pipeline_mode = #tpu.pipeline_mode<synchronous>, transform_indices = @transform_8, window_bounds = array<i64: 1, 128>}, {transform_indices = @transform_9, window_bounds = array<i64: 1, 16, 16, 32>}, {transform_indices = @transform_10, window_bounds = array<i64: 1, 256, 128>}]} {
    %cst = arith.constant 0.000000e+00 : f32
    %0 = vector.broadcast %cst : f32 to vector<18x8x32xf32>
    %c0 = arith.constant 0 : index
    %c0_0 = arith.constant 0 : index
    %c0_1 = arith.constant 0 : index
    %1 = vector.load %arg12[%c0, %c0_0, %c0_1] : memref<18x32x32xf32, #tpu.memory_space<vmem>>, vector<18x8x32xf32>
    tpu.vector_store %arg12[%c0, %c0_0, %c0_1], %0 {strides = array<i32>} : memref<18x32x32xf32, #tpu.memory_space<vmem>>, vector<18x8x32xf32>,
    %cst_2 = arith.constant 0.000000e+00 : f32
    %2 = vector.broadcast %cst_2 : f32 to vector<18x8x32xf32>
    %c0_3 = arith.constant 0 : index
    %c24 = arith.constant 24 : index
    %c0_4 = arith.constant 0 : index
    %3 = vector.load %arg12[%c0_3, %c24, %c0_4] : memref<18x32x32xf32, #tpu.memory_space<vmem>>, vector<18x8x32xf32>
    tpu.vector_store %arg12[%c0_3, %c24, %c0_4], %2 {strides = array<i32>} : memref<18x32x32xf32, #tpu.memory_space<vmem>>, vector<18x8x32xf32>,
    %cst_5 = arith.constant 0.000000e+00 : f32
    %4 = vector.broadcast %cst_5 : f32 to vector<1x32x32xf32>
    %c0_6 = arith.constant 0 : index
    %c0_7 = arith.constant 0 : index
    %c0_8 = arith.constant 0 : index
    %5 = vector.load %arg12[%c0_6, %c0_7, %c0_8] : memref<18x32x32xf32, #tpu.memory_space<vmem>>, vector<1x32x32xf32>
    tpu.vector_store %arg12[%c0_6, %c0_7, %c0_8], %4 {strides = array<i32>} : memref<18x32x32xf32, #tpu.memory_space<vmem>>, vector<1x32x32xf32>,
    %c17 = arith.constant 17 : index
    %c0_9 = arith.constant 0 : index
    %c0_10 = arith.constant 0 : index
    %6 = vector.load %arg12[%c17, %c0_9, %c0_10] : memref<18x32x32xf32, #tpu.memory_space<vmem>>, vector<1x32x32xf32>
    tpu.vector_store %arg12[%c17, %c0_9, %c0_10], %4 {strides = array<i32>} : memref<18x32x32xf32, #tpu.memory_space<vmem>>, vector<1x32x32xf32>,
    %c0_11 = arith.constant 0 : index
    %c0_12 = arith.constant 0 : index
    %c0_13 = arith.constant 0 : index
    %c0_14 = arith.constant 0 : index
    %7 = vector.load %arg1[%c0_11, %c0_12, %c0_13, %c0_14] : memref<1x16x16x8xf32, #tpu.memory_space<vmem>>, vector<1x16x16x8xf32>
    %8 = vector.shape_cast %7 : vector<1x16x16x8xf32> to vector<16x16x8xf32>
    %c1 = arith.constant 1 : index
    %c8 = arith.constant 8 : index
    %c0_15 = arith.constant 0 : index
    %9 = vector.load %arg12[%c1, %c8, %c0_15] : memref<18x32x32xf32, #tpu.memory_space<vmem>>, vector<16x16x8xf32>
    tpu.vector_store %arg12[%c1, %c8, %c0_15], %8 {strides = array<i32>} : memref<18x32x32xf32, #tpu.memory_space<vmem>>, vector<16x16x8xf32>,
    %cst_16 = arith.constant 0.000000e+00 : f32
    %10 = vector.broadcast %cst_16 : f32 to vector<256x128xf32>
    %c0_17 = arith.constant 0 : index
    %c7 = arith.constant 7 : index
    %c0_18 = arith.constant 0 : index
    %11 = vector.load %arg12[%c0_17, %c7, %c0_18] : memref<18x32x32xf32, #tpu.memory_space<vmem>>, vector<16x16x8xf32>
    %12 = vector.shape_cast %11 : vector<16x16x8xf32> to vector<256x8xf32>
    %13 = arith.truncf %12 : vector<256x8xf32> to vector<256x8xbf16>
    %c0_19 = arith.constant 0 : index
    %c0_20 = arith.constant 0 : index
    %c0_21 = arith.constant 0 : index
    %14 = vector.load %arg2[%c0_19, %c0_20, %c0_21] : memref<9x8x128xbf16, #tpu.memory_space<vmem>>, vector<1x8x128xbf16>
    %15 = vector.shape_cast %14 : vector<1x8x128xbf16> to vector<8x128xbf16>
    %cst_22 = arith.constant dense<0.000000e+00> : vector<256x128xf32>
    %16 = tpu.matmul %13, %15, %cst_22 {dimension_numbers = #tpu.dot_dimension_numbers<[1], [0], [0], [1], [0, 0, 1, 1], [], []>} : vector<256x8xbf16>, vector<8x128xbf16>, vector<256x128xf32> -> vector<256x128xf32>
    %17 = arith.addf %10, %16 : vector<256x128xf32>
    %c0_23 = arith.constant 0 : index
    %c8_24 = arith.constant 8 : index
    %c0_25 = arith.constant 0 : index
    %18 = vector.load %arg12[%c0_23, %c8_24, %c0_25] : memref<18x32x32xf32, #tpu.memory_space<vmem>>, vector<16x16x8xf32>
    %19 = vector.shape_cast %18 : vector<16x16x8xf32> to vector<256x8xf32>
    %20 = arith.truncf %19 : vector<256x8xf32> to vector<256x8xbf16>
    %c1_26 = arith.constant 1 : index
    %c0_27 = arith.constant 0 : index
    %c0_28 = arith.constant 0 : index
    %21 = vector.load %arg2[%c1_26, %c0_27, %c0_28] : memref<9x8x128xbf16, #tpu.memory_space<vmem>>, vector<1x8x128xbf16>
    %22 = vector.shape_cast %21 : vector<1x8x128xbf16> to vector<8x128xbf16>
    %cst_29 = arith.constant dense<0.000000e+00> : vector<256x128xf32>
    %23 = tpu.matmul %20, %22, %cst_29 {dimension_numbers = #tpu.dot_dimension_numbers<[1], [0], [0], [1], [0, 0, 1, 1], [], []>} : vector<256x8xbf16>, vector<8x128xbf16>, vector<256x128xf32> -> vector<256x128xf32>
    %24 = arith.addf %17, %23 : vector<256x128xf32>
    %c0_30 = arith.constant 0 : index
    %c9 = arith.constant 9 : index
    %c0_31 = arith.constant 0 : index
    %25 = vector.load %arg12[%c0_30, %c9, %c0_31] : memref<18x32x32xf32, #tpu.memory_space<vmem>>, vector<16x16x8xf32>
    %26 = vector.shape_cast %25 : vector<16x16x8xf32> to vector<256x8xf32>
    %27 = arith.truncf %26 : vector<256x8xf32> to vector<256x8xbf16>
    %c2 = arith.constant 2 : index
    %c0_32 = arith.constant 0 : index
    %c0_33 = arith.constant 0 : index
    %28 = vector.load %arg2[%c2, %c0_32, %c0_33] : memref<9x8x128xbf16, #tpu.memory_space<vmem>>, vector<1x8x128xbf16>
    %29 = vector.shape_cast %28 : vector<1x8x128xbf16> to vector<8x128xbf16>
    %cst_34 = arith.constant dense<0.000000e+00> : vector<256x128xf32>
    %30 = tpu.matmul %27, %29, %cst_34 {dimension_numbers = #tpu.dot_dimension_numbers<[1], [0], [0], [1], [0, 0, 1, 1], [], []>} : vector<256x8xbf16>, vector<8x128xbf16>, vector<256x128xf32> -> vector<256x128xf32>
    %31 = arith.addf %24, %30 : vector<256x128xf32>
    %c1_35 = arith.constant 1 : index
    %c7_36 = arith.constant 7 : index
    %c0_37 = arith.constant 0 : index
    %32 = vector.load %arg12[%c1_35, %c7_36, %c0_37] : memref<18x32x32xf32, #tpu.memory_space<vmem>>, vector<16x16x8xf32>
    %33 = vector.shape_cast %32 : vector<16x16x8xf32> to vector<256x8xf32>
    %34 = arith.truncf %33 : vector<256x8xf32> to vector<256x8xbf16>
    %c3 = arith.constant 3 : index
    %c0_38 = arith.constant 0 : index
    %c0_39 = arith.constant 0 : index
    %35 = vector.load %arg2[%c3, %c0_38, %c0_39] : memref<9x8x128xbf16, #tpu.memory_space<vmem>>, vector<1x8x128xbf16>
    %36 = vector.shape_cast %35 : vector<1x8x128xbf16> to vector<8x128xbf16>
    %cst_40 = arith.constant dense<0.000000e+00> : vector<256x128xf32>
    %37 = tpu.matmul %34, %36, %cst_40 {dimension_numbers = #tpu.dot_dimension_numbers<[1], [0], [0], [1], [0, 0, 1, 1], [], []>} : vector<256x8xbf16>, vector<8x128xbf16>, vector<256x128xf32> -> vector<256x128xf32>
    %38 = arith.addf %31, %37 : vector<256x128xf32>
    %c1_41 = arith.constant 1 : index
    %c8_42 = arith.constant 8 : index
    %c0_43 = arith.constant 0 : index
    %39 = vector.load %arg12[%c1_41, %c8_42, %c0_43] : memref<18x32x32xf32, #tpu.memory_space<vmem>>, vector<16x16x8xf32>
    %40 = vector.shape_cast %39 : vector<16x16x8xf32> to vector<256x8xf32>
    %41 = arith.truncf %40 : vector<256x8xf32> to vector<256x8xbf16>
    %c4 = arith.constant 4 : index
    %c0_44 = arith.constant 0 : index
    %c0_45 = arith.constant 0 : index
    %42 = vector.load %arg2[%c4, %c0_44, %c0_45] : memref<9x8x128xbf16, #tpu.memory_space<vmem>>, vector<1x8x128xbf16>
    %43 = vector.shape_cast %42 : vector<1x8x128xbf16> to vector<8x128xbf16>
    %cst_46 = arith.constant dense<0.000000e+00> : vector<256x128xf32>
    %44 = tpu.matmul %41, %43, %cst_46 {dimension_numbers = #tpu.dot_dimension_numbers<[1], [0], [0], [1], [0, 0, 1, 1], [], []>} : vector<256x8xbf16>, vector<8x128xbf16>, vector<256x128xf32> -> vector<256x128xf32>
    %45 = arith.addf %38, %44 : vector<256x128xf32>
    %c1_47 = arith.constant 1 : index
    %c9_48 = arith.constant 9 : index
    %c0_49 = arith.constant 0 : index
    %46 = vector.load %arg12[%c1_47, %c9_48, %c0_49] : memref<18x32x32xf32, #tpu.memory_space<vmem>>, vector<16x16x8xf32>
    %47 = vector.shape_cast %46 : vector<16x16x8xf32> to vector<256x8xf32>
    %48 = arith.truncf %47 : vector<256x8xf32> to vector<256x8xbf16>
    %c5 = arith.constant 5 : index
    %c0_50 = arith.constant 0 : index
    %c0_51 = arith.constant 0 : index
    %49 = vector.load %arg2[%c5, %c0_50, %c0_51] : memref<9x8x128xbf16, #tpu.memory_space<vmem>>, vector<1x8x128xbf16>
    %50 = vector.shape_cast %49 : vector<1x8x128xbf16> to vector<8x128xbf16>
    %cst_52 = arith.constant dense<0.000000e+00> : vector<256x128xf32>
    %51 = tpu.matmul %48, %50, %cst_52 {dimension_numbers = #tpu.dot_dimension_numbers<[1], [0], [0], [1], [0, 0, 1, 1], [], []>} : vector<256x8xbf16>, vector<8x128xbf16>, vector<256x128xf32> -> vector<256x128xf32>
    %52 = arith.addf %45, %51 : vector<256x128xf32>
    %c2_53 = arith.constant 2 : index
    %c7_54 = arith.constant 7 : index
    %c0_55 = arith.constant 0 : index
    %53 = vector.load %arg12[%c2_53, %c7_54, %c0_55] : memref<18x32x32xf32, #tpu.memory_space<vmem>>, vector<16x16x8xf32>
    %54 = vector.shape_cast %53 : vector<16x16x8xf32> to vector<256x8xf32>
    %55 = arith.truncf %54 : vector<256x8xf32> to vector<256x8xbf16>
    %c6 = arith.constant 6 : index
    %c0_56 = arith.constant 0 : index
    %c0_57 = arith.constant 0 : index
    %56 = vector.load %arg2[%c6, %c0_56, %c0_57] : memref<9x8x128xbf16, #tpu.memory_space<vmem>>, vector<1x8x128xbf16>
    %57 = vector.shape_cast %56 : vector<1x8x128xbf16> to vector<8x128xbf16>
    %cst_58 = arith.constant dense<0.000000e+00> : vector<256x128xf32>
    %58 = tpu.matmul %55, %57, %cst_58 {dimension_numbers = #tpu.dot_dimension_numbers<[1], [0], [0], [1], [0, 0, 1, 1], [], []>} : vector<256x8xbf16>, vector<8x128xbf16>, vector<256x128xf32> -> vector<256x128xf32>
    %59 = arith.addf %52, %58 : vector<256x128xf32>
    %c2_59 = arith.constant 2 : index
    %c8_60 = arith.constant 8 : index
    %c0_61 = arith.constant 0 : index
    %60 = vector.load %arg12[%c2_59, %c8_60, %c0_61] : memref<18x32x32xf32, #tpu.memory_space<vmem>>, vector<16x16x8xf32>
    %61 = vector.shape_cast %60 : vector<16x16x8xf32> to vector<256x8xf32>
    %62 = arith.truncf %61 : vector<256x8xf32> to vector<256x8xbf16>
    %c7_62 = arith.constant 7 : index
    %c0_63 = arith.constant 0 : index
    %c0_64 = arith.constant 0 : index
    %63 = vector.load %arg2[%c7_62, %c0_63, %c0_64] : memref<9x8x128xbf16, #tpu.memory_space<vmem>>, vector<1x8x128xbf16>
    %64 = vector.shape_cast %63 : vector<1x8x128xbf16> to vector<8x128xbf16>
    %cst_65 = arith.constant dense<0.000000e+00> : vector<256x128xf32>
    %65 = tpu.matmul %62, %64, %cst_65 {dimension_numbers = #tpu.dot_dimension_numbers<[1], [0], [0], [1], [0, 0, 1, 1], [], []>} : vector<256x8xbf16>, vector<8x128xbf16>, vector<256x128xf32> -> vector<256x128xf32>
    %66 = arith.addf %59, %65 : vector<256x128xf32>
    %c2_66 = arith.constant 2 : index
    %c9_67 = arith.constant 9 : index
    %c0_68 = arith.constant 0 : index
    %67 = vector.load %arg12[%c2_66, %c9_67, %c0_68] : memref<18x32x32xf32, #tpu.memory_space<vmem>>, vector<16x16x8xf32>
    %68 = vector.shape_cast %67 : vector<16x16x8xf32> to vector<256x8xf32>
    %69 = arith.truncf %68 : vector<256x8xf32> to vector<256x8xbf16>
    %c8_69 = arith.constant 8 : index
    %c0_70 = arith.constant 0 : index
    %c0_71 = arith.constant 0 : index
    %70 = vector.load %arg2[%c8_69, %c0_70, %c0_71] : memref<9x8x128xbf16, #tpu.memory_space<vmem>>, vector<1x8x128xbf16>
    %71 = vector.shape_cast %70 : vector<1x8x128xbf16> to vector<8x128xbf16>
    %cst_72 = arith.constant dense<0.000000e+00> : vector<256x128xf32>
    %72 = tpu.matmul %69, %71, %cst_72 {dimension_numbers = #tpu.dot_dimension_numbers<[1], [0], [0], [1], [0, 0, 1, 1], [], []>} : vector<256x8xbf16>, vector<8x128xbf16>, vector<256x128xf32> -> vector<256x128xf32>
    %73 = arith.addf %66, %72 : vector<256x128xf32>
    %c0_73 = arith.constant 0 : index
    %c0_74 = arith.constant 0 : index
    %74 = vector.load %arg3[%c0_73, %c0_74] : memref<1x128xf32, #tpu.memory_space<vmem>>, vector<1x128xf32>
    %75 = vector.broadcast %74 : vector<1x128xf32> to vector<256x128xf32>
    %76 = arith.addf %73, %75 : vector<256x128xf32>
    %cst_75 = arith.constant 0.000000e+00 : f32
    %77 = vector.broadcast %cst_75 : f32 to vector<256x128xf32>
    %78 = arith.maximumf %76, %77 : vector<256x128xf32>
    %79 = vector.extract_strided_slice %78 {offsets = [0, 0], sizes = [256, 16], strides = [1, 1]} : vector<256x128xf32> to vector<256x16xf32>
    %80 = vector.shape_cast %79 : vector<256x16xf32> to vector<16x16x16xf32>
    %c1_76 = arith.constant 1 : index
    %c8_77 = arith.constant 8 : index
    %c0_78 = arith.constant 0 : index
    %81 = vector.load %arg12[%c1_76, %c8_77, %c0_78] : memref<18x32x32xf32, #tpu.memory_space<vmem>>, vector<16x16x16xf32>
    tpu.vector_store %arg12[%c1_76, %c8_77, %c0_78], %80 {strides = array<i32>} : memref<18x32x32xf32, #tpu.memory_space<vmem>>, vector<16x16x16xf32>,
    %cst_79 = arith.constant 0.000000e+00 : f32
    %82 = vector.broadcast %cst_79 : f32 to vector<256x128xf32>
    %c0_80 = arith.constant 0 : index
    %c7_81 = arith.constant 7 : index
    %c0_82 = arith.constant 0 : index
    %83 = vector.load %arg12[%c0_80, %c7_81, %c0_82] : memref<18x32x32xf32, #tpu.memory_space<vmem>>, vector<16x16x16xf32>
    %84 = vector.shape_cast %83 : vector<16x16x16xf32> to vector<256x16xf32>
    %85 = arith.truncf %84 : vector<256x16xf32> to vector<256x16xbf16>
    %c0_83 = arith.constant 0 : index
    %c0_84 = arith.constant 0 : index
    %c0_85 = arith.constant 0 : index
    %86 = vector.load %arg4[%c0_83, %c0_84, %c0_85] : memref<9x16x128xbf16, #tpu.memory_space<vmem>>, vector<1x16x128xbf16>
    %87 = vector.shape_cast %86 : vector<1x16x128xbf16> to vector<16x128xbf16>
    %cst_86 = arith.constant dense<0.000000e+00> : vector<256x128xf32>
    %88 = tpu.matmul %85, %87, %cst_86 {dimension_numbers = #tpu.dot_dimension_numbers<[1], [0], [0], [1], [0, 0, 1, 1], [], []>} : vector<256x16xbf16>, vector<16x128xbf16>, vector<256x128xf32> -> vector<256x128xf32>
    %89 = arith.addf %82, %88 : vector<256x128xf32>
    %c0_87 = arith.constant 0 : index
    %c8_88 = arith.constant 8 : index
    %c0_89 = arith.constant 0 : index
    %90 = vector.load %arg12[%c0_87, %c8_88, %c0_89] : memref<18x32x32xf32, #tpu.memory_space<vmem>>, vector<16x16x16xf32>
    %91 = vector.shape_cast %90 : vector<16x16x16xf32> to vector<256x16xf32>
    %92 = arith.truncf %91 : vector<256x16xf32> to vector<256x16xbf16>
    %c1_90 = arith.constant 1 : index
    %c0_91 = arith.constant 0 : index
    %c0_92 = arith.constant 0 : index
    %93 = vector.load %arg4[%c1_90, %c0_91, %c0_92] : memref<9x16x128xbf16, #tpu.memory_space<vmem>>, vector<1x16x128xbf16>
    %94 = vector.shape_cast %93 : vector<1x16x128xbf16> to vector<16x128xbf16>
    %cst_93 = arith.constant dense<0.000000e+00> : vector<256x128xf32>
    %95 = tpu.matmul %92, %94, %cst_93 {dimension_numbers = #tpu.dot_dimension_numbers<[1], [0], [0], [1], [0, 0, 1, 1], [], []>} : vector<256x16xbf16>, vector<16x128xbf16>, vector<256x128xf32> -> vector<256x128xf32>
    %96 = arith.addf %89, %95 : vector<256x128xf32>
    %c0_94 = arith.constant 0 : index
    %c9_95 = arith.constant 9 : index
    %c0_96 = arith.constant 0 : index
    %97 = vector.load %arg12[%c0_94, %c9_95, %c0_96] : memref<18x32x32xf32, #tpu.memory_space<vmem>>, vector<16x16x16xf32>
    %98 = vector.shape_cast %97 : vector<16x16x16xf32> to vector<256x16xf32>
    %99 = arith.truncf %98 : vector<256x16xf32> to vector<256x16xbf16>
    %c2_97 = arith.constant 2 : index
    %c0_98 = arith.constant 0 : index
    %c0_99 = arith.constant 0 : index
    %100 = vector.load %arg4[%c2_97, %c0_98, %c0_99] : memref<9x16x128xbf16, #tpu.memory_space<vmem>>, vector<1x16x128xbf16>
    %101 = vector.shape_cast %100 : vector<1x16x128xbf16> to vector<16x128xbf16>
    %cst_100 = arith.constant dense<0.000000e+00> : vector<256x128xf32>
    %102 = tpu.matmul %99, %101, %cst_100 {dimension_numbers = #tpu.dot_dimension_numbers<[1], [0], [0], [1], [0, 0, 1, 1], [], []>} : vector<256x16xbf16>, vector<16x128xbf16>, vector<256x128xf32> -> vector<256x128xf32>
    %103 = arith.addf %96, %102 : vector<256x128xf32>
    %c1_101 = arith.constant 1 : index
    %c7_102 = arith.constant 7 : index
    %c0_103 = arith.constant 0 : index
    %104 = vector.load %arg12[%c1_101, %c7_102, %c0_103] : memref<18x32x32xf32, #tpu.memory_space<vmem>>, vector<16x16x16xf32>
    %105 = vector.shape_cast %104 : vector<16x16x16xf32> to vector<256x16xf32>
    %106 = arith.truncf %105 : vector<256x16xf32> to vector<256x16xbf16>
    %c3_104 = arith.constant 3 : index
    %c0_105 = arith.constant 0 : index
    %c0_106 = arith.constant 0 : index
    %107 = vector.load %arg4[%c3_104, %c0_105, %c0_106] : memref<9x16x128xbf16, #tpu.memory_space<vmem>>, vector<1x16x128xbf16>
    %108 = vector.shape_cast %107 : vector<1x16x128xbf16> to vector<16x128xbf16>
    %cst_107 = arith.constant dense<0.000000e+00> : vector<256x128xf32>
    %109 = tpu.matmul %106, %108, %cst_107 {dimension_numbers = #tpu.dot_dimension_numbers<[1], [0], [0], [1], [0, 0, 1, 1], [], []>} : vector<256x16xbf16>, vector<16x128xbf16>, vector<256x128xf32> -> vector<256x128xf32>
    %110 = arith.addf %103, %109 : vector<256x128xf32>
    %c1_108 = arith.constant 1 : index
    %c8_109 = arith.constant 8 : index
    %c0_110 = arith.constant 0 : index
    %111 = vector.load %arg12[%c1_108, %c8_109, %c0_110] : memref<18x32x32xf32, #tpu.memory_space<vmem>>, vector<16x16x16xf32>
    %112 = vector.shape_cast %111 : vector<16x16x16xf32> to vector<256x16xf32>
    %113 = arith.truncf %112 : vector<256x16xf32> to vector<256x16xbf16>
    %c4_111 = arith.constant 4 : index
    %c0_112 = arith.constant 0 : index
    %c0_113 = arith.constant 0 : index
    %114 = vector.load %arg4[%c4_111, %c0_112, %c0_113] : memref<9x16x128xbf16, #tpu.memory_space<vmem>>, vector<1x16x128xbf16>
    %115 = vector.shape_cast %114 : vector<1x16x128xbf16> to vector<16x128xbf16>
    %cst_114 = arith.constant dense<0.000000e+00> : vector<256x128xf32>
    %116 = tpu.matmul %113, %115, %cst_114 {dimension_numbers = #tpu.dot_dimension_numbers<[1], [0], [0], [1], [0, 0, 1, 1], [], []>} : vector<256x16xbf16>, vector<16x128xbf16>, vector<256x128xf32> -> vector<256x128xf32>
    %117 = arith.addf %110, %116 : vector<256x128xf32>
    %c1_115 = arith.constant 1 : index
    %c9_116 = arith.constant 9 : index
    %c0_117 = arith.constant 0 : index
    %118 = vector.load %arg12[%c1_115, %c9_116, %c0_117] : memref<18x32x32xf32, #tpu.memory_space<vmem>>, vector<16x16x16xf32>
    %119 = vector.shape_cast %118 : vector<16x16x16xf32> to vector<256x16xf32>
    %120 = arith.truncf %119 : vector<256x16xf32> to vector<256x16xbf16>
    %c5_118 = arith.constant 5 : index
    %c0_119 = arith.constant 0 : index
    %c0_120 = arith.constant 0 : index
    %121 = vector.load %arg4[%c5_118, %c0_119, %c0_120] : memref<9x16x128xbf16, #tpu.memory_space<vmem>>, vector<1x16x128xbf16>
    %122 = vector.shape_cast %121 : vector<1x16x128xbf16> to vector<16x128xbf16>
    %cst_121 = arith.constant dense<0.000000e+00> : vector<256x128xf32>
    %123 = tpu.matmul %120, %122, %cst_121 {dimension_numbers = #tpu.dot_dimension_numbers<[1], [0], [0], [1], [0, 0, 1, 1], [], []>} : vector<256x16xbf16>, vector<16x128xbf16>, vector<256x128xf32> -> vector<256x128xf32>
    %124 = arith.addf %117, %123 : vector<256x128xf32>
    %c2_122 = arith.constant 2 : index
    %c7_123 = arith.constant 7 : index
    %c0_124 = arith.constant 0 : index
    %125 = vector.load %arg12[%c2_122, %c7_123, %c0_124] : memref<18x32x32xf32, #tpu.memory_space<vmem>>, vector<16x16x16xf32>
    %126 = vector.shape_cast %125 : vector<16x16x16xf32> to vector<256x16xf32>
    %127 = arith.truncf %126 : vector<256x16xf32> to vector<256x16xbf16>
    %c6_125 = arith.constant 6 : index
    %c0_126 = arith.constant 0 : index
    %c0_127 = arith.constant 0 : index
    %128 = vector.load %arg4[%c6_125, %c0_126, %c0_127] : memref<9x16x128xbf16, #tpu.memory_space<vmem>>, vector<1x16x128xbf16>
    %129 = vector.shape_cast %128 : vector<1x16x128xbf16> to vector<16x128xbf16>
    %cst_128 = arith.constant dense<0.000000e+00> : vector<256x128xf32>
    %130 = tpu.matmul %127, %129, %cst_128 {dimension_numbers = #tpu.dot_dimension_numbers<[1], [0], [0], [1], [0, 0, 1, 1], [], []>} : vector<256x16xbf16>, vector<16x128xbf16>, vector<256x128xf32> -> vector<256x128xf32>
    %131 = arith.addf %124, %130 : vector<256x128xf32>
    %c2_129 = arith.constant 2 : index
    %c8_130 = arith.constant 8 : index
    %c0_131 = arith.constant 0 : index
    %132 = vector.load %arg12[%c2_129, %c8_130, %c0_131] : memref<18x32x32xf32, #tpu.memory_space<vmem>>, vector<16x16x16xf32>
    %133 = vector.shape_cast %132 : vector<16x16x16xf32> to vector<256x16xf32>
    %134 = arith.truncf %133 : vector<256x16xf32> to vector<256x16xbf16>
    %c7_132 = arith.constant 7 : index
    %c0_133 = arith.constant 0 : index
    %c0_134 = arith.constant 0 : index
    %135 = vector.load %arg4[%c7_132, %c0_133, %c0_134] : memref<9x16x128xbf16, #tpu.memory_space<vmem>>, vector<1x16x128xbf16>
    %136 = vector.shape_cast %135 : vector<1x16x128xbf16> to vector<16x128xbf16>
    %cst_135 = arith.constant dense<0.000000e+00> : vector<256x128xf32>
    %137 = tpu.matmul %134, %136, %cst_135 {dimension_numbers = #tpu.dot_dimension_numbers<[1], [0], [0], [1], [0, 0, 1, 1], [], []>} : vector<256x16xbf16>, vector<16x128xbf16>, vector<256x128xf32> -> vector<256x128xf32>
    %138 = arith.addf %131, %137 : vector<256x128xf32>
    %c2_136 = arith.constant 2 : index
    %c9_137 = arith.constant 9 : index
    %c0_138 = arith.constant 0 : index
    %139 = vector.load %arg12[%c2_136, %c9_137, %c0_138] : memref<18x32x32xf32, #tpu.memory_space<vmem>>, vector<16x16x16xf32>
    %140 = vector.shape_cast %139 : vector<16x16x16xf32> to vector<256x16xf32>
    %141 = arith.truncf %140 : vector<256x16xf32> to vector<256x16xbf16>
    %c8_139 = arith.constant 8 : index
    %c0_140 = arith.constant 0 : index
    %c0_141 = arith.constant 0 : index
    %142 = vector.load %arg4[%c8_139, %c0_140, %c0_141] : memref<9x16x128xbf16, #tpu.memory_space<vmem>>, vector<1x16x128xbf16>
    %143 = vector.shape_cast %142 : vector<1x16x128xbf16> to vector<16x128xbf16>
    %cst_142 = arith.constant dense<0.000000e+00> : vector<256x128xf32>
    %144 = tpu.matmul %141, %143, %cst_142 {dimension_numbers = #tpu.dot_dimension_numbers<[1], [0], [0], [1], [0, 0, 1, 1], [], []>} : vector<256x16xbf16>, vector<16x128xbf16>, vector<256x128xf32> -> vector<256x128xf32>
    %145 = arith.addf %138, %144 : vector<256x128xf32>
    %c0_143 = arith.constant 0 : index
    %c0_144 = arith.constant 0 : index
    %146 = vector.load %arg5[%c0_143, %c0_144] : memref<1x128xf32, #tpu.memory_space<vmem>>, vector<1x128xf32>
    %147 = vector.broadcast %146 : vector<1x128xf32> to vector<256x128xf32>
    %148 = arith.addf %145, %147 : vector<256x128xf32>
    %cst_145 = arith.constant 0.000000e+00 : f32
    %149 = vector.broadcast %cst_145 : f32 to vector<256x128xf32>
    %150 = arith.maximumf %148, %149 : vector<256x128xf32>
    %151 = vector.extract_strided_slice %150 {offsets = [0, 0], sizes = [256, 32], strides = [1, 1]} : vector<256x128xf32> to vector<256x32xf32>
    %152 = vector.shape_cast %151 : vector<256x32xf32> to vector<16x16x32xf32>
    %153 = arith.truncf %152 : vector<16x16x32xf32> to vector<16x16x32xbf16>
    %c0_146 = arith.constant 0 : index
    %c0_147 = arith.constant 0 : index
    %c0_148 = arith.constant 0 : index
    %c0_149 = arith.constant 0 : index
    %154 = vector.load %arg10[%c0_146, %c0_147, %c0_148, %c0_149] : memref<1x16x16x32xbf16, #tpu.memory_space<vmem>>, vector<1x16x16x32xbf16>
    %155 = vector.shape_cast %154 : vector<1x16x16x32xbf16> to vector<16x16x32xbf16>
    %156 = vector.shape_cast %153 : vector<16x16x32xbf16> to vector<1x16x16x32xbf16>
    tpu.vector_store %arg10[%c0_146, %c0_147, %c0_148, %c0_149], %156 {strides = array<i32>} : memref<1x16x16x32xbf16, #tpu.memory_space<vmem>>, vector<1x16x16x32xbf16>,
    %157 = vector.extract_strided_slice %150 {offsets = [0, 0], sizes = [256, 32], strides = [1, 1]} : vector<256x128xf32> to vector<256x32xf32>
    %158 = vector.shape_cast %157 : vector<256x32xf32> to vector<16x16x32xf32>
    %c1_150 = arith.constant 1 : index
    %c8_151 = arith.constant 8 : index
    %c0_152 = arith.constant 0 : index
    %159 = vector.load %arg12[%c1_150, %c8_151, %c0_152] : memref<18x32x32xf32, #tpu.memory_space<vmem>>, vector<16x16x32xf32>
    tpu.vector_store %arg12[%c1_150, %c8_151, %c0_152], %158 {strides = array<i32>} : memref<18x32x32xf32, #tpu.memory_space<vmem>>, vector<16x16x32xf32>,
    %cst_153 = arith.constant 0.000000e+00 : f32
    %160 = vector.broadcast %cst_153 : f32 to vector<256x128xf32>
    %c0_154 = arith.constant 0 : index
    %c7_155 = arith.constant 7 : index
    %c0_156 = arith.constant 0 : index
    %161 = vector.load %arg12[%c0_154, %c7_155, %c0_156] : memref<18x32x32xf32, #tpu.memory_space<vmem>>, vector<16x16x32xf32>
    %162 = vector.shape_cast %161 : vector<16x16x32xf32> to vector<256x32xf32>
    %163 = arith.truncf %162 : vector<256x32xf32> to vector<256x32xbf16>
    %c0_157 = arith.constant 0 : index
    %c0_158 = arith.constant 0 : index
    %c0_159 = arith.constant 0 : index
    %164 = vector.load %arg6[%c0_157, %c0_158, %c0_159] : memref<9x32x128xbf16, #tpu.memory_space<vmem>>, vector<1x32x128xbf16>
    %165 = vector.shape_cast %164 : vector<1x32x128xbf16> to vector<32x128xbf16>
    %cst_160 = arith.constant dense<0.000000e+00> : vector<256x128xf32>
    %166 = tpu.matmul %163, %165, %cst_160 {dimension_numbers = #tpu.dot_dimension_numbers<[1], [0], [0], [1], [0, 0, 1, 1], [], []>} : vector<256x32xbf16>, vector<32x128xbf16>, vector<256x128xf32> -> vector<256x128xf32>
    %167 = arith.addf %160, %166 : vector<256x128xf32>
    %c0_161 = arith.constant 0 : index
    %c8_162 = arith.constant 8 : index
    %c0_163 = arith.constant 0 : index
    %168 = vector.load %arg12[%c0_161, %c8_162, %c0_163] : memref<18x32x32xf32, #tpu.memory_space<vmem>>, vector<16x16x32xf32>
    %169 = vector.shape_cast %168 : vector<16x16x32xf32> to vector<256x32xf32>
    %170 = arith.truncf %169 : vector<256x32xf32> to vector<256x32xbf16>
    %c1_164 = arith.constant 1 : index
    %c0_165 = arith.constant 0 : index
    %c0_166 = arith.constant 0 : index
    %171 = vector.load %arg6[%c1_164, %c0_165, %c0_166] : memref<9x32x128xbf16, #tpu.memory_space<vmem>>, vector<1x32x128xbf16>
    %172 = vector.shape_cast %171 : vector<1x32x128xbf16> to vector<32x128xbf16>
    %cst_167 = arith.constant dense<0.000000e+00> : vector<256x128xf32>
    %173 = tpu.matmul %170, %172, %cst_167 {dimension_numbers = #tpu.dot_dimension_numbers<[1], [0], [0], [1], [0, 0, 1, 1], [], []>} : vector<256x32xbf16>, vector<32x128xbf16>, vector<256x128xf32> -> vector<256x128xf32>
    %174 = arith.addf %167, %173 : vector<256x128xf32>
    %c0_168 = arith.constant 0 : index
    %c9_169 = arith.constant 9 : index
    %c0_170 = arith.constant 0 : index
    %175 = vector.load %arg12[%c0_168, %c9_169, %c0_170] : memref<18x32x32xf32, #tpu.memory_space<vmem>>, vector<16x16x32xf32>
    %176 = vector.shape_cast %175 : vector<16x16x32xf32> to vector<256x32xf32>
    %177 = arith.truncf %176 : vector<256x32xf32> to vector<256x32xbf16>
    %c2_171 = arith.constant 2 : index
    %c0_172 = arith.constant 0 : index
    %c0_173 = arith.constant 0 : index
    %178 = vector.load %arg6[%c2_171, %c0_172, %c0_173] : memref<9x32x128xbf16, #tpu.memory_space<vmem>>, vector<1x32x128xbf16>
    %179 = vector.shape_cast %178 : vector<1x32x128xbf16> to vector<32x128xbf16>
    %cst_174 = arith.constant dense<0.000000e+00> : vector<256x128xf32>
    %180 = tpu.matmul %177, %179, %cst_174 {dimension_numbers = #tpu.dot_dimension_numbers<[1], [0], [0], [1], [0, 0, 1, 1], [], []>} : vector<256x32xbf16>, vector<32x128xbf16>, vector<256x128xf32> -> vector<256x128xf32>
    %181 = arith.addf %174, %180 : vector<256x128xf32>
    %c1_175 = arith.constant 1 : index
    %c7_176 = arith.constant 7 : index
    %c0_177 = arith.constant 0 : index
    %182 = vector.load %arg12[%c1_175, %c7_176, %c0_177] : memref<18x32x32xf32, #tpu.memory_space<vmem>>, vector<16x16x32xf32>
    %183 = vector.shape_cast %182 : vector<16x16x32xf32> to vector<256x32xf32>
    %184 = arith.truncf %183 : vector<256x32xf32> to vector<256x32xbf16>
    %c3_178 = arith.constant 3 : index
    %c0_179 = arith.constant 0 : index
    %c0_180 = arith.constant 0 : index
    %185 = vector.load %arg6[%c3_178, %c0_179, %c0_180] : memref<9x32x128xbf16, #tpu.memory_space<vmem>>, vector<1x32x128xbf16>
    %186 = vector.shape_cast %185 : vector<1x32x128xbf16> to vector<32x128xbf16>
    %cst_181 = arith.constant dense<0.000000e+00> : vector<256x128xf32>
    %187 = tpu.matmul %184, %186, %cst_181 {dimension_numbers = #tpu.dot_dimension_numbers<[1], [0], [0], [1], [0, 0, 1, 1], [], []>} : vector<256x32xbf16>, vector<32x128xbf16>, vector<256x128xf32> -> vector<256x128xf32>
    %188 = arith.addf %181, %187 : vector<256x128xf32>
    %c1_182 = arith.constant 1 : index
    %c8_183 = arith.constant 8 : index
    %c0_184 = arith.constant 0 : index
    %189 = vector.load %arg12[%c1_182, %c8_183, %c0_184] : memref<18x32x32xf32, #tpu.memory_space<vmem>>, vector<16x16x32xf32>
    %190 = vector.shape_cast %189 : vector<16x16x32xf32> to vector<256x32xf32>
    %191 = arith.truncf %190 : vector<256x32xf32> to vector<256x32xbf16>
    %c4_185 = arith.constant 4 : index
    %c0_186 = arith.constant 0 : index
    %c0_187 = arith.constant 0 : index
    %192 = vector.load %arg6[%c4_185, %c0_186, %c0_187] : memref<9x32x128xbf16, #tpu.memory_space<vmem>>, vector<1x32x128xbf16>
    %193 = vector.shape_cast %192 : vector<1x32x128xbf16> to vector<32x128xbf16>
    %cst_188 = arith.constant dense<0.000000e+00> : vector<256x128xf32>
    %194 = tpu.matmul %191, %193, %cst_188 {dimension_numbers = #tpu.dot_dimension_numbers<[1], [0], [0], [1], [0, 0, 1, 1], [], []>} : vector<256x32xbf16>, vector<32x128xbf16>, vector<256x128xf32> -> vector<256x128xf32>
    %195 = arith.addf %188, %194 : vector<256x128xf32>
    %c1_189 = arith.constant 1 : index
    %c9_190 = arith.constant 9 : index
    %c0_191 = arith.constant 0 : index
    %196 = vector.load %arg12[%c1_189, %c9_190, %c0_191] : memref<18x32x32xf32, #tpu.memory_space<vmem>>, vector<16x16x32xf32>
    %197 = vector.shape_cast %196 : vector<16x16x32xf32> to vector<256x32xf32>
    %198 = arith.truncf %197 : vector<256x32xf32> to vector<256x32xbf16>
    %c5_192 = arith.constant 5 : index
    %c0_193 = arith.constant 0 : index
    %c0_194 = arith.constant 0 : index
    %199 = vector.load %arg6[%c5_192, %c0_193, %c0_194] : memref<9x32x128xbf16, #tpu.memory_space<vmem>>, vector<1x32x128xbf16>
    %200 = vector.shape_cast %199 : vector<1x32x128xbf16> to vector<32x128xbf16>
    %cst_195 = arith.constant dense<0.000000e+00> : vector<256x128xf32>
    %201 = tpu.matmul %198, %200, %cst_195 {dimension_numbers = #tpu.dot_dimension_numbers<[1], [0], [0], [1], [0, 0, 1, 1], [], []>} : vector<256x32xbf16>, vector<32x128xbf16>, vector<256x128xf32> -> vector<256x128xf32>
    %202 = arith.addf %195, %201 : vector<256x128xf32>
    %c2_196 = arith.constant 2 : index
    %c7_197 = arith.constant 7 : index
    %c0_198 = arith.constant 0 : index
    %203 = vector.load %arg12[%c2_196, %c7_197, %c0_198] : memref<18x32x32xf32, #tpu.memory_space<vmem>>, vector<16x16x32xf32>
    %204 = vector.shape_cast %203 : vector<16x16x32xf32> to vector<256x32xf32>
    %205 = arith.truncf %204 : vector<256x32xf32> to vector<256x32xbf16>
    %c6_199 = arith.constant 6 : index
    %c0_200 = arith.constant 0 : index
    %c0_201 = arith.constant 0 : index
    %206 = vector.load %arg6[%c6_199, %c0_200, %c0_201] : memref<9x32x128xbf16, #tpu.memory_space<vmem>>, vector<1x32x128xbf16>
    %207 = vector.shape_cast %206 : vector<1x32x128xbf16> to vector<32x128xbf16>
    %cst_202 = arith.constant dense<0.000000e+00> : vector<256x128xf32>
    %208 = tpu.matmul %205, %207, %cst_202 {dimension_numbers = #tpu.dot_dimension_numbers<[1], [0], [0], [1], [0, 0, 1, 1], [], []>} : vector<256x32xbf16>, vector<32x128xbf16>, vector<256x128xf32> -> vector<256x128xf32>
    %209 = arith.addf %202, %208 : vector<256x128xf32>
    %c2_203 = arith.constant 2 : index
    %c8_204 = arith.constant 8 : index
    %c0_205 = arith.constant 0 : index
    %210 = vector.load %arg12[%c2_203, %c8_204, %c0_205] : memref<18x32x32xf32, #tpu.memory_space<vmem>>, vector<16x16x32xf32>
    %211 = vector.shape_cast %210 : vector<16x16x32xf32> to vector<256x32xf32>
    %212 = arith.truncf %211 : vector<256x32xf32> to vector<256x32xbf16>
    %c7_206 = arith.constant 7 : index
    %c0_207 = arith.constant 0 : index
    %c0_208 = arith.constant 0 : index
    %213 = vector.load %arg6[%c7_206, %c0_207, %c0_208] : memref<9x32x128xbf16, #tpu.memory_space<vmem>>, vector<1x32x128xbf16>
    %214 = vector.shape_cast %213 : vector<1x32x128xbf16> to vector<32x128xbf16>
    %cst_209 = arith.constant dense<0.000000e+00> : vector<256x128xf32>
    %215 = tpu.matmul %212, %214, %cst_209 {dimension_numbers = #tpu.dot_dimension_numbers<[1], [0], [0], [1], [0, 0, 1, 1], [], []>} : vector<256x32xbf16>, vector<32x128xbf16>, vector<256x128xf32> -> vector<256x128xf32>
    %216 = arith.addf %209, %215 : vector<256x128xf32>
    %c2_210 = arith.constant 2 : index
    %c9_211 = arith.constant 9 : index
    %c0_212 = arith.constant 0 : index
    %217 = vector.load %arg12[%c2_210, %c9_211, %c0_212] : memref<18x32x32xf32, #tpu.memory_space<vmem>>, vector<16x16x32xf32>
    %218 = vector.shape_cast %217 : vector<16x16x32xf32> to vector<256x32xf32>
    %219 = arith.truncf %218 : vector<256x32xf32> to vector<256x32xbf16>
    %c8_213 = arith.constant 8 : index
    %c0_214 = arith.constant 0 : index
    %c0_215 = arith.constant 0 : index
    %220 = vector.load %arg6[%c8_213, %c0_214, %c0_215] : memref<9x32x128xbf16, #tpu.memory_space<vmem>>, vector<1x32x128xbf16>
    %221 = vector.shape_cast %220 : vector<1x32x128xbf16> to vector<32x128xbf16>
    %cst_216 = arith.constant dense<0.000000e+00> : vector<256x128xf32>
    %222 = tpu.matmul %219, %221, %cst_216 {dimension_numbers = #tpu.dot_dimension_numbers<[1], [0], [0], [1], [0, 0, 1, 1], [], []>} : vector<256x32xbf16>, vector<32x128xbf16>, vector<256x128xf32> -> vector<256x128xf32>
    %223 = arith.addf %216, %222 : vector<256x128xf32>
    %c0_217 = arith.constant 0 : index
    %c0_218 = arith.constant 0 : index
    %224 = vector.load %arg7[%c0_217, %c0_218] : memref<1x128xf32, #tpu.memory_space<vmem>>, vector<1x128xf32>
    %225 = vector.broadcast %224 : vector<1x128xf32> to vector<256x128xf32>
    %226 = arith.addf %223, %225 : vector<256x128xf32>
    %cst_219 = arith.constant 0.000000e+00 : f32
    %227 = vector.broadcast %cst_219 : f32 to vector<256x128xf32>
    %228 = arith.maximumf %226, %227 : vector<256x128xf32>
    %229 = vector.extract_strided_slice %228 {offsets = [0, 0], sizes = [256, 32], strides = [1, 1]} : vector<256x128xf32> to vector<256x32xf32>
    %230 = arith.truncf %229 : vector<256x32xf32> to vector<256x32xbf16>
    %c0_220 = arith.constant 0 : index
    %c0_221 = arith.constant 0 : index
    %231 = vector.load %arg8[%c0_220, %c0_221] : memref<32x128xbf16, #tpu.memory_space<vmem>>, vector<32x128xbf16>
    %cst_222 = arith.constant dense<0.000000e+00> : vector<256x128xf32>
    %232 = tpu.matmul %230, %231, %cst_222 {dimension_numbers = #tpu.dot_dimension_numbers<[1], [0], [0], [1], [0, 0, 1, 1], [], []>} : vector<256x32xbf16>, vector<32x128xbf16>, vector<256x128xf32> -> vector<256x128xf32>
    %c0_223 = arith.constant 0 : index
    %c0_224 = arith.constant 0 : index
    %233 = vector.load %arg9[%c0_223, %c0_224] : memref<1x128xf32, #tpu.memory_space<vmem>>, vector<1x128xf32>
    %234 = vector.broadcast %233 : vector<1x128xf32> to vector<256x128xf32>
    %235 = arith.addf %232, %234 : vector<256x128xf32>
    %236 = arith.truncf %235 : vector<256x128xf32> to vector<256x128xbf16>
    %c0_225 = arith.constant 0 : index
    %c0_226 = arith.constant 0 : index
    %c0_227 = arith.constant 0 : index
    %237 = vector.load %arg11[%c0_225, %c0_226, %c0_227] : memref<1x256x128xbf16, #tpu.memory_space<vmem>>, vector<1x256x128xbf16>
    %238 = vector.shape_cast %237 : vector<1x256x128xbf16> to vector<256x128xbf16>
    %239 = vector.shape_cast %236 : vector<256x128xbf16> to vector<1x256x128xbf16>
    tpu.vector_store %arg11[%c0_225, %c0_226, %c0_227], %239 {strides = array<i32>} : memref<1x256x128xbf16, #tpu.memory_space<vmem>>, vector<1x256x128xbf16>,
    return
  }
  func.func @transform_0(%arg0: i32) -> (i32, i32, i32, i32) {
    %c0_i32 = arith.constant 0 : i32
    %c0_i32_0 = arith.constant 0 : i32
    %c0_i32_1 = arith.constant 0 : i32
    %c0_i32_2 = arith.constant 0 : i32
    return %arg0, %c0_i32, %c0_i32_0, %c0_i32_1 : i32, i32, i32, i32
  }
  func.func @transform_1(%arg0: i32) -> (i32, i32, i32) {
    %c0_i32 = arith.constant 0 : i32
    %c0_i32_0 = arith.constant 0 : i32
    %c0_i32_1 = arith.constant 0 : i32
    %c0_i32_2 = arith.constant 0 : i32
    return %c0_i32, %c0_i32_0, %c0_i32_1 : i32, i32, i32
  }
  func.func @transform_2(%arg0: i32) -> (i32, i32) {
    %c0_i32 = arith.constant 0 : i32
    %c0_i32_0 = arith.constant 0 : i32
    %c0_i32_1 = arith.constant 0 : i32
    return %c0_i32, %c0_i32_0 : i32, i32
  }
  func.func @transform_3(%arg0: i32) -> (i32, i32, i32) {
    %c0_i32 = arith.constant 0 : i32
    %c0_i32_0 = arith.constant 0 : i32
    %c0_i32_1 = arith.constant 0 : i32
    %c0_i32_2 = arith.constant 0 : i32
    return %c0_i32, %c0_i32_0, %c0_i32_1 : i32, i32, i32
  }
  func.func @transform_4(%arg0: i32) -> (i32, i32) {
    %c0_i32 = arith.constant 0 : i32
    %c0_i32_0 = arith.constant 0 : i32
    %c0_i32_1 = arith.constant 0 : i32
    return %c0_i32, %c0_i32_0 : i32, i32
  }
  func.func @transform_5(%arg0: i32) -> (i32, i32, i32) {
    %c0_i32 = arith.constant 0 : i32
    %c0_i32_0 = arith.constant 0 : i32
    %c0_i32_1 = arith.constant 0 : i32
    %c0_i32_2 = arith.constant 0 : i32
    return %c0_i32, %c0_i32_0, %c0_i32_1 : i32, i32, i32
  }
  func.func @transform_6(%arg0: i32) -> (i32, i32) {
    %c0_i32 = arith.constant 0 : i32
    %c0_i32_0 = arith.constant 0 : i32
    %c0_i32_1 = arith.constant 0 : i32
    return %c0_i32, %c0_i32_0 : i32, i32
  }
  func.func @transform_7(%arg0: i32) -> (i32, i32) {
    %c0_i32 = arith.constant 0 : i32
    %c0_i32_0 = arith.constant 0 : i32
    %c0_i32_1 = arith.constant 0 : i32
    return %c0_i32, %c0_i32_0 : i32, i32
  }
  func.func @transform_8(%arg0: i32) -> (i32, i32) {
    %c0_i32 = arith.constant 0 : i32
    %c0_i32_0 = arith.constant 0 : i32
    %c0_i32_1 = arith.constant 0 : i32
    return %c0_i32, %c0_i32_0 : i32, i32
  }
  func.func @transform_9(%arg0: i32) -> (i32, i32, i32, i32) {
    %c0_i32 = arith.constant 0 : i32
    %c0_i32_0 = arith.constant 0 : i32
    %c0_i32_1 = arith.constant 0 : i32
    %c0_i32_2 = arith.constant 0 : i32
    return %arg0, %c0_i32, %c0_i32_0, %c0_i32_1 : i32, i32, i32, i32
  }
  func.func @transform_10(%arg0: i32) -> (i32, i32, i32) {
    %c0_i32 = arith.constant 0 : i32
    %c0_i32_0 = arith.constant 0 : i32
    %c0_i32_1 = arith.constant 0 : i32
    return %arg0, %c0_i32, %c0_i32_0 : i32, i32, i32
  }
}

module attributes {stable_mosaic.version = 11 : i64} {
  func.func @_roi_head_kernel(%arg0: i32, %arg1: memref<16x512xbf16, #tpu.memory_space<vmem>>, %arg2: memref<512x128xbf16, #tpu.memory_space<vmem>>, %arg3: memref<1x128xf32, #tpu.memory_space<vmem>>, %arg4: memref<128x128xbf16, #tpu.memory_space<vmem>>, %arg5: memref<1x128xf32, #tpu.memory_space<vmem>>, %arg6: memref<128x128xbf16, #tpu.memory_space<vmem>>, %arg7: memref<1x128xf32, #tpu.memory_space<vmem>>, %arg8: memref<16x128xf32, #tpu.memory_space<vmem>>) attributes {dimension_semantics = [#tpu.dimension_semantics<parallel>], iteration_bounds = array<i64: 1>, scalar_prefetch = 0 : i64, scratch_operands = 0 : i64, tpu.core_type = #tpu.core_type<tc>, window_params = [{transform_indices = @transform_0, window_bounds = array<i64: 16, 512>}, {pipeline_mode = #tpu.pipeline_mode<synchronous>, transform_indices = @transform_1, window_bounds = array<i64: 512, 128>}, {pipeline_mode = #tpu.pipeline_mode<synchronous>, transform_indices = @transform_2, window_bounds = array<i64: 1, 128>}, {pipeline_mode = #tpu.pipeline_mode<synchronous>, transform_indices = @transform_3, window_bounds = array<i64: 128, 128>}, {pipeline_mode = #tpu.pipeline_mode<synchronous>, transform_indices = @transform_4, window_bounds = array<i64: 1, 128>}, {pipeline_mode = #tpu.pipeline_mode<synchronous>, transform_indices = @transform_5, window_bounds = array<i64: 128, 128>}, {pipeline_mode = #tpu.pipeline_mode<synchronous>, transform_indices = @transform_6, window_bounds = array<i64: 1, 128>}, {transform_indices = @transform_7, window_bounds = array<i64: 16, 128>}]} {
    %c0 = arith.constant 0 : index
    %c0_0 = arith.constant 0 : index
    %0 = vector.load %arg1[%c0, %c0_0] : memref<16x512xbf16, #tpu.memory_space<vmem>>, vector<16x512xbf16>
    %c0_1 = arith.constant 0 : index
    %c0_2 = arith.constant 0 : index
    %1 = vector.load %arg2[%c0_1, %c0_2] : memref<512x128xbf16, #tpu.memory_space<vmem>>, vector<512x128xbf16>
    %cst = arith.constant dense<0.000000e+00> : vector<16x128xf32>
    %2 = tpu.matmul %0, %1, %cst {dimension_numbers = #tpu.dot_dimension_numbers<[1], [0], [0], [1], [0, 0, 1, 1], [], []>} : vector<16x512xbf16>, vector<512x128xbf16>, vector<16x128xf32> -> vector<16x128xf32>
    %c0_3 = arith.constant 0 : index
    %c0_4 = arith.constant 0 : index
    %3 = vector.load %arg3[%c0_3, %c0_4] : memref<1x128xf32, #tpu.memory_space<vmem>>, vector<1x128xf32>
    %4 = vector.broadcast %3 : vector<1x128xf32> to vector<16x128xf32>
    %5 = arith.addf %2, %4 : vector<16x128xf32>
    %cst_5 = arith.constant 0.000000e+00 : f32
    %6 = vector.broadcast %cst_5 : f32 to vector<16x128xf32>
    %7 = arith.maximumf %5, %6 : vector<16x128xf32>
    %8 = arith.truncf %7 : vector<16x128xf32> to vector<16x128xbf16>
    %c0_6 = arith.constant 0 : index
    %c0_7 = arith.constant 0 : index
    %9 = vector.load %arg4[%c0_6, %c0_7] : memref<128x128xbf16, #tpu.memory_space<vmem>>, vector<128x128xbf16>
    %cst_8 = arith.constant dense<0.000000e+00> : vector<16x128xf32>
    %10 = tpu.matmul %8, %9, %cst_8 {dimension_numbers = #tpu.dot_dimension_numbers<[1], [0], [0], [1], [0, 0, 1, 1], [], []>} : vector<16x128xbf16>, vector<128x128xbf16>, vector<16x128xf32> -> vector<16x128xf32>
    %c0_9 = arith.constant 0 : index
    %c0_10 = arith.constant 0 : index
    %11 = vector.load %arg5[%c0_9, %c0_10] : memref<1x128xf32, #tpu.memory_space<vmem>>, vector<1x128xf32>
    %12 = vector.broadcast %11 : vector<1x128xf32> to vector<16x128xf32>
    %13 = arith.addf %10, %12 : vector<16x128xf32>
    %cst_11 = arith.constant 0.000000e+00 : f32
    %14 = vector.broadcast %cst_11 : f32 to vector<16x128xf32>
    %15 = arith.maximumf %13, %14 : vector<16x128xf32>
    %16 = arith.truncf %15 : vector<16x128xf32> to vector<16x128xbf16>
    %c0_12 = arith.constant 0 : index
    %c0_13 = arith.constant 0 : index
    %17 = vector.load %arg6[%c0_12, %c0_13] : memref<128x128xbf16, #tpu.memory_space<vmem>>, vector<128x128xbf16>
    %cst_14 = arith.constant dense<0.000000e+00> : vector<16x128xf32>
    %18 = tpu.matmul %16, %17, %cst_14 {dimension_numbers = #tpu.dot_dimension_numbers<[1], [0], [0], [1], [0, 0, 1, 1], [], []>} : vector<16x128xbf16>, vector<128x128xbf16>, vector<16x128xf32> -> vector<16x128xf32>
    %c0_15 = arith.constant 0 : index
    %c0_16 = arith.constant 0 : index
    %19 = vector.load %arg7[%c0_15, %c0_16] : memref<1x128xf32, #tpu.memory_space<vmem>>, vector<1x128xf32>
    %20 = vector.broadcast %19 : vector<1x128xf32> to vector<16x128xf32>
    %21 = arith.addf %18, %20 : vector<16x128xf32>
    %c0_17 = arith.constant 0 : index
    %c0_18 = arith.constant 0 : index
    %22 = vector.load %arg8[%c0_17, %c0_18] : memref<16x128xf32, #tpu.memory_space<vmem>>, vector<16x128xf32>
    tpu.vector_store %arg8[%c0_17, %c0_18], %21 {strides = array<i32>} : memref<16x128xf32, #tpu.memory_space<vmem>>, vector<16x128xf32>,
    return
  }
  func.func @transform_0(%arg0: i32) -> (i32, i32) {
    %c0_i32 = arith.constant 0 : i32
    %c0_i32_0 = arith.constant 0 : i32
    return %arg0, %c0_i32 : i32, i32
  }
  func.func @transform_1(%arg0: i32) -> (i32, i32) {
    %c0_i32 = arith.constant 0 : i32
    %c0_i32_0 = arith.constant 0 : i32
    %c0_i32_1 = arith.constant 0 : i32
    return %c0_i32, %c0_i32_0 : i32, i32
  }
  func.func @transform_2(%arg0: i32) -> (i32, i32) {
    %c0_i32 = arith.constant 0 : i32
    %c0_i32_0 = arith.constant 0 : i32
    %c0_i32_1 = arith.constant 0 : i32
    return %c0_i32, %c0_i32_0 : i32, i32
  }
  func.func @transform_3(%arg0: i32) -> (i32, i32) {
    %c0_i32 = arith.constant 0 : i32
    %c0_i32_0 = arith.constant 0 : i32
    %c0_i32_1 = arith.constant 0 : i32
    return %c0_i32, %c0_i32_0 : i32, i32
  }
  func.func @transform_4(%arg0: i32) -> (i32, i32) {
    %c0_i32 = arith.constant 0 : i32
    %c0_i32_0 = arith.constant 0 : i32
    %c0_i32_1 = arith.constant 0 : i32
    return %c0_i32, %c0_i32_0 : i32, i32
  }
  func.func @transform_5(%arg0: i32) -> (i32, i32) {
    %c0_i32 = arith.constant 0 : i32
    %c0_i32_0 = arith.constant 0 : i32
    %c0_i32_1 = arith.constant 0 : i32
    return %c0_i32, %c0_i32_0 : i32, i32
  }
  func.func @transform_6(%arg0: i32) -> (i32, i32) {
    %c0_i32 = arith.constant 0 : i32
    %c0_i32_0 = arith.constant 0 : i32
    %c0_i32_1 = arith.constant 0 : i32
    return %c0_i32, %c0_i32_0 : i32, i32
  }
  func.func @transform_7(%arg0: i32) -> (i32, i32) {
    %c0_i32 = arith.constant 0 : i32
    %c0_i32_0 = arith.constant 0 : i32
    return %arg0, %c0_i32 : i32, i32
  }
}

</mosaic_0001>

<llo_original>
// kernel: custom-call
$region0: #{custom-call}
  #allocation0 [shape = 'u32[8,128]{1,0}', space=vmem, size = 0x1000, scoped, tag = 'scratch']
  #allocation1 [shape = 'u32[8,128]{1,0}', space=vmem, size = 0x1000, scoped, tag = 'scratch']
  #allocation2 [shape = 'u32[8,128]{1,0}', space=vmem, size = 0x1000, scoped, tag = 'scratch']
  #allocation3 [shape = 'u32[8,128]{1,0}', space=vmem, size = 0x1000, scoped, tag = 'scratch']
  #allocation4 [shape = 'u32[8,128]{1,0}', space=vmem, size = 0x1000, scoped, tag = 'scratch']
  #allocation5 [shape = 'u32[8,128]{1,0}', space=vmem, size = 0x1000, scoped, tag = 'scratch']
  #allocation6 [shape = 'u32[8,128]{1,0}', space=vmem, size = 0x1000, scoped, tag = 'scratch']
  %s0 = inlined_call_operand.vmem [shape: f32[2,768], index: 0, kind: input, shape index: {}]
  %s1 = inlined_call_operand.hbm [shape: f32[2,8], index: 1, kind: output, shape index: {0}]
  %s2 = inlined_call_operand.vmem [shape: s32[2,8], index: 2, kind: output, shape index: {1}]
  %3 = xla_tuple %s1, %s2
  %4 = xla_tuple 2147483648, 2147483647
  $region1: #{custom-call} parent=0
    #allocation7 [shape = 'u8[4096]{0}', space=vmem, size = 0x1000, scoped, tag = 'operand span for operand 1']
    #allocation8 [shape = 'u8[1024]{0}', space=vmem, size = 0x400, scoped, tag = 'packed  for operand 1']
    #allocation9 [shape = 's32[1]{0}', space=sflag, size = 0x4, scoped, tag = 'scoped memory for custom-call']
    #allocation10 [shape = 'u8[4096]{0}', space=vmem, size = 0x1000, scoped, tag = 'operand span for operand 2']
    #allocation11 [shape = 'u8[1024]{0}', space=vmem, size = 0x400, scoped, tag = 'packed  for operand 2']
    #allocation12 [shape = 'f32[8,2]{1,0:T(8,128)}', space=vmem, size = 0x1000, scoped, tag = 'scoped memory for custom-call']
    #allocation13 [shape = 'f32[8,2]{1,0:T(8,128)}', space=vmem, size = 0x1000, scoped, tag = 'scoped memory for custom-call']
    #allocation14 [shape = 's32[8,2]{1,0:T(8,128)}', space=vmem, size = 0x1000, scoped, tag = 'scoped memory for custom-call']
    #allocation15 [shape = 's32[8,2]{1,0:T(8,128)}', space=vmem, size = 0x1000, scoped, tag = 'scoped memory for custom-call']
    %5 = vsyncpa [#allocation9], 0
    %6 = xla_tuple [#allocation7], [#allocation10]
    %7 = vst [vmem:[#allocation12] sm:$0xff] 2147483648
    %8 = vst [vmem:[#allocation14] sm:$0xff] 2147483647
    %9 = xla_tuple [#allocation12], [#allocation14]
    %10 = xla_tuple [#allocation13], [#allocation15]
    $region2: #{custom-call} parent=1
      #allocation16 [shape = 'u8[8192]{0}', space=vmem, size = 0x2000, scoped, tag = 'operand span for operand 0']
      #allocation17 [shape = 's32[2048]{0}', space=vmem, size = 0x2000, scoped, tag = 'scoped memory for custom-call']
      // Predicated region
      $region3: #{custom-call} parent=2 // pred_check
        _
      $region4: #{custom-call} parent=2 // pred_check_branch
        %12 = sbr.rel (0) target = $region6
      $region5: #{custom-call} parent=2 // pred_region
        // Predicated region
        $region7: #{custom-call} parent=5 // pred_check
          _
        $region8: #{custom-call} parent=5 // pred_check_branch
          %14 = sbr.rel (0) target = $region10
        $region9: #{custom-call} parent=5 // pred_region
          // Predicated region
          $region11: #{custom-call} parent=9 // pred_check
            _
          $region12: #{custom-call} parent=9 // pred_check_branch
            %16 = sbr.rel (0) target = $region14
          $region13: #{custom-call} parent=9 // pred_region
            %s17 = scalar_lea.vmem %s0, 8
            %s18 = scalar_lea.vmem [#allocation16], 8
            loop: start=0, step=1, limit=1
            $region15: #{custom-call} parent=13 // loop_pre_header
              _
            $region16: #{custom-call} parent=13 // loop_header
              %s20 = sphi 0, %s24
              %p21 = scmp.ge.s32.totalorder %s20, 1
              %s25 = sphi %s0, %s0
              %s26 = sphi [#allocation16], [#allocation16]
            $region17: #{custom-call} parent=13 // loop_header_branch
              %23 = sbr.rel (%p21) target = $region21
            $region18: #{custom-call} parent=13 // loop_body
              %v27 = vld [vmem:[%s25] sm:$0xff]
              %28 = vst [vmem:[%s26] sm:$0xff] %v27
            $region19: #{custom-call} parent=13 // loop_footer
              %s24 = sadd.s32 1, %s20
            $region20: #{custom-call} parent=13 // loop_footer_branch
              %19 = sbr.rel target = $region16
            $region21: #{custom-call} parent=13 // loop_exit
              _
            %s30 = ssub.s32 16, 1
            loop: start=0, step=1, limit=1
            $region22: #{custom-call} parent=13 // loop_pre_header
              _
            $region23: #{custom-call} parent=13 // loop_header
              %s32 = sphi 0, %s36
              %p33 = scmp.ge.s32.totalorder %s32, 1
              %s37 = sphi %s17, %s17
              %s38 = sphi %s18, %s18
            $region24: #{custom-call} parent=13 // loop_header_branch
              %35 = sbr.rel (%p33) target = $region28
            $region25: #{custom-call} parent=13 // loop_body
              %v39 = vld [vmem:[%s37] sm:%s30]
              %40 = vst [vmem:[%s38] sm:%s30] %v39
            $region26: #{custom-call} parent=13 // loop_footer
              %s36 = sadd.s32 1, %s32
            $region27: #{custom-call} parent=13 // loop_footer_branch
              %31 = sbr.rel target = $region23
            $region28: #{custom-call} parent=13 // loop_exit
              _
          $region14: #{custom-call} parent=9 // pred_fallthru
            _
        $region10: #{custom-call} parent=5 // pred_fallthru
          _
        %41 = vnop
      $region6: #{custom-call} parent=2 // pred_fallthru
        _
      // Predicated region
      $region29: #{custom-call} parent=2 // pred_check
        _
      $region30: #{custom-call} parent=2 // pred_check_branch
        %43 = sbr.rel (0) target = $region32
      $region31: #{custom-call} parent=2 // pred_region
        _
      $region32: #{custom-call} parent=2 // pred_fallthru
        _
      %v44 = vlaneseq
      %v45 = vand.u32 %v44, 127
      %v46 = vlaneseq
      %v47 = vshrl.u32 %v46, 7
      %v48 = vshrl.u32 %v47, 1
      %v49 = vand.u32 %v47, 1
      %v50 = vmul.u32 %v48, 128
      %v51 = vadd.s32 %v45, %v50
      %v53 = vld [vmem:[#allocation16] sm:$0xff]
      %vm54 = vcmp.lt.s32.totalorder %v53, 0
      %v55 = vsub.s32 2147483647, %v53
      %v56 = vsel %vm54, %v55, %v53
      %vm58 = vcmp.lt.s32.totalorder %v51, 768
      %v59 = vsel %vm58, %v56, 2147483648
      %60 = vst [vmem:[#allocation16] sm:$0xff] %v59
      %s61 = scalar_lea.vmem [#allocation16], 8
      %v62 = vld [vmem:[%s61] sm:$0xff]
      %vm63 = vcmp.lt.s32.totalorder %v62, 0
      %v64 = vsub.s32 2147483647, %v62
      %v65 = vsel %vm63, %v64, %v62
      %v66 = vadd.s32 %v51, 512
      %vm67 = vcmp.lt.s32.totalorder %v66, 768
      %v68 = vsel %vm67, %v65, 2147483648
      %69 = vst [vmem:[%s61] sm:$0xff] %v68
      %v70 = vlaneseq
      %v71 = vand.u32 %v70, 127
      %v72 = vlaneseq
      %v73 = vshrl.u32 %v72, 7
      %v74 = vshrl.u32 %v73, 1
      %v75 = vand.u32 %v73, 1
      %v76 = vmul.u32 %v74, 128
      %v77 = vadd.s32 %v71, %v76
      %80 = vst [vmem:[#allocation17] sm:$0xff] %v77
      %v81 = vadd.s32 %v77, 512
      %s82 = scalar_lea.vmem [#allocation17], 8
      %83 = vst [vmem:[%s82] sm:$0xff] %v81
      %84 = xla_tuple [#allocation16], [#allocation17]
      %85 = vst [vmem:[#allocation13] sm:$0xff] 2147483648
      %86 = vst [vmem:[#allocation15] sm:$0xff] 2147483647
      %87 = xla_tuple [#allocation13], [#allocation15]
      loop: start=0, step=1, limit=8
      $region33: #{custom-call} parent=2 // loop_pre_header
        _
      $region34: #{custom-call} parent=2 // loop_header
        %s89 = sphi 0, %s93
        %p90 = scmp.ge.s32.totalorder %s89, 8
      $region35: #{custom-call} parent=2 // loop_header_branch
        %92 = sbr.rel (%p90) target = $region39
      $region36: #{custom-call} parent=2 // loop_body
        %v94 = vld [vmem:[#allocation16] sm:$0xff]
        %v95 = vld [vmem:[#allocation17] sm:$0xff]
        %96 = xla_tuple %v94, %v95
        %s97 = scalar_lea.vmem [#allocation16], 8
        %v98 = vld [vmem:[%s97] sm:$0xff]
        %s99 = scalar_lea.vmem [#allocation17], 8
        %v100 = vld [vmem:[%s99] sm:$0xff]
        %101 = xla_tuple %v98, %v100
        %vm102 = vcmp.gt.s32.totalorder %v98, %v94
        %vm103 = vcmp.eq.s32.totalorder %v98, %v94
        %vm104 = vcmp.lt.s32.totalorder %v100, %v95
        %vm105 = vmand %vm103, %vm104
        %vm106 = vmor %vm102, %vm105
        %v107 = vsel %vm106, %v98, %v94
        %v108 = vsel %vm106, %v100, %v95
        %109 = xla_tuple %v107, %v108
        %v110 = vrot.slane %v107, 2
        %v111 = vrot.slane %v108, 2
        %112 = xla_tuple %v110, %v111
        %vm113 = vcmp.gt.s32.totalorder %v110, %v107
        %vm114 = vcmp.eq.s32.totalorder %v110, %v107
        %vm115 = vcmp.lt.s32.totalorder %v111, %v108
        %vm116 = vmand %vm114, %vm115
        %vm117 = vmor %vm113, %vm116
        %v118 = vsel %vm117, %v110, %v107
        %v119 = vsel %vm117, %v111, %v108
        %120 = xla_tuple %v118, %v119
        %v121 = vrot.slane %v118, 2
        %v122 = vrot.slane %v119, 2
        %123 = xla_tuple %v121, %v122
        %vm124 = vcmp.gt.s32.totalorder %v121, %v118
        %vm125 = vcmp.eq.s32.totalorder %v121, %v118
        %vm126 = vcmp.lt.s32.totalorder %v122, %v119
        %vm127 = vmand %vm125, %vm126
        %vm128 = vmor %vm124, %vm127
        %v129 = vsel %vm128, %v121, %v118
        %v130 = vsel %vm128, %v122, %v119
        %131 = xla_tuple %v129, %v130
        %v132 = vrot.slane %v129, 2
        %v133 = vrot.slane %v130, 2
        %134 = xla_tuple %v132, %v133
        %vm135 = vcmp.gt.s32.totalorder %v132, %v129
        %vm136 = vcmp.eq.s32.totalorder %v132, %v129
        %vm137 = vcmp.lt.s32.totalorder %v133, %v130
        %vm138 = vmand %vm136, %vm137
        %vm139 = vmor %vm135, %vm138
        %v140 = vsel %vm139, %v132, %v129
        %v141 = vsel %vm139, %v133, %v130
        %142 = xla_tuple %v140, %v141
        %143 = vxpose.xlu0.b32.start [1/16] %v140, 128
        %144 = vxpose.xlu0.b32.cont [2/16] %v140, 128
        %145 = vxpose.xlu0.b32.cont [3/16] %v140, 128
        %146 = vxpose.xlu0.b32.cont [4/16] %v140, 128
        %147 = vxpose.xlu0.b32.cont [5/16] %v140, 128
        %148 = vxpose.xlu0.b32.cont [6/16] %v140, 128
        %149 = vxpose.xlu0.b32.cont [7/16] %v140, 128
        %150 = vxpose.xlu0.b32.cont [8/16] %v140, 128
        %151 = vxpose.xlu0.b32.cont [9/16] %v140, 128
        %152 = vxpose.xlu0.b32.cont [10/16] %v140, 128
        %153 = vxpose.xlu0.b32.cont [11/16] %v140, 128
        %154 = vxpose.xlu0.b32.cont [12/16] %v140, 128
        %155 = vxpose.xlu0.b32.cont [13/16] %v140, 128
        %156 = vxpose.xlu0.b32.cont [14/16] %v140, 128
        %157 = vxpose.xlu0.b32.cont [15/16] %v140, 128
        %158 = vxpose.xlu0.b32.end [16/16] %v140, 128
        %v159 = vpop.trf.xlu0
        %v160 = vpop.trf.xlu0
        %v161 = vpop.trf.xlu0
        %v162 = vpop.trf.xlu0
        %v163 = vpop.trf.xlu0
        %v164 = vpop.trf.xlu0
        %v165 = vpop.trf.xlu0
        %v166 = vpop.trf.xlu0
        %v167 = vpop.trf.xlu0
        %v168 = vpop.trf.xlu0
        %v169 = vpop.trf.xlu0
        %v170 = vpop.trf.xlu0
        %v171 = vpop.trf.xlu0
        %v172 = vpop.trf.xlu0
        %v173 = vpop.trf.xlu0
        %v174 = vpop.trf.xlu0
        %175 = vxpose.xlu0.b32.start [1/16] %v141, 128
        %176 = vxpose.xlu0.b32.cont [2/16] %v141, 128
        %177 = vxpose.xlu0.b32.cont [3/16] %v141, 128
        %178 = vxpose.xlu0.b32.cont [4/16] %v141, 128
        %179 = vxpose.xlu0.b32.cont [5/16] %v141, 128
        %180 = vxpose.xlu0.b32.cont [6/16] %v141, 128
        %181 = vxpose.xlu0.b32.cont [7/16] %v141, 128
        %182 = vxpose.xlu0.b32.cont [8/16] %v141, 128
        %183 = vxpose.xlu0.b32.cont [9/16] %v141, 128
        %184 = vxpose.xlu0.b32.cont [10/16] %v141, 128
        %185 = vxpose.xlu0.b32.cont [11/16] %v141, 128
        %186 = vxpose.xlu0.b32.cont [12/16] %v141, 128
        %187 = vxpose.xlu0.b32.cont [13/16] %v141, 128
        %188 = vxpose.xlu0.b32.cont [14/16] %v141, 128
        %189 = vxpose.xlu0.b32.cont [15/16] %v141, 128
        %190 = vxpose.xlu0.b32.end [16/16] %v141, 128
        %v191 = vpop.trf.xlu0
        %v192 = vpop.trf.xlu0
        %v193 = vpop.trf.xlu0
        %v194 = vpop.trf.xlu0
        %v195 = vpop.trf.xlu0
        %v196 = vpop.trf.xlu0
        %v197 = vpop.trf.xlu0
        %v198 = vpop.trf.xlu0
        %v199 = vpop.trf.xlu0
        %v200 = vpop.trf.xlu0
        %v201 = vpop.trf.xlu0
        %v202 = vpop.trf.xlu0
        %v203 = vpop.trf.xlu0
        %v204 = vpop.trf.xlu0
        %v205 = vpop.trf.xlu0
        %v206 = vpop.trf.xlu0
        %207 = xla_tuple %v159, %v191
        %208 = xla_tuple %v160, %v192
        %vm209 = vcmp.gt.s32.totalorder %v160, %v159
        %vm210 = vcmp.eq.s32.totalorder %v160, %v159
        %vm211 = vcmp.lt.s32.totalorder %v192, %v191
        %vm212 = vmand %vm210, %vm211
        %vm213 = vmor %vm209, %vm212
        %v214 = vsel %vm213, %v160, %v159
        %v215 = vsel %vm213, %v192, %v191
        %216 = xla_tuple %v214, %v215
        %217 = xla_tuple %v161, %v193
        %vm218 = vcmp.gt.s32.totalorder %v161, %v214
        %vm219 = vcmp.eq.s32.totalorder %v161, %v214
        %vm220 = vcmp.lt.s32.totalorder %v193, %v215
        %vm221 = vmand %vm219, %vm220
        %vm222 = vmor %vm218, %vm221
        %v223 = vsel %vm222, %v161, %v214
        %v224 = vsel %vm222, %v193, %v215
        %225 = xla_tuple %v223, %v224
        %226 = xla_tuple %v162, %v194
        %vm227 = vcmp.gt.s32.totalorder %v162, %v223
        %vm228 = vcmp.eq.s32.totalorder %v162, %v223
        %vm229 = vcmp.lt.s32.totalorder %v194, %v224
        %vm230 = vmand %vm228, %vm229
        %vm231 = vmor %vm227, %vm230
        %v232 = vsel %vm231, %v162, %v223
        %v233 = vsel %vm231, %v194, %v224
        %234 = xla_tuple %v232, %v233
        %235 = xla_tuple %v163, %v195
        %vm236 = vcmp.gt.s32.totalorder %v163, %v232
        %vm237 = vcmp.eq.s32.totalorder %v163, %v232
        %vm238 = vcmp.lt.s32.totalorder %v195, %v233
        %vm239 = vmand %vm237, %vm238
        %vm240 = vmor %vm236, %vm239
        %v241 = vsel %vm240, %v163, %v232
        %v242 = vsel %vm240, %v195, %v233
        %243 = xla_tuple %v241, %v242
        %244 = xla_tuple %v164, %v196
        %vm245 = vcmp.gt.s32.totalorder %v164, %v241
        %vm246 = vcmp.eq.s32.totalorder %v164, %v241
        %vm247 = vcmp.lt.s32.totalorder %v196, %v242
        %vm248 = vmand %vm246, %vm247
        %vm249 = vmor %vm245, %vm248
        %v250 = vsel %vm249, %v164, %v241
        %v251 = vsel %vm249, %v196, %v242
        %252 = xla_tuple %v250, %v251
        %253 = xla_tuple %v165, %v197
        %vm254 = vcmp.gt.s32.totalorder %v165, %v250
        %vm255 = vcmp.eq.s32.totalorder %v165, %v250
        %vm256 = vcmp.lt.s32.totalorder %v197, %v251
        %vm257 = vmand %vm255, %vm256
        %vm258 = vmor %vm254, %vm257
        %v259 = vsel %vm258, %v165, %v250
        %v260 = vsel %vm258, %v197, %v251
        %261 = xla_tuple %v259, %v260
        %262 = xla_tuple %v166, %v198
        %vm263 = vcmp.gt.s32.totalorder %v166, %v259
        %vm264 = vcmp.eq.s32.totalorder %v166, %v259
        %vm265 = vcmp.lt.s32.totalorder %v198, %v260
        %vm266 = vmand %vm264, %vm265
        %vm267 = vmor %vm263, %vm266
        %v268 = vsel %vm267, %v166, %v259
        %v269 = vsel %vm267, %v198, %v260
        %270 = xla_tuple %v268, %v269
        %271 = xla_tuple %v167, %v199
        %vm272 = vcmp.gt.s32.totalorder %v167, %v268
        %vm273 = vcmp.eq.s32.totalorder %v167, %v268
        %vm274 = vcmp.lt.s32.totalorder %v199, %v269
        %vm275 = vmand %vm273, %vm274
        %vm276 = vmor %vm272, %vm275
        %v277 = vsel %vm276, %v167, %v268
        %v278 = vsel %vm276, %v199, %v269
        %279 = xla_tuple %v277, %v278
        %280 = xla_tuple %v168, %v200
        %vm281 = vcmp.gt.s32.totalorder %v168, %v277
        %vm282 = vcmp.eq.s32.totalorder %v168, %v277
        %vm283 = vcmp.lt.s32.totalorder %v200, %v278
        %vm284 = vmand %vm282, %vm283
        %vm285 = vmor %vm281, %vm284
        %v286 = vsel %vm285, %v168, %v277
        %v287 = vsel %vm285, %v200, %v278
        %288 = xla_tuple %v286, %v287
        %289 = xla_tuple %v169, %v201
        %vm290 = vcmp.gt.s32.totalorder %v169, %v286
        %vm291 = vcmp.eq.s32.totalorder %v169, %v286
        %vm292 = vcmp.lt.s32.totalorder %v201, %v287
        %vm293 = vmand %vm291, %vm292
        %vm294 = vmor %vm290, %vm293
        %v295 = vsel %vm294, %v169, %v286
        %v296 = vsel %vm294, %v201, %v287
        %297 = xla_tuple %v295, %v296
        %298 = xla_tuple %v170, %v202
        %vm299 = vcmp.gt.s32.totalorder %v170, %v295
        %vm300 = vcmp.eq.s32.totalorder %v170, %v295
        %vm301 = vcmp.lt.s32.totalorder %v202, %v296
        %vm302 = vmand %vm300, %vm301
        %vm303 = vmor %vm299, %vm302
        %v304 = vsel %vm303, %v170, %v295
        %v305 = vsel %vm303, %v202, %v296
        %306 = xla_tuple %v304, %v305
        %307 = xla_tuple %v171, %v203
        %vm308 = vcmp.gt.s32.totalorder %v171, %v304
        %vm309 = vcmp.eq.s32.totalorder %v171, %v304
        %vm310 = vcmp.lt.s32.totalorder %v203, %v305
        %vm311 = vmand %vm309, %vm310
        %vm312 = vmor %vm308, %vm311
        %v313 = vsel %vm312, %v171, %v304
        %v314 = vsel %vm312, %v203, %v305
        %315 = xla_tuple %v313, %v314
        %316 = xla_tuple %v172, %v204
        %vm317 = vcmp.gt.s32.totalorder %v172, %v313
        %vm318 = vcmp.eq.s32.totalorder %v172, %v313
        %vm319 = vcmp.lt.s32.totalorder %v204, %v314
        %vm320 = vmand %vm318, %vm319
        %vm321 = vmor %vm317, %vm320
        %v322 = vsel %vm321, %v172, %v313
        %v323 = vsel %vm321, %v204, %v314
        %324 = xla_tuple %v322, %v323
        %325 = xla_tuple %v173, %v205
        %vm326 = vcmp.gt.s32.totalorder %v173, %v322
        %vm327 = vcmp.eq.s32.totalorder %v173, %v322
        %vm328 = vcmp.lt.s32.totalorder %v205, %v323
        %vm329 = vmand %vm327, %vm328
        %vm330 = vmor %vm326, %vm329
        %v331 = vsel %vm330, %v173, %v322
        %v332 = vsel %vm330, %v205, %v323
        %333 = xla_tuple %v331, %v332
        %334 = xla_tuple %v174, %v206
        %vm335 = vcmp.gt.s32.totalorder %v174, %v331
        %vm336 = vcmp.eq.s32.totalorder %v174, %v331
        %vm337 = vcmp.lt.s32.totalorder %v206, %v332
        %vm338 = vmand %vm336, %vm337
        %vm339 = vmor %vm335, %vm338
        %v340 = vsel %vm339, %v174, %v331
        %v341 = vsel %vm339, %v206, %v332
        %342 = xla_tuple %v340, %v341
        %v343 = vrot.slane %v340, 1
        %v344 = vrot.slane %v341, 1
        %345 = xla_tuple %v343, %v344
        %vm346 = vcmp.gt.s32.totalorder %v343, %v340
        %vm347 = vcmp.eq.s32.totalorder %v343, %v340
        %vm348 = vcmp.lt.s32.totalorder %v344, %v341
        %vm349 = vmand %vm347, %vm348
        %vm350 = vmor %vm346, %vm349
        %v351 = vsel %vm350, %v343, %v340
        %v352 = vsel %vm350, %v344, %v341
        %353 = xla_tuple %v351, %v352
        %v354 = vrot.slane %v351, 1
        %v355 = vrot.slane %v352, 1
        %356 = xla_tuple %v354, %v355
        %vm357 = vcmp.gt.s32.totalorder %v354, %v351
        %vm358 = vcmp.eq.s32.totalorder %v354, %v351
        %vm359 = vcmp.lt.s32.totalorder %v355, %v352
        %vm360 = vmand %vm358, %vm359
        %vm361 = vmor %vm357, %vm360
        %v362 = vsel %vm361, %v354, %v351
        %v363 = vsel %vm361, %v355, %v352
        %364 = xla_tuple %v362, %v363
        %v365 = vrot.slane %v362, 1
        %v366 = vrot.slane %v363, 1
        %367 = xla_tuple %v365, %v366
        %vm368 = vcmp.gt.s32.totalorder %v365, %v362
        %vm369 = vcmp.eq.s32.totalorder %v365, %v362
        %vm370 = vcmp.lt.s32.totalorder %v366, %v363
        %vm371 = vmand %vm369, %vm370
        %vm372 = vmor %vm368, %vm371
        %v373 = vsel %vm372, %v365, %v362
        %v374 = vsel %vm372, %v366, %v363
        %375 = xla_tuple %v373, %v374
        %v376 = vrot.slane %v373, 1
        %v377 = vrot.slane %v374, 1
        %378 = xla_tuple %v376, %v377
        %vm379 = vcmp.gt.s32.totalorder %v376, %v373
        %vm380 = vcmp.eq.s32.totalorder %v376, %v373
        %vm381 = vcmp.lt.s32.totalorder %v377, %v374
        %vm382 = vmand %vm380, %vm381
        %vm383 = vmor %vm379, %vm382
        %v384 = vsel %vm383, %v376, %v373
        %v385 = vsel %vm383, %v377, %v374
        %386 = xla_tuple %v384, %v385
        %v387 = vrot.slane %v384, 1
        %v388 = vrot.slane %v385, 1
        %389 = xla_tuple %v387, %v388
        %vm390 = vcmp.gt.s32.totalorder %v387, %v384
        %vm391 = vcmp.eq.s32.totalorder %v387, %v384
        %vm392 = vcmp.lt.s32.totalorder %v388, %v385
        %vm393 = vmand %vm391, %vm392
        %vm394 = vmor %vm390, %vm393
        %v395 = vsel %vm394, %v387, %v384
        %v396 = vsel %vm394, %v388, %v385
        %397 = xla_tuple %v395, %v396
        %v398 = vrot.slane %v395, 1
        %v399 = vrot.slane %v396, 1
        %400 = xla_tuple %v398, %v399
        %vm401 = vcmp.gt.s32.totalorder %v398, %v395
        %vm402 = vcmp.eq.s32.totalorder %v398, %v395
        %vm403 = vcmp.lt.s32.totalorder %v399, %v396
        %vm404 = vmand %vm402, %vm403
        %vm405 = vmor %vm401, %vm404
        %v406 = vsel %vm405, %v398, %v395
        %v407 = vsel %vm405, %v399, %v396
        %408 = xla_tuple %v406, %v407
        %v409 = vrot.slane %v406, 1
        %v410 = vrot.slane %v407, 1
        %411 = xla_tuple %v409, %v410
        %vm412 = vcmp.gt.s32.totalorder %v409, %v406
        %vm413 = vcmp.eq.s32.totalorder %v409, %v406
        %vm414 = vcmp.lt.s32.totalorder %v410, %v407
        %vm415 = vmand %vm413, %vm414
        %vm416 = vmor %vm412, %vm415
        %v417 = vsel %vm416, %v409, %v406
        %v418 = vsel %vm416, %v410, %v407
        %419 = xla_tuple %v417, %v418
        %s420 = scalar_lea.vmem [#allocation13], %s89
        %421 = vst [vmem:[%s420] sm:$0x1] %v417
        %s422 = scalar_lea.vmem [#allocation15], %s89
        %423 = vst [vmem:[%s422] sm:$0x1] %v418
        %424 = xla_tuple %421, %423
        %425 = vxpose.xlu0.b32.start [1/16] %v418, 128
        %426 = vxpose.xlu0.b32.cont [2/16] 0.0, 128
        %427 = vxpose.xlu0.b32.cont [3/16] 0.0, 128
        %428 = vxpose.xlu0.b32.cont [4/16] 0.0, 128
        %429 = vxpose.xlu0.b32.cont [5/16] 0.0, 128
        %430 = vxpose.xlu0.b32.cont [6/16] 0.0, 128
        %431 = vxpose.xlu0.b32.cont [7/16] 0.0, 128
        %432 = vxpose.xlu0.b32.cont [8/16] 0.0, 128
        %433 = vxpose.xlu0.b32.cont [9/16] 0.0, 128
        %434 = vxpose.xlu0.b32.cont [10/16] 0.0, 128
        %435 = vxpose.xlu0.b32.cont [11/16] 0.0, 128
        %436 = vxpose.xlu0.b32.cont [12/16] 0.0, 128
        %437 = vxpose.xlu0.b32.cont [13/16] 0.0, 128
        %438 = vxpose.xlu0.b32.cont [14/16] 0.0, 128
        %439 = vxpose.xlu0.b32.cont [15/16] 0.0, 128
        %440 = vxpose.xlu0.b32.end [16/16] 0.0, 128
        %v441 = vpop.trf.xlu0
        %v442 = vpop.trf.xlu0
        %v443 = vpop.trf.xlu0
        %v444 = vpop.trf.xlu0
        %v445 = vpop.trf.xlu0
        %v446 = vpop.trf.xlu0
        %v447 = vpop.trf.xlu0
        %v448 = vpop.trf.xlu0
        %v449 = vpop.trf.xlu0
        %v450 = vpop.trf.xlu0
        %v451 = vpop.trf.xlu0
        %v452 = vpop.trf.xlu0
        %v453 = vpop.trf.xlu0
        %v454 = vpop.trf.xlu0
        %v455 = vpop.trf.xlu0
        %v456 = vpop.trf.xlu0
        %s457 = vtos %v441
        %s458 = sshrl.u32 %s457, 9
        %p459 = scmp.lt.s32.totalorder %s457, 0
        %s460 = ssub.s32 0, %s457
        %s461 = scalar_select %p459, %s460, %s457
        %s462 = sand.u32 %s461, 511
        %s463 = ssub.s32 0, %s462
        %s464 = scalar_select %p459, %s463, %s462
        %s465 = sshrl.u32 %s464, 7
        %s466 = smul.u32 %s465, 256
        %s467 = sand.u32 %s464, 127
        %s468 = sadd.s32 %s466, %s467
        %v469 = vlaneseq
        %v470 = vstv %s468
        %vm472 = vcmp.eq.s32.totalorder %v469, %v470
        %s473 = smul.addr %s458, 8
        %s474 = scalar_lea.vmem [#allocation16], %s473
        %475 = vst.msk [vmem:[%s474] sm:$0xff] %vm472, 2147483648
        %s476 = smul.addr %s458, 8
        %s477 = scalar_lea.vmem [#allocation17], %s476
        %478 = vst.msk [vmem:[%s477] sm:$0xff] %vm472, 2147483647
        %479 = xla_tuple %475, %478
        %v480 = vrot.slane %v441, 1
        %s481 = vtos %v480
        %s482 = sshrl.u32 %s481, 9
        %p483 = scmp.lt.s32.totalorder %s481, 0
        %s484 = ssub.s32 0, %s481
        %s485 = scalar_select %p483, %s484, %s481
        %s486 = sand.u32 %s485, 511
        %s487 = ssub.s32 0, %s486
        %s488 = scalar_select %p483, %s487, %s486
        %s489 = sshrl.u32 %s488, 7
        %s490 = smul.u32 %s489, 256
        %s491 = sand.u32 %s488, 127
        %s492 = sadd.s32 %s490, %s491
        %v493 = vlaneseq
        %v494 = vstv %s492
        %v495 = vadd.s32 %v494, 128
        %vm496 = vcmp.eq.s32.totalorder %v493, %v495
        %s497 = smul.addr %s482, 8
        %s498 = scalar_lea.vmem [#allocation16], %s497
        %499 = vst.msk [vmem:[%s498] sm:$0xff] %vm496, 2147483648
        %s500 = smul.addr %s482, 8
        %s501 = scalar_lea.vmem [#allocation17], %s500
        %502 = vst.msk [vmem:[%s501] sm:$0xff] %vm496, 2147483647
        %503 = xla_tuple %499, %502
        %v504 = vrot.slane %v480, 1
      $region37: #{custom-call} parent=2 // loop_footer
        %s93 = sadd.s32 1, %s89
      $region38: #{custom-call} parent=2 // loop_footer_branch
        %88 = sbr.rel target = $region34
      $region39: #{custom-call} parent=2 // loop_exit
        _
      %s505 = scalar_lea.vmem [#allocation13], 7
      %v506 = vld [vmem:[%s505] ss:$-1 sm:$0xff]
      %s507 = scalar_lea.vmem [#allocation13], 7
      %v508 = vld [vmem:[%s507] ss:$-1 sm:$0xff]
      %509 = vst [vmem:[#allocation13] sm:$0xff] %v508
      %510 = vst [vmem:[#allocation13] sm:$0xff] %v506
      %s511 = scalar_lea.vmem [#allocation15], 7
      %v512 = vld [vmem:[%s511] ss:$-1 sm:$0xff]
      %s513 = scalar_lea.vmem [#allocation15], 7
      %v514 = vld [vmem:[%s513] ss:$-1 sm:$0xff]
      %515 = vst [vmem:[#allocation15] sm:$0xff] %v514
      %516 = vst [vmem:[#allocation15] sm:$0xff] %v512
      %517 = xla_tuple %510, %516
      %v518 = vld [vmem:[#allocation12] sm:$0xff]
      %v519 = vld [vmem:[#allocation14] sm:$0xff]
      %520 = xla_tuple %v518, %v519
      %v521 = vld [vmem:[#allocation13] sm:$0xff]
      %v522 = vld [vmem:[#allocation15] sm:$0xff]
      %523 = xla_tuple %v521, %v522
      %vm524 = vcmp.gt.s32.totalorder %v518, %v521
      %vm525 = vcmp.eq.s32.totalorder %v518, %v521
      %vm526 = vcmp.lt.s32.totalorder %v519, %v522
      %vm527 = vmand %vm525, %vm526
      %vm528 = vmor %vm524, %vm527
      %v529 = vsel %vm528, %v518, %v521
      %530 = vst [vmem:[#allocation12] sm:$0xff] %v529
      %v531 = vsel %vm528, %v521, %v518
      %532 = vst [vmem:[#allocation13] sm:$0xff] %v531
      %v533 = vsel %vm528, %v519, %v522
      %534 = vst [vmem:[#allocation14] sm:$0xff] %v533
      %v535 = vsel %vm528, %v522, %v519
      %536 = vst [vmem:[#allocation15] sm:$0xff] %v535
      %537 = xla_tuple %532, %536
      %538 = xla_tuple [#allocation12], [#allocation14]
      %v539 = vld [vmem:[#allocation12] sm:$0xff]
      %v540 = vld [vmem:[#allocation14] sm:$0xff]
      %541 = xla_tuple %v539, %v540
      %v543 = vunpack.c.l.s4 839939668
      %v544 = vunpack.c.0.s8 %v543
      %v545 = vperm.slane %v539, %v544
      %v547 = vunpack.c.l.s4 839939668
      %v548 = vunpack.c.0.s8 %v547
      %v549 = vperm.slane %v540, %v548
      %550 = xla_tuple %v545, %v549
      %vm551 = vcmp.gt.s32.totalorder %v539, %v545
      %vm552 = vcmp.eq.s32.totalorder %v539, %v545
      %vm553 = vcmp.lt.s32.totalorder %v540, %v549
      %vm554 = vmand %vm552, %vm553
      %vm555 = vmor %vm551, %vm554
      %v556 = vlaneseq
      %v557 = vshrl.u32 %v556, 7
      %v558 = vand.u32 %v557, 4
      %vm559 = vcmp.ne.s32.totalorder %v558, 0
      %vm560 = vmxor %vm555, %vm559
      %v561 = vsel %vm560, %v539, %v545
      %v562 = vsel %vm560, %v540, %v549
      %563 = xla_tuple %v561, %v562
      %v565 = vunpack.c.l.s4 1417023538
      %v566 = vunpack.c.0.s8 %v565
      %v567 = vperm.slane %v561, %v566
      %v569 = vunpack.c.l.s4 1417023538
      %v570 = vunpack.c.0.s8 %v569
      %v571 = vperm.slane %v562, %v570
      %572 = xla_tuple %v567, %v571
      %vm573 = vcmp.gt.s32.totalorder %v561, %v567
      %vm574 = vcmp.eq.s32.totalorder %v561, %v567
      %vm575 = vcmp.lt.s32.totalorder %v562, %v571
      %vm576 = vmand %vm574, %vm575
      %vm577 = vmor %vm573, %vm576
      %v578 = vlaneseq
      %v579 = vshrl.u32 %v578, 7
      %v580 = vand.u32 %v579, 2
      %vm581 = vcmp.ne.s32.totalorder %v580, 0
      %vm582 = vmxor %vm577, %vm581
      %v583 = vsel %vm582, %v561, %v567
      %v584 = vsel %vm582, %v562, %v571
      %585 = xla_tuple %v583, %v584
      %v587 = vunpack.c.l.s4 1732584193
      %v588 = vunpack.c.0.s8 %v587
      %v589 = vperm.slane %v583, %v588
      %v591 = vunpack.c.l.s4 1732584193
      %v592 = vunpack.c.0.s8 %v591
      %v593 = vperm.slane %v584, %v592
      %594 = xla_tuple %v589, %v593
      %vm595 = vcmp.gt.s32.totalorder %v583, %v589
      %vm596 = vcmp.eq.s32.totalorder %v583, %v589
      %vm597 = vcmp.lt.s32.totalorder %v584, %v593
      %vm598 = vmand %vm596, %vm597
      %vm599 = vmor %vm595, %vm598
      %v600 = vlaneseq
      %v601 = vshrl.u32 %v600, 7
      %v602 = vand.u32 %v601, 1
      %vm603 = vcmp.ne.s32.totalorder %v602, 0
      %vm604 = vmxor %vm599, %vm603
      %v605 = vsel %vm604, %v583, %v589
      %v606 = vsel %vm604, %v584, %v593
      %607 = xla_tuple %v605, %v606
      %608 = vst [vmem:[#allocation12] sm:$0xff] %v605
      %609 = vst [vmem:[#allocation14] sm:$0xff] %v606
      %610 = xla_tuple %608, %609
      %v611 = vld [vmem:[#allocation12] sm:$0xff]
      %v612 = vld [vmem:[#allocation14] sm:$0xff]
      %613 = xla_tuple %v611, %v612
      %v615 = vunpack.c.l.s4 839939668
      %v616 = vunpack.c.0.s8 %v615
      %v617 = vperm.slane %v611, %v616
      %v619 = vunpack.c.l.s4 839939668
      %v620 = vunpack.c.0.s8 %v619
      %v621 = vperm.slane %v612, %v620
      %622 = xla_tuple %v617, %v621
      %vm623 = vcmp.gt.s32.totalorder %v611, %v617
      %vm624 = vcmp.eq.s32.totalorder %v611, %v617
      %vm625 = vcmp.lt.s32.totalorder %v612, %v621
      %vm626 = vmand %vm624, %vm625
      %vm627 = vmor %vm623, %vm626
      %v628 = vlaneseq
      %v629 = vshrl.u32 %v628, 7
      %v630 = vand.u32 %v629, 4
      %vm631 = vcmp.ne.s32.totalorder %v630, 0
      %vm632 = vmxor %vm627, %vm631
      %v633 = vsel %vm632, %v611, %v617
      %v634 = vsel %vm632, %v612, %v621
      %635 = xla_tuple %v633, %v634
      %v637 = vunpack.c.l.s4 1417023538
      %v638 = vunpack.c.0.s8 %v637
      %v639 = vperm.slane %v633, %v638
      %v641 = vunpack.c.l.s4 1417023538
      %v642 = vunpack.c.0.s8 %v641
      %v643 = vperm.slane %v634, %v642
      %644 = xla_tuple %v639, %v643
      %vm645 = vcmp.gt.s32.totalorder %v633, %v639
      %vm646 = vcmp.eq.s32.totalorder %v633, %v639
      %vm647 = vcmp.lt.s32.totalorder %v634, %v643
      %vm648 = vmand %vm646, %vm647
      %vm649 = vmor %vm645, %vm648
      %v650 = vlaneseq
      %v651 = vshrl.u32 %v650, 7
      %v652 = vand.u32 %v651, 2
      %vm653 = vcmp.ne.s32.totalorder %v652, 0
      %vm654 = vmxor %vm649, %vm653
      %v655 = vsel %vm654, %v633, %v639
      %v656 = vsel %vm654, %v634, %v643
      %657 = xla_tuple %v655, %v656
      %v659 = vunpack.c.l.s4 1732584193
      %v660 = vunpack.c.0.s8 %v659
      %v661 = vperm.slane %v655, %v660
      %v663 = vunpack.c.l.s4 1732584193
      %v664 = vunpack.c.0.s8 %v663
      %v665 = vperm.slane %v656, %v664
      %666 = xla_tuple %v661, %v665
      %vm667 = vcmp.gt.s32.totalorder %v655, %v661
      %vm668 = vcmp.eq.s32.totalorder %v655, %v661
      %vm669 = vcmp.lt.s32.totalorder %v656, %v665
      %vm670 = vmand %vm668, %vm669
      %vm671 = vmor %vm667, %vm670
      %v672 = vlaneseq
      %v673 = vshrl.u32 %v672, 7
      %v674 = vand.u32 %v673, 1
      %vm675 = vcmp.ne.s32.totalorder %v674, 0
      %vm676 = vmxor %vm671, %vm675
      %v677 = vsel %vm676, %v655, %v661
      %v678 = vsel %vm676, %v656, %v665
      %679 = xla_tuple %v677, %v678
      %680 = vst [vmem:[#allocation12] sm:$0xff] %v677
      %681 = vst [vmem:[#allocation14] sm:$0xff] %v678
      %682 = xla_tuple %680, %681
      %683 = xla_tuple [#allocation13], [#allocation15]
      %v684 = vld [vmem:[#allocation13] sm:$0xff]
      %v685 = vld [vmem:[#allocation15] sm:$0xff]
      %686 = xla_tuple %v684, %v685
      %v688 = vunpack.c.l.s4 839939668
      %v689 = vunpack.c.0.s8 %v688
      %v690 = vperm.slane %v684, %v689
      %v692 = vunpack.c.l.s4 839939668
      %v693 = vunpack.c.0.s8 %v692
      %v694 = vperm.slane %v685, %v693
      %695 = xla_tuple %v690, %v694
      %vm696 = vcmp.gt.s32.totalorder %v684, %v690
      %vm697 = vcmp.eq.s32.totalorder %v684, %v690
      %vm698 = vcmp.lt.s32.totalorder %v685, %v694
      %vm699 = vmand %vm697, %vm698
      %vm700 = vmor %vm696, %vm699
      %v701 = vlaneseq
      %v702 = vshrl.u32 %v701, 7
      %v703 = vand.u32 %v702, 4
      %vm704 = vcmp.ne.s32.totalorder %v703, 0
      %vm705 = vmxor %vm700, %vm704
      %v706 = vsel %vm705, %v684, %v690
      %v707 = vsel %vm705, %v685, %v694
      %708 = xla_tuple %v706, %v707
      %v710 = vunpack.c.l.s4 1417023538
      %v711 = vunpack.c.0.s8 %v710
      %v712 = vperm.slane %v706, %v711
      %v714 = vunpack.c.l.s4 1417023538
      %v715 = vunpack.c.0.s8 %v714
      %v716 = vperm.slane %v707, %v715
      %717 = xla_tuple %v712, %v716
      %vm718 = vcmp.gt.s32.totalorder %v706, %v712
      %vm719 = vcmp.eq.s32.totalorder %v706, %v712
      %vm720 = vcmp.lt.s32.totalorder %v707, %v716
      %vm721 = vmand %vm719, %vm720
      %vm722 = vmor %vm718, %vm721
      %v723 = vlaneseq
      %v724 = vshrl.u32 %v723, 7
      %v725 = vand.u32 %v724, 2
      %vm726 = vcmp.ne.s32.totalorder %v725, 0
      %vm727 = vmxor %vm722, %vm726
      %v728 = vsel %vm727, %v706, %v712
      %v729 = vsel %vm727, %v707, %v716
      %730 = xla_tuple %v728, %v729
      %v732 = vunpack.c.l.s4 1732584193
      %v733 = vunpack.c.0.s8 %v732
      %v734 = vperm.slane %v728, %v733
      %v736 = vunpack.c.l.s4 1732584193
      %v737 = vunpack.c.0.s8 %v736
      %v738 = vperm.slane %v729, %v737
      %739 = xla_tuple %v734, %v738
      %vm740 = vcmp.gt.s32.totalorder %v728, %v734
      %vm741 = vcmp.eq.s32.totalorder %v728, %v734
      %vm742 = vcmp.lt.s32.totalorder %v729, %v738
      %vm743 = vmand %vm741, %vm742
      %vm744 = vmor %vm740, %vm743
      %v745 = vlaneseq
      %v746 = vshrl.u32 %v745, 7
      %v747 = vand.u32 %v746, 1
      %vm748 = vcmp.ne.s32.totalorder %v747, 0
      %vm749 = vmxor %vm744, %vm748
      %v750 = vsel %vm749, %v728, %v734
      %v751 = vsel %vm749, %v729, %v738
      %752 = xla_tuple %v750, %v751
      %753 = vst [vmem:[#allocation13] sm:$0xff] %v750
      %754 = vst [vmem:[#allocation15] sm:$0xff] %v751
      %755 = xla_tuple %753, %754
      %v756 = vld [vmem:[#allocation13] sm:$0xff]
      %v757 = vld [vmem:[#allocation15] sm:$0xff]
      %758 = xla_tuple %v756, %v757
      %v760 = vunpack.c.l.s4 839939668
      %v761 = vunpack.c.0.s8 %v760
      %v762 = vperm.slane %v756, %v761
      %v764 = vunpack.c.l.s4 839939668
      %v765 = vunpack.c.0.s8 %v764
      %v766 = vperm.slane %v757, %v765
      %767 = xla_tuple %v762, %v766
      %vm768 = vcmp.gt.s32.totalorder %v756, %v762
      %vm769 = vcmp.eq.s32.totalorder %v756, %v762
      %vm770 = vcmp.lt.s32.totalorder %v757, %v766
      %vm771 = vmand %vm769, %vm770
      %vm772 = vmor %vm768, %vm771
      %v773 = vlaneseq
      %v774 = vshrl.u32 %v773, 7
      %v775 = vand.u32 %v774, 4
      %vm776 = vcmp.ne.s32.totalorder %v775, 0
      %vm777 = vmxor %vm772, %vm776
      %v778 = vsel %vm777, %v756, %v762
      %v779 = vsel %vm777, %v757, %v766
      %780 = xla_tuple %v778, %v779
      %v782 = vunpack.c.l.s4 1417023538
      %v783 = vunpack.c.0.s8 %v782
      %v784 = vperm.slane %v778, %v783
      %v786 = vunpack.c.l.s4 1417023538
      %v787 = vunpack.c.0.s8 %v786
      %v788 = vperm.slane %v779, %v787
      %789 = xla_tuple %v784, %v788
      %vm790 = vcmp.gt.s32.totalorder %v778, %v784
      %vm791 = vcmp.eq.s32.totalorder %v778, %v784
      %vm792 = vcmp.lt.s32.totalorder %v779, %v788
      %vm793 = vmand %vm791, %vm792
      %vm794 = vmor %vm790, %vm793
      %v795 = vlaneseq
      %v796 = vshrl.u32 %v795, 7
      %v797 = vand.u32 %v796, 2
      %vm798 = vcmp.ne.s32.totalorder %v797, 0
      %vm799 = vmxor %vm794, %vm798
      %v800 = vsel %vm799, %v778, %v784
      %v801 = vsel %vm799, %v779, %v788
      %802 = xla_tuple %v800, %v801
      %v804 = vunpack.c.l.s4 1732584193
      %v805 = vunpack.c.0.s8 %v804
      %v806 = vperm.slane %v800, %v805
      %v808 = vunpack.c.l.s4 1732584193
      %v809 = vunpack.c.0.s8 %v808
      %v810 = vperm.slane %v801, %v809
      %811 = xla_tuple %v806, %v810
      %vm812 = vcmp.gt.s32.totalorder %v800, %v806
      %vm813 = vcmp.eq.s32.totalorder %v800, %v806
      %vm814 = vcmp.lt.s32.totalorder %v801, %v810
      %vm815 = vmand %vm813, %vm814
      %vm816 = vmor %vm812, %vm815
      %v817 = vlaneseq
      %v818 = vshrl.u32 %v817, 7
      %v819 = vand.u32 %v818, 1
      %vm820 = vcmp.ne.s32.totalorder %v819, 0
      %vm821 = vmxor %vm816, %vm820
      %v822 = vsel %vm821, %v800, %v806
      %v823 = vsel %vm821, %v801, %v810
      %824 = xla_tuple %v822, %v823
      %825 = vst [vmem:[#allocation13] sm:$0xff] %v822
      %826 = vst [vmem:[#allocation15] sm:$0xff] %v823
      %827 = xla_tuple %825, %826
    %v828 = vld [vmem:[#allocation12] sm:$0xff]
    %vm829 = vcmp.lt.s32.totalorder %v828, 0
    %v830 = vsub.s32 2147483647, %v828
    %v831 = vsel %vm829, %v830, %v828
    %832 = vst [vmem:[#allocation12] sm:$0xff] %v831
    %v833 = vld [vmem:[#allocation12] sm:$0xff]
    %834 = vxpose.xlu0.b32.start.end [1/1] (short) %v833, 128
    %v835 = vpop.trf.xlu0
    %v836 = vpop.trf.xlu0
    %v837 = vpop.trf.xlu0
    %v838 = vpop.trf.xlu0
    %v839 = vpop.trf.xlu0
    %v840 = vpop.trf.xlu0
    %v841 = vpop.trf.xlu0
    %v842 = vpop.trf.xlu0
    %v843 = vpop.trf.xlu0
    %v844 = vpop.trf.xlu0
    %v845 = vpop.trf.xlu0
    %v846 = vpop.trf.xlu0
    %v847 = vpop.trf.xlu0
    %v848 = vpop.trf.xlu0
    %v849 = vpop.trf.xlu0
    %v850 = vpop.trf.xlu0
    %851 = vst [vmem:[#allocation7] sm:$0xff] %v835
    %v852 = vld [vmem:[#allocation14] sm:$0xff]
    %853 = vxpose.xlu0.b32.start.end [1/1] (short) %v852, 128
    %v854 = vpop.trf.xlu0
    %v855 = vpop.trf.xlu0
    %v856 = vpop.trf.xlu0
    %v857 = vpop.trf.xlu0
    %v858 = vpop.trf.xlu0
    %v859 = vpop.trf.xlu0
    %v860 = vpop.trf.xlu0
    %v861 = vpop.trf.xlu0
    %v862 = vpop.trf.xlu0
    %v863 = vpop.trf.xlu0
    %v864 = vpop.trf.xlu0
    %v865 = vpop.trf.xlu0
    %v866 = vpop.trf.xlu0
    %v867 = vpop.trf.xlu0
    %v868 = vpop.trf.xlu0
    %v869 = vpop.trf.xlu0
    %870 = vst [vmem:[#allocation10] sm:$0xff] %v854
    %s872 = ssub.s32 4, 1
    %v873 = vld [vmem:[#allocation7] sm:%s872]
    %s875 = ssub.s32 4, 1
    %876 = vst [vmem:[#allocation8] sm:%s875] %v873
    %s878 = ssub.s32 4, 1
    %v879 = vld [vmem:[#allocation10] sm:%s878]
    %s881 = ssub.s32 4, 1
    %882 = vst [vmem:[#allocation11] sm:%s881] %v879
    %884 = vsyncadd [#allocation9], 0
    %s886 = sshll.u32 [#allocation8], 4
    %s887 = int_to_ptr.vmem [resolvable:$true] %s886
    %s888 = sshll.u32 %s1, 4
    %s889 = int_to_ptr.hbm [resolvable:$true] %s888
    %891 = dma.vmem_to_hbm [thread:$0]  %s887, 32, %s889, [#allocation9]
    // Predicated region
    $region40: #{custom-call} parent=1 // pred_check
      _
    $region41: #{custom-call} parent=1 // pred_check_branch
      %893 = sbr.rel (0) target = $region43
    $region42: #{custom-call} parent=1 // pred_region
      // Predicated region
      $region44: #{custom-call} parent=42 // pred_check
        _
      $region45: #{custom-call} parent=42 // pred_check_branch
        %895 = sbr.rel target = $region47
      $region46: #{custom-call} parent=42 // pred_region
        // Predicated region
        $region59: #{custom-call} parent=46 // pred_check
          _
        $region60: #{custom-call} parent=46 // pred_check_branch
          %911 = sbr.rel (0) target = $region62
        $region61: #{custom-call} parent=46 // pred_region
          %s913 = ssub.s32 4, 1
          loop: start=0, step=1, limit=1
          $region63: #{custom-call} parent=61 // loop_pre_header
            _
          $region64: #{custom-call} parent=61 // loop_header
            %s915 = sphi 0, %s919
            %p916 = scmp.ge.s32.totalorder %s915, 1
            %s920 = sphi [#allocation11], [#allocation11]
            %s921 = sphi %s2, %s2
          $region65: #{custom-call} parent=61 // loop_header_branch
            %918 = sbr.rel (%p916) target = $region69
          $region66: #{custom-call} parent=61 // loop_body
            %v922 = vld [vmem:[%s920] sm:%s913]
            %923 = vst [vmem:[%s921] sm:%s913] %v922
          $region67: #{custom-call} parent=61 // loop_footer
            %s919 = sadd.s32 1, %s915
          $region68: #{custom-call} parent=61 // loop_footer_branch
            %914 = sbr.rel target = $region64
          $region69: #{custom-call} parent=61 // loop_exit
            _
        $region62: #{custom-call} parent=46 // pred_fallthru
          _
      $region47: #{custom-call} parent=42 // pred_fallthru
        _
      // Predicated region
      $region48: #{custom-call} parent=42 // pred_check
        _
      $region49: #{custom-call} parent=42 // pred_check_branch
        %897 = sbr.rel (0) target = $region51
      $region50: #{custom-call} parent=42 // pred_region
        %s899 = ssub.s32 4, 1
        loop: start=0, step=1, limit=1
        $region52: #{custom-call} parent=50 // loop_pre_header
          _
        $region53: #{custom-call} parent=50 // loop_header
          %s901 = sphi 0, %s905
          %p902 = scmp.ge.s32.totalorder %s901, 1
          %s906 = sphi [#allocation11], [#allocation11]
          %s907 = sphi %s2, %s2
        $region54: #{custom-call} parent=50 // loop_header_branch
          %904 = sbr.rel (%p902) target = $region58
        $region55: #{custom-call} parent=50 // loop_body
          %v908 = vld [vmem:[%s906] sm:%s899]
          %909 = vst [vmem:[%s907] sm:%s899] %v908
        $region56: #{custom-call} parent=50 // loop_footer
          %s905 = sadd.s32 1, %s901
        $region57: #{custom-call} parent=50 // loop_footer_branch
          %900 = sbr.rel target = $region53
        $region58: #{custom-call} parent=50 // loop_exit
          _
      $region51: #{custom-call} parent=42 // pred_fallthru
        _
    $region43: #{custom-call} parent=1 // pred_fallthru
      _
    %924 = vnop
    %926 = dma.done [#allocation9], 32
    %927 = vsyncpa [#allocation9], 1

// kernel: forward.3
$region0: #{forward.3}
  #allocation0 [shape = 'u32[]', space=smem, size = 0x4, offset = 0x4, fixed_abs, tag = 'smem constant byte address 0x4 - core index']
  #allocation1 [shape = 'u32[72,128]{1,0:T(1,128)}', space=vmem, size = 0x9000, scoped, tag = 'internal scratch']
  %s0 = inlined_call_operand.vmem [shape: bf16[16,512], index: 0, kind: input, shape index: {}]
  %s1 = inlined_call_operand.vmem [shape: bf16[512,128], index: 1, kind: input, shape index: {}]
  %s2 = inlined_call_operand.vmem [shape: f32[1,128], index: 2, kind: input, shape index: {}]
  %s3 = inlined_call_operand.vmem [shape: bf16[128,128], index: 3, kind: input, shape index: {}]
  %s4 = inlined_call_operand.vmem [shape: f32[1,128], index: 4, kind: input, shape index: {}]
  %s5 = inlined_call_operand.vmem [shape: bf16[128,128], index: 5, kind: input, shape index: {}]
  %s6 = inlined_call_operand.vmem [shape: f32[1,128], index: 6, kind: input, shape index: {}]
  %s7 = inlined_call_operand.vmem [shape: f32[16,128], index: 7, kind: output, shape index: {}]
  %s8 = sld [smem:[#allocation0]]
  $region38: #{forward.3} parent=0
    _
  %s10 = ssub.s32 1, %s8
  %s11 = scalar_select 0, %s10, %s8
  // Predicated region
  $region2: #{forward.3} parent=0 // pred_check
    _
  $region3: #{forward.3} parent=0 // pred_check_branch
    %13 = sbr.rel (0) target = $region5
  $region4: #{forward.3} parent=0 // pred_region
    _
  $region5: #{forward.3} parent=0 // pred_fallthru
    _
  // Predicated region
  $region6: #{forward.3} parent=0 // pred_check
    _
  $region7: #{forward.3} parent=0 // pred_check_branch
    %15 = sbr.rel (0) target = $region9
  $region8: #{forward.3} parent=0 // pred_region
    _
  $region9: #{forward.3} parent=0 // pred_fallthru
    _
  // Predicated region
  $region10: #{forward.3} parent=0 // pred_check
    _
  $region11: #{forward.3} parent=0 // pred_check_branch
    %17 = sbr.rel (0) target = $region13
  $region12: #{forward.3} parent=0 // pred_region
    _
  $region13: #{forward.3} parent=0 // pred_fallthru
    _
  // Predicated region
  $region14: #{forward.3} parent=0 // pred_check
    _
  $region15: #{forward.3} parent=0 // pred_check_branch
    %19 = sbr.rel (0) target = $region17
  $region16: #{forward.3} parent=0 // pred_region
    _
  $region17: #{forward.3} parent=0 // pred_fallthru
    _
  // Predicated region
  $region18: #{forward.3} parent=0 // pred_check
    _
  $region19: #{forward.3} parent=0 // pred_check_branch
    %21 = sbr.rel (0) target = $region21
  $region20: #{forward.3} parent=0 // pred_region
    _
  $region21: #{forward.3} parent=0 // pred_fallthru
    _
  // Predicated region
  $region22: #{forward.3} parent=0 // pred_check
    _
  $region23: #{forward.3} parent=0 // pred_check_branch
    %23 = sbr.rel (0) target = $region25
  $region24: #{forward.3} parent=0 // pred_region
    _
  $region25: #{forward.3} parent=0 // pred_fallthru
    _
  // Predicated region
  $region26: #{forward.3} parent=0 // pred_check
    _
  $region27: #{forward.3} parent=0 // pred_check_branch
    %25 = sbr.rel (0) target = $region29
  $region28: #{forward.3} parent=0 // pred_region
    _
  $region29: #{forward.3} parent=0 // pred_fallthru
    _
  %v26 = vld [vmem:[%s0] sm:$0xff]
  %v27 = vld [vmem:[%s0 + $0x8] sm:$0xff]
  %v28 = vld [vmem:[%s0 + $0x10] sm:$0xff]
  %v29 = vld [vmem:[%s0 + $0x18] sm:$0xff]
  %v30 = vld [vmem:[%s1] sm:$0xf]
  %v31 = vld [vmem:[%s1 + $0x4] sm:$0xf]
  %v32 = vld [vmem:[%s1 + $0x8] sm:$0xf]
  %v33 = vld [vmem:[%s1 + $0xc] sm:$0xf]
  %v34 = vld [vmem:[%s1 + $0x10] sm:$0xf]
  %v35 = vld [vmem:[%s1 + $0x14] sm:$0xf]
  %v36 = vld [vmem:[%s1 + $0x18] sm:$0xf]
  %v37 = vld [vmem:[%s1 + $0x1c] sm:$0xf]
  %v38 = vld [vmem:[%s1 + $0x20] sm:$0xf]
  %v39 = vld [vmem:[%s1 + $0x24] sm:$0xf]
  %v40 = vld [vmem:[%s1 + $0x28] sm:$0xf]
  %v41 = vld [vmem:[%s1 + $0x2c] sm:$0xf]
  %v42 = vld [vmem:[%s1 + $0x30] sm:$0xf]
  %v43 = vld [vmem:[%s1 + $0x34] sm:$0xf]
  %v44 = vld [vmem:[%s1 + $0x38] sm:$0xf]
  %v45 = vld [vmem:[%s1 + $0x3c] sm:$0xf]
  %v46 = vld [vmem:[%s1 + $0x40] sm:$0xf]
  %v47 = vld [vmem:[%s1 + $0x44] sm:$0xf]
  %v48 = vld [vmem:[%s1 + $0x48] sm:$0xf]
  %v49 = vld [vmem:[%s1 + $0x4c] sm:$0xf]
  %v50 = vld [vmem:[%s1 + $0x50] sm:$0xf]
  %v51 = vld [vmem:[%s1 + $0x54] sm:$0xf]
  %v52 = vld [vmem:[%s1 + $0x58] sm:$0xf]
  %v53 = vld [vmem:[%s1 + $0x5c] sm:$0xf]
  %v54 = vld [vmem:[%s1 + $0x60] sm:$0xf]
  %v55 = vld [vmem:[%s1 + $0x64] sm:$0xf]
  %v56 = vld [vmem:[%s1 + $0x68] sm:$0xf]
  %v57 = vld [vmem:[%s1 + $0x6c] sm:$0xf]
  %v58 = vld [vmem:[%s1 + $0x70] sm:$0xf]
  %v59 = vld [vmem:[%s1 + $0x74] sm:$0xf]
  %v60 = vld [vmem:[%s1 + $0x78] sm:$0xf]
  %v61 = vld [vmem:[%s1 + $0x7c] sm:$0xf]
  %v62 = vld [vmem:[%s1 + $0x80] sm:$0xf]
  %v63 = vld [vmem:[%s1 + $0x84] sm:$0xf]
  %v64 = vld [vmem:[%s1 + $0x88] sm:$0xf]
  %v65 = vld [vmem:[%s1 + $0x8c] sm:$0xf]
  %v66 = vld [vmem:[%s1 + $0x90] sm:$0xf]
  %v67 = vld [vmem:[%s1 + $0x94] sm:$0xf]
  %v68 = vld [vmem:[%s1 + $0x98] sm:$0xf]
  %v69 = vld [vmem:[%s1 + $0x9c] sm:$0xf]
  %v70 = vld [vmem:[%s1 + $0xa0] sm:$0xf]
  %v71 = vld [vmem:[%s1 + $0xa4] sm:$0xf]
  %v72 = vld [vmem:[%s1 + $0xa8] sm:$0xf]
  %v73 = vld [vmem:[%s1 + $0xac] sm:$0xf]
  %v74 = vld [vmem:[%s1 + $0xb0] sm:$0xf]
  %v75 = vld [vmem:[%s1 + $0xb4] sm:$0xf]
  %v76 = vld [vmem:[%s1 + $0xb8] sm:$0xf]
  %v77 = vld [vmem:[%s1 + $0xbc] sm:$0xf]
  %v78 = vld [vmem:[%s1 + $0xc0] sm:$0xf]
  %v79 = vld [vmem:[%s1 + $0xc4] sm:$0xf]
  %v80 = vld [vmem:[%s1 + $0xc8] sm:$0xf]
  %v81 = vld [vmem:[%s1 + $0xcc] sm:$0xf]
  %v82 = vld [vmem:[%s1 + $0xd0] sm:$0xf]
  %v83 = vld [vmem:[%s1 + $0xd4] sm:$0xf]
  %v84 = vld [vmem:[%s1 + $0xd8] sm:$0xf]
  %v85 = vld [vmem:[%s1 + $0xdc] sm:$0xf]
  %v86 = vld [vmem:[%s1 + $0xe0] sm:$0xf]
  %v87 = vld [vmem:[%s1 + $0xe4] sm:$0xf]
  %v88 = vld [vmem:[%s1 + $0xe8] sm:$0xf]
  %v89 = vld [vmem:[%s1 + $0xec] sm:$0xf]
  %v90 = vld [vmem:[%s1 + $0xf0] sm:$0xf]
  %v91 = vld [vmem:[%s1 + $0xf4] sm:$0xf]
  %v92 = vld [vmem:[%s1 + $0xf8] sm:$0xf]
  %v93 = vld [vmem:[%s1 + $0xfc] sm:$0xf]
  %v94 = vld [vmem:[%s2] sm:$0x1]
  %v96 = vperm.slane %v94, 0
  %v102 = vunpack.c.l.b16 %v26
  %v103 = vunpack.c.h.b16 %v26
  %v104 = vunpack.c.l.b16 %v27
  %v105 = vunpack.c.h.b16 %v27
  %v106 = vunpack.c.l.b16 %v28
  %v107 = vunpack.c.h.b16 %v28
  %v108 = vunpack.c.l.b16 %v29
  %v109 = vunpack.c.h.b16 %v29
  %v110 = vpack.c.b16 %v106, %v102
  %v111 = vpack.c.b16 %v107, %v103
  %v112 = vpack.c.b16 %v108, %v104
  %v113 = vpack.c.b16 %v109, %v105
  %v182 = vunpack.c.l.b16 %v30
  %v183 = vunpack.c.l.b16 %v31
  %v184 = vunpack.c.l.b16 %v32
  %v185 = vunpack.c.l.b16 %v33
  %v186 = vunpack.c.l.b16 %v34
  %v187 = vunpack.c.l.b16 %v35
  %v188 = vunpack.c.l.b16 %v36
  %v189 = vunpack.c.l.b16 %v37
  %v190 = vunpack.c.l.b16 %v38
  %v191 = vunpack.c.l.b16 %v39
  %v192 = vunpack.c.l.b16 %v40
  %v193 = vunpack.c.l.b16 %v41
  %v194 = vunpack.c.l.b16 %v42
  %v195 = vunpack.c.l.b16 %v43
  %v196 = vunpack.c.l.b16 %v44
  %v197 = vunpack.c.l.b16 %v45
  %v198 = vunpack.c.l.b16 %v46
  %v199 = vunpack.c.l.b16 %v47
  %v200 = vunpack.c.l.b16 %v48
  %v201 = vunpack.c.l.b16 %v49
  %v202 = vunpack.c.l.b16 %v50
  %v203 = vunpack.c.l.b16 %v51
  %v204 = vunpack.c.l.b16 %v52
  %v205 = vunpack.c.l.b16 %v53
  %v206 = vunpack.c.l.b16 %v54
  %v207 = vunpack.c.l.b16 %v55
  %v208 = vunpack.c.l.b16 %v56
  %v209 = vunpack.c.l.b16 %v57
  %v210 = vunpack.c.l.b16 %v58
  %v211 = vunpack.c.l.b16 %v59
  %v212 = vunpack.c.l.b16 %v60
  %v213 = vunpack.c.l.b16 %v61
  %v214 = vunpack.c.l.b16 %v62
  %v215 = vunpack.c.l.b16 %v63
  %v216 = vunpack.c.l.b16 %v64
  %v217 = vunpack.c.l.b16 %v65
  %v218 = vunpack.c.l.b16 %v66
  %v219 = vunpack.c.l.b16 %v67
  %v220 = vunpack.c.l.b16 %v68
  %v221 = vunpack.c.l.b16 %v69
  %v222 = vunpack.c.l.b16 %v70
  %v223 = vunpack.c.l.b16 %v71
  %v224 = vunpack.c.l.b16 %v72
  %v225 = vunpack.c.l.b16 %v73
  %v226 = vunpack.c.l.b16 %v74
  %v227 = vunpack.c.l.b16 %v75
  %v228 = vunpack.c.l.b16 %v76
  %v229 = vunpack.c.l.b16 %v77
  %v230 = vunpack.c.l.b16 %v78
  %v231 = vunpack.c.l.b16 %v79
  %v232 = vunpack.c.l.b16 %v80
  %v233 = vunpack.c.l.b16 %v81
  %v234 = vunpack.c.l.b16 %v82
  %v235 = vunpack.c.l.b16 %v83
  %v236 = vunpack.c.l.b16 %v84
  %v237 = vunpack.c.l.b16 %v85
  %v238 = vunpack.c.l.b16 %v86
  %v239 = vunpack.c.l.b16 %v87
  %v240 = vunpack.c.l.b16 %v88
  %v241 = vunpack.c.l.b16 %v89
  %v242 = vunpack.c.l.b16 %v90
  %v243 = vunpack.c.l.b16 %v91
  %v244 = vunpack.c.l.b16 %v92
  %v245 = vunpack.c.l.b16 %v93
  %v246 = vpack.c.b16 %v183, %v182
  %v247 = vpack.c.b16 %v185, %v184
  %v248 = vpack.c.b16 %v187, %v186
  %v249 = vpack.c.b16 %v189, %v188
  %v250 = vpack.c.b16 %v191, %v190
  %v251 = vpack.c.b16 %v193, %v192
  %v252 = vpack.c.b16 %v195, %v194
  %v253 = vpack.c.b16 %v197, %v196
  %v254 = vpack.c.b16 %v199, %v198
  %v255 = vpack.c.b16 %v201, %v200
  %v256 = vpack.c.b16 %v203, %v202
  %v257 = vpack.c.b16 %v205, %v204
  %v258 = vpack.c.b16 %v207, %v206
  %v259 = vpack.c.b16 %v209, %v208
  %v260 = vpack.c.b16 %v211, %v210
  %v261 = vpack.c.b16 %v213, %v212
  %v262 = vpack.c.b16 %v215, %v214
  %v263 = vpack.c.b16 %v217, %v216
  %v264 = vpack.c.b16 %v219, %v218
  %v265 = vpack.c.b16 %v221, %v220
  %v266 = vpack.c.b16 %v223, %v222
  %v267 = vpack.c.b16 %v225, %v224
  %v268 = vpack.c.b16 %v227, %v226
  %v269 = vpack.c.b16 %v229, %v228
  %v270 = vpack.c.b16 %v231, %v230
  %v271 = vpack.c.b16 %v233, %v232
  %v272 = vpack.c.b16 %v235, %v234
  %v273 = vpack.c.b16 %v237, %v236
  %v274 = vpack.c.b16 %v239, %v238
  %v275 = vpack.c.b16 %v241, %v240
  %v276 = vpack.c.b16 %v243, %v242
  %v277 = vpack.c.b16 %v245, %v244
  %310 = vmatpush.bf16.msra.mxu0 %v253
  %311 = vmatpush.bf16.msra.mxu0 %v252
  %312 = vmatpush.bf16.msra.mxu0 %v251
  %313 = vmatpush.bf16.msra.mxu0 %v250
  %314 = vmatpush.bf16.msra.mxu0 %v249
  %315 = vmatpush.bf16.msra.mxu0 %v248
  %316 = vmatpush.bf16.msra.mxu0 %v247
  %317 = vmatpush.bf16.msra.mxu0 %v246
  %318 = vmatmul.bf16.gmra.mxu0 %v110
  %v319 = vpop.f32.mrf.mxu0
  %v320 = vadd.f32 %v96, %v319
  %v321 = vpop.f32.mrf.mxu0
  %v322 = vadd.f32 %v96, %v321
  %323 = vdwg.mxu0
  %324 = vmatpush.bf16.msra.mxu0 %v261
  %325 = vmatpush.bf16.msra.mxu0 %v260
  %326 = vmatpush.bf16.msra.mxu0 %v259
  %327 = vmatpush.bf16.msra.mxu0 %v258
  %328 = vmatpush.bf16.msra.mxu0 %v257
  %329 = vmatpush.bf16.msra.mxu0 %v256
  %330 = vmatpush.bf16.msra.mxu0 %v255
  %331 = vmatpush.bf16.msra.mxu0 %v254
  %332 = vmatmul.bf16.gmra.mxu0 %v111
  %v333 = vpop.f32.mrf.mxu0
  %v334 = vadd.f32 %v320, %v333
  %v335 = vpop.f32.mrf.mxu0
  %v336 = vadd.f32 %v322, %v335
  %337 = vdwg.mxu0
  %338 = vmatpush.bf16.msra.mxu0 %v269
  %339 = vmatpush.bf16.msra.mxu0 %v268
  %340 = vmatpush.bf16.msra.mxu0 %v267
  %341 = vmatpush.bf16.msra.mxu0 %v266
  %342 = vmatpush.bf16.msra.mxu0 %v265
  %343 = vmatpush.bf16.msra.mxu0 %v264
  %344 = vmatpush.bf16.msra.mxu0 %v263
  %345 = vmatpush.bf16.msra.mxu0 %v262
  %346 = vmatmul.bf16.gmra.mxu0 %v112
  %v347 = vpop.f32.mrf.mxu0
  %v348 = vadd.f32 %v334, %v347
  %v349 = vpop.f32.mrf.mxu0
  %v350 = vadd.f32 %v336, %v349
  %351 = vdwg.mxu0
  %352 = vmatpush.bf16.msra.mxu0 %v277
  %353 = vmatpush.bf16.msra.mxu0 %v276
  %354 = vmatpush.bf16.msra.mxu0 %v275
  %355 = vmatpush.bf16.msra.mxu0 %v274
  %356 = vmatpush.bf16.msra.mxu0 %v273
  %357 = vmatpush.bf16.msra.mxu0 %v272
  %358 = vmatpush.bf16.msra.mxu0 %v271
  %359 = vmatpush.bf16.msra.mxu0 %v270
  %360 = vmatmul.bf16.gmra.mxu0 %v113
  %v361 = vpop.f32.mrf.mxu0
  %v362 = vadd.f32 %v348, %v361
  %v363 = vpop.f32.mrf.mxu0
  %v364 = vadd.f32 %v350, %v363
  %365 = vdwg.mxu0
  %v366 = vmax.f32 %v362, 0.0
  %v367 = vmax.f32 %v364, 0.0
  %v368 = vpack.c.bf16 %v367, %v366
  %v369 = vld [vmem:[%s3] sm:$0xf]
  %v370 = vld [vmem:[%s3 + $0x4] sm:$0xf]
  %v371 = vld [vmem:[%s3 + $0x8] sm:$0xf]
  %v372 = vld [vmem:[%s3 + $0xc] sm:$0xf]
  %v373 = vld [vmem:[%s3 + $0x10] sm:$0xf]
  %v374 = vld [vmem:[%s3 + $0x14] sm:$0xf]
  %v375 = vld [vmem:[%s3 + $0x18] sm:$0xf]
  %v376 = vld [vmem:[%s3 + $0x1c] sm:$0xf]
  %v377 = vld [vmem:[%s3 + $0x20] sm:$0xf]
  %v378 = vld [vmem:[%s3 + $0x24] sm:$0xf]
  %v379 = vld [vmem:[%s3 + $0x28] sm:$0xf]
  %v380 = vld [vmem:[%s3 + $0x2c] sm:$0xf]
  %v381 = vld [vmem:[%s3 + $0x30] sm:$0xf]
  %v382 = vld [vmem:[%s3 + $0x34] sm:$0xf]
  %v383 = vld [vmem:[%s3 + $0x38] sm:$0xf]
  %v384 = vld [vmem:[%s3 + $0x3c] sm:$0xf]
  %v385 = vld [vmem:[%s4] sm:$0x1]
  %v387 = vperm.slane %v385, 0
  %v405 = vunpack.c.l.b16 %v369
  %v406 = vunpack.c.l.b16 %v370
  %v407 = vunpack.c.l.b16 %v371
  %v408 = vunpack.c.l.b16 %v372
  %v409 = vunpack.c.l.b16 %v373
  %v410 = vunpack.c.l.b16 %v374
  %v411 = vunpack.c.l.b16 %v375
  %v412 = vunpack.c.l.b16 %v376
  %v413 = vunpack.c.l.b16 %v377
  %v414 = vunpack.c.l.b16 %v378
  %v415 = vunpack.c.l.b16 %v379
  %v416 = vunpack.c.l.b16 %v380
  %v417 = vunpack.c.l.b16 %v381
  %v418 = vunpack.c.l.b16 %v382
  %v419 = vunpack.c.l.b16 %v383
  %v420 = vunpack.c.l.b16 %v384
  %v421 = vpack.c.b16 %v406, %v405
  %v422 = vpack.c.b16 %v408, %v407
  %v423 = vpack.c.b16 %v410, %v409
  %v424 = vpack.c.b16 %v412, %v411
  %v425 = vpack.c.b16 %v414, %v413
  %v426 = vpack.c.b16 %v416, %v415
  %v427 = vpack.c.b16 %v418, %v417
  %v428 = vpack.c.b16 %v420, %v419
  %437 = vmatpush.bf16.msra.mxu0 %v428
  %438 = vmatpush.bf16.msra.mxu0 %v427
  %439 = vmatpush.bf16.msra.mxu0 %v426
  %440 = vmatpush.bf16.msra.mxu0 %v425
  %441 = vmatpush.bf16.msra.mxu0 %v424
  %442 = vmatpush.bf16.msra.mxu0 %v423
  %443 = vmatpush.bf16.msra.mxu0 %v422
  %444 = vmatpush.bf16.msra.mxu0 %v421
  %445 = vmatmul.bf16.gmra.mxu0 %v368
  %v446 = vpop.f32.mrf.mxu0
  %v447 = vadd.f32 %v387, %v446
  %v448 = vpop.f32.mrf.mxu0
  %v449 = vadd.f32 %v387, %v448
  %450 = vdwg.mxu0
  %v451 = vmax.f32 %v447, 0.0
  %v452 = vmax.f32 %v449, 0.0
  %v453 = vpack.c.bf16 %v452, %v451
  %v454 = vld [vmem:[%s5] sm:$0xf]
  %v455 = vld [vmem:[%s5 + $0x4] sm:$0xf]
  %v456 = vld [vmem:[%s5 + $0x8] sm:$0xf]
  %v457 = vld [vmem:[%s5 + $0xc] sm:$0xf]
  %v458 = vld [vmem:[%s5 + $0x10] sm:$0xf]
  %v459 = vld [vmem:[%s5 + $0x14] sm:$0xf]
  %v460 = vld [vmem:[%s5 + $0x18] sm:$0xf]
  %v461 = vld [vmem:[%s5 + $0x1c] sm:$0xf]
  %v462 = vld [vmem:[%s5 + $0x20] sm:$0xf]
  %v463 = vld [vmem:[%s5 + $0x24] sm:$0xf]
  %v464 = vld [vmem:[%s5 + $0x28] sm:$0xf]
  %v465 = vld [vmem:[%s5 + $0x2c] sm:$0xf]
  %v466 = vld [vmem:[%s5 + $0x30] sm:$0xf]
  %v467 = vld [vmem:[%s5 + $0x34] sm:$0xf]
  %v468 = vld [vmem:[%s5 + $0x38] sm:$0xf]
  %v469 = vld [vmem:[%s5 + $0x3c] sm:$0xf]
  %v470 = vld [vmem:[%s6] sm:$0x1]
  %v472 = vperm.slane %v470, 0
  %v490 = vunpack.c.l.b16 %v454
  %v491 = vunpack.c.l.b16 %v455
  %v492 = vunpack.c.l.b16 %v456
  %v493 = vunpack.c.l.b16 %v457
  %v494 = vunpack.c.l.b16 %v458
  %v495 = vunpack.c.l.b16 %v459
  %v496 = vunpack.c.l.b16 %v460
  %v497 = vunpack.c.l.b16 %v461
  %v498 = vunpack.c.l.b16 %v462
  %v499 = vunpack.c.l.b16 %v463
  %v500 = vunpack.c.l.b16 %v464
  %v501 = vunpack.c.l.b16 %v465
  %v502 = vunpack.c.l.b16 %v466
  %v503 = vunpack.c.l.b16 %v467
  %v504 = vunpack.c.l.b16 %v468
  %v505 = vunpack.c.l.b16 %v469
  %v506 = vpack.c.b16 %v491, %v490
  %v507 = vpack.c.b16 %v493, %v492
  %v508 = vpack.c.b16 %v495, %v494
  %v509 = vpack.c.b16 %v497, %v496
  %v510 = vpack.c.b16 %v499, %v498
  %v511 = vpack.c.b16 %v501, %v500
  %v512 = vpack.c.b16 %v503, %v502
  %v513 = vpack.c.b16 %v505, %v504
  %522 = vmatpush.bf16.msra.mxu0 %v513
  %523 = vmatpush.bf16.msra.mxu0 %v512
  %524 = vmatpush.bf16.msra.mxu0 %v511
  %525 = vmatpush.bf16.msra.mxu0 %v510
  %526 = vmatpush.bf16.msra.mxu0 %v509
  %527 = vmatpush.bf16.msra.mxu0 %v508
  %528 = vmatpush.bf16.msra.mxu0 %v507
  %529 = vmatpush.bf16.msra.mxu0 %v506
  %530 = vmatmul.bf16.gmra.mxu0 %v453
  %v531 = vpop.f32.mrf.mxu0
  %v532 = vadd.f32 %v472, %v531
  %v533 = vpop.f32.mrf.mxu0
  %v534 = vadd.f32 %v472, %v533
  %535 = vdwg.mxu0
  %536 = vst [vmem:[%s7] sm:$0xff] %v532
  %537 = vst [vmem:[%s7 + $0x8] sm:$0xff] %v534
  // Predicated region
  $region30: #{forward.3} parent=0 // pred_check
    _
  $region31: #{forward.3} parent=0 // pred_check_branch
    %539 = sbr.rel (0) target = $region33
  $region32: #{forward.3} parent=0 // pred_region
    _
  $region33: #{forward.3} parent=0 // pred_fallthru
    _
  // Predicated region
  $region34: #{forward.3} parent=0 // pred_check
    _
  $region35: #{forward.3} parent=0 // pred_check_branch
    %541 = sbr.rel (0) target = $region37
  $region36: #{forward.3} parent=0 // pred_region
    _
  $region37: #{forward.3} parent=0 // pred_fallthru
    _

// kernel: forward.2
$region0: #{forward.2}
  #allocation0 [shape = 'u32[]', space=smem, size = 0x4, offset = 0x4, fixed_abs, tag = 'smem constant byte address 0x4 - core index']
  #allocation1 [shape = 'u32[72,128]{1,0:T(1,128)}', space=vmem, size = 0x9000, scoped, tag = 'internal scratch']
  #allocation2 [shape = 'f32[18,32,32]{2,1,0:T(8,128)}', space=vmem, size = 0x48000, scoped, tag = 'scratch operand']
  %s0 = inlined_call_operand.vmem [shape: f32[2,16,16,8], index: 0, kind: input, shape index: {}]
  %s1 = inlined_call_operand.vmem [shape: bf16[9,8,128], index: 1, kind: input, shape index: {}]
  %s2 = inlined_call_operand.vmem [shape: f32[1,128], index: 2, kind: input, shape index: {}]
  %s3 = inlined_call_operand.vmem [shape: bf16[9,16,128], index: 3, kind: input, shape index: {}]
  %s4 = inlined_call_operand.vmem [shape: f32[1,128], index: 4, kind: input, shape index: {}]
  %s5 = inlined_call_operand.vmem [shape: bf16[9,32,128], index: 5, kind: input, shape index: {}]
  %s6 = inlined_call_operand.vmem [shape: f32[1,128], index: 6, kind: input, shape index: {}]
  %s7 = inlined_call_operand.vmem [shape: bf16[32,128], index: 7, kind: input, shape index: {}]
  %s8 = inlined_call_operand.vmem [shape: f32[1,128], index: 8, kind: input, shape index: {}]
  %s9 = inlined_call_operand.vmem [shape: bf16[2,16,16,32], index: 9, kind: output, shape index: {0}]
  %s10 = inlined_call_operand.vmem [shape: bf16[2,256,128], index: 10, kind: output, shape index: {1}]
  %11 = xla_tuple %s9, %s10
  %s12 = sld [smem:[#allocation0]]
  $region77: #{forward.2} parent=0
    _
  %s14 = ssub.s32 1, %s12
  %s15 = scalar_select 0, %s14, %s12
  loop: start=0, step=1, limit=4
  $region2: #{forward.2} parent=0 // loop_pre_header
    _
  $region3: #{forward.2} parent=0 // loop_header
    %s17 = sphi 0, %s21
    %p18 = scmp.ge.s32.totalorder %s17, 4
    %s27 = sphi 0, %s29
    %s30 = sphi 0, %s27
    %s31 = sphi 0, %s30
    %s47 = sphi 0, %s31
    %s51 = sphi 0, %s51
    %s53 = sphi 0, %s51
    %s54 = sphi 0, %s53
    %s68 = sphi 0, %s54
    %s72 = sphi 0, %s72
    %s74 = sphi 0, %s72
    %s75 = sphi 0, %s74
    %s89 = sphi 0, %s75
    %s93 = sphi 0, %s93
    %s95 = sphi 0, %s93
    %s96 = sphi 0, %s95
    %s110 = sphi 0, %s96
    %s114 = sphi 0, %s114
    %s116 = sphi 0, %s114
    %s117 = sphi 0, %s116
    %s131 = sphi 0, %s117
    %s135 = sphi 0, %s135
    %s137 = sphi 0, %s135
    %s138 = sphi 0, %s137
    %s152 = sphi 0, %s138
    %s156 = sphi 0, %s156
    %s158 = sphi 0, %s156
    %s159 = sphi 0, %s158
    %s173 = sphi 0, %s159
    %s177 = sphi 0, %s177
    %s179 = sphi 0, %s177
    %s180 = sphi 0, %s179
    %s194 = sphi 0, %s180
    %s198 = sphi 0, %s198
    %s200 = sphi 0, %s198
    %s201 = sphi 0, %s200
    %s215 = sphi 0, %s201
    %s221 = sphi 0, %s223
    %s224 = sphi 0, %s221
    %s225 = sphi 0, %s224
    %s241 = sphi 0, %s225
    %s247 = sphi 0, %s249
    %s250 = sphi 0, %s247
    %s251 = sphi 0, %s250
    %s267 = sphi 0, %s251
  $region4: #{forward.2} parent=0 // loop_header_branch
    %20 = sbr.rel (%p18) target = $region8
  $region5: #{forward.2} parent=0 // loop_body
    %s22 = ssub.s32 %s17, 1
    %s23 = ssub.s32 %s17, 2
    %s24 = sadd.s32 %s17, 1
    %s25 = ssub.s32 %s17, %s24
    %p26 = scmp.eq.s32.totalorder %s25, 0
    %s28 = sadd.s32 %s27, 1
    %s29 = scalar_select %p26, %s27, %s28
    %p32 = pneg %p26
    %p33 = scmp.eq.s32.totalorder %s17, 1
    %p34 = por %p32, %p33
    %p35 = scmp.ne.s32.totalorder %s27, %s30
    %p36 = scmp.eq.s32.totalorder %s17, 0
    %p37 = por %p35, %p36
    %p38 = scmp.ne.s32.totalorder %s27, %s30
    %p39 = scmp.eq.s32.totalorder %s22, 1
    %p40 = por %p38, %p39
    %p41 = scmp.ne.s32.totalorder %s30, %s31
    %p42 = scmp.eq.s32.totalorder %s22, 0
    %p43 = por %p41, %p42
    %p44 = scmp.ne.s32.totalorder %s30, %s31
    %p45 = scmp.eq.s32.totalorder %s23, 1
    %p46 = por %p44, %p45
    %p48 = scmp.ne.s32.totalorder %s31, %s47
    %p49 = scmp.eq.s32.totalorder %s23, 0
    %p50 = por %p48, %p49
    %s52 = sadd.s32 %s51, 1
    %p55 = scmp.eq.s32.totalorder %s17, 1
    %p56 = scmp.ne.s32.totalorder %s51, %s53
    %p57 = scmp.eq.s32.totalorder %s17, 0
    %p58 = por %p56, %p57
    %p59 = scmp.ne.s32.totalorder %s51, %s53
    %p60 = scmp.eq.s32.totalorder %s22, 1
    %p61 = por %p59, %p60
    %p62 = scmp.ne.s32.totalorder %s53, %s54
    %p63 = scmp.eq.s32.totalorder %s22, 0
    %p64 = por %p62, %p63
    %p65 = scmp.ne.s32.totalorder %s53, %s54
    %p66 = scmp.eq.s32.totalorder %s23, 1
    %p67 = por %p65, %p66
    %p69 = scmp.ne.s32.totalorder %s54, %s68
    %p70 = scmp.eq.s32.totalorder %s23, 0
    %p71 = por %p69, %p70
    %s73 = sadd.s32 %s72, 1
    %p76 = scmp.eq.s32.totalorder %s17, 1
    %p77 = scmp.ne.s32.totalorder %s72, %s74
    %p78 = scmp.eq.s32.totalorder %s17, 0
    %p79 = por %p77, %p78
    %p80 = scmp.ne.s32.totalorder %s72, %s74
    %p81 = scmp.eq.s32.totalorder %s22, 1
    %p82 = por %p80, %p81
    %p83 = scmp.ne.s32.totalorder %s74, %s75
    %p84 = scmp.eq.s32.totalorder %s22, 0
    %p85 = por %p83, %p84
    %p86 = scmp.ne.s32.totalorder %s74, %s75
    %p87 = scmp.eq.s32.totalorder %s23, 1
    %p88 = por %p86, %p87
    %p90 = scmp.ne.s32.totalorder %s75, %s89
    %p91 = scmp.eq.s32.totalorder %s23, 0
    %p92 = por %p90, %p91
    %s94 = sadd.s32 %s93, 1
    %p97 = scmp.eq.s32.totalorder %s17, 1
    %p98 = scmp.ne.s32.totalorder %s93, %s95
    %p99 = scmp.eq.s32.totalorder %s17, 0
    %p100 = por %p98, %p99
    %p101 = scmp.ne.s32.totalorder %s93, %s95
    %p102 = scmp.eq.s32.totalorder %s22, 1
    %p103 = por %p101, %p102
    %p104 = scmp.ne.s32.totalorder %s95, %s96
    %p105 = scmp.eq.s32.totalorder %s22, 0
    %p106 = por %p104, %p105
    %p107 = scmp.ne.s32.totalorder %s95, %s96
    %p108 = scmp.eq.s32.totalorder %s23, 1
    %p109 = por %p107, %p108
    %p111 = scmp.ne.s32.totalorder %s96, %s110
    %p112 = scmp.eq.s32.totalorder %s23, 0
    %p113 = por %p111, %p112
    %s115 = sadd.s32 %s114, 1
    %p118 = scmp.eq.s32.totalorder %s17, 1
    %p119 = scmp.ne.s32.totalorder %s114, %s116
    %p120 = scmp.eq.s32.totalorder %s17, 0
    %p121 = por %p119, %p120
    %p122 = scmp.ne.s32.totalorder %s114, %s116
    %p123 = scmp.eq.s32.totalorder %s22, 1
    %p124 = por %p122, %p123
    %p125 = scmp.ne.s32.totalorder %s116, %s117
    %p126 = scmp.eq.s32.totalorder %s22, 0
    %p127 = por %p125, %p126
    %p128 = scmp.ne.s32.totalorder %s116, %s117
    %p129 = scmp.eq.s32.totalorder %s23, 1
    %p130 = por %p128, %p129
    %p132 = scmp.ne.s32.totalorder %s117, %s131
    %p133 = scmp.eq.s32.totalorder %s23, 0
    %p134 = por %p132, %p133
    %s136 = sadd.s32 %s135, 1
    %p139 = scmp.eq.s32.totalorder %s17, 1
    %p140 = scmp.ne.s32.totalorder %s135, %s137
    %p141 = scmp.eq.s32.totalorder %s17, 0
    %p142 = por %p140, %p141
    %p143 = scmp.ne.s32.totalorder %s135, %s137
    %p144 = scmp.eq.s32.totalorder %s22, 1
    %p145 = por %p143, %p144
    %p146 = scmp.ne.s32.totalorder %s137, %s138
    %p147 = scmp.eq.s32.totalorder %s22, 0
    %p148 = por %p146, %p147
    %p149 = scmp.ne.s32.totalorder %s137, %s138
    %p150 = scmp.eq.s32.totalorder %s23, 1
    %p151 = por %p149, %p150
    %p153 = scmp.ne.s32.totalorder %s138, %s152
    %p154 = scmp.eq.s32.totalorder %s23, 0
    %p155 = por %p153, %p154
    %s157 = sadd.s32 %s156, 1
    %p160 = scmp.eq.s32.totalorder %s17, 1
    %p161 = scmp.ne.s32.totalorder %s156, %s158
    %p162 = scmp.eq.s32.totalorder %s17, 0
    %p163 = por %p161, %p162
    %p164 = scmp.ne.s32.totalorder %s156, %s158
    %p165 = scmp.eq.s32.totalorder %s22, 1
    %p166 = por %p164, %p165
    %p167 = scmp.ne.s32.totalorder %s158, %s159
    %p168 = scmp.eq.s32.totalorder %s22, 0
    %p169 = por %p167, %p168
    %p170 = scmp.ne.s32.totalorder %s158, %s159
    %p171 = scmp.eq.s32.totalorder %s23, 1
    %p172 = por %p170, %p171
    %p174 = scmp.ne.s32.totalorder %s159, %s173
    %p175 = scmp.eq.s32.totalorder %s23, 0
    %p176 = por %p174, %p175
    %s178 = sadd.s32 %s177, 1
    %p181 = scmp.eq.s32.totalorder %s17, 1
    %p182 = scmp.ne.s32.totalorder %s177, %s179
    %p183 = scmp.eq.s32.totalorder %s17, 0
    %p184 = por %p182, %p183
    %p185 = scmp.ne.s32.totalorder %s177, %s179
    %p186 = scmp.eq.s32.totalorder %s22, 1
    %p187 = por %p185, %p186
    %p188 = scmp.ne.s32.totalorder %s179, %s180
    %p189 = scmp.eq.s32.totalorder %s22, 0
    %p190 = por %p188, %p189
    %p191 = scmp.ne.s32.totalorder %s179, %s180
    %p192 = scmp.eq.s32.totalorder %s23, 1
    %p193 = por %p191, %p192
    %p195 = scmp.ne.s32.totalorder %s180, %s194
    %p196 = scmp.eq.s32.totalorder %s23, 0
    %p197 = por %p195, %p196
    %s199 = sadd.s32 %s198, 1
    %p202 = scmp.eq.s32.totalorder %s17, 1
    %p203 = scmp.ne.s32.totalorder %s198, %s200
    %p204 = scmp.eq.s32.totalorder %s17, 0
    %p205 = por %p203, %p204
    %p206 = scmp.ne.s32.totalorder %s198, %s200
    %p207 = scmp.eq.s32.totalorder %s22, 1
    %p208 = por %p206, %p207
    %p209 = scmp.ne.s32.totalorder %s200, %s201
    %p210 = scmp.eq.s32.totalorder %s22, 0
    %p211 = por %p209, %p210
    %p212 = scmp.ne.s32.totalorder %s200, %s201
    %p213 = scmp.eq.s32.totalorder %s23, 1
    %p214 = por %p212, %p213
    %p216 = scmp.ne.s32.totalorder %s201, %s215
    %p217 = scmp.eq.s32.totalorder %s23, 0
    %p218 = por %p216, %p217
    %s219 = ssub.s32 %s17, %s24
    %p220 = scmp.eq.s32.totalorder %s219, 0
    %s222 = sadd.s32 %s221, 1
    %s223 = scalar_select %p220, %s221, %s222
    %p226 = pneg %p220
    %p227 = scmp.eq.s32.totalorder %s17, 1
    %p228 = por %p226, %p227
    %p229 = scmp.ne.s32.totalorder %s221, %s224
    %p230 = scmp.eq.s32.totalorder %s17, 0
    %p231 = por %p229, %p230
    %p232 = scmp.ne.s32.totalorder %s221, %s224
    %p233 = scmp.eq.s32.totalorder %s22, 1
    %p234 = por %p232, %p233
    %p235 = scmp.ne.s32.totalorder %s224, %s225
    %p236 = scmp.eq.s32.totalorder %s22, 0
    %p237 = por %p235, %p236
    %p238 = scmp.ne.s32.totalorder %s224, %s225
    %p239 = scmp.eq.s32.totalorder %s23, 1
    %p240 = por %p238, %p239
    %p242 = scmp.ne.s32.totalorder %s225, %s241
    %p243 = scmp.eq.s32.totalorder %s23, 0
    %p244 = por %p242, %p243
    %s245 = ssub.s32 %s17, %s24
    %p246 = scmp.eq.s32.totalorder %s245, 0
    %s248 = sadd.s32 %s247, 1
    %s249 = scalar_select %p246, %s247, %s248
    %p252 = pneg %p246
    %p253 = scmp.eq.s32.totalorder %s17, 1
    %p254 = por %p252, %p253
    %p255 = scmp.ne.s32.totalorder %s247, %s250
    %p256 = scmp.eq.s32.totalorder %s17, 0
    %p257 = por %p255, %p256
    %p258 = scmp.ne.s32.totalorder %s247, %s250
    %p259 = scmp.eq.s32.totalorder %s22, 1
    %p260 = por %p258, %p259
    %p261 = scmp.ne.s32.totalorder %s250, %s251
    %p262 = scmp.eq.s32.totalorder %s22, 0
    %p263 = por %p261, %p262
    %p264 = scmp.ne.s32.totalorder %s250, %s251
    %p265 = scmp.eq.s32.totalorder %s23, 1
    %p266 = por %p264, %p265
    %p268 = scmp.ne.s32.totalorder %s251, %s267
    %p269 = scmp.eq.s32.totalorder %s23, 0
    %p270 = por %p268, %p269
    %p271 = scmp.le.s32.totalorder 1, %s17
    %p272 = scmp.lt.s32.totalorder %s17, 3
    %p273 = pnand %p271, %p272
    %p274 = pneg %p273
    // Predicated region
    $region9: #{forward.2} parent=5 // pred_check
      _
    $region10: #{forward.2} parent=5 // pred_check_branch
      %276 = sbr.rel (%p273) target = $region12
    $region11: #{forward.2} parent=5 // pred_region
      %s277 = ssub.s32 %s17, 1
      // Predicated region
      $region13: #{forward.2} parent=11 // pred_check
        %p278 = pneg %p64
      $region14: #{forward.2} parent=11 // pred_check_branch
        %280 = sbr.rel (%p278) target = $region16
      $region15: #{forward.2} parent=11 // pred_region
        _
      $region16: #{forward.2} parent=11 // pred_fallthru
        _
      // Predicated region
      $region17: #{forward.2} parent=11 // pred_check
        %p281 = pneg %p85
      $region18: #{forward.2} parent=11 // pred_check_branch
        %283 = sbr.rel (%p281) target = $region20
      $region19: #{forward.2} parent=11 // pred_region
        _
      $region20: #{forward.2} parent=11 // pred_fallthru
        _
      // Predicated region
      $region21: #{forward.2} parent=11 // pred_check
        %p284 = pneg %p106
      $region22: #{forward.2} parent=11 // pred_check_branch
        %286 = sbr.rel (%p284) target = $region24
      $region23: #{forward.2} parent=11 // pred_region
        _
      $region24: #{forward.2} parent=11 // pred_fallthru
        _
      // Predicated region
      $region25: #{forward.2} parent=11 // pred_check
        %p287 = pneg %p127
      $region26: #{forward.2} parent=11 // pred_check_branch
        %289 = sbr.rel (%p287) target = $region28
      $region27: #{forward.2} parent=11 // pred_region
        _
      $region28: #{forward.2} parent=11 // pred_fallthru
        _
      // Predicated region
      $region29: #{forward.2} parent=11 // pred_check
        %p290 = pneg %p148
      $region30: #{forward.2} parent=11 // pred_check_branch
        %292 = sbr.rel (%p290) target = $region32
      $region31: #{forward.2} parent=11 // pred_region
        _
      $region32: #{forward.2} parent=11 // pred_fallthru
        _
      // Predicated region
      $region33: #{forward.2} parent=11 // pred_check
        %p293 = pneg %p169
      $region34: #{forward.2} parent=11 // pred_check_branch
        %295 = sbr.rel (%p293) target = $region36
      $region35: #{forward.2} parent=11 // pred_region
        _
      $region36: #{forward.2} parent=11 // pred_fallthru
        _
      // Predicated region
      $region37: #{forward.2} parent=11 // pred_check
        %p296 = pneg %p190
      $region38: #{forward.2} parent=11 // pred_check_branch
        %298 = sbr.rel (%p296) target = $region40
      $region39: #{forward.2} parent=11 // pred_region
        _
      $region40: #{forward.2} parent=11 // pred_fallthru
        _
      // Predicated region
      $region41: #{forward.2} parent=11 // pred_check
        %p299 = pneg %p211
      $region42: #{forward.2} parent=11 // pred_check_branch
        %301 = sbr.rel (%p299) target = $region44
      $region43: #{forward.2} parent=11 // pred_region
        _
      $region44: #{forward.2} parent=11 // pred_fallthru
        _
    $region12: #{forward.2} parent=5 // pred_fallthru
      _
    %p302 = scmp.lt.s32.totalorder %s17, 2
    // Predicated region
    $region45: #{forward.2} parent=5 // pred_check
      %p303 = pneg %p302
    $region46: #{forward.2} parent=5 // pred_check_branch
      %305 = sbr.rel (%p303) target = $region48
    $region47: #{forward.2} parent=5 // pred_region
      // Predicated region
      $region49: #{forward.2} parent=47 // pred_check
        %p306 = pneg %p37
      $region50: #{forward.2} parent=47 // pred_check_branch
        %308 = sbr.rel (%p306) target = $region52
      $region51: #{forward.2} parent=47 // pred_region
        %p309 = scmp.lt.s32.totalorder %s17, 1
        %s310 = scalar_select %p309, %s17, 1
        %s311 = smul.addr %s310, 32
        %s312 = smul.addr %s311, 8
        %s313 = scalar_lea.vmem %s0, %s312
      $region52: #{forward.2} parent=47 // pred_fallthru
        _
    $region48: #{forward.2} parent=5 // pred_fallthru
      _
    %p314 = scmp.le.s32.totalorder 1, %s17
    %p315 = scmp.lt.s32.totalorder %s17, 3
    %p316 = pnand %p314, %p315
    %p317 = pneg %p316
    // Predicated region
    $region53: #{forward.2} parent=5 // pred_check
      _
    $region54: #{forward.2} parent=5 // pred_check_branch
      %319 = sbr.rel (%p316) target = $region56
    $region55: #{forward.2} parent=5 // pred_region
      %s320 = ssub.s32 %s17, 1
      %p321 = scmp.lt.s32.totalorder %s22, 1
      %s322 = scalar_select %p321, %s22, 1
      %s323 = smul.addr %s322, 32
      %s324 = smul.addr %s323, 8
      %s325 = scalar_lea.vmem %s0, %s324
      %p326 = pneg %p43
      %p327 = pneg %p40
      %p328 = pneg %p64
      %p329 = pneg %p61
      %p330 = pneg %p85
      %p331 = pneg %p82
      %p332 = pneg %p106
      %p333 = pneg %p103
      %p334 = pneg %p127
      %p335 = pneg %p124
      %p336 = pneg %p148
      %p337 = pneg %p145
      %p338 = pneg %p169
      %p339 = pneg %p166
      %p340 = pneg %p190
      %p341 = pneg %p187
      %p342 = pneg %p211
      %p343 = pneg %p208
      %p344 = pneg %p237
      %p345 = pneg %p234
      %p346 = scmp.lt.s32.totalorder %s22, 1
      %s347 = scalar_select %p346, %s22, 1
      %s348 = smul.addr %s347, 32
      %s349 = smul.addr %s348, 4
      %s350 = scalar_lea.vmem %s9, %s349
      %p351 = pneg %p263
      %p352 = pneg %p260
      %p353 = scmp.lt.s32.totalorder %s22, 1
      %s354 = scalar_select %p353, %s22, 1
      %s355 = smul.addr %s354, 32
      %s356 = smul.addr %s355, 4
      %s357 = scalar_lea.vmem %s10, %s356
      %p358 = scmp.lt.s32.totalorder %s22, 1
      %s359 = scalar_select %p358, %s22, 1
      %s360 = smul.addr %s359, 32
      %s361 = smul.addr %s360, 8
      %s362 = scalar_lea.vmem %s0, %s361
      %p363 = scmp.lt.s32.totalorder %s22, 1
      %s364 = scalar_select %p363, %s22, 1
      %s365 = smul.addr %s364, 32
      %s366 = smul.addr %s365, 4
      %s367 = scalar_lea.vmem %s9, %s366
      %p368 = scmp.lt.s32.totalorder %s22, 1
      %s369 = scalar_select %p368, %s22, 1
      %s370 = smul.addr %s369, 32
      %s371 = smul.addr %s370, 4
      %s372 = scalar_lea.vmem %s10, %s371
      %vm374 = vcmask 261120
      %375 = vst.msk [vmem:[#allocation2] sm:$0xff] %vm374, 0.0
      %376 = vst.msk [vmem:[#allocation2 + $0x20] sm:$0xff] %vm374, 0.0
      %377 = vst.msk [vmem:[#allocation2 + $0x40] sm:$0xff] %vm374, 0.0
      %378 = vst.msk [vmem:[#allocation2 + $0x60] sm:$0xff] %vm374, 0.0
      %379 = vst.msk [vmem:[#allocation2 + $0x80] sm:$0xff] %vm374, 0.0
      %380 = vst.msk [vmem:[#allocation2 + $0xa0] sm:$0xff] %vm374, 0.0
      %381 = vst.msk [vmem:[#allocation2 + $0xc0] sm:$0xff] %vm374, 0.0
      %382 = vst.msk [vmem:[#allocation2 + $0xe0] sm:$0xff] %vm374, 0.0
      %383 = vst.msk [vmem:[#allocation2 + $0x100] sm:$0xff] %vm374, 0.0
      %384 = vst.msk [vmem:[#allocation2 + $0x120] sm:$0xff] %vm374, 0.0
      %385 = vst.msk [vmem:[#allocation2 + $0x140] sm:$0xff] %vm374, 0.0
      %386 = vst.msk [vmem:[#allocation2 + $0x160] sm:$0xff] %vm374, 0.0
      %387 = vst.msk [vmem:[#allocation2 + $0x180] sm:$0xff] %vm374, 0.0
      %388 = vst.msk [vmem:[#allocation2 + $0x1a0] sm:$0xff] %vm374, 0.0
      %389 = vst.msk [vmem:[#allocation2 + $0x1c0] sm:$0xff] %vm374, 0.0
      %390 = vst.msk [vmem:[#allocation2 + $0x1e0] sm:$0xff] %vm374, 0.0
      %391 = vst.msk [vmem:[#allocation2 + $0x200] sm:$0xff] %vm374, 0.0
      %392 = vst.msk [vmem:[#allocation2 + $0x220] sm:$0xff] %vm374, 0.0
      %393 = vst.msk [vmem:[#allocation2 + $0x18] sm:$0xff] %vm374, 0.0
      %394 = vst.msk [vmem:[#allocation2 + $0x38] sm:$0xff] %vm374, 0.0
      %395 = vst.msk [vmem:[#allocation2 + $0x58] sm:$0xff] %vm374, 0.0
      %396 = vst.msk [vmem:[#allocation2 + $0x78] sm:$0xff] %vm374, 0.0
      %397 = vst.msk [vmem:[#allocation2 + $0x98] sm:$0xff] %vm374, 0.0
      %398 = vst.msk [vmem:[#allocation2 + $0xb8] sm:$0xff] %vm374, 0.0
      %399 = vst.msk [vmem:[#allocation2 + $0xd8] sm:$0xff] %vm374, 0.0
      %400 = vst.msk [vmem:[#allocation2 + $0xf8] sm:$0xff] %vm374, 0.0
      %401 = vst.msk [vmem:[#allocation2 + $0x118] sm:$0xff] %vm374, 0.0
      %402 = vst.msk [vmem:[#allocation2 + $0x138] sm:$0xff] %vm374, 0.0
      %403 = vst.msk [vmem:[#allocation2 + $0x158] sm:$0xff] %vm374, 0.0
      %404 = vst.msk [vmem:[#allocation2 + $0x178] sm:$0xff] %vm374, 0.0
      %405 = vst.msk [vmem:[#allocation2 + $0x198] sm:$0xff] %vm374, 0.0
      %406 = vst.msk [vmem:[#allocation2 + $0x1b8] sm:$0xff] %vm374, 0.0
      %407 = vst.msk [vmem:[#allocation2 + $0x1d8] sm:$0xff] %vm374, 0.0
      %408 = vst.msk [vmem:[#allocation2 + $0x1f8] sm:$0xff] %vm374, 0.0
      %409 = vst.msk [vmem:[#allocation2 + $0x218] sm:$0xff] %vm374, 0.0
      %410 = vst.msk [vmem:[#allocation2 + $0x238] sm:$0xff] %vm374, 0.0
      %411 = vst.msk [vmem:[#allocation2] sm:$0xff] %vm374, 0.0
      %412 = vst.msk [vmem:[#allocation2 + $0x8] sm:$0xff] %vm374, 0.0
      %413 = vst.msk [vmem:[#allocation2 + $0x10] sm:$0xff] %vm374, 0.0
      %414 = vst.msk [vmem:[#allocation2 + $0x18] sm:$0xff] %vm374, 0.0
      %s415 = scalar_lea.vmem [#allocation2], 544
      %416 = vst.msk [vmem:[%s415] sm:$0xff] %vm374, 0.0
      %417 = vst.msk [vmem:[%s415 + $0x8] sm:$0xff] %vm374, 0.0
      %418 = vst.msk [vmem:[%s415 + $0x10] sm:$0xff] %vm374, 0.0
      %419 = vst.msk [vmem:[%s415 + $0x18] sm:$0xff] %vm374, 0.0
      %v420 = vld [vmem:[%s362] sm:$0xff]
      %v421 = vld [vmem:[%s362 + $0x8] sm:$0xff]
      %v422 = vld [vmem:[%s362 + $0x10] sm:$0xff]
      %v423 = vld [vmem:[%s362 + $0x18] sm:$0xff]
      %v424 = vld [vmem:[%s362 + $0x20] sm:$0xff]
      %v425 = vld [vmem:[%s362 + $0x28] sm:$0xff]
      %v426 = vld [vmem:[%s362 + $0x30] sm:$0xff]
      %v427 = vld [vmem:[%s362 + $0x38] sm:$0xff]
      %v428 = vld [vmem:[%s362 + $0x40] sm:$0xff]
      %v429 = vld [vmem:[%s362 + $0x48] sm:$0xff]
      %v430 = vld [vmem:[%s362 + $0x50] sm:$0xff]
      %v431 = vld [vmem:[%s362 + $0x58] sm:$0xff]
      %v432 = vld [vmem:[%s362 + $0x60] sm:$0xff]
      %v433 = vld [vmem:[%s362 + $0x68] sm:$0xff]
      %v434 = vld [vmem:[%s362 + $0x70] sm:$0xff]
      %v435 = vld [vmem:[%s362 + $0x78] sm:$0xff]
      %v436 = vld [vmem:[%s362 + $0x80] sm:$0xff]
      %v437 = vld [vmem:[%s362 + $0x88] sm:$0xff]
      %v438 = vld [vmem:[%s362 + $0x90] sm:$0xff]
      %v439 = vld [vmem:[%s362 + $0x98] sm:$0xff]
      %v440 = vld [vmem:[%s362 + $0xa0] sm:$0xff]
      %v441 = vld [vmem:[%s362 + $0xa8] sm:$0xff]
      %v442 = vld [vmem:[%s362 + $0xb0] sm:$0xff]
      %v443 = vld [vmem:[%s362 + $0xb8] sm:$0xff]
      %v444 = vld [vmem:[%s362 + $0xc0] sm:$0xff]
      %v445 = vld [vmem:[%s362 + $0xc8] sm:$0xff]
      %v446 = vld [vmem:[%s362 + $0xd0] sm:$0xff]
      %v447 = vld [vmem:[%s362 + $0xd8] sm:$0xff]
      %v448 = vld [vmem:[%s362 + $0xe0] sm:$0xff]
      %v449 = vld [vmem:[%s362 + $0xe8] sm:$0xff]
      %v450 = vld [vmem:[%s362 + $0xf0] sm:$0xff]
      %v451 = vld [vmem:[%s362 + $0xf8] sm:$0xff]
      %s452 = scalar_lea.vmem [#allocation2], 32
      %vm453 = vcmask 64512
      %454 = vst.msk [vmem:[%s452 + $0x8] sm:$0xff] %vm453, %v420
      %455 = vst.msk [vmem:[%s452 + $0x10] sm:$0xff] %vm453, %v421
      %456 = vst.msk [vmem:[%s452 + $0x28] sm:$0xff] %vm453, %v422
      %457 = vst.msk [vmem:[%s452 + $0x30] sm:$0xff] %vm453, %v423
      %458 = vst.msk [vmem:[%s452 + $0x48] sm:$0xff] %vm453, %v424
      %459 = vst.msk [vmem:[%s452 + $0x50] sm:$0xff] %vm453, %v425
      %460 = vst.msk [vmem:[%s452 + $0x68] sm:$0xff] %vm453, %v426
      %461 = vst.msk [vmem:[%s452 + $0x70] sm:$0xff] %vm453, %v427
      %462 = vst.msk [vmem:[%s452 + $0x88] sm:$0xff] %vm453, %v428
      %463 = vst.msk [vmem:[%s452 + $0x90] sm:$0xff] %vm453, %v429
      %464 = vst.msk [vmem:[%s452 + $0xa8] sm:$0xff] %vm453, %v430
      %465 = vst.msk [vmem:[%s452 + $0xb0] sm:$0xff] %vm453, %v431
      %466 = vst.msk [vmem:[%s452 + $0xc8] sm:$0xff] %vm453, %v432
      %467 = vst.msk [vmem:[%s452 + $0xd0] sm:$0xff] %vm453, %v433
      %468 = vst.msk [vmem:[%s452 + $0xe8] sm:$0xff] %vm453, %v434
      %469 = vst.msk [vmem:[%s452 + $0xf0] sm:$0xff] %vm453, %v435
      %470 = vst.msk [vmem:[%s452 + $0x108] sm:$0xff] %vm453, %v436
      %471 = vst.msk [vmem:[%s452 + $0x110] sm:$0xff] %vm453, %v437
      %472 = vst.msk [vmem:[%s452 + $0x128] sm:$0xff] %vm453, %v438
      %473 = vst.msk [vmem:[%s452 + $0x130] sm:$0xff] %vm453, %v439
      %474 = vst.msk [vmem:[%s452 + $0x148] sm:$0xff] %vm453, %v440
      %475 = vst.msk [vmem:[%s452 + $0x150] sm:$0xff] %vm453, %v441
      %476 = vst.msk [vmem:[%s452 + $0x168] sm:$0xff] %vm453, %v442
      %477 = vst.msk [vmem:[%s452 + $0x170] sm:$0xff] %vm453, %v443
      %478 = vst.msk [vmem:[%s452 + $0x188] sm:$0xff] %vm453, %v444
      %479 = vst.msk [vmem:[%s452 + $0x190] sm:$0xff] %vm453, %v445
      %480 = vst.msk [vmem:[%s452 + $0x1a8] sm:$0xff] %vm453, %v446
      %481 = vst.msk [vmem:[%s452 + $0x1b0] sm:$0xff] %vm453, %v447
      %482 = vst.msk [vmem:[%s452 + $0x1c8] sm:$0xff] %vm453, %v448
      %483 = vst.msk [vmem:[%s452 + $0x1d0] sm:$0xff] %vm453, %v449
      %484 = vst.msk [vmem:[%s452 + $0x1e8] sm:$0xff] %vm453, %v450
      %485 = vst.msk [vmem:[%s452 + $0x1f0] sm:$0xff] %vm453, %v451
      %v486 = vld [vmem:[#allocation2 + $0x7] sm:$0xff]
      %v487 = vld [vmem:[#allocation2 + $0xf] sm:$0xff]
      %v488 = vld [vmem:[#allocation2 + $0x27] sm:$0xff]
      %v489 = vld [vmem:[#allocation2 + $0x2f] sm:$0xff]
      %v490 = vld [vmem:[#allocation2 + $0x47] sm:$0xff]
      %v491 = vld [vmem:[#allocation2 + $0x4f] sm:$0xff]
      %v492 = vld [vmem:[#allocation2 + $0x67] sm:$0xff]
      %v493 = vld [vmem:[#allocation2 + $0x6f] sm:$0xff]
      %v494 = vld [vmem:[#allocation2 + $0x87] sm:$0xff]
      %v495 = vld [vmem:[#allocation2 + $0x8f] sm:$0xff]
      %v496 = vld [vmem:[#allocation2 + $0xa7] sm:$0xff]
      %v497 = vld [vmem:[#allocation2 + $0xaf] sm:$0xff]
      %v498 = vld [vmem:[#allocation2 + $0xc7] sm:$0xff]
      %v499 = vld [vmem:[#allocation2 + $0xcf] sm:$0xff]
      %v500 = vld [vmem:[#allocation2 + $0xe7] sm:$0xff]
      %v501 = vld [vmem:[#allocation2 + $0xef] sm:$0xff]
      %v502 = vld [vmem:[#allocation2 + $0x107] sm:$0xff]
      %v503 = vld [vmem:[#allocation2 + $0x10f] sm:$0xff]
      %v504 = vld [vmem:[#allocation2 + $0x127] sm:$0xff]
      %v505 = vld [vmem:[#allocation2 + $0x12f] sm:$0xff]
      %v506 = vld [vmem:[#allocation2 + $0x147] sm:$0xff]
      %v507 = vld [vmem:[#allocation2 + $0x14f] sm:$0xff]
      %v508 = vld [vmem:[#allocation2 + $0x167] sm:$0xff]
      %v509 = vld [vmem:[#allocation2 + $0x16f] sm:$0xff]
      %v510 = vld [vmem:[#allocation2 + $0x187] sm:$0xff]
      %v511 = vld [vmem:[#allocation2 + $0x18f] sm:$0xff]
      %v512 = vld [vmem:[#allocation2 + $0x1a7] sm:$0xff]
      %v513 = vld [vmem:[#allocation2 + $0x1af] sm:$0xff]
      %v514 = vld [vmem:[#allocation2 + $0x1c7] sm:$0xff]
      %v515 = vld [vmem:[#allocation2 + $0x1cf] sm:$0xff]
      %v516 = vld [vmem:[#allocation2 + $0x1e7] sm:$0xff]
      %v517 = vld [vmem:[#allocation2 + $0x1ef] sm:$0xff]
      %v518 = vpack.c.bf16 %v487, %v486
      %v519 = vpack.c.bf16 %v489, %v488
      %v520 = vpack.c.bf16 %v491, %v490
      %v521 = vpack.c.bf16 %v493, %v492
      %v522 = vpack.c.bf16 %v495, %v494
      %v523 = vpack.c.bf16 %v497, %v496
      %v524 = vpack.c.bf16 %v499, %v498
      %v525 = vpack.c.bf16 %v501, %v500
      %v526 = vpack.c.bf16 %v503, %v502
      %v527 = vpack.c.bf16 %v505, %v504
      %v528 = vpack.c.bf16 %v507, %v506
      %v529 = vpack.c.bf16 %v509, %v508
      %v530 = vpack.c.bf16 %v511, %v510
      %v531 = vpack.c.bf16 %v513, %v512
      %v532 = vpack.c.bf16 %v515, %v514
      %v533 = vpack.c.bf16 %v517, %v516
      %v534 = vld [vmem:[%s1] sm:$0xf]
      %v535 = vld [vmem:[#allocation2 + $0x8] sm:$0xff]
      %v536 = vld [vmem:[#allocation2 + $0x10] sm:$0xff]
      %v537 = vld [vmem:[#allocation2 + $0x28] sm:$0xff]
      %v538 = vld [vmem:[#allocation2 + $0x30] sm:$0xff]
      %v539 = vld [vmem:[#allocation2 + $0x48] sm:$0xff]
      %v540 = vld [vmem:[#allocation2 + $0x50] sm:$0xff]
      %v541 = vld [vmem:[#allocation2 + $0x68] sm:$0xff]
      %v542 = vld [vmem:[#allocation2 + $0x70] sm:$0xff]
      %v543 = vld [vmem:[#allocation2 + $0x88] sm:$0xff]
      %v544 = vld [vmem:[#allocation2 + $0x90] sm:$0xff]
      %v545 = vld [vmem:[#allocation2 + $0xa8] sm:$0xff]
      %v546 = vld [vmem:[#allocation2 + $0xb0] sm:$0xff]
      %v547 = vld [vmem:[#allocation2 + $0xc8] sm:$0xff]
      %v548 = vld [vmem:[#allocation2 + $0xd0] sm:$0xff]
      %v549 = vld [vmem:[#allocation2 + $0xe8] sm:$0xff]
      %v550 = vld [vmem:[#allocation2 + $0xf0] sm:$0xff]
      %v551 = vld [vmem:[#allocation2 + $0x108] sm:$0xff]
      %v552 = vld [vmem:[#allocation2 + $0x110] sm:$0xff]
      %v553 = vld [vmem:[#allocation2 + $0x128] sm:$0xff]
      %v554 = vld [vmem:[#allocation2 + $0x130] sm:$0xff]
      %v555 = vld [vmem:[#allocation2 + $0x148] sm:$0xff]
      %v556 = vld [vmem:[#allocation2 + $0x150] sm:$0xff]
      %v557 = vld [vmem:[#allocation2 + $0x168] sm:$0xff]
      %v558 = vld [vmem:[#allocation2 + $0x170] sm:$0xff]
      %v559 = vld [vmem:[#allocation2 + $0x188] sm:$0xff]
      %v560 = vld [vmem:[#allocation2 + $0x190] sm:$0xff]
      %v561 = vld [vmem:[#allocation2 + $0x1a8] sm:$0xff]
      %v562 = vld [vmem:[#allocation2 + $0x1b0] sm:$0xff]
      %v563 = vld [vmem:[#allocation2 + $0x1c8] sm:$0xff]
      %v564 = vld [vmem:[#allocation2 + $0x1d0] sm:$0xff]
      %v565 = vld [vmem:[#allocation2 + $0x1e8] sm:$0xff]
      %v566 = vld [vmem:[#allocation2 + $0x1f0] sm:$0xff]
      %v567 = vpack.c.bf16 %v536, %v535
      %v568 = vpack.c.bf16 %v538, %v537
      %v569 = vpack.c.bf16 %v540, %v539
      %v570 = vpack.c.bf16 %v542, %v541
      %v571 = vpack.c.bf16 %v544, %v543
      %v572 = vpack.c.bf16 %v546, %v545
      %v573 = vpack.c.bf16 %v548, %v547
      %v574 = vpack.c.bf16 %v550, %v549
      %v575 = vpack.c.bf16 %v552, %v551
      %v576 = vpack.c.bf16 %v554, %v553
      %v577 = vpack.c.bf16 %v556, %v555
      %v578 = vpack.c.bf16 %v558, %v557
      %v579 = vpack.c.bf16 %v560, %v559
      %v580 = vpack.c.bf16 %v562, %v561
      %v581 = vpack.c.bf16 %v564, %v563
      %v582 = vpack.c.bf16 %v566, %v565
      %s583 = scalar_lea.vmem %s1, 4
      %v584 = vld [vmem:[%s583] sm:$0xf]
      %v586 = vsel %vm453, %v567, 0
      %v589 = vsel %vm453, %v568, 0
      %v592 = vsel %vm453, %v569, 0
      %v595 = vsel %vm453, %v570, 0
      %v598 = vsel %vm453, %v571, 0
      %v601 = vsel %vm453, %v572, 0
      %v604 = vsel %vm453, %v573, 0
      %v607 = vsel %vm453, %v574, 0
      %v610 = vsel %vm453, %v575, 0
      %v613 = vsel %vm453, %v576, 0
      %v616 = vsel %vm453, %v577, 0
      %v619 = vsel %vm453, %v578, 0
      %v622 = vsel %vm453, %v579, 0
      %v625 = vsel %vm453, %v580, 0
      %v628 = vsel %vm453, %v581, 0
      %v631 = vsel %vm453, %v582, 0
      %vm633 = vcmask 1043456
      %v635 = vsel %vm633, %v584, 0
      %637 = vmatpush.bf16.msra.mxu0 0
      %638 = vmatpush.bf16.msra.mxu0 0
      %639 = vmatpush.bf16.msra.mxu0 0
      %640 = vmatpush.bf16.msra.mxu0 0
      %641 = vmatpush.bf16.msra.mxu0 0
      %642 = vmatpush.bf16.msra.mxu0 0
      %643 = vmatpush.bf16.msra.mxu0 0
      %644 = vmatpush.bf16.msra.mxu0 %v635
      %645 = vmatmul.bf16.gmra.mxu0 %v586
      %v646 = vpop.f32.mrf.mxu0
      %v647 = vadd.f32 0.0, %v646
      %v648 = vpop.f32.mrf.mxu0
      %v649 = vadd.f32 0.0, %v648
      %650 = vmatmul.bf16.gmra.mxu0 %v589
      %v651 = vpop.f32.mrf.mxu0
      %v652 = vadd.f32 0.0, %v651
      %v653 = vpop.f32.mrf.mxu0
      %v654 = vadd.f32 0.0, %v653
      %655 = vmatmul.bf16.gmra.mxu0 %v592
      %v656 = vpop.f32.mrf.mxu0
      %v657 = vadd.f32 0.0, %v656
      %v658 = vpop.f32.mrf.mxu0
      %v659 = vadd.f32 0.0, %v658
      %660 = vmatmul.bf16.gmra.mxu0 %v595
      %v661 = vpop.f32.mrf.mxu0
      %v662 = vadd.f32 0.0, %v661
      %v663 = vpop.f32.mrf.mxu0
      %v664 = vadd.f32 0.0, %v663
      %665 = vmatmul.bf16.gmra.mxu0 %v598
      %v666 = vpop.f32.mrf.mxu0
      %v667 = vadd.f32 0.0, %v666
      %v668 = vpop.f32.mrf.mxu0
      %v669 = vadd.f32 0.0, %v668
      %670 = vmatmul.bf16.gmra.mxu0 %v601
      %v671 = vpop.f32.mrf.mxu0
      %v672 = vadd.f32 0.0, %v671
      %v673 = vpop.f32.mrf.mxu0
      %v674 = vadd.f32 0.0, %v673
      %675 = vmatmul.bf16.gmra.mxu0 %v604
      %v676 = vpop.f32.mrf.mxu0
      %v677 = vadd.f32 0.0, %v676
      %v678 = vpop.f32.mrf.mxu0
      %v679 = vadd.f32 0.0, %v678
      %680 = vmatmul.bf16.gmra.mxu0 %v607
      %v681 = vpop.f32.mrf.mxu0
      %v682 = vadd.f32 0.0, %v681
      %v683 = vpop.f32.mrf.mxu0
      %v684 = vadd.f32 0.0, %v683
      %685 = vmatmul.bf16.gmra.mxu0 %v610
      %v686 = vpop.f32.mrf.mxu0
      %v687 = vadd.f32 0.0, %v686
      %v688 = vpop.f32.mrf.mxu0
      %v689 = vadd.f32 0.0, %v688
      %690 = vmatmul.bf16.gmra.mxu0 %v613
      %v691 = vpop.f32.mrf.mxu0
      %v692 = vadd.f32 0.0, %v691
      %v693 = vpop.f32.mrf.mxu0
      %v694 = vadd.f32 0.0, %v693
      %695 = vmatmul.bf16.gmra.mxu0 %v616
      %v696 = vpop.f32.mrf.mxu0
      %v697 = vadd.f32 0.0, %v696
      %v698 = vpop.f32.mrf.mxu0
      %v699 = vadd.f32 0.0, %v698
      %700 = vmatmul.bf16.gmra.mxu0 %v619
      %v701 = vpop.f32.mrf.mxu0
      %v702 = vadd.f32 0.0, %v701
      %v703 = vpop.f32.mrf.mxu0
      %v704 = vadd.f32 0.0, %v703
      %705 = vmatmul.bf16.gmra.mxu0 %v622
      %v706 = vpop.f32.mrf.mxu0
      %v707 = vadd.f32 0.0, %v706
      %v708 = vpop.f32.mrf.mxu0
      %v709 = vadd.f32 0.0, %v708
      %710 = vmatmul.bf16.gmra.mxu0 %v625
      %v711 = vpop.f32.mrf.mxu0
      %v712 = vadd.f32 0.0, %v711
      %v713 = vpop.f32.mrf.mxu0
      %v714 = vadd.f32 0.0, %v713
      %715 = vmatmul.bf16.gmra.mxu0 %v628
      %v716 = vpop.f32.mrf.mxu0
      %v717 = vadd.f32 0.0, %v716
      %v718 = vpop.f32.mrf.mxu0
      %v719 = vadd.f32 0.0, %v718
      %720 = vmatmul.bf16.gmra.mxu0 %v631
      %v721 = vpop.f32.mrf.mxu0
      %v722 = vadd.f32 0.0, %v721
      %v723 = vpop.f32.mrf.mxu0
      %v724 = vadd.f32 0.0, %v723
      %725 = vdwg.mxu0
      %v727 = vsel %vm453, %v518, 0
      %v730 = vsel %vm453, %v519, 0
      %v733 = vsel %vm453, %v520, 0
      %v736 = vsel %vm453, %v521, 0
      %v739 = vsel %vm453, %v522, 0
      %v742 = vsel %vm453, %v523, 0
      %v745 = vsel %vm453, %v524, 0
      %v748 = vsel %vm453, %v525, 0
      %v751 = vsel %vm453, %v526, 0
      %v754 = vsel %vm453, %v527, 0
      %v757 = vsel %vm453, %v528, 0
      %v760 = vsel %vm453, %v529, 0
      %v763 = vsel %vm453, %v530, 0
      %v766 = vsel %vm453, %v531, 0
      %v769 = vsel %vm453, %v532, 0
      %v772 = vsel %vm453, %v533, 0
      %v775 = vsel %vm633, %v534, 0
      %777 = vmatpush.bf16.msra.mxu0 0
      %778 = vmatpush.bf16.msra.mxu0 0
      %779 = vmatpush.bf16.msra.mxu0 0
      %780 = vmatpush.bf16.msra.mxu0 0
      %781 = vmatpush.bf16.msra.mxu0 0
      %782 = vmatpush.bf16.msra.mxu0 0
      %783 = vmatpush.bf16.msra.mxu0 0
      %784 = vmatpush.bf16.msra.mxu0 %v775
      %785 = vmatmul.bf16.gmra.mxu0 %v727
      %v786 = vpop.f32.mrf.mxu0
      %v787 = vadd.f32 %v647, %v786
      %v788 = vpop.f32.mrf.mxu0
      %v789 = vadd.f32 %v649, %v788
      %790 = vmatmul.bf16.gmra.mxu0 %v730
      %v791 = vpop.f32.mrf.mxu0
      %v792 = vadd.f32 %v652, %v791
      %v793 = vpop.f32.mrf.mxu0
      %v794 = vadd.f32 %v654, %v793
      %795 = vmatmul.bf16.gmra.mxu0 %v733
      %v796 = vpop.f32.mrf.mxu0
      %v797 = vadd.f32 %v657, %v796
      %v798 = vpop.f32.mrf.mxu0
      %v799 = vadd.f32 %v659, %v798
      %800 = vmatmul.bf16.gmra.mxu0 %v736
      %v801 = vpop.f32.mrf.mxu0
      %v802 = vadd.f32 %v662, %v801
      %v803 = vpop.f32.mrf.mxu0
      %v804 = vadd.f32 %v664, %v803
      %805 = vmatmul.bf16.gmra.mxu0 %v739
      %v806 = vpop.f32.mrf.mxu0
      %v807 = vadd.f32 %v667, %v806
      %v808 = vpop.f32.mrf.mxu0
      %v809 = vadd.f32 %v669, %v808
      %810 = vmatmul.bf16.gmra.mxu0 %v742
      %v811 = vpop.f32.mrf.mxu0
      %v812 = vadd.f32 %v672, %v811
      %v813 = vpop.f32.mrf.mxu0
      %v814 = vadd.f32 %v674, %v813
      %815 = vmatmul.bf16.gmra.mxu0 %v745
      %v816 = vpop.f32.mrf.mxu0
      %v817 = vadd.f32 %v677, %v816
      %v818 = vpop.f32.mrf.mxu0
      %v819 = vadd.f32 %v679, %v818
      %820 = vmatmul.bf16.gmra.mxu0 %v748
      %v821 = vpop.f32.mrf.mxu0
      %v822 = vadd.f32 %v682, %v821
      %v823 = vpop.f32.mrf.mxu0
      %v824 = vadd.f32 %v684, %v823
      %825 = vmatmul.bf16.gmra.mxu0 %v751
      %v826 = vpop.f32.mrf.mxu0
      %v827 = vadd.f32 %v687, %v826
      %v828 = vpop.f32.mrf.mxu0
      %v829 = vadd.f32 %v689, %v828
      %830 = vmatmul.bf16.gmra.mxu0 %v754
      %v831 = vpop.f32.mrf.mxu0
      %v832 = vadd.f32 %v692, %v831
      %v833 = vpop.f32.mrf.mxu0
      %v834 = vadd.f32 %v694, %v833
      %835 = vmatmul.bf16.gmra.mxu0 %v757
      %v836 = vpop.f32.mrf.mxu0
      %v837 = vadd.f32 %v697, %v836
      %v838 = vpop.f32.mrf.mxu0
      %v839 = vadd.f32 %v699, %v838
      %840 = vmatmul.bf16.gmra.mxu0 %v760
      %v841 = vpop.f32.mrf.mxu0
      %v842 = vadd.f32 %v702, %v841
      %v843 = vpop.f32.mrf.mxu0
      %v844 = vadd.f32 %v704, %v843
      %845 = vmatmul.bf16.gmra.mxu0 %v763
      %v846 = vpop.f32.mrf.mxu0
      %v847 = vadd.f32 %v707, %v846
      %v848 = vpop.f32.mrf.mxu0
      %v849 = vadd.f32 %v709, %v848
      %850 = vmatmul.bf16.gmra.mxu0 %v766
      %v851 = vpop.f32.mrf.mxu0
      %v852 = vadd.f32 %v712, %v851
      %v853 = vpop.f32.mrf.mxu0
      %v854 = vadd.f32 %v714, %v853
      %855 = vmatmul.bf16.gmra.mxu0 %v769
      %v856 = vpop.f32.mrf.mxu0
      %v857 = vadd.f32 %v717, %v856
      %v858 = vpop.f32.mrf.mxu0
      %v859 = vadd.f32 %v719, %v858
      %860 = vmatmul.bf16.gmra.mxu0 %v772
      %v861 = vpop.f32.mrf.mxu0
      %v862 = vadd.f32 %v722, %v861
      %v863 = vpop.f32.mrf.mxu0
      %v864 = vadd.f32 %v724, %v863
      %865 = vdwg.mxu0
      %v866 = vld [vmem:[#allocation2 + $0x9] sm:$0xff]
      %v867 = vld [vmem:[#allocation2 + $0x11] sm:$0xff]
      %v868 = vld [vmem:[#allocation2 + $0x29] sm:$0xff]
      %v869 = vld [vmem:[#allocation2 + $0x31] sm:$0xff]
      %v870 = vld [vmem:[#allocation2 + $0x49] sm:$0xff]
      %v871 = vld [vmem:[#allocation2 + $0x51] sm:$0xff]
      %v872 = vld [vmem:[#allocation2 + $0x69] sm:$0xff]
      %v873 = vld [vmem:[#allocation2 + $0x71] sm:$0xff]
      %v874 = vld [vmem:[#allocation2 + $0x89] sm:$0xff]
      %v875 = vld [vmem:[#allocation2 + $0x91] sm:$0xff]
      %v876 = vld [vmem:[#allocation2 + $0xa9] sm:$0xff]
      %v877 = vld [vmem:[#allocation2 + $0xb1] sm:$0xff]
      %v878 = vld [vmem:[#allocation2 + $0xc9] sm:$0xff]
      %v879 = vld [vmem:[#allocation2 + $0xd1] sm:$0xff]
      %v880 = vld [vmem:[#allocation2 + $0xe9] sm:$0xff]
      %v881 = vld [vmem:[#allocation2 + $0xf1] sm:$0xff]
      %v882 = vld [vmem:[#allocation2 + $0x109] sm:$0xff]
      %v883 = vld [vmem:[#allocation2 + $0x111] sm:$0xff]
      %v884 = vld [vmem:[#allocation2 + $0x129] sm:$0xff]
      %v885 = vld [vmem:[#allocation2 + $0x131] sm:$0xff]
      %v886 = vld [vmem:[#allocation2 + $0x149] sm:$0xff]
      %v887 = vld [vmem:[#allocation2 + $0x151] sm:$0xff]
      %v888 = vld [vmem:[#allocation2 + $0x169] sm:$0xff]
      %v889 = vld [vmem:[#allocation2 + $0x171] sm:$0xff]
      %v890 = vld [vmem:[#allocation2 + $0x189] sm:$0xff]
      %v891 = vld [vmem:[#allocation2 + $0x191] sm:$0xff]
      %v892 = vld [vmem:[#allocation2 + $0x1a9] sm:$0xff]
      %v893 = vld [vmem:[#allocation2 + $0x1b1] sm:$0xff]
      %v894 = vld [vmem:[#allocation2 + $0x1c9] sm:$0xff]
      %v895 = vld [vmem:[#allocation2 + $0x1d1] sm:$0xff]
      %v896 = vld [vmem:[#allocation2 + $0x1e9] sm:$0xff]
      %v897 = vld [vmem:[#allocation2 + $0x1f1] sm:$0xff]
      %v898 = vpack.c.bf16 %v867, %v866
      %v899 = vpack.c.bf16 %v869, %v868
      %v900 = vpack.c.bf16 %v871, %v870
      %v901 = vpack.c.bf16 %v873, %v872
      %v902 = vpack.c.bf16 %v875, %v874
      %v903 = vpack.c.bf16 %v877, %v876
      %v904 = vpack.c.bf16 %v879, %v878
      %v905 = vpack.c.bf16 %v881, %v880
      %v906 = vpack.c.bf16 %v883, %v882
      %v907 = vpack.c.bf16 %v885, %v884
      %v908 = vpack.c.bf16 %v887, %v886
      %v909 = vpack.c.bf16 %v889, %v888
      %v910 = vpack.c.bf16 %v891, %v890
      %v911 = vpack.c.bf16 %v893, %v892
      %v912 = vpack.c.bf16 %v895, %v894
      %v913 = vpack.c.bf16 %v897, %v896
      %s914 = scalar_lea.vmem %s1, 8
      %v915 = vld [vmem:[%s914] sm:$0xf]
      %v917 = vsel %vm453, %v898, 0
      %v920 = vsel %vm453, %v899, 0
      %v923 = vsel %vm453, %v900, 0
      %v926 = vsel %vm453, %v901, 0
      %v929 = vsel %vm453, %v902, 0
      %v932 = vsel %vm453, %v903, 0
      %v935 = vsel %vm453, %v904, 0
      %v938 = vsel %vm453, %v905, 0
      %v941 = vsel %vm453, %v906, 0
      %v944 = vsel %vm453, %v907, 0
      %v947 = vsel %vm453, %v908, 0
      %v950 = vsel %vm453, %v909, 0
      %v953 = vsel %vm453, %v910, 0
      %v956 = vsel %vm453, %v911, 0
      %v959 = vsel %vm453, %v912, 0
      %v962 = vsel %vm453, %v913, 0
      %v965 = vsel %vm633, %v915, 0
      %967 = vmatpush.bf16.msra.mxu0 0
      %968 = vmatpush.bf16.msra.mxu0 0
      %969 = vmatpush.bf16.msra.mxu0 0
      %970 = vmatpush.bf16.msra.mxu0 0
      %971 = vmatpush.bf16.msra.mxu0 0
      %972 = vmatpush.bf16.msra.mxu0 0
      %973 = vmatpush.bf16.msra.mxu0 0
      %974 = vmatpush.bf16.msra.mxu0 %v965
      %975 = vmatmul.bf16.gmra.mxu0 %v917
      %v976 = vpop.f32.mrf.mxu0
      %v977 = vadd.f32 0.0, %v976
      %v978 = vpop.f32.mrf.mxu0
      %v979 = vadd.f32 0.0, %v978
      %980 = vmatmul.bf16.gmra.mxu0 %v920
      %v981 = vpop.f32.mrf.mxu0
      %v982 = vadd.f32 0.0, %v981
      %v983 = vpop.f32.mrf.mxu0
      %v984 = vadd.f32 0.0, %v983
      %985 = vmatmul.bf16.gmra.mxu0 %v923
      %v986 = vpop.f32.mrf.mxu0
      %v987 = vadd.f32 0.0, %v986
      %v988 = vpop.f32.mrf.mxu0
      %v989 = vadd.f32 0.0, %v988
      %990 = vmatmul.bf16.gmra.mxu0 %v926
      %v991 = vpop.f32.mrf.mxu0
      %v992 = vadd.f32 0.0, %v991
      %v993 = vpop.f32.mrf.mxu0
      %v994 = vadd.f32 0.0, %v993
      %995 = vmatmul.bf16.gmra.mxu0 %v929
      %v996 = vpop.f32.mrf.mxu0
      %v997 = vadd.f32 0.0, %v996
      %v998 = vpop.f32.mrf.mxu0
      %v999 = vadd.f32 0.0, %v998
      %1000 = vmatmul.bf16.gmra.mxu0 %v932
      %v1001 = vpop.f32.mrf.mxu0
      %v1002 = vadd.f32 0.0, %v1001
      %v1003 = vpop.f32.mrf.mxu0
      %v1004 = vadd.f32 0.0, %v1003
      %1005 = vmatmul.bf16.gmra.mxu0 %v935
      %v1006 = vpop.f32.mrf.mxu0
      %v1007 = vadd.f32 0.0, %v1006
      %v1008 = vpop.f32.mrf.mxu0
      %v1009 = vadd.f32 0.0, %v1008
      %1010 = vmatmul.bf16.gmra.mxu0 %v938
      %v1011 = vpop.f32.mrf.mxu0
      %v1012 = vadd.f32 0.0, %v1011
      %v1013 = vpop.f32.mrf.mxu0
      %v1014 = vadd.f32 0.0, %v1013
      %1015 = vmatmul.bf16.gmra.mxu0 %v941
      %v1016 = vpop.f32.mrf.mxu0
      %v1017 = vadd.f32 0.0, %v1016
      %v1018 = vpop.f32.mrf.mxu0
      %v1019 = vadd.f32 0.0, %v1018
      %1020 = vmatmul.bf16.gmra.mxu0 %v944
      %v1021 = vpop.f32.mrf.mxu0
      %v1022 = vadd.f32 0.0, %v1021
      %v1023 = vpop.f32.mrf.mxu0
      %v1024 = vadd.f32 0.0, %v1023
      %1025 = vmatmul.bf16.gmra.mxu0 %v947
      %v1026 = vpop.f32.mrf.mxu0
      %v1027 = vadd.f32 0.0, %v1026
      %v1028 = vpop.f32.mrf.mxu0
      %v1029 = vadd.f32 0.0, %v1028
      %1030 = vmatmul.bf16.gmra.mxu0 %v950
      %v1031 = vpop.f32.mrf.mxu0
      %v1032 = vadd.f32 0.0, %v1031
      %v1033 = vpop.f32.mrf.mxu0
      %v1034 = vadd.f32 0.0, %v1033
      %1035 = vmatmul.bf16.gmra.mxu0 %v953
      %v1036 = vpop.f32.mrf.mxu0
      %v1037 = vadd.f32 0.0, %v1036
      %v1038 = vpop.f32.mrf.mxu0
      %v1039 = vadd.f32 0.0, %v1038
      %1040 = vmatmul.bf16.gmra.mxu0 %v956
      %v1041 = vpop.f32.mrf.mxu0
      %v1042 = vadd.f32 0.0, %v1041
      %v1043 = vpop.f32.mrf.mxu0
      %v1044 = vadd.f32 0.0, %v1043
      %1045 = vmatmul.bf16.gmra.mxu0 %v959
      %v1046 = vpop.f32.mrf.mxu0
      %v1047 = vadd.f32 0.0, %v1046
      %v1048 = vpop.f32.mrf.mxu0
      %v1049 = vadd.f32 0.0, %v1048
      %1050 = vmatmul.bf16.gmra.mxu0 %v962
      %v1051 = vpop.f32.mrf.mxu0
      %v1052 = vadd.f32 0.0, %v1051
      %v1053 = vpop.f32.mrf.mxu0
      %v1054 = vadd.f32 0.0, %v1053
      %1055 = vdwg.mxu0
      %v1056 = vadd.f32 %v787, %v977
      %v1057 = vadd.f32 %v789, %v979
      %v1058 = vadd.f32 %v792, %v982
      %v1059 = vadd.f32 %v794, %v984
      %v1060 = vadd.f32 %v797, %v987
      %v1061 = vadd.f32 %v799, %v989
      %v1062 = vadd.f32 %v802, %v992
      %v1063 = vadd.f32 %v804, %v994
      %v1064 = vadd.f32 %v807, %v997
      %v1065 = vadd.f32 %v809, %v999
      %v1066 = vadd.f32 %v812, %v1002
      %v1067 = vadd.f32 %v814, %v1004
      %v1068 = vadd.f32 %v817, %v1007
      %v1069 = vadd.f32 %v819, %v1009
      %v1070 = vadd.f32 %v822, %v1012
      %v1071 = vadd.f32 %v824, %v1014
      %v1072 = vadd.f32 %v827, %v1017
      %v1073 = vadd.f32 %v829, %v1019
      %v1074 = vadd.f32 %v832, %v1022
      %v1075 = vadd.f32 %v834, %v1024
      %v1076 = vadd.f32 %v837, %v1027
      %v1077 = vadd.f32 %v839, %v1029
      %v1078 = vadd.f32 %v842, %v1032
      %v1079 = vadd.f32 %v844, %v1034
      %v1080 = vadd.f32 %v847, %v1037
      %v1081 = vadd.f32 %v849, %v1039
      %v1082 = vadd.f32 %v852, %v1042
      %v1083 = vadd.f32 %v854, %v1044
      %v1084 = vadd.f32 %v857, %v1047
      %v1085 = vadd.f32 %v859, %v1049
      %v1086 = vadd.f32 %v862, %v1052
      %v1087 = vadd.f32 %v864, %v1054
      %v1088 = vld [vmem:[%s452 + $0x7] sm:$0xff]
      %v1089 = vld [vmem:[%s452 + $0xf] sm:$0xff]
      %v1090 = vld [vmem:[%s452 + $0x27] sm:$0xff]
      %v1091 = vld [vmem:[%s452 + $0x2f] sm:$0xff]
      %v1092 = vld [vmem:[%s452 + $0x47] sm:$0xff]
      %v1093 = vld [vmem:[%s452 + $0x4f] sm:$0xff]
      %v1094 = vld [vmem:[%s452 + $0x67] sm:$0xff]
      %v1095 = vld [vmem:[%s452 + $0x6f] sm:$0xff]
      %v1096 = vld [vmem:[%s452 + $0x87] sm:$0xff]
      %v1097 = vld [vmem:[%s452 + $0x8f] sm:$0xff]
      %v1098 = vld [vmem:[%s452 + $0xa7] sm:$0xff]
      %v1099 = vld [vmem:[%s452 + $0xaf] sm:$0xff]
      %v1100 = vld [vmem:[%s452 + $0xc7] sm:$0xff]
      %v1101 = vld [vmem:[%s452 + $0xcf] sm:$0xff]
      %v1102 = vld [vmem:[%s452 + $0xe7] sm:$0xff]
      %v1103 = vld [vmem:[%s452 + $0xef] sm:$0xff]
      %v1104 = vld [vmem:[%s452 + $0x107] sm:$0xff]
      %v1105 = vld [vmem:[%s452 + $0x10f] sm:$0xff]
      %v1106 = vld [vmem:[%s452 + $0x127] sm:$0xff]
      %v1107 = vld [vmem:[%s452 + $0x12f] sm:$0xff]
      %v1108 = vld [vmem:[%s452 + $0x147] sm:$0xff]
      %v1109 = vld [vmem:[%s452 + $0x14f] sm:$0xff]
      %v1110 = vld [vmem:[%s452 + $0x167] sm:$0xff]
      %v1111 = vld [vmem:[%s452 + $0x16f] sm:$0xff]
      %v1112 = vld [vmem:[%s452 + $0x187] sm:$0xff]
      %v1113 = vld [vmem:[%s452 + $0x18f] sm:$0xff]
      %v1114 = vld [vmem:[%s452 + $0x1a7] sm:$0xff]
      %v1115 = vld [vmem:[%s452 + $0x1af] sm:$0xff]
      %v1116 = vld [vmem:[%s452 + $0x1c7] sm:$0xff]
      %v1117 = vld [vmem:[%s452 + $0x1cf] sm:$0xff]
      %v1118 = vld [vmem:[%s452 + $0x1e7] sm:$0xff]
      %v1119 = vld [vmem:[%s452 + $0x1ef] sm:$0xff]
      %v1120 = vpack.c.bf16 %v1089, %v1088
      %v1121 = vpack.c.bf16 %v1091, %v1090
      %v1122 = vpack.c.bf16 %v1093, %v1092
      %v1123 = vpack.c.bf16 %v1095, %v1094
      %v1124 = vpack.c.bf16 %v1097, %v1096
      %v1125 = vpack.c.bf16 %v1099, %v1098
      %v1126 = vpack.c.bf16 %v1101, %v1100
      %v1127 = vpack.c.bf16 %v1103, %v1102
      %v1128 = vpack.c.bf16 %v1105, %v1104
      %v1129 = vpack.c.bf16 %v1107, %v1106
      %v1130 = vpack.c.bf16 %v1109, %v1108
      %v1131 = vpack.c.bf16 %v1111, %v1110
      %v1132 = vpack.c.bf16 %v1113, %v1112
      %v1133 = vpack.c.bf16 %v1115, %v1114
      %v1134 = vpack.c.bf16 %v1117, %v1116
      %v1135 = vpack.c.bf16 %v1119, %v1118
      %s1136 = scalar_lea.vmem %s1, 12
      %v1137 = vld [vmem:[%s1136] sm:$0xf]
      %v1139 = vsel %vm453, %v1120, 0
      %v1142 = vsel %vm453, %v1121, 0
      %v1145 = vsel %vm453, %v1122, 0
      %v1148 = vsel %vm453, %v1123, 0
      %v1151 = vsel %vm453, %v1124, 0
      %v1154 = vsel %vm453, %v1125, 0
      %v1157 = vsel %vm453, %v1126, 0
      %v1160 = vsel %vm453, %v1127, 0
      %v1163 = vsel %vm453, %v1128, 0
      %v1166 = vsel %vm453, %v1129, 0
      %v1169 = vsel %vm453, %v1130, 0
      %v1172 = vsel %vm453, %v1131, 0
      %v1175 = vsel %vm453, %v1132, 0
      %v1178 = vsel %vm453, %v1133, 0
      %v1181 = vsel %vm453, %v1134, 0
      %v1184 = vsel %vm453, %v1135, 0
      %v1187 = vsel %vm633, %v1137, 0
      %1189 = vmatpush.bf16.msra.mxu0 0
      %1190 = vmatpush.bf16.msra.mxu0 0
      %1191 = vmatpush.bf16.msra.mxu0 0
      %1192 = vmatpush.bf16.msra.mxu0 0
      %1193 = vmatpush.bf16.msra.mxu0 0
      %1194 = vmatpush.bf16.msra.mxu0 0
      %1195 = vmatpush.bf16.msra.mxu0 0
      %1196 = vmatpush.bf16.msra.mxu0 %v1187
      %1197 = vmatmul.bf16.gmra.mxu0 %v1139
      %v1198 = vpop.f32.mrf.mxu0
      %v1199 = vadd.f32 0.0, %v1198
      %v1200 = vpop.f32.mrf.mxu0
      %v1201 = vadd.f32 0.0, %v1200
      %1202 = vmatmul.bf16.gmra.mxu0 %v1142
      %v1203 = vpop.f32.mrf.mxu0
      %v1204 = vadd.f32 0.0, %v1203
      %v1205 = vpop.f32.mrf.mxu0
      %v1206 = vadd.f32 0.0, %v1205
      %1207 = vmatmul.bf16.gmra.mxu0 %v1145
      %v1208 = vpop.f32.mrf.mxu0
      %v1209 = vadd.f32 0.0, %v1208
      %v1210 = vpop.f32.mrf.mxu0
      %v1211 = vadd.f32 0.0, %v1210
      %1212 = vmatmul.bf16.gmra.mxu0 %v1148
      %v1213 = vpop.f32.mrf.mxu0
      %v1214 = vadd.f32 0.0, %v1213
      %v1215 = vpop.f32.mrf.mxu0
      %v1216 = vadd.f32 0.0, %v1215
      %1217 = vmatmul.bf16.gmra.mxu0 %v1151
      %v1218 = vpop.f32.mrf.mxu0
      %v1219 = vadd.f32 0.0, %v1218
      %v1220 = vpop.f32.mrf.mxu0
      %v1221 = vadd.f32 0.0, %v1220
      %1222 = vmatmul.bf16.gmra.mxu0 %v1154
      %v1223 = vpop.f32.mrf.mxu0
      %v1224 = vadd.f32 0.0, %v1223
      %v1225 = vpop.f32.mrf.mxu0
      %v1226 = vadd.f32 0.0, %v1225
      %1227 = vmatmul.bf16.gmra.mxu0 %v1157
      %v1228 = vpop.f32.mrf.mxu0
      %v1229 = vadd.f32 0.0, %v1228
      %v1230 = vpop.f32.mrf.mxu0
      %v1231 = vadd.f32 0.0, %v1230
      %1232 = vmatmul.bf16.gmra.mxu0 %v1160
      %v1233 = vpop.f32.mrf.mxu0
      %v1234 = vadd.f32 0.0, %v1233
      %v1235 = vpop.f32.mrf.mxu0
      %v1236 = vadd.f32 0.0, %v1235
      %1237 = vmatmul.bf16.gmra.mxu0 %v1163
      %v1238 = vpop.f32.mrf.mxu0
      %v1239 = vadd.f32 0.0, %v1238
      %v1240 = vpop.f32.mrf.mxu0
      %v1241 = vadd.f32 0.0, %v1240
      %1242 = vmatmul.bf16.gmra.mxu0 %v1166
      %v1243 = vpop.f32.mrf.mxu0
      %v1244 = vadd.f32 0.0, %v1243
      %v1245 = vpop.f32.mrf.mxu0
      %v1246 = vadd.f32 0.0, %v1245
      %1247 = vmatmul.bf16.gmra.mxu0 %v1169
      %v1248 = vpop.f32.mrf.mxu0
      %v1249 = vadd.f32 0.0, %v1248
      %v1250 = vpop.f32.mrf.mxu0
      %v1251 = vadd.f32 0.0, %v1250
      %1252 = vmatmul.bf16.gmra.mxu0 %v1172
      %v1253 = vpop.f32.mrf.mxu0
      %v1254 = vadd.f32 0.0, %v1253
      %v1255 = vpop.f32.mrf.mxu0
      %v1256 = vadd.f32 0.0, %v1255
      %1257 = vmatmul.bf16.gmra.mxu0 %v1175
      %v1258 = vpop.f32.mrf.mxu0
      %v1259 = vadd.f32 0.0, %v1258
      %v1260 = vpop.f32.mrf.mxu0
      %v1261 = vadd.f32 0.0, %v1260
      %1262 = vmatmul.bf16.gmra.mxu0 %v1178
      %v1263 = vpop.f32.mrf.mxu0
      %v1264 = vadd.f32 0.0, %v1263
      %v1265 = vpop.f32.mrf.mxu0
      %v1266 = vadd.f32 0.0, %v1265
      %1267 = vmatmul.bf16.gmra.mxu0 %v1181
      %v1268 = vpop.f32.mrf.mxu0
      %v1269 = vadd.f32 0.0, %v1268
      %v1270 = vpop.f32.mrf.mxu0
      %v1271 = vadd.f32 0.0, %v1270
      %1272 = vmatmul.bf16.gmra.mxu0 %v1184
      %v1273 = vpop.f32.mrf.mxu0
      %v1274 = vadd.f32 0.0, %v1273
      %v1275 = vpop.f32.mrf.mxu0
      %v1276 = vadd.f32 0.0, %v1275
      %1277 = vdwg.mxu0
      %v1278 = vadd.f32 %v1056, %v1199
      %v1279 = vadd.f32 %v1057, %v1201
      %v1280 = vadd.f32 %v1058, %v1204
      %v1281 = vadd.f32 %v1059, %v1206
      %v1282 = vadd.f32 %v1060, %v1209
      %v1283 = vadd.f32 %v1061, %v1211
      %v1284 = vadd.f32 %v1062, %v1214
      %v1285 = vadd.f32 %v1063, %v1216
      %v1286 = vadd.f32 %v1064, %v1219
      %v1287 = vadd.f32 %v1065, %v1221
      %v1288 = vadd.f32 %v1066, %v1224
      %v1289 = vadd.f32 %v1067, %v1226
      %v1290 = vadd.f32 %v1068, %v1229
      %v1291 = vadd.f32 %v1069, %v1231
      %v1292 = vadd.f32 %v1070, %v1234
      %v1293 = vadd.f32 %v1071, %v1236
      %v1294 = vadd.f32 %v1072, %v1239
      %v1295 = vadd.f32 %v1073, %v1241
      %v1296 = vadd.f32 %v1074, %v1244
      %v1297 = vadd.f32 %v1075, %v1246
      %v1298 = vadd.f32 %v1076, %v1249
      %v1299 = vadd.f32 %v1077, %v1251
      %v1300 = vadd.f32 %v1078, %v1254
      %v1301 = vadd.f32 %v1079, %v1256
      %v1302 = vadd.f32 %v1080, %v1259
      %v1303 = vadd.f32 %v1081, %v1261
      %v1304 = vadd.f32 %v1082, %v1264
      %v1305 = vadd.f32 %v1083, %v1266
      %v1306 = vadd.f32 %v1084, %v1269
      %v1307 = vadd.f32 %v1085, %v1271
      %v1308 = vadd.f32 %v1086, %v1274
      %v1309 = vadd.f32 %v1087, %v1276
      %v1310 = vld [vmem:[%s452 + $0x8] sm:$0xff]
      %v1311 = vld [vmem:[%s452 + $0x10] sm:$0xff]
      %v1312 = vld [vmem:[%s452 + $0x28] sm:$0xff]
      %v1313 = vld [vmem:[%s452 + $0x30] sm:$0xff]
      %v1314 = vld [vmem:[%s452 + $0x48] sm:$0xff]
      %v1315 = vld [vmem:[%s452 + $0x50] sm:$0xff]
      %v1316 = vld [vmem:[%s452 + $0x68] sm:$0xff]
      %v1317 = vld [vmem:[%s452 + $0x70] sm:$0xff]
      %v1318 = vld [vmem:[%s452 + $0x88] sm:$0xff]
      %v1319 = vld [vmem:[%s452 + $0x90] sm:$0xff]
      %v1320 = vld [vmem:[%s452 + $0xa8] sm:$0xff]
      %v1321 = vld [vmem:[%s452 + $0xb0] sm:$0xff]
      %v1322 = vld [vmem:[%s452 + $0xc8] sm:$0xff]
      %v1323 = vld [vmem:[%s452 + $0xd0] sm:$0xff]
      %v1324 = vld [vmem:[%s452 + $0xe8] sm:$0xff]
      %v1325 = vld [vmem:[%s452 + $0xf0] sm:$0xff]
      %v1326 = vld [vmem:[%s452 + $0x108] sm:$0xff]
      %v1327 = vld [vmem:[%s452 + $0x110] sm:$0xff]
      %v1328 = vld [vmem:[%s452 + $0x128] sm:$0xff]
      %v1329 = vld [vmem:[%s452 + $0x130] sm:$0xff]
      %v1330 = vld [vmem:[%s452 + $0x148] sm:$0xff]
      %v1331 = vld [vmem:[%s452 + $0x150] sm:$0xff]
      %v1332 = vld [vmem:[%s452 + $0x168] sm:$0xff]
      %v1333 = vld [vmem:[%s452 + $0x170] sm:$0xff]
      %v1334 = vld [vmem:[%s452 + $0x188] sm:$0xff]
      %v1335 = vld [vmem:[%s452 + $0x190] sm:$0xff]
      %v1336 = vld [vmem:[%s452 + $0x1a8] sm:$0xff]
      %v1337 = vld [vmem:[%s452 + $0x1b0] sm:$0xff]
      %v1338 = vld [vmem:[%s452 + $0x1c8] sm:$0xff]
      %v1339 = vld [vmem:[%s452 + $0x1d0] sm:$0xff]
      %v1340 = vld [vmem:[%s452 + $0x1e8] sm:$0xff]
      %v1341 = vld [vmem:[%s452 + $0x1f0] sm:$0xff]
      %v1342 = vpack.c.bf16 %v1311, %v1310
      %v1343 = vpack.c.bf16 %v1313, %v1312
      %v1344 = vpack.c.bf16 %v1315, %v1314
      %v1345 = vpack.c.bf16 %v1317, %v1316
      %v1346 = vpack.c.bf16 %v1319, %v1318
      %v1347 = vpack.c.bf16 %v1321, %v1320
      %v1348 = vpack.c.bf16 %v1323, %v1322
      %v1349 = vpack.c.bf16 %v1325, %v1324
      %v1350 = vpack.c.bf16 %v1327, %v1326
      %v1351 = vpack.c.bf16 %v1329, %v1328
      %v1352 = vpack.c.bf16 %v1331, %v1330
      %v1353 = vpack.c.bf16 %v1333, %v1332
      %v1354 = vpack.c.bf16 %v1335, %v1334
      %v1355 = vpack.c.bf16 %v1337, %v1336
      %v1356 = vpack.c.bf16 %v1339, %v1338
      %v1357 = vpack.c.bf16 %v1341, %v1340
      %s1358 = scalar_lea.vmem %s1, 16
      %v1359 = vld [vmem:[%s1358] sm:$0xf]
      %v1361 = vsel %vm453, %v1342, 0
      %v1364 = vsel %vm453, %v1343, 0
      %v1367 = vsel %vm453, %v1344, 0
      %v1370 = vsel %vm453, %v1345, 0
      %v1373 = vsel %vm453, %v1346, 0
      %v1376 = vsel %vm453, %v1347, 0
      %v1379 = vsel %vm453, %v1348, 0
      %v1382 = vsel %vm453, %v1349, 0
      %v1385 = vsel %vm453, %v1350, 0
      %v1388 = vsel %vm453, %v1351, 0
      %v1391 = vsel %vm453, %v1352, 0
      %v1394 = vsel %vm453, %v1353, 0
      %v1397 = vsel %vm453, %v1354, 0
      %v1400 = vsel %vm453, %v1355, 0
      %v1403 = vsel %vm453, %v1356, 0
      %v1406 = vsel %vm453, %v1357, 0
      %v1409 = vsel %vm633, %v1359, 0
      %1411 = vmatpush.bf16.msra.mxu0 0
      %1412 = vmatpush.bf16.msra.mxu0 0
      %1413 = vmatpush.bf16.msra.mxu0 0
      %1414 = vmatpush.bf16.msra.mxu0 0
      %1415 = vmatpush.bf16.msra.mxu0 0
      %1416 = vmatpush.bf16.msra.mxu0 0
      %1417 = vmatpush.bf16.msra.mxu0 0
      %1418 = vmatpush.bf16.msra.mxu0 %v1409
      %1419 = vmatmul.bf16.gmra.mxu0 %v1361
      %v1420 = vpop.f32.mrf.mxu0
      %v1421 = vadd.f32 0.0, %v1420
      %v1422 = vpop.f32.mrf.mxu0
      %v1423 = vadd.f32 0.0, %v1422
      %1424 = vmatmul.bf16.gmra.mxu0 %v1364
      %v1425 = vpop.f32.mrf.mxu0
      %v1426 = vadd.f32 0.0, %v1425
      %v1427 = vpop.f32.mrf.mxu0
      %v1428 = vadd.f32 0.0, %v1427
      %1429 = vmatmul.bf16.gmra.mxu0 %v1367
      %v1430 = vpop.f32.mrf.mxu0
      %v1431 = vadd.f32 0.0, %v1430
      %v1432 = vpop.f32.mrf.mxu0
      %v1433 = vadd.f32 0.0, %v1432
      %1434 = vmatmul.bf16.gmra.mxu0 %v1370
      %v1435 = vpop.f32.mrf.mxu0
      %v1436 = vadd.f32 0.0, %v1435
      %v1437 = vpop.f32.mrf.mxu0
      %v1438 = vadd.f32 0.0, %v1437
      %1439 = vmatmul.bf16.gmra.mxu0 %v1373
      %v1440 = vpop.f32.mrf.mxu0
      %v1441 = vadd.f32 0.0, %v1440
      %v1442 = vpop.f32.mrf.mxu0
      %v1443 = vadd.f32 0.0, %v1442
      %1444 = vmatmul.bf16.gmra.mxu0 %v1376
      %v1445 = vpop.f32.mrf.mxu0
      %v1446 = vadd.f32 0.0, %v1445
      %v1447 = vpop.f32.mrf.mxu0
      %v1448 = vadd.f32 0.0, %v1447
      %1449 = vmatmul.bf16.gmra.mxu0 %v1379
      %v1450 = vpop.f32.mrf.mxu0
      %v1451 = vadd.f32 0.0, %v1450
      %v1452 = vpop.f32.mrf.mxu0
      %v1453 = vadd.f32 0.0, %v1452
      %1454 = vmatmul.bf16.gmra.mxu0 %v1382
      %v1455 = vpop.f32.mrf.mxu0
      %v1456 = vadd.f32 0.0, %v1455
      %v1457 = vpop.f32.mrf.mxu0
      %v1458 = vadd.f32 0.0, %v1457
      %1459 = vmatmul.bf16.gmra.mxu0 %v1385
      %v1460 = vpop.f32.mrf.mxu0
      %v1461 = vadd.f32 0.0, %v1460
      %v1462 = vpop.f32.mrf.mxu0
      %v1463 = vadd.f32 0.0, %v1462
      %1464 = vmatmul.bf16.gmra.mxu0 %v1388
      %v1465 = vpop.f32.mrf.mxu0
      %v1466 = vadd.f32 0.0, %v1465
      %v1467 = vpop.f32.mrf.mxu0
      %v1468 = vadd.f32 0.0, %v1467
      %1469 = vmatmul.bf16.gmra.mxu0 %v1391
      %v1470 = vpop.f32.mrf.mxu0
      %v1471 = vadd.f32 0.0, %v1470
      %v1472 = vpop.f32.mrf.mxu0
      %v1473 = vadd.f32 0.0, %v1472
      %1474 = vmatmul.bf16.gmra.mxu0 %v1394
      %v1475 = vpop.f32.mrf.mxu0
      %v1476 = vadd.f32 0.0, %v1475
      %v1477 = vpop.f32.mrf.mxu0
      %v1478 = vadd.f32 0.0, %v1477
      %1479 = vmatmul.bf16.gmra.mxu0 %v1397
      %v1480 = vpop.f32.mrf.mxu0
      %v1481 = vadd.f32 0.0, %v1480
      %v1482 = vpop.f32.mrf.mxu0
      %v1483 = vadd.f32 0.0, %v1482
      %1484 = vmatmul.bf16.gmra.mxu0 %v1400
      %v1485 = vpop.f32.mrf.mxu0
      %v1486 = vadd.f32 0.0, %v1485
      %v1487 = vpop.f32.mrf.mxu0
      %v1488 = vadd.f32 0.0, %v1487
      %1489 = vmatmul.bf16.gmra.mxu0 %v1403
      %v1490 = vpop.f32.mrf.mxu0
      %v1491 = vadd.f32 0.0, %v1490
      %v1492 = vpop.f32.mrf.mxu0
      %v1493 = vadd.f32 0.0, %v1492
      %1494 = vmatmul.bf16.gmra.mxu0 %v1406
      %v1495 = vpop.f32.mrf.mxu0
      %v1496 = vadd.f32 0.0, %v1495
      %v1497 = vpop.f32.mrf.mxu0
      %v1498 = vadd.f32 0.0, %v1497
      %1499 = vdwg.mxu0
      %v1500 = vadd.f32 %v1278, %v1421
      %v1501 = vadd.f32 %v1279, %v1423
      %v1502 = vadd.f32 %v1280, %v1426
      %v1503 = vadd.f32 %v1281, %v1428
      %v1504 = vadd.f32 %v1282, %v1431
      %v1505 = vadd.f32 %v1283, %v1433
      %v1506 = vadd.f32 %v1284, %v1436
      %v1507 = vadd.f32 %v1285, %v1438
      %v1508 = vadd.f32 %v1286, %v1441
      %v1509 = vadd.f32 %v1287, %v1443
      %v1510 = vadd.f32 %v1288, %v1446
      %v1511 = vadd.f32 %v1289, %v1448
      %v1512 = vadd.f32 %v1290, %v1451
      %v1513 = vadd.f32 %v1291, %v1453
      %v1514 = vadd.f32 %v1292, %v1456
      %v1515 = vadd.f32 %v1293, %v1458
      %v1516 = vadd.f32 %v1294, %v1461
      %v1517 = vadd.f32 %v1295, %v1463
      %v1518 = vadd.f32 %v1296, %v1466
      %v1519 = vadd.f32 %v1297, %v1468
      %v1520 = vadd.f32 %v1298, %v1471
      %v1521 = vadd.f32 %v1299, %v1473
      %v1522 = vadd.f32 %v1300, %v1476
      %v1523 = vadd.f32 %v1301, %v1478
      %v1524 = vadd.f32 %v1302, %v1481
      %v1525 = vadd.f32 %v1303, %v1483
      %v1526 = vadd.f32 %v1304, %v1486
      %v1527 = vadd.f32 %v1305, %v1488
      %v1528 = vadd.f32 %v1306, %v1491
      %v1529 = vadd.f32 %v1307, %v1493
      %v1530 = vadd.f32 %v1308, %v1496
      %v1531 = vadd.f32 %v1309, %v1498
      %v1532 = vld [vmem:[%s452 + $0x9] sm:$0xff]
      %v1533 = vld [vmem:[%s452 + $0x11] sm:$0xff]
      %v1534 = vld [vmem:[%s452 + $0x29] sm:$0xff]
      %v1535 = vld [vmem:[%s452 + $0x31] sm:$0xff]
      %v1536 = vld [vmem:[%s452 + $0x49] sm:$0xff]
      %v1537 = vld [vmem:[%s452 + $0x51] sm:$0xff]
      %v1538 = vld [vmem:[%s452 + $0x69] sm:$0xff]
      %v1539 = vld [vmem:[%s452 + $0x71] sm:$0xff]
      %v1540 = vld [vmem:[%s452 + $0x89] sm:$0xff]
      %v1541 = vld [vmem:[%s452 + $0x91] sm:$0xff]
      %v1542 = vld [vmem:[%s452 + $0xa9] sm:$0xff]
      %v1543 = vld [vmem:[%s452 + $0xb1] sm:$0xff]
      %v1544 = vld [vmem:[%s452 + $0xc9] sm:$0xff]
      %v1545 = vld [vmem:[%s452 + $0xd1] sm:$0xff]
      %v1546 = vld [vmem:[%s452 + $0xe9] sm:$0xff]
      %v1547 = vld [vmem:[%s452 + $0xf1] sm:$0xff]
      %v1548 = vld [vmem:[%s452 + $0x109] sm:$0xff]
      %v1549 = vld [vmem:[%s452 + $0x111] sm:$0xff]
      %v1550 = vld [vmem:[%s452 + $0x129] sm:$0xff]
      %v1551 = vld [vmem:[%s452 + $0x131] sm:$0xff]
      %v1552 = vld [vmem:[%s452 + $0x149] sm:$0xff]
      %v1553 = vld [vmem:[%s452 + $0x151] sm:$0xff]
      %v1554 = vld [vmem:[%s452 + $0x169] sm:$0xff]
      %v1555 = vld [vmem:[%s452 + $0x171] sm:$0xff]
      %v1556 = vld [vmem:[%s452 + $0x189] sm:$0xff]
      %v1557 = vld [vmem:[%s452 + $0x191] sm:$0xff]
      %v1558 = vld [vmem:[%s452 + $0x1a9] sm:$0xff]
      %v1559 = vld [vmem:[%s452 + $0x1b1] sm:$0xff]
      %v1560 = vld [vmem:[%s452 + $0x1c9] sm:$0xff]
      %v1561 = vld [vmem:[%s452 + $0x1d1] sm:$0xff]
      %v1562 = vld [vmem:[%s452 + $0x1e9] sm:$0xff]
      %v1563 = vld [vmem:[%s452 + $0x1f1] sm:$0xff]
      %v1564 = vpack.c.bf16 %v1533, %v1532
      %v1565 = vpack.c.bf16 %v1535, %v1534
      %v1566 = vpack.c.bf16 %v1537, %v1536
      %v1567 = vpack.c.bf16 %v1539, %v1538
      %v1568 = vpack.c.bf16 %v1541, %v1540
      %v1569 = vpack.c.bf16 %v1543, %v1542
      %v1570 = vpack.c.bf16 %v1545, %v1544
      %v1571 = vpack.c.bf16 %v1547, %v1546
      %v1572 = vpack.c.bf16 %v1549, %v1548
      %v1573 = vpack.c.bf16 %v1551, %v1550
      %v1574 = vpack.c.bf16 %v1553, %v1552
      %v1575 = vpack.c.bf16 %v1555, %v1554
      %v1576 = vpack.c.bf16 %v1557, %v1556
      %v1577 = vpack.c.bf16 %v1559, %v1558
      %v1578 = vpack.c.bf16 %v1561, %v1560
      %v1579 = vpack.c.bf16 %v1563, %v1562
      %s1580 = scalar_lea.vmem %s1, 20
      %v1581 = vld [vmem:[%s1580] sm:$0xf]
      %v1583 = vsel %vm453, %v1564, 0
      %v1586 = vsel %vm453, %v1565, 0
      %v1589 = vsel %vm453, %v1566, 0
      %v1592 = vsel %vm453, %v1567, 0
      %v1595 = vsel %vm453, %v1568, 0
      %v1598 = vsel %vm453, %v1569, 0
      %v1601 = vsel %vm453, %v1570, 0
      %v1604 = vsel %vm453, %v1571, 0
      %v1607 = vsel %vm453, %v1572, 0
      %v1610 = vsel %vm453, %v1573, 0
      %v1613 = vsel %vm453, %v1574, 0
      %v1616 = vsel %vm453, %v1575, 0
      %v1619 = vsel %vm453, %v1576, 0
      %v1622 = vsel %vm453, %v1577, 0
      %v1625 = vsel %vm453, %v1578, 0
      %v1628 = vsel %vm453, %v1579, 0
      %v1631 = vsel %vm633, %v1581, 0
      %1633 = vmatpush.bf16.msra.mxu0 0
      %1634 = vmatpush.bf16.msra.mxu0 0
      %1635 = vmatpush.bf16.msra.mxu0 0
      %1636 = vmatpush.bf16.msra.mxu0 0
      %1637 = vmatpush.bf16.msra.mxu0 0
      %1638 = vmatpush.bf16.msra.mxu0 0
      %1639 = vmatpush.bf16.msra.mxu0 0
      %1640 = vmatpush.bf16.msra.mxu0 %v1631
      %1641 = vmatmul.bf16.gmra.mxu0 %v1583
      %v1642 = vpop.f32.mrf.mxu0
      %v1643 = vadd.f32 0.0, %v1642
      %v1644 = vpop.f32.mrf.mxu0
      %v1645 = vadd.f32 0.0, %v1644
      %1646 = vmatmul.bf16.gmra.mxu0 %v1586
      %v1647 = vpop.f32.mrf.mxu0
      %v1648 = vadd.f32 0.0, %v1647
      %v1649 = vpop.f32.mrf.mxu0
      %v1650 = vadd.f32 0.0, %v1649
      %1651 = vmatmul.bf16.gmra.mxu0 %v1589
      %v1652 = vpop.f32.mrf.mxu0
      %v1653 = vadd.f32 0.0, %v1652
      %v1654 = vpop.f32.mrf.mxu0
      %v1655 = vadd.f32 0.0, %v1654
      %1656 = vmatmul.bf16.gmra.mxu0 %v1592
      %v1657 = vpop.f32.mrf.mxu0
      %v1658 = vadd.f32 0.0, %v1657
      %v1659 = vpop.f32.mrf.mxu0
      %v1660 = vadd.f32 0.0, %v1659
      %1661 = vmatmul.bf16.gmra.mxu0 %v1595
      %v1662 = vpop.f32.mrf.mxu0
      %v1663 = vadd.f32 0.0, %v1662
      %v1664 = vpop.f32.mrf.mxu0
      %v1665 = vadd.f32 0.0, %v1664
      %1666 = vmatmul.bf16.gmra.mxu0 %v1598
      %v1667 = vpop.f32.mrf.mxu0
      %v1668 = vadd.f32 0.0, %v1667
      %v1669 = vpop.f32.mrf.mxu0
      %v1670 = vadd.f32 0.0, %v1669
      %1671 = vmatmul.bf16.gmra.mxu0 %v1601
      %v1672 = vpop.f32.mrf.mxu0
      %v1673 = vadd.f32 0.0, %v1672
      %v1674 = vpop.f32.mrf.mxu0
      %v1675 = vadd.f32 0.0, %v1674
      %1676 = vmatmul.bf16.gmra.mxu0 %v1604
      %v1677 = vpop.f32.mrf.mxu0
      %v1678 = vadd.f32 0.0, %v1677
      %v1679 = vpop.f32.mrf.mxu0
      %v1680 = vadd.f32 0.0, %v1679
      %1681 = vmatmul.bf16.gmra.mxu0 %v1607
      %v1682 = vpop.f32.mrf.mxu0
      %v1683 = vadd.f32 0.0, %v1682
      %v1684 = vpop.f32.mrf.mxu0
      %v1685 = vadd.f32 0.0, %v1684
      %1686 = vmatmul.bf16.gmra.mxu0 %v1610
      %v1687 = vpop.f32.mrf.mxu0
      %v1688 = vadd.f32 0.0, %v1687
      %v1689 = vpop.f32.mrf.mxu0
      %v1690 = vadd.f32 0.0, %v1689
      %1691 = vmatmul.bf16.gmra.mxu0 %v1613
      %v1692 = vpop.f32.mrf.mxu0
      %v1693 = vadd.f32 0.0, %v1692
      %v1694 = vpop.f32.mrf.mxu0
      %v1695 = vadd.f32 0.0, %v1694
      %1696 = vmatmul.bf16.gmra.mxu0 %v1616
      %v1697 = vpop.f32.mrf.mxu0
      %v1698 = vadd.f32 0.0, %v1697
      %v1699 = vpop.f32.mrf.mxu0
      %v1700 = vadd.f32 0.0, %v1699
      %1701 = vmatmul.bf16.gmra.mxu0 %v1619
      %v1702 = vpop.f32.mrf.mxu0
      %v1703 = vadd.f32 0.0, %v1702
      %v1704 = vpop.f32.mrf.mxu0
      %v1705 = vadd.f32 0.0, %v1704
      %1706 = vmatmul.bf16.gmra.mxu0 %v1622
      %v1707 = vpop.f32.mrf.mxu0
      %v1708 = vadd.f32 0.0, %v1707
      %v1709 = vpop.f32.mrf.mxu0
      %v1710 = vadd.f32 0.0, %v1709
      %1711 = vmatmul.bf16.gmra.mxu0 %v1625
      %v1712 = vpop.f32.mrf.mxu0
      %v1713 = vadd.f32 0.0, %v1712
      %v1714 = vpop.f32.mrf.mxu0
      %v1715 = vadd.f32 0.0, %v1714
      %1716 = vmatmul.bf16.gmra.mxu0 %v1628
      %v1717 = vpop.f32.mrf.mxu0
      %v1718 = vadd.f32 0.0, %v1717
      %v1719 = vpop.f32.mrf.mxu0
      %v1720 = vadd.f32 0.0, %v1719
      %1721 = vdwg.mxu0
      %v1722 = vadd.f32 %v1500, %v1643
      %v1723 = vadd.f32 %v1501, %v1645
      %v1724 = vadd.f32 %v1502, %v1648
      %v1725 = vadd.f32 %v1503, %v1650
      %v1726 = vadd.f32 %v1504, %v1653
      %v1727 = vadd.f32 %v1505, %v1655
      %v1728 = vadd.f32 %v1506, %v1658
      %v1729 = vadd.f32 %v1507, %v1660
      %v1730 = vadd.f32 %v1508, %v1663
      %v1731 = vadd.f32 %v1509, %v1665
      %v1732 = vadd.f32 %v1510, %v1668
      %v1733 = vadd.f32 %v1511, %v1670
      %v1734 = vadd.f32 %v1512, %v1673
      %v1735 = vadd.f32 %v1513, %v1675
      %v1736 = vadd.f32 %v1514, %v1678
      %v1737 = vadd.f32 %v1515, %v1680
      %v1738 = vadd.f32 %v1516, %v1683
      %v1739 = vadd.f32 %v1517, %v1685
      %v1740 = vadd.f32 %v1518, %v1688
      %v1741 = vadd.f32 %v1519, %v1690
      %v1742 = vadd.f32 %v1520, %v1693
      %v1743 = vadd.f32 %v1521, %v1695
      %v1744 = vadd.f32 %v1522, %v1698
      %v1745 = vadd.f32 %v1523, %v1700
      %v1746 = vadd.f32 %v1524, %v1703
      %v1747 = vadd.f32 %v1525, %v1705
      %v1748 = vadd.f32 %v1526, %v1708
      %v1749 = vadd.f32 %v1527, %v1710
      %v1750 = vadd.f32 %v1528, %v1713
      %v1751 = vadd.f32 %v1529, %v1715
      %v1752 = vadd.f32 %v1530, %v1718
      %v1753 = vadd.f32 %v1531, %v1720
      %s1754 = scalar_lea.vmem [#allocation2], 64
      %v1755 = vld [vmem:[%s1754 + $0x7] sm:$0xff]
      %v1756 = vld [vmem:[%s1754 + $0xf] sm:$0xff]
      %v1757 = vld [vmem:[%s1754 + $0x27] sm:$0xff]
      %v1758 = vld [vmem:[%s1754 + $0x2f] sm:$0xff]
      %v1759 = vld [vmem:[%s1754 + $0x47] sm:$0xff]
      %v1760 = vld [vmem:[%s1754 + $0x4f] sm:$0xff]
      %v1761 = vld [vmem:[%s1754 + $0x67] sm:$0xff]
      %v1762 = vld [vmem:[%s1754 + $0x6f] sm:$0xff]
      %v1763 = vld [vmem:[%s1754 + $0x87] sm:$0xff]
      %v1764 = vld [vmem:[%s1754 + $0x8f] sm:$0xff]
      %v1765 = vld [vmem:[%s1754 + $0xa7] sm:$0xff]
      %v1766 = vld [vmem:[%s1754 + $0xaf] sm:$0xff]
      %v1767 = vld [vmem:[%s1754 + $0xc7] sm:$0xff]
      %v1768 = vld [vmem:[%s1754 + $0xcf] sm:$0xff]
      %v1769 = vld [vmem:[%s1754 + $0xe7] sm:$0xff]
      %v1770 = vld [vmem:[%s1754 + $0xef] sm:$0xff]
      %v1771 = vld [vmem:[%s1754 + $0x107] sm:$0xff]
      %v1772 = vld [vmem:[%s1754 + $0x10f] sm:$0xff]
      %v1773 = vld [vmem:[%s1754 + $0x127] sm:$0xff]
      %v1774 = vld [vmem:[%s1754 + $0x12f] sm:$0xff]
      %v1775 = vld [vmem:[%s1754 + $0x147] sm:$0xff]
      %v1776 = vld [vmem:[%s1754 + $0x14f] sm:$0xff]
      %v1777 = vld [vmem:[%s1754 + $0x167] sm:$0xff]
      %v1778 = vld [vmem:[%s1754 + $0x16f] sm:$0xff]
      %v1779 = vld [vmem:[%s1754 + $0x187] sm:$0xff]
      %v1780 = vld [vmem:[%s1754 + $0x18f] sm:$0xff]
      %v1781 = vld [vmem:[%s1754 + $0x1a7] sm:$0xff]
      %v1782 = vld [vmem:[%s1754 + $0x1af] sm:$0xff]
      %v1783 = vld [vmem:[%s1754 + $0x1c7] sm:$0xff]
      %v1784 = vld [vmem:[%s1754 + $0x1cf] sm:$0xff]
      %v1785 = vld [vmem:[%s1754 + $0x1e7] sm:$0xff]
      %v1786 = vld [vmem:[%s1754 + $0x1ef] sm:$0xff]
      %v1787 = vpack.c.bf16 %v1756, %v1755
      %v1788 = vpack.c.bf16 %v1758, %v1757
      %v1789 = vpack.c.bf16 %v1760, %v1759
      %v1790 = vpack.c.bf16 %v1762, %v1761
      %v1791 = vpack.c.bf16 %v1764, %v1763
      %v1792 = vpack.c.bf16 %v1766, %v1765
      %v1793 = vpack.c.bf16 %v1768, %v1767
      %v1794 = vpack.c.bf16 %v1770, %v1769
      %v1795 = vpack.c.bf16 %v1772, %v1771
      %v1796 = vpack.c.bf16 %v1774, %v1773
      %v1797 = vpack.c.bf16 %v1776, %v1775
      %v1798 = vpack.c.bf16 %v1778, %v1777
      %v1799 = vpack.c.bf16 %v1780, %v1779
      %v1800 = vpack.c.bf16 %v1782, %v1781
      %v1801 = vpack.c.bf16 %v1784, %v1783
      %v1802 = vpack.c.bf16 %v1786, %v1785
      %s1803 = scalar_lea.vmem %s1, 24
      %v1804 = vld [vmem:[%s1803] sm:$0xf]
      %v1806 = vsel %vm453, %v1787, 0
      %v1809 = vsel %vm453, %v1788, 0
      %v1812 = vsel %vm453, %v1789, 0
      %v1815 = vsel %vm453, %v1790, 0
      %v1818 = vsel %vm453, %v1791, 0
      %v1821 = vsel %vm453, %v1792, 0
      %v1824 = vsel %vm453, %v1793, 0
      %v1827 = vsel %vm453, %v1794, 0
      %v1830 = vsel %vm453, %v1795, 0
      %v1833 = vsel %vm453, %v1796, 0
      %v1836 = vsel %vm453, %v1797, 0
      %v1839 = vsel %vm453, %v1798, 0
      %v1842 = vsel %vm453, %v1799, 0
      %v1845 = vsel %vm453, %v1800, 0
      %v1848 = vsel %vm453, %v1801, 0
      %v1851 = vsel %vm453, %v1802, 0
      %v1854 = vsel %vm633, %v1804, 0
      %1856 = vmatpush.bf16.msra.mxu0 0
      %1857 = vmatpush.bf16.msra.mxu0 0
      %1858 = vmatpush.bf16.msra.mxu0 0
      %1859 = vmatpush.bf16.msra.mxu0 0
      %1860 = vmatpush.bf16.msra.mxu0 0
      %1861 = vmatpush.bf16.msra.mxu0 0
      %1862 = vmatpush.bf16.msra.mxu0 0
      %1863 = vmatpush.bf16.msra.mxu0 %v1854
      %1864 = vmatmul.bf16.gmra.mxu0 %v1806
      %v1865 = vpop.f32.mrf.mxu0
      %v1866 = vadd.f32 0.0, %v1865
      %v1867 = vpop.f32.mrf.mxu0
      %v1868 = vadd.f32 0.0, %v1867
      %1869 = vmatmul.bf16.gmra.mxu0 %v1809
      %v1870 = vpop.f32.mrf.mxu0
      %v1871 = vadd.f32 0.0, %v1870
      %v1872 = vpop.f32.mrf.mxu0
      %v1873 = vadd.f32 0.0, %v1872
      %1874 = vmatmul.bf16.gmra.mxu0 %v1812
      %v1875 = vpop.f32.mrf.mxu0
      %v1876 = vadd.f32 0.0, %v1875
      %v1877 = vpop.f32.mrf.mxu0
      %v1878 = vadd.f32 0.0, %v1877
      %1879 = vmatmul.bf16.gmra.mxu0 %v1815
      %v1880 = vpop.f32.mrf.mxu0
      %v1881 = vadd.f32 0.0, %v1880
      %v1882 = vpop.f32.mrf.mxu0
      %v1883 = vadd.f32 0.0, %v1882
      %1884 = vmatmul.bf16.gmra.mxu0 %v1818
      %v1885 = vpop.f32.mrf.mxu0
      %v1886 = vadd.f32 0.0, %v1885
      %v1887 = vpop.f32.mrf.mxu0
      %v1888 = vadd.f32 0.0, %v1887
      %1889 = vmatmul.bf16.gmra.mxu0 %v1821
      %v1890 = vpop.f32.mrf.mxu0
      %v1891 = vadd.f32 0.0, %v1890
      %v1892 = vpop.f32.mrf.mxu0
      %v1893 = vadd.f32 0.0, %v1892
      %1894 = vmatmul.bf16.gmra.mxu0 %v1824
      %v1895 = vpop.f32.mrf.mxu0
      %v1896 = vadd.f32 0.0, %v1895
      %v1897 = vpop.f32.mrf.mxu0
      %v1898 = vadd.f32 0.0, %v1897
      %1899 = vmatmul.bf16.gmra.mxu0 %v1827
      %v1900 = vpop.f32.mrf.mxu0
      %v1901 = vadd.f32 0.0, %v1900
      %v1902 = vpop.f32.mrf.mxu0
      %v1903 = vadd.f32 0.0, %v1902
      %1904 = vmatmul.bf16.gmra.mxu0 %v1830
      %v1905 = vpop.f32.mrf.mxu0
      %v1906 = vadd.f32 0.0, %v1905
      %v1907 = vpop.f32.mrf.mxu0
      %v1908 = vadd.f32 0.0, %v1907
      %1909 = vmatmul.bf16.gmra.mxu0 %v1833
      %v1910 = vpop.f32.mrf.mxu0
      %v1911 = vadd.f32 0.0, %v1910
      %v1912 = vpop.f32.mrf.mxu0
      %v1913 = vadd.f32 0.0, %v1912
      %1914 = vmatmul.bf16.gmra.mxu0 %v1836
      %v1915 = vpop.f32.mrf.mxu0
      %v1916 = vadd.f32 0.0, %v1915
      %v1917 = vpop.f32.mrf.mxu0
      %v1918 = vadd.f32 0.0, %v1917
      %1919 = vmatmul.bf16.gmra.mxu0 %v1839
      %v1920 = vpop.f32.mrf.mxu0
      %v1921 = vadd.f32 0.0, %v1920
      %v1922 = vpop.f32.mrf.mxu0
      %v1923 = vadd.f32 0.0, %v1922
      %1924 = vmatmul.bf16.gmra.mxu0 %v1842
      %v1925 = vpop.f32.mrf.mxu0
      %v1926 = vadd.f32 0.0, %v1925
      %v1927 = vpop.f32.mrf.mxu0
      %v1928 = vadd.f32 0.0, %v1927
      %1929 = vmatmul.bf16.gmra.mxu0 %v1845
      %v1930 = vpop.f32.mrf.mxu0
      %v1931 = vadd.f32 0.0, %v1930
      %v1932 = vpop.f32.mrf.mxu0
      %v1933 = vadd.f32 0.0, %v1932
      %1934 = vmatmul.bf16.gmra.mxu0 %v1848
      %v1935 = vpop.f32.mrf.mxu0
      %v1936 = vadd.f32 0.0, %v1935
      %v1937 = vpop.f32.mrf.mxu0
      %v1938 = vadd.f32 0.0, %v1937
      %1939 = vmatmul.bf16.gmra.mxu0 %v1851
      %v1940 = vpop.f32.mrf.mxu0
      %v1941 = vadd.f32 0.0, %v1940
      %v1942 = vpop.f32.mrf.mxu0
      %v1943 = vadd.f32 0.0, %v1942
      %1944 = vdwg.mxu0
      %v1945 = vadd.f32 %v1722, %v1866
      %v1946 = vadd.f32 %v1723, %v1868
      %v1947 = vadd.f32 %v1724, %v1871
      %v1948 = vadd.f32 %v1725, %v1873
      %v1949 = vadd.f32 %v1726, %v1876
      %v1950 = vadd.f32 %v1727, %v1878
      %v1951 = vadd.f32 %v1728, %v1881
      %v1952 = vadd.f32 %v1729, %v1883
      %v1953 = vadd.f32 %v1730, %v1886
      %v1954 = vadd.f32 %v1731, %v1888
      %v1955 = vadd.f32 %v1732, %v1891
      %v1956 = vadd.f32 %v1733, %v1893
      %v1957 = vadd.f32 %v1734, %v1896
      %v1958 = vadd.f32 %v1735, %v1898
      %v1959 = vadd.f32 %v1736, %v1901
      %v1960 = vadd.f32 %v1737, %v1903
      %v1961 = vadd.f32 %v1738, %v1906
      %v1962 = vadd.f32 %v1739, %v1908
      %v1963 = vadd.f32 %v1740, %v1911
      %v1964 = vadd.f32 %v1741, %v1913
      %v1965 = vadd.f32 %v1742, %v1916
      %v1966 = vadd.f32 %v1743, %v1918
      %v1967 = vadd.f32 %v1744, %v1921
      %v1968 = vadd.f32 %v1745, %v1923
      %v1969 = vadd.f32 %v1746, %v1926
      %v1970 = vadd.f32 %v1747, %v1928
      %v1971 = vadd.f32 %v1748, %v1931
      %v1972 = vadd.f32 %v1749, %v1933
      %v1973 = vadd.f32 %v1750, %v1936
      %v1974 = vadd.f32 %v1751, %v1938
      %v1975 = vadd.f32 %v1752, %v1941
      %v1976 = vadd.f32 %v1753, %v1943
      %v1977 = vld [vmem:[%s1754 + $0x8] sm:$0xff]
      %v1978 = vld [vmem:[%s1754 + $0x10] sm:$0xff]
      %v1979 = vld [vmem:[%s1754 + $0x28] sm:$0xff]
      %v1980 = vld [vmem:[%s1754 + $0x30] sm:$0xff]
      %v1981 = vld [vmem:[%s1754 + $0x48] sm:$0xff]
      %v1982 = vld [vmem:[%s1754 + $0x50] sm:$0xff]
      %v1983 = vld [vmem:[%s1754 + $0x68] sm:$0xff]
      %v1984 = vld [vmem:[%s1754 + $0x70] sm:$0xff]
      %v1985 = vld [vmem:[%s1754 + $0x88] sm:$0xff]
      %v1986 = vld [vmem:[%s1754 + $0x90] sm:$0xff]
      %v1987 = vld [vmem:[%s1754 + $0xa8] sm:$0xff]
      %v1988 = vld [vmem:[%s1754 + $0xb0] sm:$0xff]
      %v1989 = vld [vmem:[%s1754 + $0xc8] sm:$0xff]
      %v1990 = vld [vmem:[%s1754 + $0xd0] sm:$0xff]
      %v1991 = vld [vmem:[%s1754 + $0xe8] sm:$0xff]
      %v1992 = vld [vmem:[%s1754 + $0xf0] sm:$0xff]
      %v1993 = vld [vmem:[%s1754 + $0x108] sm:$0xff]
      %v1994 = vld [vmem:[%s1754 + $0x110] sm:$0xff]
      %v1995 = vld [vmem:[%s1754 + $0x128] sm:$0xff]
      %v1996 = vld [vmem:[%s1754 + $0x130] sm:$0xff]
      %v1997 = vld [vmem:[%s1754 + $0x148] sm:$0xff]
      %v1998 = vld [vmem:[%s1754 + $0x150] sm:$0xff]
      %v1999 = vld [vmem:[%s1754 + $0x168] sm:$0xff]
      %v2000 = vld [vmem:[%s1754 + $0x170] sm:$0xff]
      %v2001 = vld [vmem:[%s1754 + $0x188] sm:$0xff]
      %v2002 = vld [vmem:[%s1754 + $0x190] sm:$0xff]
      %v2003 = vld [vmem:[%s1754 + $0x1a8] sm:$0xff]
      %v2004 = vld [vmem:[%s1754 + $0x1b0] sm:$0xff]
      %v2005 = vld [vmem:[%s1754 + $0x1c8] sm:$0xff]
      %v2006 = vld [vmem:[%s1754 + $0x1d0] sm:$0xff]
      %v2007 = vld [vmem:[%s1754 + $0x1e8] sm:$0xff]
      %v2008 = vld [vmem:[%s1754 + $0x1f0] sm:$0xff]
      %v2009 = vpack.c.bf16 %v1978, %v1977
      %v2010 = vpack.c.bf16 %v1980, %v1979
      %v2011 = vpack.c.bf16 %v1982, %v1981
      %v2012 = vpack.c.bf16 %v1984, %v1983
      %v2013 = vpack.c.bf16 %v1986, %v1985
      %v2014 = vpack.c.bf16 %v1988, %v1987
      %v2015 = vpack.c.bf16 %v1990, %v1989
      %v2016 = vpack.c.bf16 %v1992, %v1991
      %v2017 = vpack.c.bf16 %v1994, %v1993
      %v2018 = vpack.c.bf16 %v1996, %v1995
      %v2019 = vpack.c.bf16 %v1998, %v1997
      %v2020 = vpack.c.bf16 %v2000, %v1999
      %v2021 = vpack.c.bf16 %v2002, %v2001
      %v2022 = vpack.c.bf16 %v2004, %v2003
      %v2023 = vpack.c.bf16 %v2006, %v2005
      %v2024 = vpack.c.bf16 %v2008, %v2007
      %s2025 = scalar_lea.vmem %s1, 28
      %v2026 = vld [vmem:[%s2025] sm:$0xf]
      %v2028 = vsel %vm453, %v2009, 0
      %v2031 = vsel %vm453, %v2010, 0
      %v2034 = vsel %vm453, %v2011, 0
      %v2037 = vsel %vm453, %v2012, 0
      %v2040 = vsel %vm453, %v2013, 0
      %v2043 = vsel %vm453, %v2014, 0
      %v2046 = vsel %vm453, %v2015, 0
      %v2049 = vsel %vm453, %v2016, 0
      %v2052 = vsel %vm453, %v2017, 0
      %v2055 = vsel %vm453, %v2018, 0
      %v2058 = vsel %vm453, %v2019, 0
      %v2061 = vsel %vm453, %v2020, 0
      %v2064 = vsel %vm453, %v2021, 0
      %v2067 = vsel %vm453, %v2022, 0
      %v2070 = vsel %vm453, %v2023, 0
      %v2073 = vsel %vm453, %v2024, 0
      %v2076 = vsel %vm633, %v2026, 0
      %2078 = vmatpush.bf16.msra.mxu0 0
      %2079 = vmatpush.bf16.msra.mxu0 0
      %2080 = vmatpush.bf16.msra.mxu0 0
      %2081 = vmatpush.bf16.msra.mxu0 0
      %2082 = vmatpush.bf16.msra.mxu0 0
      %2083 = vmatpush.bf16.msra.mxu0 0
      %2084 = vmatpush.bf16.msra.mxu0 0
      %2085 = vmatpush.bf16.msra.mxu0 %v2076
      %2086 = vmatmul.bf16.gmra.mxu0 %v2028
      %v2087 = vpop.f32.mrf.mxu0
      %v2088 = vadd.f32 0.0, %v2087
      %v2089 = vpop.f32.mrf.mxu0
      %v2090 = vadd.f32 0.0, %v2089
      %2091 = vmatmul.bf16.gmra.mxu0 %v2031
      %v2092 = vpop.f32.mrf.mxu0
      %v2093 = vadd.f32 0.0, %v2092
      %v2094 = vpop.f32.mrf.mxu0
      %v2095 = vadd.f32 0.0, %v2094
      %2096 = vmatmul.bf16.gmra.mxu0 %v2034
      %v2097 = vpop.f32.mrf.mxu0
      %v2098 = vadd.f32 0.0, %v2097
      %v2099 = vpop.f32.mrf.mxu0
      %v2100 = vadd.f32 0.0, %v2099
      %2101 = vmatmul.bf16.gmra.mxu0 %v2037
      %v2102 = vpop.f32.mrf.mxu0
      %v2103 = vadd.f32 0.0, %v2102
      %v2104 = vpop.f32.mrf.mxu0
      %v2105 = vadd.f32 0.0, %v2104
      %2106 = vmatmul.bf16.gmra.mxu0 %v2040
      %v2107 = vpop.f32.mrf.mxu0
      %v2108 = vadd.f32 0.0, %v2107
      %v2109 = vpop.f32.mrf.mxu0
      %v2110 = vadd.f32 0.0, %v2109
      %2111 = vmatmul.bf16.gmra.mxu0 %v2043
      %v2112 = vpop.f32.mrf.mxu0
      %v2113 = vadd.f32 0.0, %v2112
      %v2114 = vpop.f32.mrf.mxu0
      %v2115 = vadd.f32 0.0, %v2114
      %2116 = vmatmul.bf16.gmra.mxu0 %v2046
      %v2117 = vpop.f32.mrf.mxu0
      %v2118 = vadd.f32 0.0, %v2117
      %v2119 = vpop.f32.mrf.mxu0
      %v2120 = vadd.f32 0.0, %v2119
      %2121 = vmatmul.bf16.gmra.mxu0 %v2049
      %v2122 = vpop.f32.mrf.mxu0
      %v2123 = vadd.f32 0.0, %v2122
      %v2124 = vpop.f32.mrf.mxu0
      %v2125 = vadd.f32 0.0, %v2124
      %2126 = vmatmul.bf16.gmra.mxu0 %v2052
      %v2127 = vpop.f32.mrf.mxu0
      %v2128 = vadd.f32 0.0, %v2127
      %v2129 = vpop.f32.mrf.mxu0
      %v2130 = vadd.f32 0.0, %v2129
      %2131 = vmatmul.bf16.gmra.mxu0 %v2055
      %v2132 = vpop.f32.mrf.mxu0
      %v2133 = vadd.f32 0.0, %v2132
      %v2134 = vpop.f32.mrf.mxu0
      %v2135 = vadd.f32 0.0, %v2134
      %2136 = vmatmul.bf16.gmra.mxu0 %v2058
      %v2137 = vpop.f32.mrf.mxu0
      %v2138 = vadd.f32 0.0, %v2137
      %v2139 = vpop.f32.mrf.mxu0
      %v2140 = vadd.f32 0.0, %v2139
      %2141 = vmatmul.bf16.gmra.mxu0 %v2061
      %v2142 = vpop.f32.mrf.mxu0
      %v2143 = vadd.f32 0.0, %v2142
      %v2144 = vpop.f32.mrf.mxu0
      %v2145 = vadd.f32 0.0, %v2144
      %2146 = vmatmul.bf16.gmra.mxu0 %v2064
      %v2147 = vpop.f32.mrf.mxu0
      %v2148 = vadd.f32 0.0, %v2147
      %v2149 = vpop.f32.mrf.mxu0
      %v2150 = vadd.f32 0.0, %v2149
      %2151 = vmatmul.bf16.gmra.mxu0 %v2067
      %v2152 = vpop.f32.mrf.mxu0
      %v2153 = vadd.f32 0.0, %v2152
      %v2154 = vpop.f32.mrf.mxu0
      %v2155 = vadd.f32 0.0, %v2154
      %2156 = vmatmul.bf16.gmra.mxu0 %v2070
      %v2157 = vpop.f32.mrf.mxu0
      %v2158 = vadd.f32 0.0, %v2157
      %v2159 = vpop.f32.mrf.mxu0
      %v2160 = vadd.f32 0.0, %v2159
      %2161 = vmatmul.bf16.gmra.mxu0 %v2073
      %v2162 = vpop.f32.mrf.mxu0
      %v2163 = vadd.f32 0.0, %v2162
      %v2164 = vpop.f32.mrf.mxu0
      %v2165 = vadd.f32 0.0, %v2164
      %2166 = vdwg.mxu0
      %v2167 = vadd.f32 %v1945, %v2088
      %v2168 = vadd.f32 %v1946, %v2090
      %v2169 = vadd.f32 %v1947, %v2093
      %v2170 = vadd.f32 %v1948, %v2095
      %v2171 = vadd.f32 %v1949, %v2098
      %v2172 = vadd.f32 %v1950, %v2100
      %v2173 = vadd.f32 %v1951, %v2103
      %v2174 = vadd.f32 %v1952, %v2105
      %v2175 = vadd.f32 %v1953, %v2108
      %v2176 = vadd.f32 %v1954, %v2110
      %v2177 = vadd.f32 %v1955, %v2113
      %v2178 = vadd.f32 %v1956, %v2115
      %v2179 = vadd.f32 %v1957, %v2118
      %v2180 = vadd.f32 %v1958, %v2120
      %v2181 = vadd.f32 %v1959, %v2123
      %v2182 = vadd.f32 %v1960, %v2125
      %v2183 = vadd.f32 %v1961, %v2128
      %v2184 = vadd.f32 %v1962, %v2130
      %v2185 = vadd.f32 %v1963, %v2133
      %v2186 = vadd.f32 %v1964, %v2135
      %v2187 = vadd.f32 %v1965, %v2138
      %v2188 = vadd.f32 %v1966, %v2140
      %v2189 = vadd.f32 %v1967, %v2143
      %v2190 = vadd.f32 %v1968, %v2145
      %v2191 = vadd.f32 %v1969, %v2148
      %v2192 = vadd.f32 %v1970, %v2150
      %v2193 = vadd.f32 %v1971, %v2153
      %v2194 = vadd.f32 %v1972, %v2155
      %v2195 = vadd.f32 %v1973, %v2158
      %v2196 = vadd.f32 %v1974, %v2160
      %v2197 = vadd.f32 %v1975, %v2163
      %v2198 = vadd.f32 %v1976, %v2165
      %v2199 = vld [vmem:[%s1754 + $0x9] sm:$0xff]
      %v2200 = vld [vmem:[%s1754 + $0x11] sm:$0xff]
      %v2201 = vld [vmem:[%s1754 + $0x29] sm:$0xff]
      %v2202 = vld [vmem:[%s1754 + $0x31] sm:$0xff]
      %v2203 = vld [vmem:[%s1754 + $0x49] sm:$0xff]
      %v2204 = vld [vmem:[%s1754 + $0x51] sm:$0xff]
      %v2205 = vld [vmem:[%s1754 + $0x69] sm:$0xff]
      %v2206 = vld [vmem:[%s1754 + $0x71] sm:$0xff]
      %v2207 = vld [vmem:[%s1754 + $0x89] sm:$0xff]
      %v2208 = vld [vmem:[%s1754 + $0x91] sm:$0xff]
      %v2209 = vld [vmem:[%s1754 + $0xa9] sm:$0xff]
      %v2210 = vld [vmem:[%s1754 + $0xb1] sm:$0xff]
      %v2211 = vld [vmem:[%s1754 + $0xc9] sm:$0xff]
      %v2212 = vld [vmem:[%s1754 + $0xd1] sm:$0xff]
      %v2213 = vld [vmem:[%s1754 + $0xe9] sm:$0xff]
      %v2214 = vld [vmem:[%s1754 + $0xf1] sm:$0xff]
      %v2215 = vld [vmem:[%s1754 + $0x109] sm:$0xff]
      %v2216 = vld [vmem:[%s1754 + $0x111] sm:$0xff]
      %v2217 = vld [vmem:[%s1754 + $0x129] sm:$0xff]
      %v2218 = vld [vmem:[%s1754 + $0x131] sm:$0xff]
      %v2219 = vld [vmem:[%s1754 + $0x149] sm:$0xff]
      %v2220 = vld [vmem:[%s1754 + $0x151] sm:$0xff]
      %v2221 = vld [vmem:[%s1754 + $0x169] sm:$0xff]
      %v2222 = vld [vmem:[%s1754 + $0x171] sm:$0xff]
      %v2223 = vld [vmem:[%s1754 + $0x189] sm:$0xff]
      %v2224 = vld [vmem:[%s1754 + $0x191] sm:$0xff]
      %v2225 = vld [vmem:[%s1754 + $0x1a9] sm:$0xff]
      %v2226 = vld [vmem:[%s1754 + $0x1b1] sm:$0xff]
      %v2227 = vld [vmem:[%s1754 + $0x1c9] sm:$0xff]
      %v2228 = vld [vmem:[%s1754 + $0x1d1] sm:$0xff]
      %v2229 = vld [vmem:[%s1754 + $0x1e9] sm:$0xff]
      %v2230 = vld [vmem:[%s1754 + $0x1f1] sm:$0xff]
      %v2231 = vpack.c.bf16 %v2200, %v2199
      %v2232 = vpack.c.bf16 %v2202, %v2201
      %v2233 = vpack.c.bf16 %v2204, %v2203
      %v2234 = vpack.c.bf16 %v2206, %v2205
      %v2235 = vpack.c.bf16 %v2208, %v2207
      %v2236 = vpack.c.bf16 %v2210, %v2209
      %v2237 = vpack.c.bf16 %v2212, %v2211
      %v2238 = vpack.c.bf16 %v2214, %v2213
      %v2239 = vpack.c.bf16 %v2216, %v2215
      %v2240 = vpack.c.bf16 %v2218, %v2217
      %v2241 = vpack.c.bf16 %v2220, %v2219
      %v2242 = vpack.c.bf16 %v2222, %v2221
      %v2243 = vpack.c.bf16 %v2224, %v2223
      %v2244 = vpack.c.bf16 %v2226, %v2225
      %v2245 = vpack.c.bf16 %v2228, %v2227
      %v2246 = vpack.c.bf16 %v2230, %v2229
      %s2247 = scalar_lea.vmem %s1, 32
      %v2248 = vld [vmem:[%s2247] sm:$0xf]
      %v2250 = vsel %vm453, %v2231, 0
      %v2253 = vsel %vm453, %v2232, 0
      %v2256 = vsel %vm453, %v2233, 0
      %v2259 = vsel %vm453, %v2234, 0
      %v2262 = vsel %vm453, %v2235, 0
      %v2265 = vsel %vm453, %v2236, 0
      %v2268 = vsel %vm453, %v2237, 0
      %v2271 = vsel %vm453, %v2238, 0
      %v2274 = vsel %vm453, %v2239, 0
      %v2277 = vsel %vm453, %v2240, 0
      %v2280 = vsel %vm453, %v2241, 0
      %v2283 = vsel %vm453, %v2242, 0
      %v2286 = vsel %vm453, %v2243, 0
      %v2289 = vsel %vm453, %v2244, 0
      %v2292 = vsel %vm453, %v2245, 0
      %v2295 = vsel %vm453, %v2246, 0
      %v2298 = vsel %vm633, %v2248, 0
      %2300 = vmatpush.bf16.msra.mxu0 0
      %2301 = vmatpush.bf16.msra.mxu0 0
      %2302 = vmatpush.bf16.msra.mxu0 0
      %2303 = vmatpush.bf16.msra.mxu0 0
      %2304 = vmatpush.bf16.msra.mxu0 0
      %2305 = vmatpush.bf16.msra.mxu0 0
      %2306 = vmatpush.bf16.msra.mxu0 0
      %2307 = vmatpush.bf16.msra.mxu0 %v2298
      %2308 = vmatmul.bf16.gmra.mxu0 %v2250
      %v2309 = vpop.f32.mrf.mxu0
      %v2310 = vadd.f32 0.0, %v2309
      %v2311 = vpop.f32.mrf.mxu0
      %v2312 = vadd.f32 0.0, %v2311
      %2313 = vmatmul.bf16.gmra.mxu0 %v2253
      %v2314 = vpop.f32.mrf.mxu0
      %v2315 = vadd.f32 0.0, %v2314
      %v2316 = vpop.f32.mrf.mxu0
      %v2317 = vadd.f32 0.0, %v2316
      %2318 = vmatmul.bf16.gmra.mxu0 %v2256
      %v2319 = vpop.f32.mrf.mxu0
      %v2320 = vadd.f32 0.0, %v2319
      %v2321 = vpop.f32.mrf.mxu0
      %v2322 = vadd.f32 0.0, %v2321
      %2323 = vmatmul.bf16.gmra.mxu0 %v2259
      %v2324 = vpop.f32.mrf.mxu0
      %v2325 = vadd.f32 0.0, %v2324
      %v2326 = vpop.f32.mrf.mxu0
      %v2327 = vadd.f32 0.0, %v2326
      %2328 = vmatmul.bf16.gmra.mxu0 %v2262
      %v2329 = vpop.f32.mrf.mxu0
      %v2330 = vadd.f32 0.0, %v2329
      %v2331 = vpop.f32.mrf.mxu0
      %v2332 = vadd.f32 0.0, %v2331
      %2333 = vmatmul.bf16.gmra.mxu0 %v2265
      %v2334 = vpop.f32.mrf.mxu0
      %v2335 = vadd.f32 0.0, %v2334
      %v2336 = vpop.f32.mrf.mxu0
      %v2337 = vadd.f32 0.0, %v2336
      %2338 = vmatmul.bf16.gmra.mxu0 %v2268
      %v2339 = vpop.f32.mrf.mxu0
      %v2340 = vadd.f32 0.0, %v2339
      %v2341 = vpop.f32.mrf.mxu0
      %v2342 = vadd.f32 0.0, %v2341
      %2343 = vmatmul.bf16.gmra.mxu0 %v2271
      %v2344 = vpop.f32.mrf.mxu0
      %v2345 = vadd.f32 0.0, %v2344
      %v2346 = vpop.f32.mrf.mxu0
      %v2347 = vadd.f32 0.0, %v2346
      %2348 = vmatmul.bf16.gmra.mxu0 %v2274
      %v2349 = vpop.f32.mrf.mxu0
      %v2350 = vadd.f32 0.0, %v2349
      %v2351 = vpop.f32.mrf.mxu0
      %v2352 = vadd.f32 0.0, %v2351
      %2353 = vmatmul.bf16.gmra.mxu0 %v2277
      %v2354 = vpop.f32.mrf.mxu0
      %v2355 = vadd.f32 0.0, %v2354
      %v2356 = vpop.f32.mrf.mxu0
      %v2357 = vadd.f32 0.0, %v2356
      %2358 = vmatmul.bf16.gmra.mxu0 %v2280
      %v2359 = vpop.f32.mrf.mxu0
      %v2360 = vadd.f32 0.0, %v2359
      %v2361 = vpop.f32.mrf.mxu0
      %v2362 = vadd.f32 0.0, %v2361
      %2363 = vmatmul.bf16.gmra.mxu0 %v2283
      %v2364 = vpop.f32.mrf.mxu0
      %v2365 = vadd.f32 0.0, %v2364
      %v2366 = vpop.f32.mrf.mxu0
      %v2367 = vadd.f32 0.0, %v2366
      %2368 = vmatmul.bf16.gmra.mxu0 %v2286
      %v2369 = vpop.f32.mrf.mxu0
      %v2370 = vadd.f32 0.0, %v2369
      %v2371 = vpop.f32.mrf.mxu0
      %v2372 = vadd.f32 0.0, %v2371
      %2373 = vmatmul.bf16.gmra.mxu0 %v2289
      %v2374 = vpop.f32.mrf.mxu0
      %v2375 = vadd.f32 0.0, %v2374
      %v2376 = vpop.f32.mrf.mxu0
      %v2377 = vadd.f32 0.0, %v2376
      %2378 = vmatmul.bf16.gmra.mxu0 %v2292
      %v2379 = vpop.f32.mrf.mxu0
      %v2380 = vadd.f32 0.0, %v2379
      %v2381 = vpop.f32.mrf.mxu0
      %v2382 = vadd.f32 0.0, %v2381
      %2383 = vmatmul.bf16.gmra.mxu0 %v2295
      %v2384 = vpop.f32.mrf.mxu0
      %v2385 = vadd.f32 0.0, %v2384
      %v2386 = vpop.f32.mrf.mxu0
      %v2387 = vadd.f32 0.0, %v2386
      %2388 = vdwg.mxu0
      %v2389 = vadd.f32 %v2167, %v2310
      %v2390 = vadd.f32 %v2168, %v2312
      %v2391 = vadd.f32 %v2169, %v2315
      %v2392 = vadd.f32 %v2170, %v2317
      %v2393 = vadd.f32 %v2171, %v2320
      %v2394 = vadd.f32 %v2172, %v2322
      %v2395 = vadd.f32 %v2173, %v2325
      %v2396 = vadd.f32 %v2174, %v2327
      %v2397 = vadd.f32 %v2175, %v2330
      %v2398 = vadd.f32 %v2176, %v2332
      %v2399 = vadd.f32 %v2177, %v2335
      %v2400 = vadd.f32 %v2178, %v2337
      %v2401 = vadd.f32 %v2179, %v2340
      %v2402 = vadd.f32 %v2180, %v2342
      %v2403 = vadd.f32 %v2181, %v2345
      %v2404 = vadd.f32 %v2182, %v2347
      %v2405 = vadd.f32 %v2183, %v2350
      %v2406 = vadd.f32 %v2184, %v2352
      %v2407 = vadd.f32 %v2185, %v2355
      %v2408 = vadd.f32 %v2186, %v2357
      %v2409 = vadd.f32 %v2187, %v2360
      %v2410 = vadd.f32 %v2188, %v2362
      %v2411 = vadd.f32 %v2189, %v2365
      %v2412 = vadd.f32 %v2190, %v2367
      %v2413 = vadd.f32 %v2191, %v2370
      %v2414 = vadd.f32 %v2192, %v2372
      %v2415 = vadd.f32 %v2193, %v2375
      %v2416 = vadd.f32 %v2194, %v2377
      %v2417 = vadd.f32 %v2195, %v2380
      %v2418 = vadd.f32 %v2196, %v2382
      %v2419 = vadd.f32 %v2197, %v2385
      %v2420 = vadd.f32 %v2198, %v2387
      %v2421 = vld [vmem:[%s2] sm:$0x1]
      %v2423 = vperm.slane %v2421, 0
      %v2425 = vadd.f32 %v2389, %v2423
      %v2426 = vadd.f32 %v2390, %v2423
      %v2427 = vadd.f32 %v2391, %v2423
      %v2428 = vadd.f32 %v2392, %v2423
      %v2429 = vadd.f32 %v2393, %v2423
      %v2430 = vadd.f32 %v2394, %v2423
      %v2431 = vadd.f32 %v2395, %v2423
      %v2432 = vadd.f32 %v2396, %v2423
      %v2433 = vadd.f32 %v2397, %v2423
      %v2434 = vadd.f32 %v2398, %v2423
      %v2435 = vadd.f32 %v2399, %v2423
      %v2436 = vadd.f32 %v2400, %v2423
      %v2437 = vadd.f32 %v2401, %v2423
      %v2438 = vadd.f32 %v2402, %v2423
      %v2439 = vadd.f32 %v2403, %v2423
      %v2440 = vadd.f32 %v2404, %v2423
      %v2441 = vadd.f32 %v2405, %v2423
      %v2442 = vadd.f32 %v2406, %v2423
      %v2443 = vadd.f32 %v2407, %v2423
      %v2444 = vadd.f32 %v2408, %v2423
      %v2445 = vadd.f32 %v2409, %v2423
      %v2446 = vadd.f32 %v2410, %v2423
      %v2447 = vadd.f32 %v2411, %v2423
      %v2448 = vadd.f32 %v2412, %v2423
      %v2449 = vadd.f32 %v2413, %v2423
      %v2450 = vadd.f32 %v2414, %v2423
      %v2451 = vadd.f32 %v2415, %v2423
      %v2452 = vadd.f32 %v2416, %v2423
      %v2453 = vadd.f32 %v2417, %v2423
      %v2454 = vadd.f32 %v2418, %v2423
      %v2455 = vadd.f32 %v2419, %v2423
      %v2456 = vadd.f32 %v2420, %v2423
      %v2457 = vmax.f32 %v2425, 0.0
      %v2458 = vmax.f32 %v2426, 0.0
      %v2459 = vmax.f32 %v2427, 0.0
      %v2460 = vmax.f32 %v2428, 0.0
      %v2461 = vmax.f32 %v2429, 0.0
      %v2462 = vmax.f32 %v2430, 0.0
      %v2463 = vmax.f32 %v2431, 0.0
      %v2464 = vmax.f32 %v2432, 0.0
      %v2465 = vmax.f32 %v2433, 0.0
      %v2466 = vmax.f32 %v2434, 0.0
      %v2467 = vmax.f32 %v2435, 0.0
      %v2468 = vmax.f32 %v2436, 0.0
      %v2469 = vmax.f32 %v2437, 0.0
      %v2470 = vmax.f32 %v2438, 0.0
      %v2471 = vmax.f32 %v2439, 0.0
      %v2472 = vmax.f32 %v2440, 0.0
      %v2473 = vmax.f32 %v2441, 0.0
      %v2474 = vmax.f32 %v2442, 0.0
      %v2475 = vmax.f32 %v2443, 0.0
      %v2476 = vmax.f32 %v2444, 0.0
      %v2477 = vmax.f32 %v2445, 0.0
      %v2478 = vmax.f32 %v2446, 0.0
      %v2479 = vmax.f32 %v2447, 0.0
      %v2480 = vmax.f32 %v2448, 0.0
      %v2481 = vmax.f32 %v2449, 0.0
      %v2482 = vmax.f32 %v2450, 0.0
      %v2483 = vmax.f32 %v2451, 0.0
      %v2484 = vmax.f32 %v2452, 0.0
      %v2485 = vmax.f32 %v2453, 0.0
      %v2486 = vmax.f32 %v2454, 0.0
      %v2487 = vmax.f32 %v2455, 0.0
      %v2488 = vmax.f32 %v2456, 0.0
      %vm2489 = vcmask 130048
      %2490 = vst.msk [vmem:[%s452 + $0x8] sm:$0xff] %vm2489, %v2457
      %2491 = vst.msk [vmem:[%s452 + $0x10] sm:$0xff] %vm2489, %v2458
      %2492 = vst.msk [vmem:[%s452 + $0x28] sm:$0xff] %vm2489, %v2459
      %2493 = vst.msk [vmem:[%s452 + $0x30] sm:$0xff] %vm2489, %v2460
      %2494 = vst.msk [vmem:[%s452 + $0x48] sm:$0xff] %vm2489, %v2461
      %2495 = vst.msk [vmem:[%s452 + $0x50] sm:$0xff] %vm2489, %v2462
      %2496 = vst.msk [vmem:[%s452 + $0x68] sm:$0xff] %vm2489, %v2463
      %2497 = vst.msk [vmem:[%s452 + $0x70] sm:$0xff] %vm2489, %v2464
      %2498 = vst.msk [vmem:[%s452 + $0x88] sm:$0xff] %vm2489, %v2465
      %2499 = vst.msk [vmem:[%s452 + $0x90] sm:$0xff] %vm2489, %v2466
      %2500 = vst.msk [vmem:[%s452 + $0xa8] sm:$0xff] %vm2489, %v2467
      %2501 = vst.msk [vmem:[%s452 + $0xb0] sm:$0xff] %vm2489, %v2468
      %2502 = vst.msk [vmem:[%s452 + $0xc8] sm:$0xff] %vm2489, %v2469
      %2503 = vst.msk [vmem:[%s452 + $0xd0] sm:$0xff] %vm2489, %v2470
      %2504 = vst.msk [vmem:[%s452 + $0xe8] sm:$0xff] %vm2489, %v2471
      %2505 = vst.msk [vmem:[%s452 + $0xf0] sm:$0xff] %vm2489, %v2472
      %2506 = vst.msk [vmem:[%s452 + $0x108] sm:$0xff] %vm2489, %v2473
      %2507 = vst.msk [vmem:[%s452 + $0x110] sm:$0xff] %vm2489, %v2474
      %2508 = vst.msk [vmem:[%s452 + $0x128] sm:$0xff] %vm2489, %v2475
      %2509 = vst.msk [vmem:[%s452 + $0x130] sm:$0xff] %vm2489, %v2476
      %2510 = vst.msk [vmem:[%s452 + $0x148] sm:$0xff] %vm2489, %v2477
      %2511 = vst.msk [vmem:[%s452 + $0x150] sm:$0xff] %vm2489, %v2478
      %2512 = vst.msk [vmem:[%s452 + $0x168] sm:$0xff] %vm2489, %v2479
      %2513 = vst.msk [vmem:[%s452 + $0x170] sm:$0xff] %vm2489, %v2480
      %2514 = vst.msk [vmem:[%s452 + $0x188] sm:$0xff] %vm2489, %v2481
      %2515 = vst.msk [vmem:[%s452 + $0x190] sm:$0xff] %vm2489, %v2482
      %2516 = vst.msk [vmem:[%s452 + $0x1a8] sm:$0xff] %vm2489, %v2483
      %2517 = vst.msk [vmem:[%s452 + $0x1b0] sm:$0xff] %vm2489, %v2484
      %2518 = vst.msk [vmem:[%s452 + $0x1c8] sm:$0xff] %vm2489, %v2485
      %2519 = vst.msk [vmem:[%s452 + $0x1d0] sm:$0xff] %vm2489, %v2486
      %2520 = vst.msk [vmem:[%s452 + $0x1e8] sm:$0xff] %vm2489, %v2487
      %2521 = vst.msk [vmem:[%s452 + $0x1f0] sm:$0xff] %vm2489, %v2488
      %v2522 = vld [vmem:[#allocation2 + $0x7] sm:$0xff]
      %v2523 = vld [vmem:[#allocation2 + $0xf] sm:$0xff]
      %v2524 = vld [vmem:[#allocation2 + $0x27] sm:$0xff]
      %v2525 = vld [vmem:[#allocation2 + $0x2f] sm:$0xff]
      %v2526 = vld [vmem:[#allocation2 + $0x47] sm:$0xff]
      %v2527 = vld [vmem:[#allocation2 + $0x4f] sm:$0xff]
      %v2528 = vld [vmem:[#allocation2 + $0x67] sm:$0xff]
      %v2529 = vld [vmem:[#allocation2 + $0x6f] sm:$0xff]
      %v2530 = vld [vmem:[#allocation2 + $0x87] sm:$0xff]
      %v2531 = vld [vmem:[#allocation2 + $0x8f] sm:$0xff]
      %v2532 = vld [vmem:[#allocation2 + $0xa7] sm:$0xff]
      %v2533 = vld [vmem:[#allocation2 + $0xaf] sm:$0xff]
      %v2534 = vld [vmem:[#allocation2 + $0xc7] sm:$0xff]
      %v2535 = vld [vmem:[#allocation2 + $0xcf] sm:$0xff]
      %v2536 = vld [vmem:[#allocation2 + $0xe7] sm:$0xff]
      %v2537 = vld [vmem:[#allocation2 + $0xef] sm:$0xff]
      %v2538 = vld [vmem:[#allocation2 + $0x107] sm:$0xff]
      %v2539 = vld [vmem:[#allocation2 + $0x10f] sm:$0xff]
      %v2540 = vld [vmem:[#allocation2 + $0x127] sm:$0xff]
      %v2541 = vld [vmem:[#allocation2 + $0x12f] sm:$0xff]
      %v2542 = vld [vmem:[#allocation2 + $0x147] sm:$0xff]
      %v2543 = vld [vmem:[#allocation2 + $0x14f] sm:$0xff]
      %v2544 = vld [vmem:[#allocation2 + $0x167] sm:$0xff]
      %v2545 = vld [vmem:[#allocation2 + $0x16f] sm:$0xff]
      %v2546 = vld [vmem:[#allocation2 + $0x187] sm:$0xff]
      %v2547 = vld [vmem:[#allocation2 + $0x18f] sm:$0xff]
      %v2548 = vld [vmem:[#allocation2 + $0x1a7] sm:$0xff]
      %v2549 = vld [vmem:[#allocation2 + $0x1af] sm:$0xff]
      %v2550 = vld [vmem:[#allocation2 + $0x1c7] sm:$0xff]
      %v2551 = vld [vmem:[#allocation2 + $0x1cf] sm:$0xff]
      %v2552 = vld [vmem:[#allocation2 + $0x1e7] sm:$0xff]
      %v2553 = vld [vmem:[#allocation2 + $0x1ef] sm:$0xff]
      %v2554 = vpack.c.bf16 %v2523, %v2522
      %v2555 = vpack.c.bf16 %v2525, %v2524
      %v2556 = vpack.c.bf16 %v2527, %v2526
      %v2557 = vpack.c.bf16 %v2529, %v2528
      %v2558 = vpack.c.bf16 %v2531, %v2530
      %v2559 = vpack.c.bf16 %v2533, %v2532
      %v2560 = vpack.c.bf16 %v2535, %v2534
      %v2561 = vpack.c.bf16 %v2537, %v2536
      %v2562 = vpack.c.bf16 %v2539, %v2538
      %v2563 = vpack.c.bf16 %v2541, %v2540
      %v2564 = vpack.c.bf16 %v2543, %v2542
      %v2565 = vpack.c.bf16 %v2545, %v2544
      %v2566 = vpack.c.bf16 %v2547, %v2546
      %v2567 = vpack.c.bf16 %v2549, %v2548
      %v2568 = vpack.c.bf16 %v2551, %v2550
      %v2569 = vpack.c.bf16 %v2553, %v2552
      %v2570 = vld [vmem:[%s3] sm:$0xf]
      %v2571 = vld [vmem:[%s3 + $0x4] sm:$0xf]
      %v2572 = vld [vmem:[#allocation2 + $0x8] sm:$0xff]
      %v2573 = vld [vmem:[#allocation2 + $0x10] sm:$0xff]
      %v2574 = vld [vmem:[#allocation2 + $0x28] sm:$0xff]
      %v2575 = vld [vmem:[#allocation2 + $0x30] sm:$0xff]
      %v2576 = vld [vmem:[#allocation2 + $0x48] sm:$0xff]
      %v2577 = vld [vmem:[#allocation2 + $0x50] sm:$0xff]
      %v2578 = vld [vmem:[#allocation2 + $0x68] sm:$0xff]
      %v2579 = vld [vmem:[#allocation2 + $0x70] sm:$0xff]
      %v2580 = vld [vmem:[#allocation2 + $0x88] sm:$0xff]
      %v2581 = vld [vmem:[#allocation2 + $0x90] sm:$0xff]
      %v2582 = vld [vmem:[#allocation2 + $0xa8] sm:$0xff]
      %v2583 = vld [vmem:[#allocation2 + $0xb0] sm:$0xff]
      %v2584 = vld [vmem:[#allocation2 + $0xc8] sm:$0xff]
      %v2585 = vld [vmem:[#allocation2 + $0xd0] sm:$0xff]
      %v2586 = vld [vmem:[#allocation2 + $0xe8] sm:$0xff]
      %v2587 = vld [vmem:[#allocation2 + $0xf0] sm:$0xff]
      %v2588 = vld [vmem:[#allocation2 + $0x108] sm:$0xff]
      %v2589 = vld [vmem:[#allocation2 + $0x110] sm:$0xff]
      %v2590 = vld [vmem:[#allocation2 + $0x128] sm:$0xff]
      %v2591 = vld [vmem:[#allocation2 + $0x130] sm:$0xff]
      %v2592 = vld [vmem:[#allocation2 + $0x148] sm:$0xff]
      %v2593 = vld [vmem:[#allocation2 + $0x150] sm:$0xff]
      %v2594 = vld [vmem:[#allocation2 + $0x168] sm:$0xff]
      %v2595 = vld [vmem:[#allocation2 + $0x170] sm:$0xff]
      %v2596 = vld [vmem:[#allocation2 + $0x188] sm:$0xff]
      %v2597 = vld [vmem:[#allocation2 + $0x190] sm:$0xff]
      %v2598 = vld [vmem:[#allocation2 + $0x1a8] sm:$0xff]
      %v2599 = vld [vmem:[#allocation2 + $0x1b0] sm:$0xff]
      %v2600 = vld [vmem:[#allocation2 + $0x1c8] sm:$0xff]
      %v2601 = vld [vmem:[#allocation2 + $0x1d0] sm:$0xff]
      %v2602 = vld [vmem:[#allocation2 + $0x1e8] sm:$0xff]
      %v2603 = vld [vmem:[#allocation2 + $0x1f0] sm:$0xff]
      %v2604 = vpack.c.bf16 %v2573, %v2572
      %v2605 = vpack.c.bf16 %v2575, %v2574
      %v2606 = vpack.c.bf16 %v2577, %v2576
      %v2607 = vpack.c.bf16 %v2579, %v2578
      %v2608 = vpack.c.bf16 %v2581, %v2580
      %v2609 = vpack.c.bf16 %v2583, %v2582
      %v2610 = vpack.c.bf16 %v2585, %v2584
      %v2611 = vpack.c.bf16 %v2587, %v2586
      %v2612 = vpack.c.bf16 %v2589, %v2588
      %v2613 = vpack.c.bf16 %v2591, %v2590
      %v2614 = vpack.c.bf16 %v2593, %v2592
      %v2615 = vpack.c.bf16 %v2595, %v2594
      %v2616 = vpack.c.bf16 %v2597, %v2596
      %v2617 = vpack.c.bf16 %v2599, %v2598
      %v2618 = vpack.c.bf16 %v2601, %v2600
      %v2619 = vpack.c.bf16 %v2603, %v2602
      %s2620 = scalar_lea.vmem %s3, 8
      %v2621 = vld [vmem:[%s2620] sm:$0xf]
      %v2622 = vld [vmem:[%s2620 + $0x4] sm:$0xf]
      %v2625 = vunpack.c.l.b16 %v2621
      %v2626 = vunpack.c.l.b16 %v2622
      %v2627 = vpack.c.b16 %v2626, %v2625
      %v2630 = vsel %vm2489, %v2604, 0
      %v2633 = vsel %vm2489, %v2605, 0
      %v2636 = vsel %vm2489, %v2606, 0
      %v2639 = vsel %vm2489, %v2607, 0
      %v2642 = vsel %vm2489, %v2608, 0
      %v2645 = vsel %vm2489, %v2609, 0
      %v2648 = vsel %vm2489, %v2610, 0
      %v2651 = vsel %vm2489, %v2611, 0
      %v2654 = vsel %vm2489, %v2612, 0
      %v2657 = vsel %vm2489, %v2613, 0
      %v2660 = vsel %vm2489, %v2614, 0
      %v2663 = vsel %vm2489, %v2615, 0
      %v2666 = vsel %vm2489, %v2616, 0
      %v2669 = vsel %vm2489, %v2617, 0
      %v2672 = vsel %vm2489, %v2618, 0
      %v2675 = vsel %vm2489, %v2619, 0
      %2677 = vmatpush.bf16.msra.mxu0 0
      %2678 = vmatpush.bf16.msra.mxu0 0
      %2679 = vmatpush.bf16.msra.mxu0 0
      %2680 = vmatpush.bf16.msra.mxu0 0
      %2681 = vmatpush.bf16.msra.mxu0 0
      %2682 = vmatpush.bf16.msra.mxu0 0
      %2683 = vmatpush.bf16.msra.mxu0 0
      %2684 = vmatpush.bf16.msra.mxu0 %v2627
      %2685 = vmatmul.bf16.gmra.mxu0 %v2630
      %v2686 = vpop.f32.mrf.mxu0
      %v2687 = vadd.f32 0.0, %v2686
      %v2688 = vpop.f32.mrf.mxu0
      %v2689 = vadd.f32 0.0, %v2688
      %2690 = vmatmul.bf16.gmra.mxu0 %v2633
      %v2691 = vpop.f32.mrf.mxu0
      %v2692 = vadd.f32 0.0, %v2691
      %v2693 = vpop.f32.mrf.mxu0
      %v2694 = vadd.f32 0.0, %v2693
      %2695 = vmatmul.bf16.gmra.mxu0 %v2636
      %v2696 = vpop.f32.mrf.mxu0
      %v2697 = vadd.f32 0.0, %v2696
      %v2698 = vpop.f32.mrf.mxu0
      %v2699 = vadd.f32 0.0, %v2698
      %2700 = vmatmul.bf16.gmra.mxu0 %v2639
      %v2701 = vpop.f32.mrf.mxu0
      %v2702 = vadd.f32 0.0, %v2701
      %v2703 = vpop.f32.mrf.mxu0
      %v2704 = vadd.f32 0.0, %v2703
      %2705 = vmatmul.bf16.gmra.mxu0 %v2642
      %v2706 = vpop.f32.mrf.mxu0
      %v2707 = vadd.f32 0.0, %v2706
      %v2708 = vpop.f32.mrf.mxu0
      %v2709 = vadd.f32 0.0, %v2708
      %2710 = vmatmul.bf16.gmra.mxu0 %v2645
      %v2711 = vpop.f32.mrf.mxu0
      %v2712 = vadd.f32 0.0, %v2711
      %v2713 = vpop.f32.mrf.mxu0
      %v2714 = vadd.f32 0.0, %v2713
      %2715 = vmatmul.bf16.gmra.mxu0 %v2648
      %v2716 = vpop.f32.mrf.mxu0
      %v2717 = vadd.f32 0.0, %v2716
      %v2718 = vpop.f32.mrf.mxu0
      %v2719 = vadd.f32 0.0, %v2718
      %2720 = vmatmul.bf16.gmra.mxu0 %v2651
      %v2721 = vpop.f32.mrf.mxu0
      %v2722 = vadd.f32 0.0, %v2721
      %v2723 = vpop.f32.mrf.mxu0
      %v2724 = vadd.f32 0.0, %v2723
      %2725 = vmatmul.bf16.gmra.mxu0 %v2654
      %v2726 = vpop.f32.mrf.mxu0
      %v2727 = vadd.f32 0.0, %v2726
      %v2728 = vpop.f32.mrf.mxu0
      %v2729 = vadd.f32 0.0, %v2728
      %2730 = vmatmul.bf16.gmra.mxu0 %v2657
      %v2731 = vpop.f32.mrf.mxu0
      %v2732 = vadd.f32 0.0, %v2731
      %v2733 = vpop.f32.mrf.mxu0
      %v2734 = vadd.f32 0.0, %v2733
      %2735 = vmatmul.bf16.gmra.mxu0 %v2660
      %v2736 = vpop.f32.mrf.mxu0
      %v2737 = vadd.f32 0.0, %v2736
      %v2738 = vpop.f32.mrf.mxu0
      %v2739 = vadd.f32 0.0, %v2738
      %2740 = vmatmul.bf16.gmra.mxu0 %v2663
      %v2741 = vpop.f32.mrf.mxu0
      %v2742 = vadd.f32 0.0, %v2741
      %v2743 = vpop.f32.mrf.mxu0
      %v2744 = vadd.f32 0.0, %v2743
      %2745 = vmatmul.bf16.gmra.mxu0 %v2666
      %v2746 = vpop.f32.mrf.mxu0
      %v2747 = vadd.f32 0.0, %v2746
      %v2748 = vpop.f32.mrf.mxu0
      %v2749 = vadd.f32 0.0, %v2748
      %2750 = vmatmul.bf16.gmra.mxu0 %v2669
      %v2751 = vpop.f32.mrf.mxu0
      %v2752 = vadd.f32 0.0, %v2751
      %v2753 = vpop.f32.mrf.mxu0
      %v2754 = vadd.f32 0.0, %v2753
      %2755 = vmatmul.bf16.gmra.mxu0 %v2672
      %v2756 = vpop.f32.mrf.mxu0
      %v2757 = vadd.f32 0.0, %v2756
      %v2758 = vpop.f32.mrf.mxu0
      %v2759 = vadd.f32 0.0, %v2758
      %2760 = vmatmul.bf16.gmra.mxu0 %v2675
      %v2761 = vpop.f32.mrf.mxu0
      %v2762 = vadd.f32 0.0, %v2761
      %v2763 = vpop.f32.mrf.mxu0
      %v2764 = vadd.f32 0.0, %v2763
      %2765 = vdwg.mxu0
      %v2768 = vunpack.c.l.b16 %v2570
      %v2769 = vunpack.c.l.b16 %v2571
      %v2770 = vpack.c.b16 %v2769, %v2768
      %v2773 = vsel %vm2489, %v2554, 0
      %v2776 = vsel %vm2489, %v2555, 0
      %v2779 = vsel %vm2489, %v2556, 0
      %v2782 = vsel %vm2489, %v2557, 0
      %v2785 = vsel %vm2489, %v2558, 0
      %v2788 = vsel %vm2489, %v2559, 0
      %v2791 = vsel %vm2489, %v2560, 0
      %v2794 = vsel %vm2489, %v2561, 0
      %v2797 = vsel %vm2489, %v2562, 0
      %v2800 = vsel %vm2489, %v2563, 0
      %v2803 = vsel %vm2489, %v2564, 0
      %v2806 = vsel %vm2489, %v2565, 0
      %v2809 = vsel %vm2489, %v2566, 0
      %v2812 = vsel %vm2489, %v2567, 0
      %v2815 = vsel %vm2489, %v2568, 0
      %v2818 = vsel %vm2489, %v2569, 0
      %2820 = vmatpush.bf16.msra.mxu0 0
      %2821 = vmatpush.bf16.msra.mxu0 0
      %2822 = vmatpush.bf16.msra.mxu0 0
      %2823 = vmatpush.bf16.msra.mxu0 0
      %2824 = vmatpush.bf16.msra.mxu0 0
      %2825 = vmatpush.bf16.msra.mxu0 0
      %2826 = vmatpush.bf16.msra.mxu0 0
      %2827 = vmatpush.bf16.msra.mxu0 %v2770
      %2828 = vmatmul.bf16.gmra.mxu0 %v2773
      %v2829 = vpop.f32.mrf.mxu0
      %v2830 = vadd.f32 %v2687, %v2829
      %v2831 = vpop.f32.mrf.mxu0
      %v2832 = vadd.f32 %v2689, %v2831
      %2833 = vmatmul.bf16.gmra.mxu0 %v2776
      %v2834 = vpop.f32.mrf.mxu0
      %v2835 = vadd.f32 %v2692, %v2834
      %v2836 = vpop.f32.mrf.mxu0
      %v2837 = vadd.f32 %v2694, %v2836
      %2838 = vmatmul.bf16.gmra.mxu0 %v2779
      %v2839 = vpop.f32.mrf.mxu0
      %v2840 = vadd.f32 %v2697, %v2839
      %v2841 = vpop.f32.mrf.mxu0
      %v2842 = vadd.f32 %v2699, %v2841
      %2843 = vmatmul.bf16.gmra.mxu0 %v2782
      %v2844 = vpop.f32.mrf.mxu0
      %v2845 = vadd.f32 %v2702, %v2844
      %v2846 = vpop.f32.mrf.mxu0
      %v2847 = vadd.f32 %v2704, %v2846
      %2848 = vmatmul.bf16.gmra.mxu0 %v2785
      %v2849 = vpop.f32.mrf.mxu0
      %v2850 = vadd.f32 %v2707, %v2849
      %v2851 = vpop.f32.mrf.mxu0
      %v2852 = vadd.f32 %v2709, %v2851
      %2853 = vmatmul.bf16.gmra.mxu0 %v2788
      %v2854 = vpop.f32.mrf.mxu0
      %v2855 = vadd.f32 %v2712, %v2854
      %v2856 = vpop.f32.mrf.mxu0
      %v2857 = vadd.f32 %v2714, %v2856
      %2858 = vmatmul.bf16.gmra.mxu0 %v2791
      %v2859 = vpop.f32.mrf.mxu0
      %v2860 = vadd.f32 %v2717, %v2859
      %v2861 = vpop.f32.mrf.mxu0
      %v2862 = vadd.f32 %v2719, %v2861
      %2863 = vmatmul.bf16.gmra.mxu0 %v2794
      %v2864 = vpop.f32.mrf.mxu0
      %v2865 = vadd.f32 %v2722, %v2864
      %v2866 = vpop.f32.mrf.mxu0
      %v2867 = vadd.f32 %v2724, %v2866
      %2868 = vmatmul.bf16.gmra.mxu0 %v2797
      %v2869 = vpop.f32.mrf.mxu0
      %v2870 = vadd.f32 %v2727, %v2869
      %v2871 = vpop.f32.mrf.mxu0
      %v2872 = vadd.f32 %v2729, %v2871
      %2873 = vmatmul.bf16.gmra.mxu0 %v2800
      %v2874 = vpop.f32.mrf.mxu0
      %v2875 = vadd.f32 %v2732, %v2874
      %v2876 = vpop.f32.mrf.mxu0
      %v2877 = vadd.f32 %v2734, %v2876
      %2878 = vmatmul.bf16.gmra.mxu0 %v2803
      %v2879 = vpop.f32.mrf.mxu0
      %v2880 = vadd.f32 %v2737, %v2879
      %v2881 = vpop.f32.mrf.mxu0
      %v2882 = vadd.f32 %v2739, %v2881
      %2883 = vmatmul.bf16.gmra.mxu0 %v2806
      %v2884 = vpop.f32.mrf.mxu0
      %v2885 = vadd.f32 %v2742, %v2884
      %v2886 = vpop.f32.mrf.mxu0
      %v2887 = vadd.f32 %v2744, %v2886
      %2888 = vmatmul.bf16.gmra.mxu0 %v2809
      %v2889 = vpop.f32.mrf.mxu0
      %v2890 = vadd.f32 %v2747, %v2889
      %v2891 = vpop.f32.mrf.mxu0
      %v2892 = vadd.f32 %v2749, %v2891
      %2893 = vmatmul.bf16.gmra.mxu0 %v2812
      %v2894 = vpop.f32.mrf.mxu0
      %v2895 = vadd.f32 %v2752, %v2894
      %v2896 = vpop.f32.mrf.mxu0
      %v2897 = vadd.f32 %v2754, %v2896
      %2898 = vmatmul.bf16.gmra.mxu0 %v2815
      %v2899 = vpop.f32.mrf.mxu0
      %v2900 = vadd.f32 %v2757, %v2899
      %v2901 = vpop.f32.mrf.mxu0
      %v2902 = vadd.f32 %v2759, %v2901
      %2903 = vmatmul.bf16.gmra.mxu0 %v2818
      %v2904 = vpop.f32.mrf.mxu0
      %v2905 = vadd.f32 %v2762, %v2904
      %v2906 = vpop.f32.mrf.mxu0
      %v2907 = vadd.f32 %v2764, %v2906
      %2908 = vdwg.mxu0
      %v2909 = vld [vmem:[#allocation2 + $0x9] sm:$0xff]
      %v2910 = vld [vmem:[#allocation2 + $0x11] sm:$0xff]
      %v2911 = vld [vmem:[#allocation2 + $0x29] sm:$0xff]
      %v2912 = vld [vmem:[#allocation2 + $0x31] sm:$0xff]
      %v2913 = vld [vmem:[#allocation2 + $0x49] sm:$0xff]
      %v2914 = vld [vmem:[#allocation2 + $0x51] sm:$0xff]
      %v2915 = vld [vmem:[#allocation2 + $0x69] sm:$0xff]
      %v2916 = vld [vmem:[#allocation2 + $0x71] sm:$0xff]
      %v2917 = vld [vmem:[#allocation2 + $0x89] sm:$0xff]
      %v2918 = vld [vmem:[#allocation2 + $0x91] sm:$0xff]
      %v2919 = vld [vmem:[#allocation2 + $0xa9] sm:$0xff]
      %v2920 = vld [vmem:[#allocation2 + $0xb1] sm:$0xff]
      %v2921 = vld [vmem:[#allocation2 + $0xc9] sm:$0xff]
      %v2922 = vld [vmem:[#allocation2 + $0xd1] sm:$0xff]
      %v2923 = vld [vmem:[#allocation2 + $0xe9] sm:$0xff]
      %v2924 = vld [vmem:[#allocation2 + $0xf1] sm:$0xff]
      %v2925 = vld [vmem:[#allocation2 + $0x109] sm:$0xff]
      %v2926 = vld [vmem:[#allocation2 + $0x111] sm:$0xff]
      %v2927 = vld [vmem:[#allocation2 + $0x129] sm:$0xff]
      %v2928 = vld [vmem:[#allocation2 + $0x131] sm:$0xff]
      %v2929 = vld [vmem:[#allocation2 + $0x149] sm:$0xff]
      %v2930 = vld [vmem:[#allocation2 + $0x151] sm:$0xff]
      %v2931 = vld [vmem:[#allocation2 + $0x169] sm:$0xff]
      %v2932 = vld [vmem:[#allocation2 + $0x171] sm:$0xff]
      %v2933 = vld [vmem:[#allocation2 + $0x189] sm:$0xff]
      %v2934 = vld [vmem:[#allocation2 + $0x191] sm:$0xff]
      %v2935 = vld [vmem:[#allocation2 + $0x1a9] sm:$0xff]
      %v2936 = vld [vmem:[#allocation2 + $0x1b1] sm:$0xff]
      %v2937 = vld [vmem:[#allocation2 + $0x1c9] sm:$0xff]
      %v2938 = vld [vmem:[#allocation2 + $0x1d1] sm:$0xff]
      %v2939 = vld [vmem:[#allocation2 + $0x1e9] sm:$0xff]
      %v2940 = vld [vmem:[#allocation2 + $0x1f1] sm:$0xff]
      %v2941 = vpack.c.bf16 %v2910, %v2909
      %v2942 = vpack.c.bf16 %v2912, %v2911
      %v2943 = vpack.c.bf16 %v2914, %v2913
      %v2944 = vpack.c.bf16 %v2916, %v2915
      %v2945 = vpack.c.bf16 %v2918, %v2917
      %v2946 = vpack.c.bf16 %v2920, %v2919
      %v2947 = vpack.c.bf16 %v2922, %v2921
      %v2948 = vpack.c.bf16 %v2924, %v2923
      %v2949 = vpack.c.bf16 %v2926, %v2925
      %v2950 = vpack.c.bf16 %v2928, %v2927
      %v2951 = vpack.c.bf16 %v2930, %v2929
      %v2952 = vpack.c.bf16 %v2932, %v2931
      %v2953 = vpack.c.bf16 %v2934, %v2933
      %v2954 = vpack.c.bf16 %v2936, %v2935
      %v2955 = vpack.c.bf16 %v2938, %v2937
      %v2956 = vpack.c.bf16 %v2940, %v2939
      %s2957 = scalar_lea.vmem %s3, 16
      %v2958 = vld [vmem:[%s2957] sm:$0xf]
      %v2959 = vld [vmem:[%s2957 + $0x4] sm:$0xf]
      %v2962 = vunpack.c.l.b16 %v2958
      %v2963 = vunpack.c.l.b16 %v2959
      %v2964 = vpack.c.b16 %v2963, %v2962
      %v2967 = vsel %vm2489, %v2941, 0
      %v2970 = vsel %vm2489, %v2942, 0
      %v2973 = vsel %vm2489, %v2943, 0
      %v2976 = vsel %vm2489, %v2944, 0
      %v2979 = vsel %vm2489, %v2945, 0
      %v2982 = vsel %vm2489, %v2946, 0
      %v2985 = vsel %vm2489, %v2947, 0
      %v2988 = vsel %vm2489, %v2948, 0
      %v2991 = vsel %vm2489, %v2949, 0
      %v2994 = vsel %vm2489, %v2950, 0
      %v2997 = vsel %vm2489, %v2951, 0
      %v3000 = vsel %vm2489, %v2952, 0
      %v3003 = vsel %vm2489, %v2953, 0
      %v3006 = vsel %vm2489, %v2954, 0
      %v3009 = vsel %vm2489, %v2955, 0
      %v3012 = vsel %vm2489, %v2956, 0
      %3014 = vmatpush.bf16.msra.mxu0 0
      %3015 = vmatpush.bf16.msra.mxu0 0
      %3016 = vmatpush.bf16.msra.mxu0 0
      %3017 = vmatpush.bf16.msra.mxu0 0
      %3018 = vmatpush.bf16.msra.mxu0 0
      %3019 = vmatpush.bf16.msra.mxu0 0
      %3020 = vmatpush.bf16.msra.mxu0 0
      %3021 = vmatpush.bf16.msra.mxu0 %v2964
      %3022 = vmatmul.bf16.gmra.mxu0 %v2967
      %v3023 = vpop.f32.mrf.mxu0
      %v3024 = vadd.f32 0.0, %v3023
      %v3025 = vpop.f32.mrf.mxu0
      %v3026 = vadd.f32 0.0, %v3025
      %3027 = vmatmul.bf16.gmra.mxu0 %v2970
      %v3028 = vpop.f32.mrf.mxu0
      %v3029 = vadd.f32 0.0, %v3028
      %v3030 = vpop.f32.mrf.mxu0
      %v3031 = vadd.f32 0.0, %v3030
      %3032 = vmatmul.bf16.gmra.mxu0 %v2973
      %v3033 = vpop.f32.mrf.mxu0
      %v3034 = vadd.f32 0.0, %v3033
      %v3035 = vpop.f32.mrf.mxu0
      %v3036 = vadd.f32 0.0, %v3035
      %3037 = vmatmul.bf16.gmra.mxu0 %v2976
      %v3038 = vpop.f32.mrf.mxu0
      %v3039 = vadd.f32 0.0, %v3038
      %v3040 = vpop.f32.mrf.mxu0
      %v3041 = vadd.f32 0.0, %v3040
      %3042 = vmatmul.bf16.gmra.mxu0 %v2979
      %v3043 = vpop.f32.mrf.mxu0
      %v3044 = vadd.f32 0.0, %v3043
      %v3045 = vpop.f32.mrf.mxu0
      %v3046 = vadd.f32 0.0, %v3045
      %3047 = vmatmul.bf16.gmra.mxu0 %v2982
      %v3048 = vpop.f32.mrf.mxu0
      %v3049 = vadd.f32 0.0, %v3048
      %v3050 = vpop.f32.mrf.mxu0
      %v3051 = vadd.f32 0.0, %v3050
      %3052 = vmatmul.bf16.gmra.mxu0 %v2985
      %v3053 = vpop.f32.mrf.mxu0
      %v3054 = vadd.f32 0.0, %v3053
      %v3055 = vpop.f32.mrf.mxu0
      %v3056 = vadd.f32 0.0, %v3055
      %3057 = vmatmul.bf16.gmra.mxu0 %v2988
      %v3058 = vpop.f32.mrf.mxu0
      %v3059 = vadd.f32 0.0, %v3058
      %v3060 = vpop.f32.mrf.mxu0
      %v3061 = vadd.f32 0.0, %v3060
      %3062 = vmatmul.bf16.gmra.mxu0 %v2991
      %v3063 = vpop.f32.mrf.mxu0
      %v3064 = vadd.f32 0.0, %v3063
      %v3065 = vpop.f32.mrf.mxu0
      %v3066 = vadd.f32 0.0, %v3065
      %3067 = vmatmul.bf16.gmra.mxu0 %v2994
      %v3068 = vpop.f32.mrf.mxu0
      %v3069 = vadd.f32 0.0, %v3068
      %v3070 = vpop.f32.mrf.mxu0
      %v3071 = vadd.f32 0.0, %v3070
      %3072 = vmatmul.bf16.gmra.mxu0 %v2997
      %v3073 = vpop.f32.mrf.mxu0
      %v3074 = vadd.f32 0.0, %v3073
      %v3075 = vpop.f32.mrf.mxu0
      %v3076 = vadd.f32 0.0, %v3075
      %3077 = vmatmul.bf16.gmra.mxu0 %v3000
      %v3078 = vpop.f32.mrf.mxu0
      %v3079 = vadd.f32 0.0, %v3078
      %v3080 = vpop.f32.mrf.mxu0
      %v3081 = vadd.f32 0.0, %v3080
      %3082 = vmatmul.bf16.gmra.mxu0 %v3003
      %v3083 = vpop.f32.mrf.mxu0
      %v3084 = vadd.f32 0.0, %v3083
      %v3085 = vpop.f32.mrf.mxu0
      %v3086 = vadd.f32 0.0, %v3085
      %3087 = vmatmul.bf16.gmra.mxu0 %v3006
      %v3088 = vpop.f32.mrf.mxu0
      %v3089 = vadd.f32 0.0, %v3088
      %v3090 = vpop.f32.mrf.mxu0
      %v3091 = vadd.f32 0.0, %v3090
      %3092 = vmatmul.bf16.gmra.mxu0 %v3009
      %v3093 = vpop.f32.mrf.mxu0
      %v3094 = vadd.f32 0.0, %v3093
      %v3095 = vpop.f32.mrf.mxu0
      %v3096 = vadd.f32 0.0, %v3095
      %3097 = vmatmul.bf16.gmra.mxu0 %v3012
      %v3098 = vpop.f32.mrf.mxu0
      %v3099 = vadd.f32 0.0, %v3098
      %v3100 = vpop.f32.mrf.mxu0
      %v3101 = vadd.f32 0.0, %v3100
      %3102 = vdwg.mxu0
      %v3103 = vadd.f32 %v2830, %v3024
      %v3104 = vadd.f32 %v2832, %v3026
      %v3105 = vadd.f32 %v2835, %v3029
      %v3106 = vadd.f32 %v2837, %v3031
      %v3107 = vadd.f32 %v2840, %v3034
      %v3108 = vadd.f32 %v2842, %v3036
      %v3109 = vadd.f32 %v2845, %v3039
      %v3110 = vadd.f32 %v2847, %v3041
      %v3111 = vadd.f32 %v2850, %v3044
      %v3112 = vadd.f32 %v2852, %v3046
      %v3113 = vadd.f32 %v2855, %v3049
      %v3114 = vadd.f32 %v2857, %v3051
      %v3115 = vadd.f32 %v2860, %v3054
      %v3116 = vadd.f32 %v2862, %v3056
      %v3117 = vadd.f32 %v2865, %v3059
      %v3118 = vadd.f32 %v2867, %v3061
      %v3119 = vadd.f32 %v2870, %v3064
      %v3120 = vadd.f32 %v2872, %v3066
      %v3121 = vadd.f32 %v2875, %v3069
      %v3122 = vadd.f32 %v2877, %v3071
      %v3123 = vadd.f32 %v2880, %v3074
      %v3124 = vadd.f32 %v2882, %v3076
      %v3125 = vadd.f32 %v2885, %v3079
      %v3126 = vadd.f32 %v2887, %v3081
      %v3127 = vadd.f32 %v2890, %v3084
      %v3128 = vadd.f32 %v2892, %v3086
      %v3129 = vadd.f32 %v2895, %v3089
      %v3130 = vadd.f32 %v2897, %v3091
      %v3131 = vadd.f32 %v2900, %v3094
      %v3132 = vadd.f32 %v2902, %v3096
      %v3133 = vadd.f32 %v2905, %v3099
      %v3134 = vadd.f32 %v2907, %v3101
      %v3135 = vld [vmem:[%s452 + $0x7] sm:$0xff]
      %v3136 = vld [vmem:[%s452 + $0xf] sm:$0xff]
      %v3137 = vld [vmem:[%s452 + $0x27] sm:$0xff]
      %v3138 = vld [vmem:[%s452 + $0x2f] sm:$0xff]
      %v3139 = vld [vmem:[%s452 + $0x47] sm:$0xff]
      %v3140 = vld [vmem:[%s452 + $0x4f] sm:$0xff]
      %v3141 = vld [vmem:[%s452 + $0x67] sm:$0xff]
      %v3142 = vld [vmem:[%s452 + $0x6f] sm:$0xff]
      %v3143 = vld [vmem:[%s452 + $0x87] sm:$0xff]
      %v3144 = vld [vmem:[%s452 + $0x8f] sm:$0xff]
      %v3145 = vld [vmem:[%s452 + $0xa7] sm:$0xff]
      %v3146 = vld [vmem:[%s452 + $0xaf] sm:$0xff]
      %v3147 = vld [vmem:[%s452 + $0xc7] sm:$0xff]
      %v3148 = vld [vmem:[%s452 + $0xcf] sm:$0xff]
      %v3149 = vld [vmem:[%s452 + $0xe7] sm:$0xff]
      %v3150 = vld [vmem:[%s452 + $0xef] sm:$0xff]
      %v3151 = vld [vmem:[%s452 + $0x107] sm:$0xff]
      %v3152 = vld [vmem:[%s452 + $0x10f] sm:$0xff]
      %v3153 = vld [vmem:[%s452 + $0x127] sm:$0xff]
      %v3154 = vld [vmem:[%s452 + $0x12f] sm:$0xff]
      %v3155 = vld [vmem:[%s452 + $0x147] sm:$0xff]
      %v3156 = vld [vmem:[%s452 + $0x14f] sm:$0xff]
      %v3157 = vld [vmem:[%s452 + $0x167] sm:$0xff]
      %v3158 = vld [vmem:[%s452 + $0x16f] sm:$0xff]
      %v3159 = vld [vmem:[%s452 + $0x187] sm:$0xff]
      %v3160 = vld [vmem:[%s452 + $0x18f] sm:$0xff]
      %v3161 = vld [vmem:[%s452 + $0x1a7] sm:$0xff]
      %v3162 = vld [vmem:[%s452 + $0x1af] sm:$0xff]
      %v3163 = vld [vmem:[%s452 + $0x1c7] sm:$0xff]
      %v3164 = vld [vmem:[%s452 + $0x1cf] sm:$0xff]
      %v3165 = vld [vmem:[%s452 + $0x1e7] sm:$0xff]
      %v3166 = vld [vmem:[%s452 + $0x1ef] sm:$0xff]
      %v3167 = vpack.c.bf16 %v3136, %v3135
      %v3168 = vpack.c.bf16 %v3138, %v3137
      %v3169 = vpack.c.bf16 %v3140, %v3139
      %v3170 = vpack.c.bf16 %v3142, %v3141
      %v3171 = vpack.c.bf16 %v3144, %v3143
      %v3172 = vpack.c.bf16 %v3146, %v3145
      %v3173 = vpack.c.bf16 %v3148, %v3147
      %v3174 = vpack.c.bf16 %v3150, %v3149
      %v3175 = vpack.c.bf16 %v3152, %v3151
      %v3176 = vpack.c.bf16 %v3154, %v3153
      %v3177 = vpack.c.bf16 %v3156, %v3155
      %v3178 = vpack.c.bf16 %v3158, %v3157
      %v3179 = vpack.c.bf16 %v3160, %v3159
      %v3180 = vpack.c.bf16 %v3162, %v3161
      %v3181 = vpack.c.bf16 %v3164, %v3163
      %v3182 = vpack.c.bf16 %v3166, %v3165
      %s3183 = scalar_lea.vmem %s3, 24
      %v3184 = vld [vmem:[%s3183] sm:$0xf]
      %v3185 = vld [vmem:[%s3183 + $0x4] sm:$0xf]
      %v3188 = vunpack.c.l.b16 %v3184
      %v3189 = vunpack.c.l.b16 %v3185
      %v3190 = vpack.c.b16 %v3189, %v3188
      %v3193 = vsel %vm2489, %v3167, 0
      %v3196 = vsel %vm2489, %v3168, 0
      %v3199 = vsel %vm2489, %v3169, 0
      %v3202 = vsel %vm2489, %v3170, 0
      %v3205 = vsel %vm2489, %v3171, 0
      %v3208 = vsel %vm2489, %v3172, 0
      %v3211 = vsel %vm2489, %v3173, 0
      %v3214 = vsel %vm2489, %v3174, 0
      %v3217 = vsel %vm2489, %v3175, 0
      %v3220 = vsel %vm2489, %v3176, 0
      %v3223 = vsel %vm2489, %v3177, 0
      %v3226 = vsel %vm2489, %v3178, 0
      %v3229 = vsel %vm2489, %v3179, 0
      %v3232 = vsel %vm2489, %v3180, 0
      %v3235 = vsel %vm2489, %v3181, 0
      %v3238 = vsel %vm2489, %v3182, 0
      %3240 = vmatpush.bf16.msra.mxu0 0
      %3241 = vmatpush.bf16.msra.mxu0 0
      %3242 = vmatpush.bf16.msra.mxu0 0
      %3243 = vmatpush.bf16.msra.mxu0 0
      %3244 = vmatpush.bf16.msra.mxu0 0
      %3245 = vmatpush.bf16.msra.mxu0 0
      %3246 = vmatpush.bf16.msra.mxu0 0
      %3247 = vmatpush.bf16.msra.mxu0 %v3190
      %3248 = vmatmul.bf16.gmra.mxu0 %v3193
      %v3249 = vpop.f32.mrf.mxu0
      %v3250 = vadd.f32 0.0, %v3249
      %v3251 = vpop.f32.mrf.mxu0
      %v3252 = vadd.f32 0.0, %v3251
      %3253 = vmatmul.bf16.gmra.mxu0 %v3196
      %v3254 = vpop.f32.mrf.mxu0
      %v3255 = vadd.f32 0.0, %v3254
      %v3256 = vpop.f32.mrf.mxu0
      %v3257 = vadd.f32 0.0, %v3256
      %3258 = vmatmul.bf16.gmra.mxu0 %v3199
      %v3259 = vpop.f32.mrf.mxu0
      %v3260 = vadd.f32 0.0, %v3259
      %v3261 = vpop.f32.mrf.mxu0
      %v3262 = vadd.f32 0.0, %v3261
      %3263 = vmatmul.bf16.gmra.mxu0 %v3202
      %v3264 = vpop.f32.mrf.mxu0
      %v3265 = vadd.f32 0.0, %v3264
      %v3266 = vpop.f32.mrf.mxu0
      %v3267 = vadd.f32 0.0, %v3266
      %3268 = vmatmul.bf16.gmra.mxu0 %v3205
      %v3269 = vpop.f32.mrf.mxu0
      %v3270 = vadd.f32 0.0, %v3269
      %v3271 = vpop.f32.mrf.mxu0
      %v3272 = vadd.f32 0.0, %v3271
      %3273 = vmatmul.bf16.gmra.mxu0 %v3208
      %v3274 = vpop.f32.mrf.mxu0
      %v3275 = vadd.f32 0.0, %v3274
      %v3276 = vpop.f32.mrf.mxu0
      %v3277 = vadd.f32 0.0, %v3276
      %3278 = vmatmul.bf16.gmra.mxu0 %v3211
      %v3279 = vpop.f32.mrf.mxu0
      %v3280 = vadd.f32 0.0, %v3279
      %v3281 = vpop.f32.mrf.mxu0
      %v3282 = vadd.f32 0.0, %v3281
      %3283 = vmatmul.bf16.gmra.mxu0 %v3214
      %v3284 = vpop.f32.mrf.mxu0
      %v3285 = vadd.f32 0.0, %v3284
      %v3286 = vpop.f32.mrf.mxu0
      %v3287 = vadd.f32 0.0, %v3286
      %3288 = vmatmul.bf16.gmra.mxu0 %v3217
      %v3289 = vpop.f32.mrf.mxu0
      %v3290 = vadd.f32 0.0, %v3289
      %v3291 = vpop.f32.mrf.mxu0
      %v3292 = vadd.f32 0.0, %v3291
      %3293 = vmatmul.bf16.gmra.mxu0 %v3220
      %v3294 = vpop.f32.mrf.mxu0
      %v3295 = vadd.f32 0.0, %v3294
      %v3296 = vpop.f32.mrf.mxu0
      %v3297 = vadd.f32 0.0, %v3296
      %3298 = vmatmul.bf16.gmra.mxu0 %v3223
      %v3299 = vpop.f32.mrf.mxu0
      %v3300 = vadd.f32 0.0, %v3299
      %v3301 = vpop.f32.mrf.mxu0
      %v3302 = vadd.f32 0.0, %v3301
      %3303 = vmatmul.bf16.gmra.mxu0 %v3226
      %v3304 = vpop.f32.mrf.mxu0
      %v3305 = vadd.f32 0.0, %v3304
      %v3306 = vpop.f32.mrf.mxu0
      %v3307 = vadd.f32 0.0, %v3306
      %3308 = vmatmul.bf16.gmra.mxu0 %v3229
      %v3309 = vpop.f32.mrf.mxu0
      %v3310 = vadd.f32 0.0, %v3309
      %v3311 = vpop.f32.mrf.mxu0
      %v3312 = vadd.f32 0.0, %v3311
      %3313 = vmatmul.bf16.gmra.mxu0 %v3232
      %v3314 = vpop.f32.mrf.mxu0
      %v3315 = vadd.f32 0.0, %v3314
      %v3316 = vpop.f32.mrf.mxu0
      %v3317 = vadd.f32 0.0, %v3316
      %3318 = vmatmul.bf16.gmra.mxu0 %v3235
      %v3319 = vpop.f32.mrf.mxu0
      %v3320 = vadd.f32 0.0, %v3319
      %v3321 = vpop.f32.mrf.mxu0
      %v3322 = vadd.f32 0.0, %v3321
      %3323 = vmatmul.bf16.gmra.mxu0 %v3238
      %v3324 = vpop.f32.mrf.mxu0
      %v3325 = vadd.f32 0.0, %v3324
      %v3326 = vpop.f32.mrf.mxu0
      %v3327 = vadd.f32 0.0, %v3326
      %3328 = vdwg.mxu0
      %v3329 = vadd.f32 %v3103, %v3250
      %v3330 = vadd.f32 %v3104, %v3252
      %v3331 = vadd.f32 %v3105, %v3255
      %v3332 = vadd.f32 %v3106, %v3257
      %v3333 = vadd.f32 %v3107, %v3260
      %v3334 = vadd.f32 %v3108, %v3262
      %v3335 = vadd.f32 %v3109, %v3265
      %v3336 = vadd.f32 %v3110, %v3267
      %v3337 = vadd.f32 %v3111, %v3270
      %v3338 = vadd.f32 %v3112, %v3272
      %v3339 = vadd.f32 %v3113, %v3275
      %v3340 = vadd.f32 %v3114, %v3277
      %v3341 = vadd.f32 %v3115, %v3280
      %v3342 = vadd.f32 %v3116, %v3282
      %v3343 = vadd.f32 %v3117, %v3285
      %v3344 = vadd.f32 %v3118, %v3287
      %v3345 = vadd.f32 %v3119, %v3290
      %v3346 = vadd.f32 %v3120, %v3292
      %v3347 = vadd.f32 %v3121, %v3295
      %v3348 = vadd.f32 %v3122, %v3297
      %v3349 = vadd.f32 %v3123, %v3300
      %v3350 = vadd.f32 %v3124, %v3302
      %v3351 = vadd.f32 %v3125, %v3305
      %v3352 = vadd.f32 %v3126, %v3307
      %v3353 = vadd.f32 %v3127, %v3310
      %v3354 = vadd.f32 %v3128, %v3312
      %v3355 = vadd.f32 %v3129, %v3315
      %v3356 = vadd.f32 %v3130, %v3317
      %v3357 = vadd.f32 %v3131, %v3320
      %v3358 = vadd.f32 %v3132, %v3322
      %v3359 = vadd.f32 %v3133, %v3325
      %v3360 = vadd.f32 %v3134, %v3327
      %v3361 = vld [vmem:[%s452 + $0x8] sm:$0xff]
      %v3362 = vld [vmem:[%s452 + $0x10] sm:$0xff]
      %v3363 = vld [vmem:[%s452 + $0x28] sm:$0xff]
      %v3364 = vld [vmem:[%s452 + $0x30] sm:$0xff]
      %v3365 = vld [vmem:[%s452 + $0x48] sm:$0xff]
      %v3366 = vld [vmem:[%s452 + $0x50] sm:$0xff]
      %v3367 = vld [vmem:[%s452 + $0x68] sm:$0xff]
      %v3368 = vld [vmem:[%s452 + $0x70] sm:$0xff]
      %v3369 = vld [vmem:[%s452 + $0x88] sm:$0xff]
      %v3370 = vld [vmem:[%s452 + $0x90] sm:$0xff]
      %v3371 = vld [vmem:[%s452 + $0xa8] sm:$0xff]
      %v3372 = vld [vmem:[%s452 + $0xb0] sm:$0xff]
      %v3373 = vld [vmem:[%s452 + $0xc8] sm:$0xff]
      %v3374 = vld [vmem:[%s452 + $0xd0] sm:$0xff]
      %v3375 = vld [vmem:[%s452 + $0xe8] sm:$0xff]
      %v3376 = vld [vmem:[%s452 + $0xf0] sm:$0xff]
      %v3377 = vld [vmem:[%s452 + $0x108] sm:$0xff]
      %v3378 = vld [vmem:[%s452 + $0x110] sm:$0xff]
      %v3379 = vld [vmem:[%s452 + $0x128] sm:$0xff]
      %v3380 = vld [vmem:[%s452 + $0x130] sm:$0xff]
      %v3381 = vld [vmem:[%s452 + $0x148] sm:$0xff]
      %v3382 = vld [vmem:[%s452 + $0x150] sm:$0xff]
      %v3383 = vld [vmem:[%s452 + $0x168] sm:$0xff]
      %v3384 = vld [vmem:[%s452 + $0x170] sm:$0xff]
      %v3385 = vld [vmem:[%s452 + $0x188] sm:$0xff]
      %v3386 = vld [vmem:[%s452 + $0x190] sm:$0xff]
      %v3387 = vld [vmem:[%s452 + $0x1a8] sm:$0xff]
      %v3388 = vld [vmem:[%s452 + $0x1b0] sm:$0xff]
      %v3389 = vld [vmem:[%s452 + $0x1c8] sm:$0xff]
      %v3390 = vld [vmem:[%s452 + $0x1d0] sm:$0xff]
      %v3391 = vld [vmem:[%s452 + $0x1e8] sm:$0xff]
      %v3392 = vld [vmem:[%s452 + $0x1f0] sm:$0xff]
      %v3393 = vpack.c.bf16 %v3362, %v3361
      %v3394 = vpack.c.bf16 %v3364, %v3363
      %v3395 = vpack.c.bf16 %v3366, %v3365
      %v3396 = vpack.c.bf16 %v3368, %v3367
      %v3397 = vpack.c.bf16 %v3370, %v3369
      %v3398 = vpack.c.bf16 %v3372, %v3371
      %v3399 = vpack.c.bf16 %v3374, %v3373
      %v3400 = vpack.c.bf16 %v3376, %v3375
      %v3401 = vpack.c.bf16 %v3378, %v3377
      %v3402 = vpack.c.bf16 %v3380, %v3379
      %v3403 = vpack.c.bf16 %v3382, %v3381
      %v3404 = vpack.c.bf16 %v3384, %v3383
      %v3405 = vpack.c.bf16 %v3386, %v3385
      %v3406 = vpack.c.bf16 %v3388, %v3387
      %v3407 = vpack.c.bf16 %v3390, %v3389
      %v3408 = vpack.c.bf16 %v3392, %v3391
      %s3409 = scalar_lea.vmem %s3, 32
      %v3410 = vld [vmem:[%s3409] sm:$0xf]
      %v3411 = vld [vmem:[%s3409 + $0x4] sm:$0xf]
      %v3414 = vunpack.c.l.b16 %v3410
      %v3415 = vunpack.c.l.b16 %v3411
      %v3416 = vpack.c.b16 %v3415, %v3414
      %v3419 = vsel %vm2489, %v3393, 0
      %v3422 = vsel %vm2489, %v3394, 0
      %v3425 = vsel %vm2489, %v3395, 0
      %v3428 = vsel %vm2489, %v3396, 0
      %v3431 = vsel %vm2489, %v3397, 0
      %v3434 = vsel %vm2489, %v3398, 0
      %v3437 = vsel %vm2489, %v3399, 0
      %v3440 = vsel %vm2489, %v3400, 0
      %v3443 = vsel %vm2489, %v3401, 0
      %v3446 = vsel %vm2489, %v3402, 0
      %v3449 = vsel %vm2489, %v3403, 0
      %v3452 = vsel %vm2489, %v3404, 0
      %v3455 = vsel %vm2489, %v3405, 0
      %v3458 = vsel %vm2489, %v3406, 0
      %v3461 = vsel %vm2489, %v3407, 0
      %v3464 = vsel %vm2489, %v3408, 0
      %3466 = vmatpush.bf16.msra.mxu0 0
      %3467 = vmatpush.bf16.msra.mxu0 0
      %3468 = vmatpush.bf16.msra.mxu0 0
      %3469 = vmatpush.bf16.msra.mxu0 0
      %3470 = vmatpush.bf16.msra.mxu0 0
      %3471 = vmatpush.bf16.msra.mxu0 0
      %3472 = vmatpush.bf16.msra.mxu0 0
      %3473 = vmatpush.bf16.msra.mxu0 %v3416
      %3474 = vmatmul.bf16.gmra.mxu0 %v3419
      %v3475 = vpop.f32.mrf.mxu0
      %v3476 = vadd.f32 0.0, %v3475
      %v3477 = vpop.f32.mrf.mxu0
      %v3478 = vadd.f32 0.0, %v3477
      %3479 = vmatmul.bf16.gmra.mxu0 %v3422
      %v3480 = vpop.f32.mrf.mxu0
      %v3481 = vadd.f32 0.0, %v3480
      %v3482 = vpop.f32.mrf.mxu0
      %v3483 = vadd.f32 0.0, %v3482
      %3484 = vmatmul.bf16.gmra.mxu0 %v3425
      %v3485 = vpop.f32.mrf.mxu0
      %v3486 = vadd.f32 0.0, %v3485
      %v3487 = vpop.f32.mrf.mxu0
      %v3488 = vadd.f32 0.0, %v3487
      %3489 = vmatmul.bf16.gmra.mxu0 %v3428
      %v3490 = vpop.f32.mrf.mxu0
      %v3491 = vadd.f32 0.0, %v3490
      %v3492 = vpop.f32.mrf.mxu0
      %v3493 = vadd.f32 0.0, %v3492
      %3494 = vmatmul.bf16.gmra.mxu0 %v3431
      %v3495 = vpop.f32.mrf.mxu0
      %v3496 = vadd.f32 0.0, %v3495
      %v3497 = vpop.f32.mrf.mxu0
      %v3498 = vadd.f32 0.0, %v3497
      %3499 = vmatmul.bf16.gmra.mxu0 %v3434
      %v3500 = vpop.f32.mrf.mxu0
      %v3501 = vadd.f32 0.0, %v3500
      %v3502 = vpop.f32.mrf.mxu0
      %v3503 = vadd.f32 0.0, %v3502
      %3504 = vmatmul.bf16.gmra.mxu0 %v3437
      %v3505 = vpop.f32.mrf.mxu0
      %v3506 = vadd.f32 0.0, %v3505
      %v3507 = vpop.f32.mrf.mxu0
      %v3508 = vadd.f32 0.0, %v3507
      %3509 = vmatmul.bf16.gmra.mxu0 %v3440
      %v3510 = vpop.f32.mrf.mxu0
      %v3511 = vadd.f32 0.0, %v3510
      %v3512 = vpop.f32.mrf.mxu0
      %v3513 = vadd.f32 0.0, %v3512
      %3514 = vmatmul.bf16.gmra.mxu0 %v3443
      %v3515 = vpop.f32.mrf.mxu0
      %v3516 = vadd.f32 0.0, %v3515
      %v3517 = vpop.f32.mrf.mxu0
      %v3518 = vadd.f32 0.0, %v3517
      %3519 = vmatmul.bf16.gmra.mxu0 %v3446
      %v3520 = vpop.f32.mrf.mxu0
      %v3521 = vadd.f32 0.0, %v3520
      %v3522 = vpop.f32.mrf.mxu0
      %v3523 = vadd.f32 0.0, %v3522
      %3524 = vmatmul.bf16.gmra.mxu0 %v3449
      %v3525 = vpop.f32.mrf.mxu0
      %v3526 = vadd.f32 0.0, %v3525
      %v3527 = vpop.f32.mrf.mxu0
      %v3528 = vadd.f32 0.0, %v3527
      %3529 = vmatmul.bf16.gmra.mxu0 %v3452
      %v3530 = vpop.f32.mrf.mxu0
      %v3531 = vadd.f32 0.0, %v3530
      %v3532 = vpop.f32.mrf.mxu0
      %v3533 = vadd.f32 0.0, %v3532
      %3534 = vmatmul.bf16.gmra.mxu0 %v3455
      %v3535 = vpop.f32.mrf.mxu0
      %v3536 = vadd.f32 0.0, %v3535
      %v3537 = vpop.f32.mrf.mxu0
      %v3538 = vadd.f32 0.0, %v3537
      %3539 = vmatmul.bf16.gmra.mxu0 %v3458
      %v3540 = vpop.f32.mrf.mxu0
      %v3541 = vadd.f32 0.0, %v3540
      %v3542 = vpop.f32.mrf.mxu0
      %v3543 = vadd.f32 0.0, %v3542
      %3544 = vmatmul.bf16.gmra.mxu0 %v3461
      %v3545 = vpop.f32.mrf.mxu0
      %v3546 = vadd.f32 0.0, %v3545
      %v3547 = vpop.f32.mrf.mxu0
      %v3548 = vadd.f32 0.0, %v3547
      %3549 = vmatmul.bf16.gmra.mxu0 %v3464
      %v3550 = vpop.f32.mrf.mxu0
      %v3551 = vadd.f32 0.0, %v3550
      %v3552 = vpop.f32.mrf.mxu0
      %v3553 = vadd.f32 0.0, %v3552
      %3554 = vdwg.mxu0
      %v3555 = vadd.f32 %v3329, %v3476
      %v3556 = vadd.f32 %v3330, %v3478
      %v3557 = vadd.f32 %v3331, %v3481
      %v3558 = vadd.f32 %v3332, %v3483
      %v3559 = vadd.f32 %v3333, %v3486
      %v3560 = vadd.f32 %v3334, %v3488
      %v3561 = vadd.f32 %v3335, %v3491
      %v3562 = vadd.f32 %v3336, %v3493
      %v3563 = vadd.f32 %v3337, %v3496
      %v3564 = vadd.f32 %v3338, %v3498
      %v3565 = vadd.f32 %v3339, %v3501
      %v3566 = vadd.f32 %v3340, %v3503
      %v3567 = vadd.f32 %v3341, %v3506
      %v3568 = vadd.f32 %v3342, %v3508
      %v3569 = vadd.f32 %v3343, %v3511
      %v3570 = vadd.f32 %v3344, %v3513
      %v3571 = vadd.f32 %v3345, %v3516
      %v3572 = vadd.f32 %v3346, %v3518
      %v3573 = vadd.f32 %v3347, %v3521
      %v3574 = vadd.f32 %v3348, %v3523
      %v3575 = vadd.f32 %v3349, %v3526
      %v3576 = vadd.f32 %v3350, %v3528
      %v3577 = vadd.f32 %v3351, %v3531
      %v3578 = vadd.f32 %v3352, %v3533
      %v3579 = vadd.f32 %v3353, %v3536
      %v3580 = vadd.f32 %v3354, %v3538
      %v3581 = vadd.f32 %v3355, %v3541
      %v3582 = vadd.f32 %v3356, %v3543
      %v3583 = vadd.f32 %v3357, %v3546
      %v3584 = vadd.f32 %v3358, %v3548
      %v3585 = vadd.f32 %v3359, %v3551
      %v3586 = vadd.f32 %v3360, %v3553
      %v3587 = vld [vmem:[%s452 + $0x9] sm:$0xff]
      %v3588 = vld [vmem:[%s452 + $0x11] sm:$0xff]
      %v3589 = vld [vmem:[%s452 + $0x29] sm:$0xff]
      %v3590 = vld [vmem:[%s452 + $0x31] sm:$0xff]
      %v3591 = vld [vmem:[%s452 + $0x49] sm:$0xff]
      %v3592 = vld [vmem:[%s452 + $0x51] sm:$0xff]
      %v3593 = vld [vmem:[%s452 + $0x69] sm:$0xff]
      %v3594 = vld [vmem:[%s452 + $0x71] sm:$0xff]
      %v3595 = vld [vmem:[%s452 + $0x89] sm:$0xff]
      %v3596 = vld [vmem:[%s452 + $0x91] sm:$0xff]
      %v3597 = vld [vmem:[%s452 + $0xa9] sm:$0xff]
      %v3598 = vld [vmem:[%s452 + $0xb1] sm:$0xff]
      %v3599 = vld [vmem:[%s452 + $0xc9] sm:$0xff]
      %v3600 = vld [vmem:[%s452 + $0xd1] sm:$0xff]
      %v3601 = vld [vmem:[%s452 + $0xe9] sm:$0xff]
      %v3602 = vld [vmem:[%s452 + $0xf1] sm:$0xff]
      %v3603 = vld [vmem:[%s452 + $0x109] sm:$0xff]
      %v3604 = vld [vmem:[%s452 + $0x111] sm:$0xff]
      %v3605 = vld [vmem:[%s452 + $0x129] sm:$0xff]
      %v3606 = vld [vmem:[%s452 + $0x131] sm:$0xff]
      %v3607 = vld [vmem:[%s452 + $0x149] sm:$0xff]
      %v3608 = vld [vmem:[%s452 + $0x151] sm:$0xff]
      %v3609 = vld [vmem:[%s452 + $0x169] sm:$0xff]
      %v3610 = vld [vmem:[%s452 + $0x171] sm:$0xff]
      %v3611 = vld [vmem:[%s452 + $0x189] sm:$0xff]
      %v3612 = vld [vmem:[%s452 + $0x191] sm:$0xff]
      %v3613 = vld [vmem:[%s452 + $0x1a9] sm:$0xff]
      %v3614 = vld [vmem:[%s452 + $0x1b1] sm:$0xff]
      %v3615 = vld [vmem:[%s452 + $0x1c9] sm:$0xff]
      %v3616 = vld [vmem:[%s452 + $0x1d1] sm:$0xff]
      %v3617 = vld [vmem:[%s452 + $0x1e9] sm:$0xff]
      %v3618 = vld [vmem:[%s452 + $0x1f1] sm:$0xff]
      %v3619 = vpack.c.bf16 %v3588, %v3587
      %v3620 = vpack.c.bf16 %v3590, %v3589
      %v3621 = vpack.c.bf16 %v3592, %v3591
      %v3622 = vpack.c.bf16 %v3594, %v3593
      %v3623 = vpack.c.bf16 %v3596, %v3595
      %v3624 = vpack.c.bf16 %v3598, %v3597
      %v3625 = vpack.c.bf16 %v3600, %v3599
      %v3626 = vpack.c.bf16 %v3602, %v3601
      %v3627 = vpack.c.bf16 %v3604, %v3603
      %v3628 = vpack.c.bf16 %v3606, %v3605
      %v3629 = vpack.c.bf16 %v3608, %v3607
      %v3630 = vpack.c.bf16 %v3610, %v3609
      %v3631 = vpack.c.bf16 %v3612, %v3611
      %v3632 = vpack.c.bf16 %v3614, %v3613
      %v3633 = vpack.c.bf16 %v3616, %v3615
      %v3634 = vpack.c.bf16 %v3618, %v3617
      %s3635 = scalar_lea.vmem %s3, 40
      %v3636 = vld [vmem:[%s3635] sm:$0xf]
      %v3637 = vld [vmem:[%s3635 + $0x4] sm:$0xf]
      %v3640 = vunpack.c.l.b16 %v3636
      %v3641 = vunpack.c.l.b16 %v3637
      %v3642 = vpack.c.b16 %v3641, %v3640
      %v3645 = vsel %vm2489, %v3619, 0
      %v3648 = vsel %vm2489, %v3620, 0
      %v3651 = vsel %vm2489, %v3621, 0
      %v3654 = vsel %vm2489, %v3622, 0
      %v3657 = vsel %vm2489, %v3623, 0
      %v3660 = vsel %vm2489, %v3624, 0
      %v3663 = vsel %vm2489, %v3625, 0
      %v3666 = vsel %vm2489, %v3626, 0
      %v3669 = vsel %vm2489, %v3627, 0
      %v3672 = vsel %vm2489, %v3628, 0
      %v3675 = vsel %vm2489, %v3629, 0
      %v3678 = vsel %vm2489, %v3630, 0
      %v3681 = vsel %vm2489, %v3631, 0
      %v3684 = vsel %vm2489, %v3632, 0
      %v3687 = vsel %vm2489, %v3633, 0
      %v3690 = vsel %vm2489, %v3634, 0
      %3692 = vmatpush.bf16.msra.mxu0 0
      %3693 = vmatpush.bf16.msra.mxu0 0
      %3694 = vmatpush.bf16.msra.mxu0 0
      %3695 = vmatpush.bf16.msra.mxu0 0
      %3696 = vmatpush.bf16.msra.mxu0 0
      %3697 = vmatpush.bf16.msra.mxu0 0
      %3698 = vmatpush.bf16.msra.mxu0 0
      %3699 = vmatpush.bf16.msra.mxu0 %v3642
      %3700 = vmatmul.bf16.gmra.mxu0 %v3645
      %v3701 = vpop.f32.mrf.mxu0
      %v3702 = vadd.f32 0.0, %v3701
      %v3703 = vpop.f32.mrf.mxu0
      %v3704 = vadd.f32 0.0, %v3703
      %3705 = vmatmul.bf16.gmra.mxu0 %v3648
      %v3706 = vpop.f32.mrf.mxu0
      %v3707 = vadd.f32 0.0, %v3706
      %v3708 = vpop.f32.mrf.mxu0
      %v3709 = vadd.f32 0.0, %v3708
      %3710 = vmatmul.bf16.gmra.mxu0 %v3651
      %v3711 = vpop.f32.mrf.mxu0
      %v3712 = vadd.f32 0.0, %v3711
      %v3713 = vpop.f32.mrf.mxu0
      %v3714 = vadd.f32 0.0, %v3713
      %3715 = vmatmul.bf16.gmra.mxu0 %v3654
      %v3716 = vpop.f32.mrf.mxu0
      %v3717 = vadd.f32 0.0, %v3716
      %v3718 = vpop.f32.mrf.mxu0
      %v3719 = vadd.f32 0.0, %v3718
      %3720 = vmatmul.bf16.gmra.mxu0 %v3657
      %v3721 = vpop.f32.mrf.mxu0
      %v3722 = vadd.f32 0.0, %v3721
      %v3723 = vpop.f32.mrf.mxu0
      %v3724 = vadd.f32 0.0, %v3723
      %3725 = vmatmul.bf16.gmra.mxu0 %v3660
      %v3726 = vpop.f32.mrf.mxu0
      %v3727 = vadd.f32 0.0, %v3726
      %v3728 = vpop.f32.mrf.mxu0
      %v3729 = vadd.f32 0.0, %v3728
      %3730 = vmatmul.bf16.gmra.mxu0 %v3663
      %v3731 = vpop.f32.mrf.mxu0
      %v3732 = vadd.f32 0.0, %v3731
      %v3733 = vpop.f32.mrf.mxu0
      %v3734 = vadd.f32 0.0, %v3733
      %3735 = vmatmul.bf16.gmra.mxu0 %v3666
      %v3736 = vpop.f32.mrf.mxu0
      %v3737 = vadd.f32 0.0, %v3736
      %v3738 = vpop.f32.mrf.mxu0
      %v3739 = vadd.f32 0.0, %v3738
      %3740 = vmatmul.bf16.gmra.mxu0 %v3669
      %v3741 = vpop.f32.mrf.mxu0
      %v3742 = vadd.f32 0.0, %v3741
      %v3743 = vpop.f32.mrf.mxu0
      %v3744 = vadd.f32 0.0, %v3743
      %3745 = vmatmul.bf16.gmra.mxu0 %v3672
      %v3746 = vpop.f32.mrf.mxu0
      %v3747 = vadd.f32 0.0, %v3746
      %v3748 = vpop.f32.mrf.mxu0
      %v3749 = vadd.f32 0.0, %v3748
      %3750 = vmatmul.bf16.gmra.mxu0 %v3675
      %v3751 = vpop.f32.mrf.mxu0
      %v3752 = vadd.f32 0.0, %v3751
      %v3753 = vpop.f32.mrf.mxu0
      %v3754 = vadd.f32 0.0, %v3753
      %3755 = vmatmul.bf16.gmra.mxu0 %v3678
      %v3756 = vpop.f32.mrf.mxu0
      %v3757 = vadd.f32 0.0, %v3756
      %v3758 = vpop.f32.mrf.mxu0
      %v3759 = vadd.f32 0.0, %v3758
      %3760 = vmatmul.bf16.gmra.mxu0 %v3681
      %v3761 = vpop.f32.mrf.mxu0
      %v3762 = vadd.f32 0.0, %v3761
      %v3763 = vpop.f32.mrf.mxu0
      %v3764 = vadd.f32 0.0, %v3763
      %3765 = vmatmul.bf16.gmra.mxu0 %v3684
      %v3766 = vpop.f32.mrf.mxu0
      %v3767 = vadd.f32 0.0, %v3766
      %v3768 = vpop.f32.mrf.mxu0
      %v3769 = vadd.f32 0.0, %v3768
      %3770 = vmatmul.bf16.gmra.mxu0 %v3687
      %v3771 = vpop.f32.mrf.mxu0
      %v3772 = vadd.f32 0.0, %v3771
      %v3773 = vpop.f32.mrf.mxu0
      %v3774 = vadd.f32 0.0, %v3773
      %3775 = vmatmul.bf16.gmra.mxu0 %v3690
      %v3776 = vpop.f32.mrf.mxu0
      %v3777 = vadd.f32 0.0, %v3776
      %v3778 = vpop.f32.mrf.mxu0
      %v3779 = vadd.f32 0.0, %v3778
      %3780 = vdwg.mxu0
      %v3781 = vadd.f32 %v3555, %v3702
      %v3782 = vadd.f32 %v3556, %v3704
      %v3783 = vadd.f32 %v3557, %v3707
      %v3784 = vadd.f32 %v3558, %v3709
      %v3785 = vadd.f32 %v3559, %v3712
      %v3786 = vadd.f32 %v3560, %v3714
      %v3787 = vadd.f32 %v3561, %v3717
      %v3788 = vadd.f32 %v3562, %v3719
      %v3789 = vadd.f32 %v3563, %v3722
      %v3790 = vadd.f32 %v3564, %v3724
      %v3791 = vadd.f32 %v3565, %v3727
      %v3792 = vadd.f32 %v3566, %v3729
      %v3793 = vadd.f32 %v3567, %v3732
      %v3794 = vadd.f32 %v3568, %v3734
      %v3795 = vadd.f32 %v3569, %v3737
      %v3796 = vadd.f32 %v3570, %v3739
      %v3797 = vadd.f32 %v3571, %v3742
      %v3798 = vadd.f32 %v3572, %v3744
      %v3799 = vadd.f32 %v3573, %v3747
      %v3800 = vadd.f32 %v3574, %v3749
      %v3801 = vadd.f32 %v3575, %v3752
      %v3802 = vadd.f32 %v3576, %v3754
      %v3803 = vadd.f32 %v3577, %v3757
      %v3804 = vadd.f32 %v3578, %v3759
      %v3805 = vadd.f32 %v3579, %v3762
      %v3806 = vadd.f32 %v3580, %v3764
      %v3807 = vadd.f32 %v3581, %v3767
      %v3808 = vadd.f32 %v3582, %v3769
      %v3809 = vadd.f32 %v3583, %v3772
      %v3810 = vadd.f32 %v3584, %v3774
      %v3811 = vadd.f32 %v3585, %v3777
      %v3812 = vadd.f32 %v3586, %v3779
      %v3813 = vld [vmem:[%s1754 + $0x7] sm:$0xff]
      %v3814 = vld [vmem:[%s1754 + $0xf] sm:$0xff]
      %v3815 = vld [vmem:[%s1754 + $0x27] sm:$0xff]
      %v3816 = vld [vmem:[%s1754 + $0x2f] sm:$0xff]
      %v3817 = vld [vmem:[%s1754 + $0x47] sm:$0xff]
      %v3818 = vld [vmem:[%s1754 + $0x4f] sm:$0xff]
      %v3819 = vld [vmem:[%s1754 + $0x67] sm:$0xff]
      %v3820 = vld [vmem:[%s1754 + $0x6f] sm:$0xff]
      %v3821 = vld [vmem:[%s1754 + $0x87] sm:$0xff]
      %v3822 = vld [vmem:[%s1754 + $0x8f] sm:$0xff]
      %v3823 = vld [vmem:[%s1754 + $0xa7] sm:$0xff]
      %v3824 = vld [vmem:[%s1754 + $0xaf] sm:$0xff]
      %v3825 = vld [vmem:[%s1754 + $0xc7] sm:$0xff]
      %v3826 = vld [vmem:[%s1754 + $0xcf] sm:$0xff]
      %v3827 = vld [vmem:[%s1754 + $0xe7] sm:$0xff]
      %v3828 = vld [vmem:[%s1754 + $0xef] sm:$0xff]
      %v3829 = vld [vmem:[%s1754 + $0x107] sm:$0xff]
      %v3830 = vld [vmem:[%s1754 + $0x10f] sm:$0xff]
      %v3831 = vld [vmem:[%s1754 + $0x127] sm:$0xff]
      %v3832 = vld [vmem:[%s1754 + $0x12f] sm:$0xff]
      %v3833 = vld [vmem:[%s1754 + $0x147] sm:$0xff]
      %v3834 = vld [vmem:[%s1754 + $0x14f] sm:$0xff]
      %v3835 = vld [vmem:[%s1754 + $0x167] sm:$0xff]
      %v3836 = vld [vmem:[%s1754 + $0x16f] sm:$0xff]
      %v3837 = vld [vmem:[%s1754 + $0x187] sm:$0xff]
      %v3838 = vld [vmem:[%s1754 + $0x18f] sm:$0xff]
      %v3839 = vld [vmem:[%s1754 + $0x1a7] sm:$0xff]
      %v3840 = vld [vmem:[%s1754 + $0x1af] sm:$0xff]
      %v3841 = vld [vmem:[%s1754 + $0x1c7] sm:$0xff]
      %v3842 = vld [vmem:[%s1754 + $0x1cf] sm:$0xff]
      %v3843 = vld [vmem:[%s1754 + $0x1e7] sm:$0xff]
      %v3844 = vld [vmem:[%s1754 + $0x1ef] sm:$0xff]
      %v3845 = vpack.c.bf16 %v3814, %v3813
      %v3846 = vpack.c.bf16 %v3816, %v3815
      %v3847 = vpack.c.bf16 %v3818, %v3817
      %v3848 = vpack.c.bf16 %v3820, %v3819
      %v3849 = vpack.c.bf16 %v3822, %v3821
      %v3850 = vpack.c.bf16 %v3824, %v3823
      %v3851 = vpack.c.bf16 %v3826, %v3825
      %v3852 = vpack.c.bf16 %v3828, %v3827
      %v3853 = vpack.c.bf16 %v3830, %v3829
      %v3854 = vpack.c.bf16 %v3832, %v3831
      %v3855 = vpack.c.bf16 %v3834, %v3833
      %v3856 = vpack.c.bf16 %v3836, %v3835
      %v3857 = vpack.c.bf16 %v3838, %v3837
      %v3858 = vpack.c.bf16 %v3840, %v3839
      %v3859 = vpack.c.bf16 %v3842, %v3841
      %v3860 = vpack.c.bf16 %v3844, %v3843
      %s3861 = scalar_lea.vmem %s3, 48
      %v3862 = vld [vmem:[%s3861] sm:$0xf]
      %v3863 = vld [vmem:[%s3861 + $0x4] sm:$0xf]
      %v3866 = vunpack.c.l.b16 %v3862
      %v3867 = vunpack.c.l.b16 %v3863
      %v3868 = vpack.c.b16 %v3867, %v3866
      %v3871 = vsel %vm2489, %v3845, 0
      %v3874 = vsel %vm2489, %v3846, 0
      %v3877 = vsel %vm2489, %v3847, 0
      %v3880 = vsel %vm2489, %v3848, 0
      %v3883 = vsel %vm2489, %v3849, 0
      %v3886 = vsel %vm2489, %v3850, 0
      %v3889 = vsel %vm2489, %v3851, 0
      %v3892 = vsel %vm2489, %v3852, 0
      %v3895 = vsel %vm2489, %v3853, 0
      %v3898 = vsel %vm2489, %v3854, 0
      %v3901 = vsel %vm2489, %v3855, 0
      %v3904 = vsel %vm2489, %v3856, 0
      %v3907 = vsel %vm2489, %v3857, 0
      %v3910 = vsel %vm2489, %v3858, 0
      %v3913 = vsel %vm2489, %v3859, 0
      %v3916 = vsel %vm2489, %v3860, 0
      %3918 = vmatpush.bf16.msra.mxu0 0
      %3919 = vmatpush.bf16.msra.mxu0 0
      %3920 = vmatpush.bf16.msra.mxu0 0
      %3921 = vmatpush.bf16.msra.mxu0 0
      %3922 = vmatpush.bf16.msra.mxu0 0
      %3923 = vmatpush.bf16.msra.mxu0 0
      %3924 = vmatpush.bf16.msra.mxu0 0
      %3925 = vmatpush.bf16.msra.mxu0 %v3868
      %3926 = vmatmul.bf16.gmra.mxu0 %v3871
      %v3927 = vpop.f32.mrf.mxu0
      %v3928 = vadd.f32 0.0, %v3927
      %v3929 = vpop.f32.mrf.mxu0
      %v3930 = vadd.f32 0.0, %v3929
      %3931 = vmatmul.bf16.gmra.mxu0 %v3874
      %v3932 = vpop.f32.mrf.mxu0
      %v3933 = vadd.f32 0.0, %v3932
      %v3934 = vpop.f32.mrf.mxu0
      %v3935 = vadd.f32 0.0, %v3934
      %3936 = vmatmul.bf16.gmra.mxu0 %v3877
      %v3937 = vpop.f32.mrf.mxu0
      %v3938 = vadd.f32 0.0, %v3937
      %v3939 = vpop.f32.mrf.mxu0
      %v3940 = vadd.f32 0.0, %v3939
      %3941 = vmatmul.bf16.gmra.mxu0 %v3880
      %v3942 = vpop.f32.mrf.mxu0
      %v3943 = vadd.f32 0.0, %v3942
      %v3944 = vpop.f32.mrf.mxu0
      %v3945 = vadd.f32 0.0, %v3944
      %3946 = vmatmul.bf16.gmra.mxu0 %v3883
      %v3947 = vpop.f32.mrf.mxu0
      %v3948 = vadd.f32 0.0, %v3947
      %v3949 = vpop.f32.mrf.mxu0
      %v3950 = vadd.f32 0.0, %v3949
      %3951 = vmatmul.bf16.gmra.mxu0 %v3886
      %v3952 = vpop.f32.mrf.mxu0
      %v3953 = vadd.f32 0.0, %v3952
      %v3954 = vpop.f32.mrf.mxu0
      %v3955 = vadd.f32 0.0, %v3954
      %3956 = vmatmul.bf16.gmra.mxu0 %v3889
      %v3957 = vpop.f32.mrf.mxu0
      %v3958 = vadd.f32 0.0, %v3957
      %v3959 = vpop.f32.mrf.mxu0
      %v3960 = vadd.f32 0.0, %v3959
      %3961 = vmatmul.bf16.gmra.mxu0 %v3892
      %v3962 = vpop.f32.mrf.mxu0
      %v3963 = vadd.f32 0.0, %v3962
      %v3964 = vpop.f32.mrf.mxu0
      %v3965 = vadd.f32 0.0, %v3964
      %3966 = vmatmul.bf16.gmra.mxu0 %v3895
      %v3967 = vpop.f32.mrf.mxu0
      %v3968 = vadd.f32 0.0, %v3967
      %v3969 = vpop.f32.mrf.mxu0
      %v3970 = vadd.f32 0.0, %v3969
      %3971 = vmatmul.bf16.gmra.mxu0 %v3898
      %v3972 = vpop.f32.mrf.mxu0
      %v3973 = vadd.f32 0.0, %v3972
      %v3974 = vpop.f32.mrf.mxu0
      %v3975 = vadd.f32 0.0, %v3974
      %3976 = vmatmul.bf16.gmra.mxu0 %v3901
      %v3977 = vpop.f32.mrf.mxu0
      %v3978 = vadd.f32 0.0, %v3977
      %v3979 = vpop.f32.mrf.mxu0
      %v3980 = vadd.f32 0.0, %v3979
      %3981 = vmatmul.bf16.gmra.mxu0 %v3904
      %v3982 = vpop.f32.mrf.mxu0
      %v3983 = vadd.f32 0.0, %v3982
      %v3984 = vpop.f32.mrf.mxu0
      %v3985 = vadd.f32 0.0, %v3984
      %3986 = vmatmul.bf16.gmra.mxu0 %v3907
      %v3987 = vpop.f32.mrf.mxu0
      %v3988 = vadd.f32 0.0, %v3987
      %v3989 = vpop.f32.mrf.mxu0
      %v3990 = vadd.f32 0.0, %v3989
      %3991 = vmatmul.bf16.gmra.mxu0 %v3910
      %v3992 = vpop.f32.mrf.mxu0
      %v3993 = vadd.f32 0.0, %v3992
      %v3994 = vpop.f32.mrf.mxu0
      %v3995 = vadd.f32 0.0, %v3994
      %3996 = vmatmul.bf16.gmra.mxu0 %v3913
      %v3997 = vpop.f32.mrf.mxu0
      %v3998 = vadd.f32 0.0, %v3997
      %v3999 = vpop.f32.mrf.mxu0
      %v4000 = vadd.f32 0.0, %v3999
      %4001 = vmatmul.bf16.gmra.mxu0 %v3916
      %v4002 = vpop.f32.mrf.mxu0
      %v4003 = vadd.f32 0.0, %v4002
      %v4004 = vpop.f32.mrf.mxu0
      %v4005 = vadd.f32 0.0, %v4004
      %4006 = vdwg.mxu0
      %v4007 = vadd.f32 %v3781, %v3928
      %v4008 = vadd.f32 %v3782, %v3930
      %v4009 = vadd.f32 %v3783, %v3933
      %v4010 = vadd.f32 %v3784, %v3935
      %v4011 = vadd.f32 %v3785, %v3938
      %v4012 = vadd.f32 %v3786, %v3940
      %v4013 = vadd.f32 %v3787, %v3943
      %v4014 = vadd.f32 %v3788, %v3945
      %v4015 = vadd.f32 %v3789, %v3948
      %v4016 = vadd.f32 %v3790, %v3950
      %v4017 = vadd.f32 %v3791, %v3953
      %v4018 = vadd.f32 %v3792, %v3955
      %v4019 = vadd.f32 %v3793, %v3958
      %v4020 = vadd.f32 %v3794, %v3960
      %v4021 = vadd.f32 %v3795, %v3963
      %v4022 = vadd.f32 %v3796, %v3965
      %v4023 = vadd.f32 %v3797, %v3968
      %v4024 = vadd.f32 %v3798, %v3970
      %v4025 = vadd.f32 %v3799, %v3973
      %v4026 = vadd.f32 %v3800, %v3975
      %v4027 = vadd.f32 %v3801, %v3978
      %v4028 = vadd.f32 %v3802, %v3980
      %v4029 = vadd.f32 %v3803, %v3983
      %v4030 = vadd.f32 %v3804, %v3985
      %v4031 = vadd.f32 %v3805, %v3988
      %v4032 = vadd.f32 %v3806, %v3990
      %v4033 = vadd.f32 %v3807, %v3993
      %v4034 = vadd.f32 %v3808, %v3995
      %v4035 = vadd.f32 %v3809, %v3998
      %v4036 = vadd.f32 %v3810, %v4000
      %v4037 = vadd.f32 %v3811, %v4003
      %v4038 = vadd.f32 %v3812, %v4005
      %v4039 = vld [vmem:[%s1754 + $0x8] sm:$0xff]
      %v4040 = vld [vmem:[%s1754 + $0x10] sm:$0xff]
      %v4041 = vld [vmem:[%s1754 + $0x28] sm:$0xff]
      %v4042 = vld [vmem:[%s1754 + $0x30] sm:$0xff]
      %v4043 = vld [vmem:[%s1754 + $0x48] sm:$0xff]
      %v4044 = vld [vmem:[%s1754 + $0x50] sm:$0xff]
      %v4045 = vld [vmem:[%s1754 + $0x68] sm:$0xff]
      %v4046 = vld [vmem:[%s1754 + $0x70] sm:$0xff]
      %v4047 = vld [vmem:[%s1754 + $0x88] sm:$0xff]
      %v4048 = vld [vmem:[%s1754 + $0x90] sm:$0xff]
      %v4049 = vld [vmem:[%s1754 + $0xa8] sm:$0xff]
      %v4050 = vld [vmem:[%s1754 + $0xb0] sm:$0xff]
      %v4051 = vld [vmem:[%s1754 + $0xc8] sm:$0xff]
      %v4052 = vld [vmem:[%s1754 + $0xd0] sm:$0xff]
      %v4053 = vld [vmem:[%s1754 + $0xe8] sm:$0xff]
      %v4054 = vld [vmem:[%s1754 + $0xf0] sm:$0xff]
      %v4055 = vld [vmem:[%s1754 + $0x108] sm:$0xff]
      %v4056 = vld [vmem:[%s1754 + $0x110] sm:$0xff]
      %v4057 = vld [vmem:[%s1754 + $0x128] sm:$0xff]
      %v4058 = vld [vmem:[%s1754 + $0x130] sm:$0xff]
      %v4059 = vld [vmem:[%s1754 + $0x148] sm:$0xff]
      %v4060 = vld [vmem:[%s1754 + $0x150] sm:$0xff]
      %v4061 = vld [vmem:[%s1754 + $0x168] sm:$0xff]
      %v4062 = vld [vmem:[%s1754 + $0x170] sm:$0xff]
      %v4063 = vld [vmem:[%s1754 + $0x188] sm:$0xff]
      %v4064 = vld [vmem:[%s1754 + $0x190] sm:$0xff]
      %v4065 = vld [vmem:[%s1754 + $0x1a8] sm:$0xff]
      %v4066 = vld [vmem:[%s1754 + $0x1b0] sm:$0xff]
      %v4067 = vld [vmem:[%s1754 + $0x1c8] sm:$0xff]
      %v4068 = vld [vmem:[%s1754 + $0x1d0] sm:$0xff]
      %v4069 = vld [vmem:[%s1754 + $0x1e8] sm:$0xff]
      %v4070 = vld [vmem:[%s1754 + $0x1f0] sm:$0xff]
      %v4071 = vpack.c.bf16 %v4040, %v4039
      %v4072 = vpack.c.bf16 %v4042, %v4041
      %v4073 = vpack.c.bf16 %v4044, %v4043
      %v4074 = vpack.c.bf16 %v4046, %v4045
      %v4075 = vpack.c.bf16 %v4048, %v4047
      %v4076 = vpack.c.bf16 %v4050, %v4049
      %v4077 = vpack.c.bf16 %v4052, %v4051
      %v4078 = vpack.c.bf16 %v4054, %v4053
      %v4079 = vpack.c.bf16 %v4056, %v4055
      %v4080 = vpack.c.bf16 %v4058, %v4057
      %v4081 = vpack.c.bf16 %v4060, %v4059
      %v4082 = vpack.c.bf16 %v4062, %v4061
      %v4083 = vpack.c.bf16 %v4064, %v4063
      %v4084 = vpack.c.bf16 %v4066, %v4065
      %v4085 = vpack.c.bf16 %v4068, %v4067
      %v4086 = vpack.c.bf16 %v4070, %v4069
      %s4087 = scalar_lea.vmem %s3, 56
      %v4088 = vld [vmem:[%s4087] sm:$0xf]
      %v4089 = vld [vmem:[%s4087 + $0x4] sm:$0xf]
      %v4092 = vunpack.c.l.b16 %v4088
      %v4093 = vunpack.c.l.b16 %v4089
      %v4094 = vpack.c.b16 %v4093, %v4092
      %v4097 = vsel %vm2489, %v4071, 0
      %v4100 = vsel %vm2489, %v4072, 0
      %v4103 = vsel %vm2489, %v4073, 0
      %v4106 = vsel %vm2489, %v4074, 0
      %v4109 = vsel %vm2489, %v4075, 0
      %v4112 = vsel %vm2489, %v4076, 0
      %v4115 = vsel %vm2489, %v4077, 0
      %v4118 = vsel %vm2489, %v4078, 0
      %v4121 = vsel %vm2489, %v4079, 0
      %v4124 = vsel %vm2489, %v4080, 0
      %v4127 = vsel %vm2489, %v4081, 0
      %v4130 = vsel %vm2489, %v4082, 0
      %v4133 = vsel %vm2489, %v4083, 0
      %v4136 = vsel %vm2489, %v4084, 0
      %v4139 = vsel %vm2489, %v4085, 0
      %v4142 = vsel %vm2489, %v4086, 0
      %4144 = vmatpush.bf16.msra.mxu0 0
      %4145 = vmatpush.bf16.msra.mxu0 0
      %4146 = vmatpush.bf16.msra.mxu0 0
      %4147 = vmatpush.bf16.msra.mxu0 0
      %4148 = vmatpush.bf16.msra.mxu0 0
      %4149 = vmatpush.bf16.msra.mxu0 0
      %4150 = vmatpush.bf16.msra.mxu0 0
      %4151 = vmatpush.bf16.msra.mxu0 %v4094
      %4152 = vmatmul.bf16.gmra.mxu0 %v4097
      %v4153 = vpop.f32.mrf.mxu0
      %v4154 = vadd.f32 0.0, %v4153
      %v4155 = vpop.f32.mrf.mxu0
      %v4156 = vadd.f32 0.0, %v4155
      %4157 = vmatmul.bf16.gmra.mxu0 %v4100
      %v4158 = vpop.f32.mrf.mxu0
      %v4159 = vadd.f32 0.0, %v4158
      %v4160 = vpop.f32.mrf.mxu0
      %v4161 = vadd.f32 0.0, %v4160
      %4162 = vmatmul.bf16.gmra.mxu0 %v4103
      %v4163 = vpop.f32.mrf.mxu0
      %v4164 = vadd.f32 0.0, %v4163
      %v4165 = vpop.f32.mrf.mxu0
      %v4166 = vadd.f32 0.0, %v4165
      %4167 = vmatmul.bf16.gmra.mxu0 %v4106
      %v4168 = vpop.f32.mrf.mxu0
      %v4169 = vadd.f32 0.0, %v4168
      %v4170 = vpop.f32.mrf.mxu0
      %v4171 = vadd.f32 0.0, %v4170
      %4172 = vmatmul.bf16.gmra.mxu0 %v4109
      %v4173 = vpop.f32.mrf.mxu0
      %v4174 = vadd.f32 0.0, %v4173
      %v4175 = vpop.f32.mrf.mxu0
      %v4176 = vadd.f32 0.0, %v4175
      %4177 = vmatmul.bf16.gmra.mxu0 %v4112
      %v4178 = vpop.f32.mrf.mxu0
      %v4179 = vadd.f32 0.0, %v4178
      %v4180 = vpop.f32.mrf.mxu0
      %v4181 = vadd.f32 0.0, %v4180
      %4182 = vmatmul.bf16.gmra.mxu0 %v4115
      %v4183 = vpop.f32.mrf.mxu0
      %v4184 = vadd.f32 0.0, %v4183
      %v4185 = vpop.f32.mrf.mxu0
      %v4186 = vadd.f32 0.0, %v4185
      %4187 = vmatmul.bf16.gmra.mxu0 %v4118
      %v4188 = vpop.f32.mrf.mxu0
      %v4189 = vadd.f32 0.0, %v4188
      %v4190 = vpop.f32.mrf.mxu0
      %v4191 = vadd.f32 0.0, %v4190
      %4192 = vmatmul.bf16.gmra.mxu0 %v4121
      %v4193 = vpop.f32.mrf.mxu0
      %v4194 = vadd.f32 0.0, %v4193
      %v4195 = vpop.f32.mrf.mxu0
      %v4196 = vadd.f32 0.0, %v4195
      %4197 = vmatmul.bf16.gmra.mxu0 %v4124
      %v4198 = vpop.f32.mrf.mxu0
      %v4199 = vadd.f32 0.0, %v4198
      %v4200 = vpop.f32.mrf.mxu0
      %v4201 = vadd.f32 0.0, %v4200
      %4202 = vmatmul.bf16.gmra.mxu0 %v4127
      %v4203 = vpop.f32.mrf.mxu0
      %v4204 = vadd.f32 0.0, %v4203
      %v4205 = vpop.f32.mrf.mxu0
      %v4206 = vadd.f32 0.0, %v4205
      %4207 = vmatmul.bf16.gmra.mxu0 %v4130
      %v4208 = vpop.f32.mrf.mxu0
      %v4209 = vadd.f32 0.0, %v4208
      %v4210 = vpop.f32.mrf.mxu0
      %v4211 = vadd.f32 0.0, %v4210
      %4212 = vmatmul.bf16.gmra.mxu0 %v4133
      %v4213 = vpop.f32.mrf.mxu0
      %v4214 = vadd.f32 0.0, %v4213
      %v4215 = vpop.f32.mrf.mxu0
      %v4216 = vadd.f32 0.0, %v4215
      %4217 = vmatmul.bf16.gmra.mxu0 %v4136
      %v4218 = vpop.f32.mrf.mxu0
      %v4219 = vadd.f32 0.0, %v4218
      %v4220 = vpop.f32.mrf.mxu0
      %v4221 = vadd.f32 0.0, %v4220
      %4222 = vmatmul.bf16.gmra.mxu0 %v4139
      %v4223 = vpop.f32.mrf.mxu0
      %v4224 = vadd.f32 0.0, %v4223
      %v4225 = vpop.f32.mrf.mxu0
      %v4226 = vadd.f32 0.0, %v4225
      %4227 = vmatmul.bf16.gmra.mxu0 %v4142
      %v4228 = vpop.f32.mrf.mxu0
      %v4229 = vadd.f32 0.0, %v4228
      %v4230 = vpop.f32.mrf.mxu0
      %v4231 = vadd.f32 0.0, %v4230
      %4232 = vdwg.mxu0
      %v4233 = vadd.f32 %v4007, %v4154
      %v4234 = vadd.f32 %v4008, %v4156
      %v4235 = vadd.f32 %v4009, %v4159
      %v4236 = vadd.f32 %v4010, %v4161
      %v4237 = vadd.f32 %v4011, %v4164
      %v4238 = vadd.f32 %v4012, %v4166
      %v4239 = vadd.f32 %v4013, %v4169
      %v4240 = vadd.f32 %v4014, %v4171
      %v4241 = vadd.f32 %v4015, %v4174
      %v4242 = vadd.f32 %v4016, %v4176
      %v4243 = vadd.f32 %v4017, %v4179
      %v4244 = vadd.f32 %v4018, %v4181
      %v4245 = vadd.f32 %v4019, %v4184
      %v4246 = vadd.f32 %v4020, %v4186
      %v4247 = vadd.f32 %v4021, %v4189
      %v4248 = vadd.f32 %v4022, %v4191
      %v4249 = vadd.f32 %v4023, %v4194
      %v4250 = vadd.f32 %v4024, %v4196
      %v4251 = vadd.f32 %v4025, %v4199
      %v4252 = vadd.f32 %v4026, %v4201
      %v4253 = vadd.f32 %v4027, %v4204
      %v4254 = vadd.f32 %v4028, %v4206
      %v4255 = vadd.f32 %v4029, %v4209
      %v4256 = vadd.f32 %v4030, %v4211
      %v4257 = vadd.f32 %v4031, %v4214
      %v4258 = vadd.f32 %v4032, %v4216
      %v4259 = vadd.f32 %v4033, %v4219
      %v4260 = vadd.f32 %v4034, %v4221
      %v4261 = vadd.f32 %v4035, %v4224
      %v4262 = vadd.f32 %v4036, %v4226
      %v4263 = vadd.f32 %v4037, %v4229
      %v4264 = vadd.f32 %v4038, %v4231
      %v4265 = vld [vmem:[%s1754 + $0x9] sm:$0xff]
      %v4266 = vld [vmem:[%s1754 + $0x11] sm:$0xff]
      %v4267 = vld [vmem:[%s1754 + $0x29] sm:$0xff]
      %v4268 = vld [vmem:[%s1754 + $0x31] sm:$0xff]
      %v4269 = vld [vmem:[%s1754 + $0x49] sm:$0xff]
      %v4270 = vld [vmem:[%s1754 + $0x51] sm:$0xff]
      %v4271 = vld [vmem:[%s1754 + $0x69] sm:$0xff]
      %v4272 = vld [vmem:[%s1754 + $0x71] sm:$0xff]
      %v4273 = vld [vmem:[%s1754 + $0x89] sm:$0xff]
      %v4274 = vld [vmem:[%s1754 + $0x91] sm:$0xff]
      %v4275 = vld [vmem:[%s1754 + $0xa9] sm:$0xff]
      %v4276 = vld [vmem:[%s1754 + $0xb1] sm:$0xff]
      %v4277 = vld [vmem:[%s1754 + $0xc9] sm:$0xff]
      %v4278 = vld [vmem:[%s1754 + $0xd1] sm:$0xff]
      %v4279 = vld [vmem:[%s1754 + $0xe9] sm:$0xff]
      %v4280 = vld [vmem:[%s1754 + $0xf1] sm:$0xff]
      %v4281 = vld [vmem:[%s1754 + $0x109] sm:$0xff]
      %v4282 = vld [vmem:[%s1754 + $0x111] sm:$0xff]
      %v4283 = vld [vmem:[%s1754 + $0x129] sm:$0xff]
      %v4284 = vld [vmem:[%s1754 + $0x131] sm:$0xff]
      %v4285 = vld [vmem:[%s1754 + $0x149] sm:$0xff]
      %v4286 = vld [vmem:[%s1754 + $0x151] sm:$0xff]
      %v4287 = vld [vmem:[%s1754 + $0x169] sm:$0xff]
      %v4288 = vld [vmem:[%s1754 + $0x171] sm:$0xff]
      %v4289 = vld [vmem:[%s1754 + $0x189] sm:$0xff]
      %v4290 = vld [vmem:[%s1754 + $0x191] sm:$0xff]
      %v4291 = vld [vmem:[%s1754 + $0x1a9] sm:$0xff]
      %v4292 = vld [vmem:[%s1754 + $0x1b1] sm:$0xff]
      %v4293 = vld [vmem:[%s1754 + $0x1c9] sm:$0xff]
      %v4294 = vld [vmem:[%s1754 + $0x1d1] sm:$0xff]
      %v4295 = vld [vmem:[%s1754 + $0x1e9] sm:$0xff]
      %v4296 = vld [vmem:[%s1754 + $0x1f1] sm:$0xff]
      %v4297 = vpack.c.bf16 %v4266, %v4265
      %v4298 = vpack.c.bf16 %v4268, %v4267
      %v4299 = vpack.c.bf16 %v4270, %v4269
      %v4300 = vpack.c.bf16 %v4272, %v4271
      %v4301 = vpack.c.bf16 %v4274, %v4273
      %v4302 = vpack.c.bf16 %v4276, %v4275
      %v4303 = vpack.c.bf16 %v4278, %v4277
      %v4304 = vpack.c.bf16 %v4280, %v4279
      %v4305 = vpack.c.bf16 %v4282, %v4281
      %v4306 = vpack.c.bf16 %v4284, %v4283
      %v4307 = vpack.c.bf16 %v4286, %v4285
      %v4308 = vpack.c.bf16 %v4288, %v4287
      %v4309 = vpack.c.bf16 %v4290, %v4289
      %v4310 = vpack.c.bf16 %v4292, %v4291
      %v4311 = vpack.c.bf16 %v4294, %v4293
      %v4312 = vpack.c.bf16 %v4296, %v4295
      %s4313 = scalar_lea.vmem %s3, 64
      %v4314 = vld [vmem:[%s4313] sm:$0xf]
      %v4315 = vld [vmem:[%s4313 + $0x4] sm:$0xf]
      %v4318 = vunpack.c.l.b16 %v4314
      %v4319 = vunpack.c.l.b16 %v4315
      %v4320 = vpack.c.b16 %v4319, %v4318
      %v4323 = vsel %vm2489, %v4297, 0
      %v4326 = vsel %vm2489, %v4298, 0
      %v4329 = vsel %vm2489, %v4299, 0
      %v4332 = vsel %vm2489, %v4300, 0
      %v4335 = vsel %vm2489, %v4301, 0
      %v4338 = vsel %vm2489, %v4302, 0
      %v4341 = vsel %vm2489, %v4303, 0
      %v4344 = vsel %vm2489, %v4304, 0
      %v4347 = vsel %vm2489, %v4305, 0
      %v4350 = vsel %vm2489, %v4306, 0
      %v4353 = vsel %vm2489, %v4307, 0
      %v4356 = vsel %vm2489, %v4308, 0
      %v4359 = vsel %vm2489, %v4309, 0
      %v4362 = vsel %vm2489, %v4310, 0
      %v4365 = vsel %vm2489, %v4311, 0
      %v4368 = vsel %vm2489, %v4312, 0
      %4370 = vmatpush.bf16.msra.mxu0 0
      %4371 = vmatpush.bf16.msra.mxu0 0
      %4372 = vmatpush.bf16.msra.mxu0 0
      %4373 = vmatpush.bf16.msra.mxu0 0
      %4374 = vmatpush.bf16.msra.mxu0 0
      %4375 = vmatpush.bf16.msra.mxu0 0
      %4376 = vmatpush.bf16.msra.mxu0 0
      %4377 = vmatpush.bf16.msra.mxu0 %v4320
      %4378 = vmatmul.bf16.gmra.mxu0 %v4323
      %v4379 = vpop.f32.mrf.mxu0
      %v4380 = vadd.f32 0.0, %v4379
      %v4381 = vpop.f32.mrf.mxu0
      %v4382 = vadd.f32 0.0, %v4381
      %4383 = vmatmul.bf16.gmra.mxu0 %v4326
      %v4384 = vpop.f32.mrf.mxu0
      %v4385 = vadd.f32 0.0, %v4384
      %v4386 = vpop.f32.mrf.mxu0
      %v4387 = vadd.f32 0.0, %v4386
      %4388 = vmatmul.bf16.gmra.mxu0 %v4329
      %v4389 = vpop.f32.mrf.mxu0
      %v4390 = vadd.f32 0.0, %v4389
      %v4391 = vpop.f32.mrf.mxu0
      %v4392 = vadd.f32 0.0, %v4391
      %4393 = vmatmul.bf16.gmra.mxu0 %v4332
      %v4394 = vpop.f32.mrf.mxu0
      %v4395 = vadd.f32 0.0, %v4394
      %v4396 = vpop.f32.mrf.mxu0
      %v4397 = vadd.f32 0.0, %v4396
      %4398 = vmatmul.bf16.gmra.mxu0 %v4335
      %v4399 = vpop.f32.mrf.mxu0
      %v4400 = vadd.f32 0.0, %v4399
      %v4401 = vpop.f32.mrf.mxu0
      %v4402 = vadd.f32 0.0, %v4401
      %4403 = vmatmul.bf16.gmra.mxu0 %v4338
      %v4404 = vpop.f32.mrf.mxu0
      %v4405 = vadd.f32 0.0, %v4404
      %v4406 = vpop.f32.mrf.mxu0
      %v4407 = vadd.f32 0.0, %v4406
      %4408 = vmatmul.bf16.gmra.mxu0 %v4341
      %v4409 = vpop.f32.mrf.mxu0
      %v4410 = vadd.f32 0.0, %v4409
      %v4411 = vpop.f32.mrf.mxu0
      %v4412 = vadd.f32 0.0, %v4411
      %4413 = vmatmul.bf16.gmra.mxu0 %v4344
      %v4414 = vpop.f32.mrf.mxu0
      %v4415 = vadd.f32 0.0, %v4414
      %v4416 = vpop.f32.mrf.mxu0
      %v4417 = vadd.f32 0.0, %v4416
      %4418 = vmatmul.bf16.gmra.mxu0 %v4347
      %v4419 = vpop.f32.mrf.mxu0
      %v4420 = vadd.f32 0.0, %v4419
      %v4421 = vpop.f32.mrf.mxu0
      %v4422 = vadd.f32 0.0, %v4421
      %4423 = vmatmul.bf16.gmra.mxu0 %v4350
      %v4424 = vpop.f32.mrf.mxu0
      %v4425 = vadd.f32 0.0, %v4424
      %v4426 = vpop.f32.mrf.mxu0
      %v4427 = vadd.f32 0.0, %v4426
      %4428 = vmatmul.bf16.gmra.mxu0 %v4353
      %v4429 = vpop.f32.mrf.mxu0
      %v4430 = vadd.f32 0.0, %v4429
      %v4431 = vpop.f32.mrf.mxu0
      %v4432 = vadd.f32 0.0, %v4431
      %4433 = vmatmul.bf16.gmra.mxu0 %v4356
      %v4434 = vpop.f32.mrf.mxu0
      %v4435 = vadd.f32 0.0, %v4434
      %v4436 = vpop.f32.mrf.mxu0
      %v4437 = vadd.f32 0.0, %v4436
      %4438 = vmatmul.bf16.gmra.mxu0 %v4359
      %v4439 = vpop.f32.mrf.mxu0
      %v4440 = vadd.f32 0.0, %v4439
      %v4441 = vpop.f32.mrf.mxu0
      %v4442 = vadd.f32 0.0, %v4441
      %4443 = vmatmul.bf16.gmra.mxu0 %v4362
      %v4444 = vpop.f32.mrf.mxu0
      %v4445 = vadd.f32 0.0, %v4444
      %v4446 = vpop.f32.mrf.mxu0
      %v4447 = vadd.f32 0.0, %v4446
      %4448 = vmatmul.bf16.gmra.mxu0 %v4365
      %v4449 = vpop.f32.mrf.mxu0
      %v4450 = vadd.f32 0.0, %v4449
      %v4451 = vpop.f32.mrf.mxu0
      %v4452 = vadd.f32 0.0, %v4451
      %4453 = vmatmul.bf16.gmra.mxu0 %v4368
      %v4454 = vpop.f32.mrf.mxu0
      %v4455 = vadd.f32 0.0, %v4454
      %v4456 = vpop.f32.mrf.mxu0
      %v4457 = vadd.f32 0.0, %v4456
      %4458 = vdwg.mxu0
      %v4459 = vadd.f32 %v4233, %v4380
      %v4460 = vadd.f32 %v4234, %v4382
      %v4461 = vadd.f32 %v4235, %v4385
      %v4462 = vadd.f32 %v4236, %v4387
      %v4463 = vadd.f32 %v4237, %v4390
      %v4464 = vadd.f32 %v4238, %v4392
      %v4465 = vadd.f32 %v4239, %v4395
      %v4466 = vadd.f32 %v4240, %v4397
      %v4467 = vadd.f32 %v4241, %v4400
      %v4468 = vadd.f32 %v4242, %v4402
      %v4469 = vadd.f32 %v4243, %v4405
      %v4470 = vadd.f32 %v4244, %v4407
      %v4471 = vadd.f32 %v4245, %v4410
      %v4472 = vadd.f32 %v4246, %v4412
      %v4473 = vadd.f32 %v4247, %v4415
      %v4474 = vadd.f32 %v4248, %v4417
      %v4475 = vadd.f32 %v4249, %v4420
      %v4476 = vadd.f32 %v4250, %v4422
      %v4477 = vadd.f32 %v4251, %v4425
      %v4478 = vadd.f32 %v4252, %v4427
      %v4479 = vadd.f32 %v4253, %v4430
      %v4480 = vadd.f32 %v4254, %v4432
      %v4481 = vadd.f32 %v4255, %v4435
      %v4482 = vadd.f32 %v4256, %v4437
      %v4483 = vadd.f32 %v4257, %v4440
      %v4484 = vadd.f32 %v4258, %v4442
      %v4485 = vadd.f32 %v4259, %v4445
      %v4486 = vadd.f32 %v4260, %v4447
      %v4487 = vadd.f32 %v4261, %v4450
      %v4488 = vadd.f32 %v4262, %v4452
      %v4489 = vadd.f32 %v4263, %v4455
      %v4490 = vadd.f32 %v4264, %v4457
      %v4491 = vld [vmem:[%s4] sm:$0x1]
      %v4493 = vperm.slane %v4491, 0
      %v4495 = vadd.f32 %v4459, %v4493
      %v4496 = vadd.f32 %v4460, %v4493
      %v4497 = vadd.f32 %v4461, %v4493
      %v4498 = vadd.f32 %v4462, %v4493
      %v4499 = vadd.f32 %v4463, %v4493
      %v4500 = vadd.f32 %v4464, %v4493
      %v4501 = vadd.f32 %v4465, %v4493
      %v4502 = vadd.f32 %v4466, %v4493
      %v4503 = vadd.f32 %v4467, %v4493
      %v4504 = vadd.f32 %v4468, %v4493
      %v4505 = vadd.f32 %v4469, %v4493
      %v4506 = vadd.f32 %v4470, %v4493
      %v4507 = vadd.f32 %v4471, %v4493
      %v4508 = vadd.f32 %v4472, %v4493
      %v4509 = vadd.f32 %v4473, %v4493
      %v4510 = vadd.f32 %v4474, %v4493
      %v4511 = vadd.f32 %v4475, %v4493
      %v4512 = vadd.f32 %v4476, %v4493
      %v4513 = vadd.f32 %v4477, %v4493
      %v4514 = vadd.f32 %v4478, %v4493
      %v4515 = vadd.f32 %v4479, %v4493
      %v4516 = vadd.f32 %v4480, %v4493
      %v4517 = vadd.f32 %v4481, %v4493
      %v4518 = vadd.f32 %v4482, %v4493
      %v4519 = vadd.f32 %v4483, %v4493
      %v4520 = vadd.f32 %v4484, %v4493
      %v4521 = vadd.f32 %v4485, %v4493
      %v4522 = vadd.f32 %v4486, %v4493
      %v4523 = vadd.f32 %v4487, %v4493
      %v4524 = vadd.f32 %v4488, %v4493
      %v4525 = vadd.f32 %v4489, %v4493
      %v4526 = vadd.f32 %v4490, %v4493
      %v4527 = vmax.f32 %v4495, 0.0
      %v4528 = vmax.f32 %v4496, 0.0
      %v4529 = vmax.f32 %v4497, 0.0
      %v4530 = vmax.f32 %v4498, 0.0
      %v4531 = vmax.f32 %v4499, 0.0
      %v4532 = vmax.f32 %v4500, 0.0
      %v4533 = vmax.f32 %v4501, 0.0
      %v4534 = vmax.f32 %v4502, 0.0
      %v4535 = vmax.f32 %v4503, 0.0
      %v4536 = vmax.f32 %v4504, 0.0
      %v4537 = vmax.f32 %v4505, 0.0
      %v4538 = vmax.f32 %v4506, 0.0
      %v4539 = vmax.f32 %v4507, 0.0
      %v4540 = vmax.f32 %v4508, 0.0
      %v4541 = vmax.f32 %v4509, 0.0
      %v4542 = vmax.f32 %v4510, 0.0
      %v4543 = vmax.f32 %v4511, 0.0
      %v4544 = vmax.f32 %v4512, 0.0
      %v4545 = vmax.f32 %v4513, 0.0
      %v4546 = vmax.f32 %v4514, 0.0
      %v4547 = vmax.f32 %v4515, 0.0
      %v4548 = vmax.f32 %v4516, 0.0
      %v4549 = vmax.f32 %v4517, 0.0
      %v4550 = vmax.f32 %v4518, 0.0
      %v4551 = vmax.f32 %v4519, 0.0
      %v4552 = vmax.f32 %v4520, 0.0
      %v4553 = vmax.f32 %v4521, 0.0
      %v4554 = vmax.f32 %v4522, 0.0
      %v4555 = vmax.f32 %v4523, 0.0
      %v4556 = vmax.f32 %v4524, 0.0
      %v4557 = vmax.f32 %v4525, 0.0
      %v4558 = vmax.f32 %v4526, 0.0
      %v4559 = vpack.c.bf16 %v4527, %v4527
      %v4560 = vpack.c.bf16 %v4528, %v4528
      %v4561 = vpack.c.bf16 %v4529, %v4529
      %v4562 = vpack.c.bf16 %v4530, %v4530
      %v4563 = vpack.c.bf16 %v4531, %v4531
      %v4564 = vpack.c.bf16 %v4532, %v4532
      %v4565 = vpack.c.bf16 %v4533, %v4533
      %v4566 = vpack.c.bf16 %v4534, %v4534
      %v4567 = vpack.c.bf16 %v4535, %v4535
      %v4568 = vpack.c.bf16 %v4536, %v4536
      %v4569 = vpack.c.bf16 %v4537, %v4537
      %v4570 = vpack.c.bf16 %v4538, %v4538
      %v4571 = vpack.c.bf16 %v4539, %v4539
      %v4572 = vpack.c.bf16 %v4540, %v4540
      %v4573 = vpack.c.bf16 %v4541, %v4541
      %v4574 = vpack.c.bf16 %v4542, %v4542
      %v4575 = vpack.c.bf16 %v4543, %v4543
      %v4576 = vpack.c.bf16 %v4544, %v4544
      %v4577 = vpack.c.bf16 %v4545, %v4545
      %v4578 = vpack.c.bf16 %v4546, %v4546
      %v4579 = vpack.c.bf16 %v4547, %v4547
      %v4580 = vpack.c.bf16 %v4548, %v4548
      %v4581 = vpack.c.bf16 %v4549, %v4549
      %v4582 = vpack.c.bf16 %v4550, %v4550
      %v4583 = vpack.c.bf16 %v4551, %v4551
      %v4584 = vpack.c.bf16 %v4552, %v4552
      %v4585 = vpack.c.bf16 %v4553, %v4553
      %v4586 = vpack.c.bf16 %v4554, %v4554
      %v4587 = vpack.c.bf16 %v4555, %v4555
      %v4588 = vpack.c.bf16 %v4556, %v4556
      %v4589 = vpack.c.bf16 %v4557, %v4557
      %v4590 = vpack.c.bf16 %v4558, %v4558
      %vm4591 = vcmask 257024
      %4592 = vst.msk [vmem:[%s367] sm:$0xf] %vm4591, %v4559
      %4593 = vst.msk [vmem:[%s367 + $0x4] sm:$0xf] %vm4591, %v4560
      %4594 = vst.msk [vmem:[%s367 + $0x8] sm:$0xf] %vm4591, %v4561
      %4595 = vst.msk [vmem:[%s367 + $0xc] sm:$0xf] %vm4591, %v4562
      %4596 = vst.msk [vmem:[%s367 + $0x10] sm:$0xf] %vm4591, %v4563
      %4597 = vst.msk [vmem:[%s367 + $0x14] sm:$0xf] %vm4591, %v4564
      %4598 = vst.msk [vmem:[%s367 + $0x18] sm:$0xf] %vm4591, %v4565
      %4599 = vst.msk [vmem:[%s367 + $0x1c] sm:$0xf] %vm4591, %v4566
      %4600 = vst.msk [vmem:[%s367 + $0x20] sm:$0xf] %vm4591, %v4567
      %4601 = vst.msk [vmem:[%s367 + $0x24] sm:$0xf] %vm4591, %v4568
      %4602 = vst.msk [vmem:[%s367 + $0x28] sm:$0xf] %vm4591, %v4569
      %4603 = vst.msk [vmem:[%s367 + $0x2c] sm:$0xf] %vm4591, %v4570
      %4604 = vst.msk [vmem:[%s367 + $0x30] sm:$0xf] %vm4591, %v4571
      %4605 = vst.msk [vmem:[%s367 + $0x34] sm:$0xf] %vm4591, %v4572
      %4606 = vst.msk [vmem:[%s367 + $0x38] sm:$0xf] %vm4591, %v4573
      %4607 = vst.msk [vmem:[%s367 + $0x3c] sm:$0xf] %vm4591, %v4574
      %4608 = vst.msk [vmem:[%s367 + $0x40] sm:$0xf] %vm4591, %v4575
      %4609 = vst.msk [vmem:[%s367 + $0x44] sm:$0xf] %vm4591, %v4576
      %4610 = vst.msk [vmem:[%s367 + $0x48] sm:$0xf] %vm4591, %v4577
      %4611 = vst.msk [vmem:[%s367 + $0x4c] sm:$0xf] %vm4591, %v4578
      %4612 = vst.msk [vmem:[%s367 + $0x50] sm:$0xf] %vm4591, %v4579
      %4613 = vst.msk [vmem:[%s367 + $0x54] sm:$0xf] %vm4591, %v4580
      %4614 = vst.msk [vmem:[%s367 + $0x58] sm:$0xf] %vm4591, %v4581
      %4615 = vst.msk [vmem:[%s367 + $0x5c] sm:$0xf] %vm4591, %v4582
      %4616 = vst.msk [vmem:[%s367 + $0x60] sm:$0xf] %vm4591, %v4583
      %4617 = vst.msk [vmem:[%s367 + $0x64] sm:$0xf] %vm4591, %v4584
      %4618 = vst.msk [vmem:[%s367 + $0x68] sm:$0xf] %vm4591, %v4585
      %4619 = vst.msk [vmem:[%s367 + $0x6c] sm:$0xf] %vm4591, %v4586
      %4620 = vst.msk [vmem:[%s367 + $0x70] sm:$0xf] %vm4591, %v4587
      %4621 = vst.msk [vmem:[%s367 + $0x74] sm:$0xf] %vm4591, %v4588
      %4622 = vst.msk [vmem:[%s367 + $0x78] sm:$0xf] %vm4591, %v4589
      %4623 = vst.msk [vmem:[%s367 + $0x7c] sm:$0xf] %vm4591, %v4590
      %4624 = vst.msk [vmem:[%s452 + $0x8] sm:$0xff] %vm374, %v4527
      %4625 = vst.msk [vmem:[%s452 + $0x10] sm:$0xff] %vm374, %v4528
      %4626 = vst.msk [vmem:[%s452 + $0x28] sm:$0xff] %vm374, %v4529
      %4627 = vst.msk [vmem:[%s452 + $0x30] sm:$0xff] %vm374, %v4530
      %4628 = vst.msk [vmem:[%s452 + $0x48] sm:$0xff] %vm374, %v4531
      %4629 = vst.msk [vmem:[%s452 + $0x50] sm:$0xff] %vm374, %v4532
      %4630 = vst.msk [vmem:[%s452 + $0x68] sm:$0xff] %vm374, %v4533
      %4631 = vst.msk [vmem:[%s452 + $0x70] sm:$0xff] %vm374, %v4534
      %4632 = vst.msk [vmem:[%s452 + $0x88] sm:$0xff] %vm374, %v4535
      %4633 = vst.msk [vmem:[%s452 + $0x90] sm:$0xff] %vm374, %v4536
      %4634 = vst.msk [vmem:[%s452 + $0xa8] sm:$0xff] %vm374, %v4537
      %4635 = vst.msk [vmem:[%s452 + $0xb0] sm:$0xff] %vm374, %v4538
      %4636 = vst.msk [vmem:[%s452 + $0xc8] sm:$0xff] %vm374, %v4539
      %4637 = vst.msk [vmem:[%s452 + $0xd0] sm:$0xff] %vm374, %v4540
      %4638 = vst.msk [vmem:[%s452 + $0xe8] sm:$0xff] %vm374, %v4541
      %4639 = vst.msk [vmem:[%s452 + $0xf0] sm:$0xff] %vm374, %v4542
      %4640 = vst.msk [vmem:[%s452 + $0x108] sm:$0xff] %vm374, %v4543
      %4641 = vst.msk [vmem:[%s452 + $0x110] sm:$0xff] %vm374, %v4544
      %4642 = vst.msk [vmem:[%s452 + $0x128] sm:$0xff] %vm374, %v4545
      %4643 = vst.msk [vmem:[%s452 + $0x130] sm:$0xff] %vm374, %v4546
      %4644 = vst.msk [vmem:[%s452 + $0x148] sm:$0xff] %vm374, %v4547
      %4645 = vst.msk [vmem:[%s452 + $0x150] sm:$0xff] %vm374, %v4548
      %4646 = vst.msk [vmem:[%s452 + $0x168] sm:$0xff] %vm374, %v4549
      %4647 = vst.msk [vmem:[%s452 + $0x170] sm:$0xff] %vm374, %v4550
      %4648 = vst.msk [vmem:[%s452 + $0x188] sm:$0xff] %vm374, %v4551
      %4649 = vst.msk [vmem:[%s452 + $0x190] sm:$0xff] %vm374, %v4552
      %4650 = vst.msk [vmem:[%s452 + $0x1a8] sm:$0xff] %vm374, %v4553
      %4651 = vst.msk [vmem:[%s452 + $0x1b0] sm:$0xff] %vm374, %v4554
      %4652 = vst.msk [vmem:[%s452 + $0x1c8] sm:$0xff] %vm374, %v4555
      %4653 = vst.msk [vmem:[%s452 + $0x1d0] sm:$0xff] %vm374, %v4556
      %4654 = vst.msk [vmem:[%s452 + $0x1e8] sm:$0xff] %vm374, %v4557
      %4655 = vst.msk [vmem:[%s452 + $0x1f0] sm:$0xff] %vm374, %v4558
      %v4656 = vld [vmem:[#allocation2 + $0x7] sm:$0xff]
      %v4657 = vld [vmem:[#allocation2 + $0xf] sm:$0xff]
      %v4658 = vld [vmem:[#allocation2 + $0x27] sm:$0xff]
      %v4659 = vld [vmem:[#allocation2 + $0x2f] sm:$0xff]
      %v4660 = vld [vmem:[#allocation2 + $0x47] sm:$0xff]
      %v4661 = vld [vmem:[#allocation2 + $0x4f] sm:$0xff]
      %v4662 = vld [vmem:[#allocation2 + $0x67] sm:$0xff]
      %v4663 = vld [vmem:[#allocation2 + $0x6f] sm:$0xff]
      %v4664 = vld [vmem:[#allocation2 + $0x87] sm:$0xff]
      %v4665 = vld [vmem:[#allocation2 + $0x8f] sm:$0xff]
      %v4666 = vld [vmem:[#allocation2 + $0xa7] sm:$0xff]
      %v4667 = vld [vmem:[#allocation2 + $0xaf] sm:$0xff]
      %v4668 = vld [vmem:[#allocation2 + $0xc7] sm:$0xff]
      %v4669 = vld [vmem:[#allocation2 + $0xcf] sm:$0xff]
      %v4670 = vld [vmem:[#allocation2 + $0xe7] sm:$0xff]
      %v4671 = vld [vmem:[#allocation2 + $0xef] sm:$0xff]
      %v4672 = vld [vmem:[#allocation2 + $0x107] sm:$0xff]
      %v4673 = vld [vmem:[#allocation2 + $0x10f] sm:$0xff]
      %v4674 = vld [vmem:[#allocation2 + $0x127] sm:$0xff]
      %v4675 = vld [vmem:[#allocation2 + $0x12f] sm:$0xff]
      %v4676 = vld [vmem:[#allocation2 + $0x147] sm:$0xff]
      %v4677 = vld [vmem:[#allocation2 + $0x14f] sm:$0xff]
      %v4678 = vld [vmem:[#allocation2 + $0x167] sm:$0xff]
      %v4679 = vld [vmem:[#allocation2 + $0x16f] sm:$0xff]
      %v4680 = vld [vmem:[#allocation2 + $0x187] sm:$0xff]
      %v4681 = vld [vmem:[#allocation2 + $0x18f] sm:$0xff]
      %v4682 = vld [vmem:[#allocation2 + $0x1a7] sm:$0xff]
      %v4683 = vld [vmem:[#allocation2 + $0x1af] sm:$0xff]
      %v4684 = vld [vmem:[#allocation2 + $0x1c7] sm:$0xff]
      %v4685 = vld [vmem:[#allocation2 + $0x1cf] sm:$0xff]
      %v4686 = vld [vmem:[#allocation2 + $0x1e7] sm:$0xff]
      %v4687 = vld [vmem:[#allocation2 + $0x1ef] sm:$0xff]
      %v4688 = vpack.c.bf16 %v4657, %v4656
      %v4689 = vpack.c.bf16 %v4659, %v4658
      %v4690 = vpack.c.bf16 %v4661, %v4660
      %v4691 = vpack.c.bf16 %v4663, %v4662
      %v4692 = vpack.c.bf16 %v4665, %v4664
      %v4693 = vpack.c.bf16 %v4667, %v4666
      %v4694 = vpack.c.bf16 %v4669, %v4668
      %v4695 = vpack.c.bf16 %v4671, %v4670
      %v4696 = vpack.c.bf16 %v4673, %v4672
      %v4697 = vpack.c.bf16 %v4675, %v4674
      %v4698 = vpack.c.bf16 %v4677, %v4676
      %v4699 = vpack.c.bf16 %v4679, %v4678
      %v4700 = vpack.c.bf16 %v4681, %v4680
      %v4701 = vpack.c.bf16 %v4683, %v4682
      %v4702 = vpack.c.bf16 %v4685, %v4684
      %v4703 = vpack.c.bf16 %v4687, %v4686
      %v4704 = vld [vmem:[%s5] sm:$0xf]
      %v4705 = vld [vmem:[%s5 + $0x4] sm:$0xf]
      %v4706 = vld [vmem:[%s5 + $0x8] sm:$0xf]
      %v4707 = vld [vmem:[%s5 + $0xc] sm:$0xf]
      %v4708 = vld [vmem:[#allocation2 + $0x8] sm:$0xff]
      %v4709 = vld [vmem:[#allocation2 + $0x10] sm:$0xff]
      %v4710 = vld [vmem:[#allocation2 + $0x28] sm:$0xff]
      %v4711 = vld [vmem:[#allocation2 + $0x30] sm:$0xff]
      %v4712 = vld [vmem:[#allocation2 + $0x48] sm:$0xff]
      %v4713 = vld [vmem:[#allocation2 + $0x50] sm:$0xff]
      %v4714 = vld [vmem:[#allocation2 + $0x68] sm:$0xff]
      %v4715 = vld [vmem:[#allocation2 + $0x70] sm:$0xff]
      %v4716 = vld [vmem:[#allocation2 + $0x88] sm:$0xff]
      %v4717 = vld [vmem:[#allocation2 + $0x90] sm:$0xff]
      %v4718 = vld [vmem:[#allocation2 + $0xa8] sm:$0xff]
      %v4719 = vld [vmem:[#allocation2 + $0xb0] sm:$0xff]
      %v4720 = vld [vmem:[#allocation2 + $0xc8] sm:$0xff]
      %v4721 = vld [vmem:[#allocation2 + $0xd0] sm:$0xff]
      %v4722 = vld [vmem:[#allocation2 + $0xe8] sm:$0xff]
      %v4723 = vld [vmem:[#allocation2 + $0xf0] sm:$0xff]
      %v4724 = vld [vmem:[#allocation2 + $0x108] sm:$0xff]
      %v4725 = vld [vmem:[#allocation2 + $0x110] sm:$0xff]
      %v4726 = vld [vmem:[#allocation2 + $0x128] sm:$0xff]
      %v4727 = vld [vmem:[#allocation2 + $0x130] sm:$0xff]
      %v4728 = vld [vmem:[#allocation2 + $0x148] sm:$0xff]
      %v4729 = vld [vmem:[#allocation2 + $0x150] sm:$0xff]
      %v4730 = vld [vmem:[#allocation2 + $0x168] sm:$0xff]
      %v4731 = vld [vmem:[#allocation2 + $0x170] sm:$0xff]
      %v4732 = vld [vmem:[#allocation2 + $0x188] sm:$0xff]
      %v4733 = vld [vmem:[#allocation2 + $0x190] sm:$0xff]
      %v4734 = vld [vmem:[#allocation2 + $0x1a8] sm:$0xff]
      %v4735 = vld [vmem:[#allocation2 + $0x1b0] sm:$0xff]
      %v4736 = vld [vmem:[#allocation2 + $0x1c8] sm:$0xff]
      %v4737 = vld [vmem:[#allocation2 + $0x1d0] sm:$0xff]
      %v4738 = vld [vmem:[#allocation2 + $0x1e8] sm:$0xff]
      %v4739 = vld [vmem:[#allocation2 + $0x1f0] sm:$0xff]
      %v4740 = vpack.c.bf16 %v4709, %v4708
      %v4741 = vpack.c.bf16 %v4711, %v4710
      %v4742 = vpack.c.bf16 %v4713, %v4712
      %v4743 = vpack.c.bf16 %v4715, %v4714
      %v4744 = vpack.c.bf16 %v4717, %v4716
      %v4745 = vpack.c.bf16 %v4719, %v4718
      %v4746 = vpack.c.bf16 %v4721, %v4720
      %v4747 = vpack.c.bf16 %v4723, %v4722
      %v4748 = vpack.c.bf16 %v4725, %v4724
      %v4749 = vpack.c.bf16 %v4727, %v4726
      %v4750 = vpack.c.bf16 %v4729, %v4728
      %v4751 = vpack.c.bf16 %v4731, %v4730
      %v4752 = vpack.c.bf16 %v4733, %v4732
      %v4753 = vpack.c.bf16 %v4735, %v4734
      %v4754 = vpack.c.bf16 %v4737, %v4736
      %v4755 = vpack.c.bf16 %v4739, %v4738
      %s4756 = scalar_lea.vmem %s5, 16
      %v4757 = vld [vmem:[%s4756] sm:$0xf]
      %v4758 = vld [vmem:[%s4756 + $0x4] sm:$0xf]
      %v4759 = vld [vmem:[%s4756 + $0x8] sm:$0xf]
      %v4760 = vld [vmem:[%s4756 + $0xc] sm:$0xf]
      %v4765 = vunpack.c.l.b16 %v4757
      %v4766 = vunpack.c.l.b16 %v4758
      %v4767 = vunpack.c.l.b16 %v4759
      %v4768 = vunpack.c.l.b16 %v4760
      %v4769 = vpack.c.b16 %v4766, %v4765
      %v4770 = vpack.c.b16 %v4768, %v4767
      %v4774 = vsel %vm374, %v4740, 0
      %v4777 = vsel %vm374, %v4741, 0
      %v4780 = vsel %vm374, %v4742, 0
      %v4783 = vsel %vm374, %v4743, 0
      %v4786 = vsel %vm374, %v4744, 0
      %v4789 = vsel %vm374, %v4745, 0
      %v4792 = vsel %vm374, %v4746, 0
      %v4795 = vsel %vm374, %v4747, 0
      %v4798 = vsel %vm374, %v4748, 0
      %v4801 = vsel %vm374, %v4749, 0
      %v4804 = vsel %vm374, %v4750, 0
      %v4807 = vsel %vm374, %v4751, 0
      %v4810 = vsel %vm374, %v4752, 0
      %v4813 = vsel %vm374, %v4753, 0
      %v4816 = vsel %vm374, %v4754, 0
      %v4819 = vsel %vm374, %v4755, 0
      %4821 = vmatpush.bf16.msra.mxu0 0
      %4822 = vmatpush.bf16.msra.mxu0 0
      %4823 = vmatpush.bf16.msra.mxu0 0
      %4824 = vmatpush.bf16.msra.mxu0 0
      %4825 = vmatpush.bf16.msra.mxu0 0
      %4826 = vmatpush.bf16.msra.mxu0 0
      %4827 = vmatpush.bf16.msra.mxu0 %v4770
      %4828 = vmatpush.bf16.msra.mxu0 %v4769
      %4829 = vmatmul.bf16.gmra.mxu0 %v4774
      %v4830 = vpop.f32.mrf.mxu0
      %v4831 = vadd.f32 0.0, %v4830
      %v4832 = vpop.f32.mrf.mxu0
      %v4833 = vadd.f32 0.0, %v4832
      %4834 = vmatmul.bf16.gmra.mxu0 %v4777
      %v4835 = vpop.f32.mrf.mxu0
      %v4836 = vadd.f32 0.0, %v4835
      %v4837 = vpop.f32.mrf.mxu0
      %v4838 = vadd.f32 0.0, %v4837
      %4839 = vmatmul.bf16.gmra.mxu0 %v4780
      %v4840 = vpop.f32.mrf.mxu0
      %v4841 = vadd.f32 0.0, %v4840
      %v4842 = vpop.f32.mrf.mxu0
      %v4843 = vadd.f32 0.0, %v4842
      %4844 = vmatmul.bf16.gmra.mxu0 %v4783
      %v4845 = vpop.f32.mrf.mxu0
      %v4846 = vadd.f32 0.0, %v4845
      %v4847 = vpop.f32.mrf.mxu0
      %v4848 = vadd.f32 0.0, %v4847
      %4849 = vmatmul.bf16.gmra.mxu0 %v4786
      %v4850 = vpop.f32.mrf.mxu0
      %v4851 = vadd.f32 0.0, %v4850
      %v4852 = vpop.f32.mrf.mxu0
      %v4853 = vadd.f32 0.0, %v4852
      %4854 = vmatmul.bf16.gmra.mxu0 %v4789
      %v4855 = vpop.f32.mrf.mxu0
      %v4856 = vadd.f32 0.0, %v4855
      %v4857 = vpop.f32.mrf.mxu0
      %v4858 = vadd.f32 0.0, %v4857
      %4859 = vmatmul.bf16.gmra.mxu0 %v4792
      %v4860 = vpop.f32.mrf.mxu0
      %v4861 = vadd.f32 0.0, %v4860
      %v4862 = vpop.f32.mrf.mxu0
      %v4863 = vadd.f32 0.0, %v4862
      %4864 = vmatmul.bf16.gmra.mxu0 %v4795
      %v4865 = vpop.f32.mrf.mxu0
      %v4866 = vadd.f32 0.0, %v4865
      %v4867 = vpop.f32.mrf.mxu0
      %v4868 = vadd.f32 0.0, %v4867
      %4869 = vmatmul.bf16.gmra.mxu0 %v4798
      %v4870 = vpop.f32.mrf.mxu0
      %v4871 = vadd.f32 0.0, %v4870
      %v4872 = vpop.f32.mrf.mxu0
      %v4873 = vadd.f32 0.0, %v4872
      %4874 = vmatmul.bf16.gmra.mxu0 %v4801
      %v4875 = vpop.f32.mrf.mxu0
      %v4876 = vadd.f32 0.0, %v4875
      %v4877 = vpop.f32.mrf.mxu0
      %v4878 = vadd.f32 0.0, %v4877
      %4879 = vmatmul.bf16.gmra.mxu0 %v4804
      %v4880 = vpop.f32.mrf.mxu0
      %v4881 = vadd.f32 0.0, %v4880
      %v4882 = vpop.f32.mrf.mxu0
      %v4883 = vadd.f32 0.0, %v4882
      %4884 = vmatmul.bf16.gmra.mxu0 %v4807
      %v4885 = vpop.f32.mrf.mxu0
      %v4886 = vadd.f32 0.0, %v4885
      %v4887 = vpop.f32.mrf.mxu0
      %v4888 = vadd.f32 0.0, %v4887
      %4889 = vmatmul.bf16.gmra.mxu0 %v4810
      %v4890 = vpop.f32.mrf.mxu0
      %v4891 = vadd.f32 0.0, %v4890
      %v4892 = vpop.f32.mrf.mxu0
      %v4893 = vadd.f32 0.0, %v4892
      %4894 = vmatmul.bf16.gmra.mxu0 %v4813
      %v4895 = vpop.f32.mrf.mxu0
      %v4896 = vadd.f32 0.0, %v4895
      %v4897 = vpop.f32.mrf.mxu0
      %v4898 = vadd.f32 0.0, %v4897
      %4899 = vmatmul.bf16.gmra.mxu0 %v4816
      %v4900 = vpop.f32.mrf.mxu0
      %v4901 = vadd.f32 0.0, %v4900
      %v4902 = vpop.f32.mrf.mxu0
      %v4903 = vadd.f32 0.0, %v4902
      %4904 = vmatmul.bf16.gmra.mxu0 %v4819
      %v4905 = vpop.f32.mrf.mxu0
      %v4906 = vadd.f32 0.0, %v4905
      %v4907 = vpop.f32.mrf.mxu0
      %v4908 = vadd.f32 0.0, %v4907
      %4909 = vdwg.mxu0
      %v4914 = vunpack.c.l.b16 %v4704
      %v4915 = vunpack.c.l.b16 %v4705
      %v4916 = vunpack.c.l.b16 %v4706
      %v4917 = vunpack.c.l.b16 %v4707
      %v4918 = vpack.c.b16 %v4915, %v4914
      %v4919 = vpack.c.b16 %v4917, %v4916
      %v4923 = vsel %vm374, %v4688, 0
      %v4926 = vsel %vm374, %v4689, 0
      %v4929 = vsel %vm374, %v4690, 0
      %v4932 = vsel %vm374, %v4691, 0
      %v4935 = vsel %vm374, %v4692, 0
      %v4938 = vsel %vm374, %v4693, 0
      %v4941 = vsel %vm374, %v4694, 0
      %v4944 = vsel %vm374, %v4695, 0
      %v4947 = vsel %vm374, %v4696, 0
      %v4950 = vsel %vm374, %v4697, 0
      %v4953 = vsel %vm374, %v4698, 0
      %v4956 = vsel %vm374, %v4699, 0
      %v4959 = vsel %vm374, %v4700, 0
      %v4962 = vsel %vm374, %v4701, 0
      %v4965 = vsel %vm374, %v4702, 0
      %v4968 = vsel %vm374, %v4703, 0
      %4970 = vmatpush.bf16.msra.mxu0 0
      %4971 = vmatpush.bf16.msra.mxu0 0
      %4972 = vmatpush.bf16.msra.mxu0 0
      %4973 = vmatpush.bf16.msra.mxu0 0
      %4974 = vmatpush.bf16.msra.mxu0 0
      %4975 = vmatpush.bf16.msra.mxu0 0
      %4976 = vmatpush.bf16.msra.mxu0 %v4919
      %4977 = vmatpush.bf16.msra.mxu0 %v4918
      %4978 = vmatmul.bf16.gmra.mxu0 %v4923
      %v4979 = vpop.f32.mrf.mxu0
      %v4980 = vadd.f32 %v4831, %v4979
      %v4981 = vpop.f32.mrf.mxu0
      %v4982 = vadd.f32 %v4833, %v4981
      %4983 = vmatmul.bf16.gmra.mxu0 %v4926
      %v4984 = vpop.f32.mrf.mxu0
      %v4985 = vadd.f32 %v4836, %v4984
      %v4986 = vpop.f32.mrf.mxu0
      %v4987 = vadd.f32 %v4838, %v4986
      %4988 = vmatmul.bf16.gmra.mxu0 %v4929
      %v4989 = vpop.f32.mrf.mxu0
      %v4990 = vadd.f32 %v4841, %v4989
      %v4991 = vpop.f32.mrf.mxu0
      %v4992 = vadd.f32 %v4843, %v4991
      %4993 = vmatmul.bf16.gmra.mxu0 %v4932
      %v4994 = vpop.f32.mrf.mxu0
      %v4995 = vadd.f32 %v4846, %v4994
      %v4996 = vpop.f32.mrf.mxu0
      %v4997 = vadd.f32 %v4848, %v4996
      %4998 = vmatmul.bf16.gmra.mxu0 %v4935
      %v4999 = vpop.f32.mrf.mxu0
      %v5000 = vadd.f32 %v4851, %v4999
      %v5001 = vpop.f32.mrf.mxu0
      %v5002 = vadd.f32 %v4853, %v5001
      %5003 = vmatmul.bf16.gmra.mxu0 %v4938
      %v5004 = vpop.f32.mrf.mxu0
      %v5005 = vadd.f32 %v4856, %v5004
      %v5006 = vpop.f32.mrf.mxu0
      %v5007 = vadd.f32 %v4858, %v5006
      %5008 = vmatmul.bf16.gmra.mxu0 %v4941
      %v5009 = vpop.f32.mrf.mxu0
      %v5010 = vadd.f32 %v4861, %v5009
      %v5011 = vpop.f32.mrf.mxu0
      %v5012 = vadd.f32 %v4863, %v5011
      %5013 = vmatmul.bf16.gmra.mxu0 %v4944
      %v5014 = vpop.f32.mrf.mxu0
      %v5015 = vadd.f32 %v4866, %v5014
      %v5016 = vpop.f32.mrf.mxu0
      %v5017 = vadd.f32 %v4868, %v5016
      %5018 = vmatmul.bf16.gmra.mxu0 %v4947
      %v5019 = vpop.f32.mrf.mxu0
      %v5020 = vadd.f32 %v4871, %v5019
      %v5021 = vpop.f32.mrf.mxu0
      %v5022 = vadd.f32 %v4873, %v5021
      %5023 = vmatmul.bf16.gmra.mxu0 %v4950
      %v5024 = vpop.f32.mrf.mxu0
      %v5025 = vadd.f32 %v4876, %v5024
      %v5026 = vpop.f32.mrf.mxu0
      %v5027 = vadd.f32 %v4878, %v5026
      %5028 = vmatmul.bf16.gmra.mxu0 %v4953
      %v5029 = vpop.f32.mrf.mxu0
      %v5030 = vadd.f32 %v4881, %v5029
      %v5031 = vpop.f32.mrf.mxu0
      %v5032 = vadd.f32 %v4883, %v5031
      %5033 = vmatmul.bf16.gmra.mxu0 %v4956
      %v5034 = vpop.f32.mrf.mxu0
      %v5035 = vadd.f32 %v4886, %v5034
      %v5036 = vpop.f32.mrf.mxu0
      %v5037 = vadd.f32 %v4888, %v5036
      %5038 = vmatmul.bf16.gmra.mxu0 %v4959
      %v5039 = vpop.f32.mrf.mxu0
      %v5040 = vadd.f32 %v4891, %v5039
      %v5041 = vpop.f32.mrf.mxu0
      %v5042 = vadd.f32 %v4893, %v5041
      %5043 = vmatmul.bf16.gmra.mxu0 %v4962
      %v5044 = vpop.f32.mrf.mxu0
      %v5045 = vadd.f32 %v4896, %v5044
      %v5046 = vpop.f32.mrf.mxu0
      %v5047 = vadd.f32 %v4898, %v5046
      %5048 = vmatmul.bf16.gmra.mxu0 %v4965
      %v5049 = vpop.f32.mrf.mxu0
      %v5050 = vadd.f32 %v4901, %v5049
      %v5051 = vpop.f32.mrf.mxu0
      %v5052 = vadd.f32 %v4903, %v5051
      %5053 = vmatmul.bf16.gmra.mxu0 %v4968
      %v5054 = vpop.f32.mrf.mxu0
      %v5055 = vadd.f32 %v4906, %v5054
      %v5056 = vpop.f32.mrf.mxu0
      %v5057 = vadd.f32 %v4908, %v5056
      %5058 = vdwg.mxu0
      %v5059 = vld [vmem:[#allocation2 + $0x9] sm:$0xff]
      %v5060 = vld [vmem:[#allocation2 + $0x11] sm:$0xff]
      %v5061 = vld [vmem:[#allocation2 + $0x29] sm:$0xff]
      %v5062 = vld [vmem:[#allocation2 + $0x31] sm:$0xff]
      %v5063 = vld [vmem:[#allocation2 + $0x49] sm:$0xff]
      %v5064 = vld [vmem:[#allocation2 + $0x51] sm:$0xff]
      %v5065 = vld [vmem:[#allocation2 + $0x69] sm:$0xff]
      %v5066 = vld [vmem:[#allocation2 + $0x71] sm:$0xff]
      %v5067 = vld [vmem:[#allocation2 + $0x89] sm:$0xff]
      %v5068 = vld [vmem:[#allocation2 + $0x91] sm:$0xff]
      %v5069 = vld [vmem:[#allocation2 + $0xa9] sm:$0xff]
      %v5070 = vld [vmem:[#allocation2 + $0xb1] sm:$0xff]
      %v5071 = vld [vmem:[#allocation2 + $0xc9] sm:$0xff]
      %v5072 = vld [vmem:[#allocation2 + $0xd1] sm:$0xff]
      %v5073 = vld [vmem:[#allocation2 + $0xe9] sm:$0xff]
      %v5074 = vld [vmem:[#allocation2 + $0xf1] sm:$0xff]
      %v5075 = vld [vmem:[#allocation2 + $0x109] sm:$0xff]
      %v5076 = vld [vmem:[#allocation2 + $0x111] sm:$0xff]
      %v5077 = vld [vmem:[#allocation2 + $0x129] sm:$0xff]
      %v5078 = vld [vmem:[#allocation2 + $0x131] sm:$0xff]
      %v5079 = vld [vmem:[#allocation2 + $0x149] sm:$0xff]
      %v5080 = vld [vmem:[#allocation2 + $0x151] sm:$0xff]
      %v5081 = vld [vmem:[#allocation2 + $0x169] sm:$0xff]
      %v5082 = vld [vmem:[#allocation2 + $0x171] sm:$0xff]
      %v5083 = vld [vmem:[#allocation2 + $0x189] sm:$0xff]
      %v5084 = vld [vmem:[#allocation2 + $0x191] sm:$0xff]
      %v5085 = vld [vmem:[#allocation2 + $0x1a9] sm:$0xff]
      %v5086 = vld [vmem:[#allocation2 + $0x1b1] sm:$0xff]
      %v5087 = vld [vmem:[#allocation2 + $0x1c9] sm:$0xff]
      %v5088 = vld [vmem:[#allocation2 + $0x1d1] sm:$0xff]
      %v5089 = vld [vmem:[#allocation2 + $0x1e9] sm:$0xff]
      %v5090 = vld [vmem:[#allocation2 + $0x1f1] sm:$0xff]
      %v5091 = vpack.c.bf16 %v5060, %v5059
      %v5092 = vpack.c.bf16 %v5062, %v5061
      %v5093 = vpack.c.bf16 %v5064, %v5063
      %v5094 = vpack.c.bf16 %v5066, %v5065
      %v5095 = vpack.c.bf16 %v5068, %v5067
      %v5096 = vpack.c.bf16 %v5070, %v5069
      %v5097 = vpack.c.bf16 %v5072, %v5071
      %v5098 = vpack.c.bf16 %v5074, %v5073
      %v5099 = vpack.c.bf16 %v5076, %v5075
      %v5100 = vpack.c.bf16 %v5078, %v5077
      %v5101 = vpack.c.bf16 %v5080, %v5079
      %v5102 = vpack.c.bf16 %v5082, %v5081
      %v5103 = vpack.c.bf16 %v5084, %v5083
      %v5104 = vpack.c.bf16 %v5086, %v5085
      %v5105 = vpack.c.bf16 %v5088, %v5087
      %v5106 = vpack.c.bf16 %v5090, %v5089
      %s5107 = scalar_lea.vmem %s5, 32
      %v5108 = vld [vmem:[%s5107] sm:$0xf]
      %v5109 = vld [vmem:[%s5107 + $0x4] sm:$0xf]
      %v5110 = vld [vmem:[%s5107 + $0x8] sm:$0xf]
      %v5111 = vld [vmem:[%s5107 + $0xc] sm:$0xf]
      %v5116 = vunpack.c.l.b16 %v5108
      %v5117 = vunpack.c.l.b16 %v5109
      %v5118 = vunpack.c.l.b16 %v5110
      %v5119 = vunpack.c.l.b16 %v5111
      %v5120 = vpack.c.b16 %v5117, %v5116
      %v5121 = vpack.c.b16 %v5119, %v5118
      %v5125 = vsel %vm374, %v5091, 0
      %v5128 = vsel %vm374, %v5092, 0
      %v5131 = vsel %vm374, %v5093, 0
      %v5134 = vsel %vm374, %v5094, 0
      %v5137 = vsel %vm374, %v5095, 0
      %v5140 = vsel %vm374, %v5096, 0
      %v5143 = vsel %vm374, %v5097, 0
      %v5146 = vsel %vm374, %v5098, 0
      %v5149 = vsel %vm374, %v5099, 0
      %v5152 = vsel %vm374, %v5100, 0
      %v5155 = vsel %vm374, %v5101, 0
      %v5158 = vsel %vm374, %v5102, 0
      %v5161 = vsel %vm374, %v5103, 0
      %v5164 = vsel %vm374, %v5104, 0
      %v5167 = vsel %vm374, %v5105, 0
      %v5170 = vsel %vm374, %v5106, 0
      %5172 = vmatpush.bf16.msra.mxu0 0
      %5173 = vmatpush.bf16.msra.mxu0 0
      %5174 = vmatpush.bf16.msra.mxu0 0
      %5175 = vmatpush.bf16.msra.mxu0 0
      %5176 = vmatpush.bf16.msra.mxu0 0
      %5177 = vmatpush.bf16.msra.mxu0 0
      %5178 = vmatpush.bf16.msra.mxu0 %v5121
      %5179 = vmatpush.bf16.msra.mxu0 %v5120
      %5180 = vmatmul.bf16.gmra.mxu0 %v5125
      %v5181 = vpop.f32.mrf.mxu0
      %v5182 = vadd.f32 0.0, %v5181
      %v5183 = vpop.f32.mrf.mxu0
      %v5184 = vadd.f32 0.0, %v5183
      %5185 = vmatmul.bf16.gmra.mxu0 %v5128
      %v5186 = vpop.f32.mrf.mxu0
      %v5187 = vadd.f32 0.0, %v5186
      %v5188 = vpop.f32.mrf.mxu0
      %v5189 = vadd.f32 0.0, %v5188
      %5190 = vmatmul.bf16.gmra.mxu0 %v5131
      %v5191 = vpop.f32.mrf.mxu0
      %v5192 = vadd.f32 0.0, %v5191
      %v5193 = vpop.f32.mrf.mxu0
      %v5194 = vadd.f32 0.0, %v5193
      %5195 = vmatmul.bf16.gmra.mxu0 %v5134
      %v5196 = vpop.f32.mrf.mxu0
      %v5197 = vadd.f32 0.0, %v5196
      %v5198 = vpop.f32.mrf.mxu0
      %v5199 = vadd.f32 0.0, %v5198
      %5200 = vmatmul.bf16.gmra.mxu0 %v5137
      %v5201 = vpop.f32.mrf.mxu0
      %v5202 = vadd.f32 0.0, %v5201
      %v5203 = vpop.f32.mrf.mxu0
      %v5204 = vadd.f32 0.0, %v5203
      %5205 = vmatmul.bf16.gmra.mxu0 %v5140
      %v5206 = vpop.f32.mrf.mxu0
      %v5207 = vadd.f32 0.0, %v5206
      %v5208 = vpop.f32.mrf.mxu0
      %v5209 = vadd.f32 0.0, %v5208
      %5210 = vmatmul.bf16.gmra.mxu0 %v5143
      %v5211 = vpop.f32.mrf.mxu0
      %v5212 = vadd.f32 0.0, %v5211
      %v5213 = vpop.f32.mrf.mxu0
      %v5214 = vadd.f32 0.0, %v5213
      %5215 = vmatmul.bf16.gmra.mxu0 %v5146
      %v5216 = vpop.f32.mrf.mxu0
      %v5217 = vadd.f32 0.0, %v5216
      %v5218 = vpop.f32.mrf.mxu0
      %v5219 = vadd.f32 0.0, %v5218
      %5220 = vmatmul.bf16.gmra.mxu0 %v5149
      %v5221 = vpop.f32.mrf.mxu0
      %v5222 = vadd.f32 0.0, %v5221
      %v5223 = vpop.f32.mrf.mxu0
      %v5224 = vadd.f32 0.0, %v5223
      %5225 = vmatmul.bf16.gmra.mxu0 %v5152
      %v5226 = vpop.f32.mrf.mxu0
      %v5227 = vadd.f32 0.0, %v5226
      %v5228 = vpop.f32.mrf.mxu0
      %v5229 = vadd.f32 0.0, %v5228
      %5230 = vmatmul.bf16.gmra.mxu0 %v5155
      %v5231 = vpop.f32.mrf.mxu0
      %v5232 = vadd.f32 0.0, %v5231
      %v5233 = vpop.f32.mrf.mxu0
      %v5234 = vadd.f32 0.0, %v5233
      %5235 = vmatmul.bf16.gmra.mxu0 %v5158
      %v5236 = vpop.f32.mrf.mxu0
      %v5237 = vadd.f32 0.0, %v5236
      %v5238 = vpop.f32.mrf.mxu0
      %v5239 = vadd.f32 0.0, %v5238
      %5240 = vmatmul.bf16.gmra.mxu0 %v5161
      %v5241 = vpop.f32.mrf.mxu0
      %v5242 = vadd.f32 0.0, %v5241
      %v5243 = vpop.f32.mrf.mxu0
      %v5244 = vadd.f32 0.0, %v5243
      %5245 = vmatmul.bf16.gmra.mxu0 %v5164
      %v5246 = vpop.f32.mrf.mxu0
      %v5247 = vadd.f32 0.0, %v5246
      %v5248 = vpop.f32.mrf.mxu0
      %v5249 = vadd.f32 0.0, %v5248
      %5250 = vmatmul.bf16.gmra.mxu0 %v5167
      %v5251 = vpop.f32.mrf.mxu0
      %v5252 = vadd.f32 0.0, %v5251
      %v5253 = vpop.f32.mrf.mxu0
      %v5254 = vadd.f32 0.0, %v5253
      %5255 = vmatmul.bf16.gmra.mxu0 %v5170
      %v5256 = vpop.f32.mrf.mxu0
      %v5257 = vadd.f32 0.0, %v5256
      %v5258 = vpop.f32.mrf.mxu0
      %v5259 = vadd.f32 0.0, %v5258
      %5260 = vdwg.mxu0
      %v5261 = vadd.f32 %v4980, %v5182
      %v5262 = vadd.f32 %v4982, %v5184
      %v5263 = vadd.f32 %v4985, %v5187
      %v5264 = vadd.f32 %v4987, %v5189
      %v5265 = vadd.f32 %v4990, %v5192
      %v5266 = vadd.f32 %v4992, %v5194
      %v5267 = vadd.f32 %v4995, %v5197
      %v5268 = vadd.f32 %v4997, %v5199
      %v5269 = vadd.f32 %v5000, %v5202
      %v5270 = vadd.f32 %v5002, %v5204
      %v5271 = vadd.f32 %v5005, %v5207
      %v5272 = vadd.f32 %v5007, %v5209
      %v5273 = vadd.f32 %v5010, %v5212
      %v5274 = vadd.f32 %v5012, %v5214
      %v5275 = vadd.f32 %v5015, %v5217
      %v5276 = vadd.f32 %v5017, %v5219
      %v5277 = vadd.f32 %v5020, %v5222
      %v5278 = vadd.f32 %v5022, %v5224
      %v5279 = vadd.f32 %v5025, %v5227
      %v5280 = vadd.f32 %v5027, %v5229
      %v5281 = vadd.f32 %v5030, %v5232
      %v5282 = vadd.f32 %v5032, %v5234
      %v5283 = vadd.f32 %v5035, %v5237
      %v5284 = vadd.f32 %v5037, %v5239
      %v5285 = vadd.f32 %v5040, %v5242
      %v5286 = vadd.f32 %v5042, %v5244
      %v5287 = vadd.f32 %v5045, %v5247
      %v5288 = vadd.f32 %v5047, %v5249
      %v5289 = vadd.f32 %v5050, %v5252
      %v5290 = vadd.f32 %v5052, %v5254
      %v5291 = vadd.f32 %v5055, %v5257
      %v5292 = vadd.f32 %v5057, %v5259
      %v5293 = vld [vmem:[%s452 + $0x7] sm:$0xff]
      %v5294 = vld [vmem:[%s452 + $0xf] sm:$0xff]
      %v5295 = vld [vmem:[%s452 + $0x27] sm:$0xff]
      %v5296 = vld [vmem:[%s452 + $0x2f] sm:$0xff]
      %v5297 = vld [vmem:[%s452 + $0x47] sm:$0xff]
      %v5298 = vld [vmem:[%s452 + $0x4f] sm:$0xff]
      %v5299 = vld [vmem:[%s452 + $0x67] sm:$0xff]
      %v5300 = vld [vmem:[%s452 + $0x6f] sm:$0xff]
      %v5301 = vld [vmem:[%s452 + $0x87] sm:$0xff]
      %v5302 = vld [vmem:[%s452 + $0x8f] sm:$0xff]
      %v5303 = vld [vmem:[%s452 + $0xa7] sm:$0xff]
      %v5304 = vld [vmem:[%s452 + $0xaf] sm:$0xff]
      %v5305 = vld [vmem:[%s452 + $0xc7] sm:$0xff]
      %v5306 = vld [vmem:[%s452 + $0xcf] sm:$0xff]
      %v5307 = vld [vmem:[%s452 + $0xe7] sm:$0xff]
      %v5308 = vld [vmem:[%s452 + $0xef] sm:$0xff]
      %v5309 = vld [vmem:[%s452 + $0x107] sm:$0xff]
      %v5310 = vld [vmem:[%s452 + $0x10f] sm:$0xff]
      %v5311 = vld [vmem:[%s452 + $0x127] sm:$0xff]
      %v5312 = vld [vmem:[%s452 + $0x12f] sm:$0xff]
      %v5313 = vld [vmem:[%s452 + $0x147] sm:$0xff]
      %v5314 = vld [vmem:[%s452 + $0x14f] sm:$0xff]
      %v5315 = vld [vmem:[%s452 + $0x167] sm:$0xff]
      %v5316 = vld [vmem:[%s452 + $0x16f] sm:$0xff]
      %v5317 = vld [vmem:[%s452 + $0x187] sm:$0xff]
      %v5318 = vld [vmem:[%s452 + $0x18f] sm:$0xff]
      %v5319 = vld [vmem:[%s452 + $0x1a7] sm:$0xff]
      %v5320 = vld [vmem:[%s452 + $0x1af] sm:$0xff]
      %v5321 = vld [vmem:[%s452 + $0x1c7] sm:$0xff]
      %v5322 = vld [vmem:[%s452 + $0x1cf] sm:$0xff]
      %v5323 = vld [vmem:[%s452 + $0x1e7] sm:$0xff]
      %v5324 = vld [vmem:[%s452 + $0x1ef] sm:$0xff]
      %v5325 = vpack.c.bf16 %v5294, %v5293
      %v5326 = vpack.c.bf16 %v5296, %v5295
      %v5327 = vpack.c.bf16 %v5298, %v5297
      %v5328 = vpack.c.bf16 %v5300, %v5299
      %v5329 = vpack.c.bf16 %v5302, %v5301
      %v5330 = vpack.c.bf16 %v5304, %v5303
      %v5331 = vpack.c.bf16 %v5306, %v5305
      %v5332 = vpack.c.bf16 %v5308, %v5307
      %v5333 = vpack.c.bf16 %v5310, %v5309
      %v5334 = vpack.c.bf16 %v5312, %v5311
      %v5335 = vpack.c.bf16 %v5314, %v5313
      %v5336 = vpack.c.bf16 %v5316, %v5315
      %v5337 = vpack.c.bf16 %v5318, %v5317
      %v5338 = vpack.c.bf16 %v5320, %v5319
      %v5339 = vpack.c.bf16 %v5322, %v5321
      %v5340 = vpack.c.bf16 %v5324, %v5323
      %s5341 = scalar_lea.vmem %s5, 48
      %v5342 = vld [vmem:[%s5341] sm:$0xf]
      %v5343 = vld [vmem:[%s5341 + $0x4] sm:$0xf]
      %v5344 = vld [vmem:[%s5341 + $0x8] sm:$0xf]
      %v5345 = vld [vmem:[%s5341 + $0xc] sm:$0xf]
      %v5350 = vunpack.c.l.b16 %v5342
      %v5351 = vunpack.c.l.b16 %v5343
      %v5352 = vunpack.c.l.b16 %v5344
      %v5353 = vunpack.c.l.b16 %v5345
      %v5354 = vpack.c.b16 %v5351, %v5350
      %v5355 = vpack.c.b16 %v5353, %v5352
      %v5359 = vsel %vm374, %v5325, 0
      %v5362 = vsel %vm374, %v5326, 0
      %v5365 = vsel %vm374, %v5327, 0
      %v5368 = vsel %vm374, %v5328, 0
      %v5371 = vsel %vm374, %v5329, 0
      %v5374 = vsel %vm374, %v5330, 0
      %v5377 = vsel %vm374, %v5331, 0
      %v5380 = vsel %vm374, %v5332, 0
      %v5383 = vsel %vm374, %v5333, 0
      %v5386 = vsel %vm374, %v5334, 0
      %v5389 = vsel %vm374, %v5335, 0
      %v5392 = vsel %vm374, %v5336, 0
      %v5395 = vsel %vm374, %v5337, 0
      %v5398 = vsel %vm374, %v5338, 0
      %v5401 = vsel %vm374, %v5339, 0
      %v5404 = vsel %vm374, %v5340, 0
      %5406 = vmatpush.bf16.msra.mxu0 0
      %5407 = vmatpush.bf16.msra.mxu0 0
      %5408 = vmatpush.bf16.msra.mxu0 0
      %5409 = vmatpush.bf16.msra.mxu0 0
      %5410 = vmatpush.bf16.msra.mxu0 0
      %5411 = vmatpush.bf16.msra.mxu0 0
      %5412 = vmatpush.bf16.msra.mxu0 %v5355
      %5413 = vmatpush.bf16.msra.mxu0 %v5354
      %5414 = vmatmul.bf16.gmra.mxu0 %v5359
      %v5415 = vpop.f32.mrf.mxu0
      %v5416 = vadd.f32 0.0, %v5415
      %v5417 = vpop.f32.mrf.mxu0
      %v5418 = vadd.f32 0.0, %v5417
      %5419 = vmatmul.bf16.gmra.mxu0 %v5362
      %v5420 = vpop.f32.mrf.mxu0
      %v5421 = vadd.f32 0.0, %v5420
      %v5422 = vpop.f32.mrf.mxu0
      %v5423 = vadd.f32 0.0, %v5422
      %5424 = vmatmul.bf16.gmra.mxu0 %v5365
      %v5425 = vpop.f32.mrf.mxu0
      %v5426 = vadd.f32 0.0, %v5425
      %v5427 = vpop.f32.mrf.mxu0
      %v5428 = vadd.f32 0.0, %v5427
      %5429 = vmatmul.bf16.gmra.mxu0 %v5368
      %v5430 = vpop.f32.mrf.mxu0
      %v5431 = vadd.f32 0.0, %v5430
      %v5432 = vpop.f32.mrf.mxu0
      %v5433 = vadd.f32 0.0, %v5432
      %5434 = vmatmul.bf16.gmra.mxu0 %v5371
      %v5435 = vpop.f32.mrf.mxu0
      %v5436 = vadd.f32 0.0, %v5435
      %v5437 = vpop.f32.mrf.mxu0
      %v5438 = vadd.f32 0.0, %v5437
      %5439 = vmatmul.bf16.gmra.mxu0 %v5374
      %v5440 = vpop.f32.mrf.mxu0
      %v5441 = vadd.f32 0.0, %v5440
      %v5442 = vpop.f32.mrf.mxu0
      %v5443 = vadd.f32 0.0, %v5442
      %5444 = vmatmul.bf16.gmra.mxu0 %v5377
      %v5445 = vpop.f32.mrf.mxu0
      %v5446 = vadd.f32 0.0, %v5445
      %v5447 = vpop.f32.mrf.mxu0
      %v5448 = vadd.f32 0.0, %v5447
      %5449 = vmatmul.bf16.gmra.mxu0 %v5380
      %v5450 = vpop.f32.mrf.mxu0
      %v5451 = vadd.f32 0.0, %v5450
      %v5452 = vpop.f32.mrf.mxu0
      %v5453 = vadd.f32 0.0, %v5452
      %5454 = vmatmul.bf16.gmra.mxu0 %v5383
      %v5455 = vpop.f32.mrf.mxu0
      %v5456 = vadd.f32 0.0, %v5455
      %v5457 = vpop.f32.mrf.mxu0
      %v5458 = vadd.f32 0.0, %v5457
      %5459 = vmatmul.bf16.gmra.mxu0 %v5386
      %v5460 = vpop.f32.mrf.mxu0
      %v5461 = vadd.f32 0.0, %v5460
      %v5462 = vpop.f32.mrf.mxu0
      %v5463 = vadd.f32 0.0, %v5462
      %5464 = vmatmul.bf16.gmra.mxu0 %v5389
      %v5465 = vpop.f32.mrf.mxu0
      %v5466 = vadd.f32 0.0, %v5465
      %v5467 = vpop.f32.mrf.mxu0
      %v5468 = vadd.f32 0.0, %v5467
      %5469 = vmatmul.bf16.gmra.mxu0 %v5392
      %v5470 = vpop.f32.mrf.mxu0
      %v5471 = vadd.f32 0.0, %v5470
      %v5472 = vpop.f32.mrf.mxu0
      %v5473 = vadd.f32 0.0, %v5472
      %5474 = vmatmul.bf16.gmra.mxu0 %v5395
      %v5475 = vpop.f32.mrf.mxu0
      %v5476 = vadd.f32 0.0, %v5475
      %v5477 = vpop.f32.mrf.mxu0
      %v5478 = vadd.f32 0.0, %v5477
      %5479 = vmatmul.bf16.gmra.mxu0 %v5398
      %v5480 = vpop.f32.mrf.mxu0
      %v5481 = vadd.f32 0.0, %v5480
      %v5482 = vpop.f32.mrf.mxu0
      %v5483 = vadd.f32 0.0, %v5482
      %5484 = vmatmul.bf16.gmra.mxu0 %v5401
      %v5485 = vpop.f32.mrf.mxu0
      %v5486 = vadd.f32 0.0, %v5485
      %v5487 = vpop.f32.mrf.mxu0
      %v5488 = vadd.f32 0.0, %v5487
      %5489 = vmatmul.bf16.gmra.mxu0 %v5404
      %v5490 = vpop.f32.mrf.mxu0
      %v5491 = vadd.f32 0.0, %v5490
      %v5492 = vpop.f32.mrf.mxu0
      %v5493 = vadd.f32 0.0, %v5492
      %5494 = vdwg.mxu0
      %v5495 = vadd.f32 %v5261, %v5416
      %v5496 = vadd.f32 %v5262, %v5418
      %v5497 = vadd.f32 %v5263, %v5421
      %v5498 = vadd.f32 %v5264, %v5423
      %v5499 = vadd.f32 %v5265, %v5426
      %v5500 = vadd.f32 %v5266, %v5428
      %v5501 = vadd.f32 %v5267, %v5431
      %v5502 = vadd.f32 %v5268, %v5433
      %v5503 = vadd.f32 %v5269, %v5436
      %v5504 = vadd.f32 %v5270, %v5438
      %v5505 = vadd.f32 %v5271, %v5441
      %v5506 = vadd.f32 %v5272, %v5443
      %v5507 = vadd.f32 %v5273, %v5446
      %v5508 = vadd.f32 %v5274, %v5448
      %v5509 = vadd.f32 %v5275, %v5451
      %v5510 = vadd.f32 %v5276, %v5453
      %v5511 = vadd.f32 %v5277, %v5456
      %v5512 = vadd.f32 %v5278, %v5458
      %v5513 = vadd.f32 %v5279, %v5461
      %v5514 = vadd.f32 %v5280, %v5463
      %v5515 = vadd.f32 %v5281, %v5466
      %v5516 = vadd.f32 %v5282, %v5468
      %v5517 = vadd.f32 %v5283, %v5471
      %v5518 = vadd.f32 %v5284, %v5473
      %v5519 = vadd.f32 %v5285, %v5476
      %v5520 = vadd.f32 %v5286, %v5478
      %v5521 = vadd.f32 %v5287, %v5481
      %v5522 = vadd.f32 %v5288, %v5483
      %v5523 = vadd.f32 %v5289, %v5486
      %v5524 = vadd.f32 %v5290, %v5488
      %v5525 = vadd.f32 %v5291, %v5491
      %v5526 = vadd.f32 %v5292, %v5493
      %v5527 = vld [vmem:[%s452 + $0x8] sm:$0xff]
      %v5528 = vld [vmem:[%s452 + $0x10] sm:$0xff]
      %v5529 = vld [vmem:[%s452 + $0x28] sm:$0xff]
      %v5530 = vld [vmem:[%s452 + $0x30] sm:$0xff]
      %v5531 = vld [vmem:[%s452 + $0x48] sm:$0xff]
      %v5532 = vld [vmem:[%s452 + $0x50] sm:$0xff]
      %v5533 = vld [vmem:[%s452 + $0x68] sm:$0xff]
      %v5534 = vld [vmem:[%s452 + $0x70] sm:$0xff]
      %v5535 = vld [vmem:[%s452 + $0x88] sm:$0xff]
      %v5536 = vld [vmem:[%s452 + $0x90] sm:$0xff]
      %v5537 = vld [vmem:[%s452 + $0xa8] sm:$0xff]
      %v5538 = vld [vmem:[%s452 + $0xb0] sm:$0xff]
      %v5539 = vld [vmem:[%s452 + $0xc8] sm:$0xff]
      %v5540 = vld [vmem:[%s452 + $0xd0] sm:$0xff]
      %v5541 = vld [vmem:[%s452 + $0xe8] sm:$0xff]
      %v5542 = vld [vmem:[%s452 + $0xf0] sm:$0xff]
      %v5543 = vld [vmem:[%s452 + $0x108] sm:$0xff]
      %v5544 = vld [vmem:[%s452 + $0x110] sm:$0xff]
      %v5545 = vld [vmem:[%s452 + $0x128] sm:$0xff]
      %v5546 = vld [vmem:[%s452 + $0x130] sm:$0xff]
      %v5547 = vld [vmem:[%s452 + $0x148] sm:$0xff]
      %v5548 = vld [vmem:[%s452 + $0x150] sm:$0xff]
      %v5549 = vld [vmem:[%s452 + $0x168] sm:$0xff]
      %v5550 = vld [vmem:[%s452 + $0x170] sm:$0xff]
      %v5551 = vld [vmem:[%s452 + $0x188] sm:$0xff]
      %v5552 = vld [vmem:[%s452 + $0x190] sm:$0xff]
      %v5553 = vld [vmem:[%s452 + $0x1a8] sm:$0xff]
      %v5554 = vld [vmem:[%s452 + $0x1b0] sm:$0xff]
      %v5555 = vld [vmem:[%s452 + $0x1c8] sm:$0xff]
      %v5556 = vld [vmem:[%s452 + $0x1d0] sm:$0xff]
      %v5557 = vld [vmem:[%s452 + $0x1e8] sm:$0xff]
      %v5558 = vld [vmem:[%s452 + $0x1f0] sm:$0xff]
      %v5559 = vpack.c.bf16 %v5528, %v5527
      %v5560 = vpack.c.bf16 %v5530, %v5529
      %v5561 = vpack.c.bf16 %v5532, %v5531
      %v5562 = vpack.c.bf16 %v5534, %v5533
      %v5563 = vpack.c.bf16 %v5536, %v5535
      %v5564 = vpack.c.bf16 %v5538, %v5537
      %v5565 = vpack.c.bf16 %v5540, %v5539
      %v5566 = vpack.c.bf16 %v5542, %v5541
      %v5567 = vpack.c.bf16 %v5544, %v5543
      %v5568 = vpack.c.bf16 %v5546, %v5545
      %v5569 = vpack.c.bf16 %v5548, %v5547
      %v5570 = vpack.c.bf16 %v5550, %v5549
      %v5571 = vpack.c.bf16 %v5552, %v5551
      %v5572 = vpack.c.bf16 %v5554, %v5553
      %v5573 = vpack.c.bf16 %v5556, %v5555
      %v5574 = vpack.c.bf16 %v5558, %v5557
      %s5575 = scalar_lea.vmem %s5, 64
      %v5576 = vld [vmem:[%s5575] sm:$0xf]
      %v5577 = vld [vmem:[%s5575 + $0x4] sm:$0xf]
      %v5578 = vld [vmem:[%s5575 + $0x8] sm:$0xf]
      %v5579 = vld [vmem:[%s5575 + $0xc] sm:$0xf]
      %v5584 = vunpack.c.l.b16 %v5576
      %v5585 = vunpack.c.l.b16 %v5577
      %v5586 = vunpack.c.l.b16 %v5578
      %v5587 = vunpack.c.l.b16 %v5579
      %v5588 = vpack.c.b16 %v5585, %v5584
      %v5589 = vpack.c.b16 %v5587, %v5586
      %v5593 = vsel %vm374, %v5559, 0
      %v5596 = vsel %vm374, %v5560, 0
      %v5599 = vsel %vm374, %v5561, 0
      %v5602 = vsel %vm374, %v5562, 0
      %v5605 = vsel %vm374, %v5563, 0
      %v5608 = vsel %vm374, %v5564, 0
      %v5611 = vsel %vm374, %v5565, 0
      %v5614 = vsel %vm374, %v5566, 0
      %v5617 = vsel %vm374, %v5567, 0
      %v5620 = vsel %vm374, %v5568, 0
      %v5623 = vsel %vm374, %v5569, 0
      %v5626 = vsel %vm374, %v5570, 0
      %v5629 = vsel %vm374, %v5571, 0
      %v5632 = vsel %vm374, %v5572, 0
      %v5635 = vsel %vm374, %v5573, 0
      %v5638 = vsel %vm374, %v5574, 0
      %5640 = vmatpush.bf16.msra.mxu0 0
      %5641 = vmatpush.bf16.msra.mxu0 0
      %5642 = vmatpush.bf16.msra.mxu0 0
      %5643 = vmatpush.bf16.msra.mxu0 0
      %5644 = vmatpush.bf16.msra.mxu0 0
      %5645 = vmatpush.bf16.msra.mxu0 0
      %5646 = vmatpush.bf16.msra.mxu0 %v5589
      %5647 = vmatpush.bf16.msra.mxu0 %v5588
      %5648 = vmatmul.bf16.gmra.mxu0 %v5593
      %v5649 = vpop.f32.mrf.mxu0
      %v5650 = vadd.f32 0.0, %v5649
      %v5651 = vpop.f32.mrf.mxu0
      %v5652 = vadd.f32 0.0, %v5651
      %5653 = vmatmul.bf16.gmra.mxu0 %v5596
      %v5654 = vpop.f32.mrf.mxu0
      %v5655 = vadd.f32 0.0, %v5654
      %v5656 = vpop.f32.mrf.mxu0
      %v5657 = vadd.f32 0.0, %v5656
      %5658 = vmatmul.bf16.gmra.mxu0 %v5599
      %v5659 = vpop.f32.mrf.mxu0
      %v5660 = vadd.f32 0.0, %v5659
      %v5661 = vpop.f32.mrf.mxu0
      %v5662 = vadd.f32 0.0, %v5661
      %5663 = vmatmul.bf16.gmra.mxu0 %v5602
      %v5664 = vpop.f32.mrf.mxu0
      %v5665 = vadd.f32 0.0, %v5664
      %v5666 = vpop.f32.mrf.mxu0
      %v5667 = vadd.f32 0.0, %v5666
      %5668 = vmatmul.bf16.gmra.mxu0 %v5605
      %v5669 = vpop.f32.mrf.mxu0
      %v5670 = vadd.f32 0.0, %v5669
      %v5671 = vpop.f32.mrf.mxu0
      %v5672 = vadd.f32 0.0, %v5671
      %5673 = vmatmul.bf16.gmra.mxu0 %v5608
      %v5674 = vpop.f32.mrf.mxu0
      %v5675 = vadd.f32 0.0, %v5674
      %v5676 = vpop.f32.mrf.mxu0
      %v5677 = vadd.f32 0.0, %v5676
      %5678 = vmatmul.bf16.gmra.mxu0 %v5611
      %v5679 = vpop.f32.mrf.mxu0
      %v5680 = vadd.f32 0.0, %v5679
      %v5681 = vpop.f32.mrf.mxu0
      %v5682 = vadd.f32 0.0, %v5681
      %5683 = vmatmul.bf16.gmra.mxu0 %v5614
      %v5684 = vpop.f32.mrf.mxu0
      %v5685 = vadd.f32 0.0, %v5684
      %v5686 = vpop.f32.mrf.mxu0
      %v5687 = vadd.f32 0.0, %v5686
      %5688 = vmatmul.bf16.gmra.mxu0 %v5617
      %v5689 = vpop.f32.mrf.mxu0
      %v5690 = vadd.f32 0.0, %v5689
      %v5691 = vpop.f32.mrf.mxu0
      %v5692 = vadd.f32 0.0, %v5691
      %5693 = vmatmul.bf16.gmra.mxu0 %v5620
      %v5694 = vpop.f32.mrf.mxu0
      %v5695 = vadd.f32 0.0, %v5694
      %v5696 = vpop.f32.mrf.mxu0
      %v5697 = vadd.f32 0.0, %v5696
      %5698 = vmatmul.bf16.gmra.mxu0 %v5623
      %v5699 = vpop.f32.mrf.mxu0
      %v5700 = vadd.f32 0.0, %v5699
      %v5701 = vpop.f32.mrf.mxu0
      %v5702 = vadd.f32 0.0, %v5701
      %5703 = vmatmul.bf16.gmra.mxu0 %v5626
      %v5704 = vpop.f32.mrf.mxu0
      %v5705 = vadd.f32 0.0, %v5704
      %v5706 = vpop.f32.mrf.mxu0
      %v5707 = vadd.f32 0.0, %v5706
      %5708 = vmatmul.bf16.gmra.mxu0 %v5629
      %v5709 = vpop.f32.mrf.mxu0
      %v5710 = vadd.f32 0.0, %v5709
      %v5711 = vpop.f32.mrf.mxu0
      %v5712 = vadd.f32 0.0, %v5711
      %5713 = vmatmul.bf16.gmra.mxu0 %v5632
      %v5714 = vpop.f32.mrf.mxu0
      %v5715 = vadd.f32 0.0, %v5714
      %v5716 = vpop.f32.mrf.mxu0
      %v5717 = vadd.f32 0.0, %v5716
      %5718 = vmatmul.bf16.gmra.mxu0 %v5635
      %v5719 = vpop.f32.mrf.mxu0
      %v5720 = vadd.f32 0.0, %v5719
      %v5721 = vpop.f32.mrf.mxu0
      %v5722 = vadd.f32 0.0, %v5721
      %5723 = vmatmul.bf16.gmra.mxu0 %v5638
      %v5724 = vpop.f32.mrf.mxu0
      %v5725 = vadd.f32 0.0, %v5724
      %v5726 = vpop.f32.mrf.mxu0
      %v5727 = vadd.f32 0.0, %v5726
      %5728 = vdwg.mxu0
      %v5729 = vadd.f32 %v5495, %v5650
      %v5730 = vadd.f32 %v5496, %v5652
      %v5731 = vadd.f32 %v5497, %v5655
      %v5732 = vadd.f32 %v5498, %v5657
      %v5733 = vadd.f32 %v5499, %v5660
      %v5734 = vadd.f32 %v5500, %v5662
      %v5735 = vadd.f32 %v5501, %v5665
      %v5736 = vadd.f32 %v5502, %v5667
      %v5737 = vadd.f32 %v5503, %v5670
      %v5738 = vadd.f32 %v5504, %v5672
      %v5739 = vadd.f32 %v5505, %v5675
      %v5740 = vadd.f32 %v5506, %v5677
      %v5741 = vadd.f32 %v5507, %v5680
      %v5742 = vadd.f32 %v5508, %v5682
      %v5743 = vadd.f32 %v5509, %v5685
      %v5744 = vadd.f32 %v5510, %v5687
      %v5745 = vadd.f32 %v5511, %v5690
      %v5746 = vadd.f32 %v5512, %v5692
      %v5747 = vadd.f32 %v5513, %v5695
      %v5748 = vadd.f32 %v5514, %v5697
      %v5749 = vadd.f32 %v5515, %v5700
      %v5750 = vadd.f32 %v5516, %v5702
      %v5751 = vadd.f32 %v5517, %v5705
      %v5752 = vadd.f32 %v5518, %v5707
      %v5753 = vadd.f32 %v5519, %v5710
      %v5754 = vadd.f32 %v5520, %v5712
      %v5755 = vadd.f32 %v5521, %v5715
      %v5756 = vadd.f32 %v5522, %v5717
      %v5757 = vadd.f32 %v5523, %v5720
      %v5758 = vadd.f32 %v5524, %v5722
      %v5759 = vadd.f32 %v5525, %v5725
      %v5760 = vadd.f32 %v5526, %v5727
      %v5761 = vld [vmem:[%s452 + $0x9] sm:$0xff]
      %v5762 = vld [vmem:[%s452 + $0x11] sm:$0xff]
      %v5763 = vld [vmem:[%s452 + $0x29] sm:$0xff]
      %v5764 = vld [vmem:[%s452 + $0x31] sm:$0xff]
      %v5765 = vld [vmem:[%s452 + $0x49] sm:$0xff]
      %v5766 = vld [vmem:[%s452 + $0x51] sm:$0xff]
      %v5767 = vld [vmem:[%s452 + $0x69] sm:$0xff]
      %v5768 = vld [vmem:[%s452 + $0x71] sm:$0xff]
      %v5769 = vld [vmem:[%s452 + $0x89] sm:$0xff]
      %v5770 = vld [vmem:[%s452 + $0x91] sm:$0xff]
      %v5771 = vld [vmem:[%s452 + $0xa9] sm:$0xff]
      %v5772 = vld [vmem:[%s452 + $0xb1] sm:$0xff]
      %v5773 = vld [vmem:[%s452 + $0xc9] sm:$0xff]
      %v5774 = vld [vmem:[%s452 + $0xd1] sm:$0xff]
      %v5775 = vld [vmem:[%s452 + $0xe9] sm:$0xff]
      %v5776 = vld [vmem:[%s452 + $0xf1] sm:$0xff]
      %v5777 = vld [vmem:[%s452 + $0x109] sm:$0xff]
      %v5778 = vld [vmem:[%s452 + $0x111] sm:$0xff]
      %v5779 = vld [vmem:[%s452 + $0x129] sm:$0xff]
      %v5780 = vld [vmem:[%s452 + $0x131] sm:$0xff]
      %v5781 = vld [vmem:[%s452 + $0x149] sm:$0xff]
      %v5782 = vld [vmem:[%s452 + $0x151] sm:$0xff]
      %v5783 = vld [vmem:[%s452 + $0x169] sm:$0xff]
      %v5784 = vld [vmem:[%s452 + $0x171] sm:$0xff]
      %v5785 = vld [vmem:[%s452 + $0x189] sm:$0xff]
      %v5786 = vld [vmem:[%s452 + $0x191] sm:$0xff]
      %v5787 = vld [vmem:[%s452 + $0x1a9] sm:$0xff]
      %v5788 = vld [vmem:[%s452 + $0x1b1] sm:$0xff]
      %v5789 = vld [vmem:[%s452 + $0x1c9] sm:$0xff]
      %v5790 = vld [vmem:[%s452 + $0x1d1] sm:$0xff]
      %v5791 = vld [vmem:[%s452 + $0x1e9] sm:$0xff]
      %v5792 = vld [vmem:[%s452 + $0x1f1] sm:$0xff]
      %v5793 = vpack.c.bf16 %v5762, %v5761
      %v5794 = vpack.c.bf16 %v5764, %v5763
      %v5795 = vpack.c.bf16 %v5766, %v5765
      %v5796 = vpack.c.bf16 %v5768, %v5767
      %v5797 = vpack.c.bf16 %v5770, %v5769
      %v5798 = vpack.c.bf16 %v5772, %v5771
      %v5799 = vpack.c.bf16 %v5774, %v5773
      %v5800 = vpack.c.bf16 %v5776, %v5775
      %v5801 = vpack.c.bf16 %v5778, %v5777
      %v5802 = vpack.c.bf16 %v5780, %v5779
      %v5803 = vpack.c.bf16 %v5782, %v5781
      %v5804 = vpack.c.bf16 %v5784, %v5783
      %v5805 = vpack.c.bf16 %v5786, %v5785
      %v5806 = vpack.c.bf16 %v5788, %v5787
      %v5807 = vpack.c.bf16 %v5790, %v5789
      %v5808 = vpack.c.bf16 %v5792, %v5791
      %s5809 = scalar_lea.vmem %s5, 80
      %v5810 = vld [vmem:[%s5809] sm:$0xf]
      %v5811 = vld [vmem:[%s5809 + $0x4] sm:$0xf]
      %v5812 = vld [vmem:[%s5809 + $0x8] sm:$0xf]
      %v5813 = vld [vmem:[%s5809 + $0xc] sm:$0xf]
      %v5818 = vunpack.c.l.b16 %v5810
      %v5819 = vunpack.c.l.b16 %v5811
      %v5820 = vunpack.c.l.b16 %v5812
      %v5821 = vunpack.c.l.b16 %v5813
      %v5822 = vpack.c.b16 %v5819, %v5818
      %v5823 = vpack.c.b16 %v5821, %v5820
      %v5827 = vsel %vm374, %v5793, 0
      %v5830 = vsel %vm374, %v5794, 0
      %v5833 = vsel %vm374, %v5795, 0
      %v5836 = vsel %vm374, %v5796, 0
      %v5839 = vsel %vm374, %v5797, 0
      %v5842 = vsel %vm374, %v5798, 0
      %v5845 = vsel %vm374, %v5799, 0
      %v5848 = vsel %vm374, %v5800, 0
      %v5851 = vsel %vm374, %v5801, 0
      %v5854 = vsel %vm374, %v5802, 0
      %v5857 = vsel %vm374, %v5803, 0
      %v5860 = vsel %vm374, %v5804, 0
      %v5863 = vsel %vm374, %v5805, 0
      %v5866 = vsel %vm374, %v5806, 0
      %v5869 = vsel %vm374, %v5807, 0
      %v5872 = vsel %vm374, %v5808, 0
      %5874 = vmatpush.bf16.msra.mxu0 0
      %5875 = vmatpush.bf16.msra.mxu0 0
      %5876 = vmatpush.bf16.msra.mxu0 0
      %5877 = vmatpush.bf16.msra.mxu0 0
      %5878 = vmatpush.bf16.msra.mxu0 0
      %5879 = vmatpush.bf16.msra.mxu0 0
      %5880 = vmatpush.bf16.msra.mxu0 %v5823
      %5881 = vmatpush.bf16.msra.mxu0 %v5822
      %5882 = vmatmul.bf16.gmra.mxu0 %v5827
      %v5883 = vpop.f32.mrf.mxu0
      %v5884 = vadd.f32 0.0, %v5883
      %v5885 = vpop.f32.mrf.mxu0
      %v5886 = vadd.f32 0.0, %v5885
      %5887 = vmatmul.bf16.gmra.mxu0 %v5830
      %v5888 = vpop.f32.mrf.mxu0
      %v5889 = vadd.f32 0.0, %v5888
      %v5890 = vpop.f32.mrf.mxu0
      %v5891 = vadd.f32 0.0, %v5890
      %5892 = vmatmul.bf16.gmra.mxu0 %v5833
      %v5893 = vpop.f32.mrf.mxu0
      %v5894 = vadd.f32 0.0, %v5893
      %v5895 = vpop.f32.mrf.mxu0
      %v5896 = vadd.f32 0.0, %v5895
      %5897 = vmatmul.bf16.gmra.mxu0 %v5836
      %v5898 = vpop.f32.mrf.mxu0
      %v5899 = vadd.f32 0.0, %v5898
      %v5900 = vpop.f32.mrf.mxu0
      %v5901 = vadd.f32 0.0, %v5900
      %5902 = vmatmul.bf16.gmra.mxu0 %v5839
      %v5903 = vpop.f32.mrf.mxu0
      %v5904 = vadd.f32 0.0, %v5903
      %v5905 = vpop.f32.mrf.mxu0
      %v5906 = vadd.f32 0.0, %v5905
      %5907 = vmatmul.bf16.gmra.mxu0 %v5842
      %v5908 = vpop.f32.mrf.mxu0
      %v5909 = vadd.f32 0.0, %v5908
      %v5910 = vpop.f32.mrf.mxu0
      %v5911 = vadd.f32 0.0, %v5910
      %5912 = vmatmul.bf16.gmra.mxu0 %v5845
      %v5913 = vpop.f32.mrf.mxu0
      %v5914 = vadd.f32 0.0, %v5913
      %v5915 = vpop.f32.mrf.mxu0
      %v5916 = vadd.f32 0.0, %v5915
      %5917 = vmatmul.bf16.gmra.mxu0 %v5848
      %v5918 = vpop.f32.mrf.mxu0
      %v5919 = vadd.f32 0.0, %v5918
      %v5920 = vpop.f32.mrf.mxu0
      %v5921 = vadd.f32 0.0, %v5920
      %5922 = vmatmul.bf16.gmra.mxu0 %v5851
      %v5923 = vpop.f32.mrf.mxu0
      %v5924 = vadd.f32 0.0, %v5923
      %v5925 = vpop.f32.mrf.mxu0
      %v5926 = vadd.f32 0.0, %v5925
      %5927 = vmatmul.bf16.gmra.mxu0 %v5854
      %v5928 = vpop.f32.mrf.mxu0
      %v5929 = vadd.f32 0.0, %v5928
      %v5930 = vpop.f32.mrf.mxu0
      %v5931 = vadd.f32 0.0, %v5930
      %5932 = vmatmul.bf16.gmra.mxu0 %v5857
      %v5933 = vpop.f32.mrf.mxu0
      %v5934 = vadd.f32 0.0, %v5933
      %v5935 = vpop.f32.mrf.mxu0
      %v5936 = vadd.f32 0.0, %v5935
      %5937 = vmatmul.bf16.gmra.mxu0 %v5860
      %v5938 = vpop.f32.mrf.mxu0
      %v5939 = vadd.f32 0.0, %v5938
      %v5940 = vpop.f32.mrf.mxu0
      %v5941 = vadd.f32 0.0, %v5940
      %5942 = vmatmul.bf16.gmra.mxu0 %v5863
      %v5943 = vpop.f32.mrf.mxu0
      %v5944 = vadd.f32 0.0, %v5943
      %v5945 = vpop.f32.mrf.mxu0
      %v5946 = vadd.f32 0.0, %v5945
      %5947 = vmatmul.bf16.gmra.mxu0 %v5866
      %v5948 = vpop.f32.mrf.mxu0
      %v5949 = vadd.f32 0.0, %v5948
      %v5950 = vpop.f32.mrf.mxu0
      %v5951 = vadd.f32 0.0, %v5950
      %5952 = vmatmul.bf16.gmra.mxu0 %v5869
      %v5953 = vpop.f32.mrf.mxu0
      %v5954 = vadd.f32 0.0, %v5953
      %v5955 = vpop.f32.mrf.mxu0
      %v5956 = vadd.f32 0.0, %v5955
      %5957 = vmatmul.bf16.gmra.mxu0 %v5872
      %v5958 = vpop.f32.mrf.mxu0
      %v5959 = vadd.f32 0.0, %v5958
      %v5960 = vpop.f32.mrf.mxu0
      %v5961 = vadd.f32 0.0, %v5960
      %5962 = vdwg.mxu0
      %v5963 = vadd.f32 %v5729, %v5884
      %v5964 = vadd.f32 %v5730, %v5886
      %v5965 = vadd.f32 %v5731, %v5889
      %v5966 = vadd.f32 %v5732, %v5891
      %v5967 = vadd.f32 %v5733, %v5894
      %v5968 = vadd.f32 %v5734, %v5896
      %v5969 = vadd.f32 %v5735, %v5899
      %v5970 = vadd.f32 %v5736, %v5901
      %v5971 = vadd.f32 %v5737, %v5904
      %v5972 = vadd.f32 %v5738, %v5906
      %v5973 = vadd.f32 %v5739, %v5909
      %v5974 = vadd.f32 %v5740, %v5911
      %v5975 = vadd.f32 %v5741, %v5914
      %v5976 = vadd.f32 %v5742, %v5916
      %v5977 = vadd.f32 %v5743, %v5919
      %v5978 = vadd.f32 %v5744, %v5921
      %v5979 = vadd.f32 %v5745, %v5924
      %v5980 = vadd.f32 %v5746, %v5926
      %v5981 = vadd.f32 %v5747, %v5929
      %v5982 = vadd.f32 %v5748, %v5931
      %v5983 = vadd.f32 %v5749, %v5934
      %v5984 = vadd.f32 %v5750, %v5936
      %v5985 = vadd.f32 %v5751, %v5939
      %v5986 = vadd.f32 %v5752, %v5941
      %v5987 = vadd.f32 %v5753, %v5944
      %v5988 = vadd.f32 %v5754, %v5946
      %v5989 = vadd.f32 %v5755, %v5949
      %v5990 = vadd.f32 %v5756, %v5951
      %v5991 = vadd.f32 %v5757, %v5954
      %v5992 = vadd.f32 %v5758, %v5956
      %v5993 = vadd.f32 %v5759, %v5959
      %v5994 = vadd.f32 %v5760, %v5961
      %v5995 = vld [vmem:[%s1754 + $0x7] sm:$0xff]
      %v5996 = vld [vmem:[%s1754 + $0xf] sm:$0xff]
      %v5997 = vld [vmem:[%s1754 + $0x27] sm:$0xff]
      %v5998 = vld [vmem:[%s1754 + $0x2f] sm:$0xff]
      %v5999 = vld [vmem:[%s1754 + $0x47] sm:$0xff]
      %v6000 = vld [vmem:[%s1754 + $0x4f] sm:$0xff]
      %v6001 = vld [vmem:[%s1754 + $0x67] sm:$0xff]
      %v6002 = vld [vmem:[%s1754 + $0x6f] sm:$0xff]
      %v6003 = vld [vmem:[%s1754 + $0x87] sm:$0xff]
      %v6004 = vld [vmem:[%s1754 + $0x8f] sm:$0xff]
      %v6005 = vld [vmem:[%s1754 + $0xa7] sm:$0xff]
      %v6006 = vld [vmem:[%s1754 + $0xaf] sm:$0xff]
      %v6007 = vld [vmem:[%s1754 + $0xc7] sm:$0xff]
      %v6008 = vld [vmem:[%s1754 + $0xcf] sm:$0xff]
      %v6009 = vld [vmem:[%s1754 + $0xe7] sm:$0xff]
      %v6010 = vld [vmem:[%s1754 + $0xef] sm:$0xff]
      %v6011 = vld [vmem:[%s1754 + $0x107] sm:$0xff]
      %v6012 = vld [vmem:[%s1754 + $0x10f] sm:$0xff]
      %v6013 = vld [vmem:[%s1754 + $0x127] sm:$0xff]
      %v6014 = vld [vmem:[%s1754 + $0x12f] sm:$0xff]
      %v6015 = vld [vmem:[%s1754 + $0x147] sm:$0xff]
      %v6016 = vld [vmem:[%s1754 + $0x14f] sm:$0xff]
      %v6017 = vld [vmem:[%s1754 + $0x167] sm:$0xff]
      %v6018 = vld [vmem:[%s1754 + $0x16f] sm:$0xff]
      %v6019 = vld [vmem:[%s1754 + $0x187] sm:$0xff]
      %v6020 = vld [vmem:[%s1754 + $0x18f] sm:$0xff]
      %v6021 = vld [vmem:[%s1754 + $0x1a7] sm:$0xff]
      %v6022 = vld [vmem:[%s1754 + $0x1af] sm:$0xff]
      %v6023 = vld [vmem:[%s1754 + $0x1c7] sm:$0xff]
      %v6024 = vld [vmem:[%s1754 + $0x1cf] sm:$0xff]
      %v6025 = vld [vmem:[%s1754 + $0x1e7] sm:$0xff]
      %v6026 = vld [vmem:[%s1754 + $0x1ef] sm:$0xff]
      %v6027 = vpack.c.bf16 %v5996, %v5995
      %v6028 = vpack.c.bf16 %v5998, %v5997
      %v6029 = vpack.c.bf16 %v6000, %v5999
      %v6030 = vpack.c.bf16 %v6002, %v6001
      %v6031 = vpack.c.bf16 %v6004, %v6003
      %v6032 = vpack.c.bf16 %v6006, %v6005
      %v6033 = vpack.c.bf16 %v6008, %v6007
      %v6034 = vpack.c.bf16 %v6010, %v6009
      %v6035 = vpack.c.bf16 %v6012, %v6011
      %v6036 = vpack.c.bf16 %v6014, %v6013
      %v6037 = vpack.c.bf16 %v6016, %v6015
      %v6038 = vpack.c.bf16 %v6018, %v6017
      %v6039 = vpack.c.bf16 %v6020, %v6019
      %v6040 = vpack.c.bf16 %v6022, %v6021
      %v6041 = vpack.c.bf16 %v6024, %v6023
      %v6042 = vpack.c.bf16 %v6026, %v6025
      %s6043 = scalar_lea.vmem %s5, 96
      %v6044 = vld [vmem:[%s6043] sm:$0xf]
      %v6045 = vld [vmem:[%s6043 + $0x4] sm:$0xf]
      %v6046 = vld [vmem:[%s6043 + $0x8] sm:$0xf]
      %v6047 = vld [vmem:[%s6043 + $0xc] sm:$0xf]
      %v6052 = vunpack.c.l.b16 %v6044
      %v6053 = vunpack.c.l.b16 %v6045
      %v6054 = vunpack.c.l.b16 %v6046
      %v6055 = vunpack.c.l.b16 %v6047
      %v6056 = vpack.c.b16 %v6053, %v6052
      %v6057 = vpack.c.b16 %v6055, %v6054
      %v6061 = vsel %vm374, %v6027, 0
      %v6064 = vsel %vm374, %v6028, 0
      %v6067 = vsel %vm374, %v6029, 0
      %v6070 = vsel %vm374, %v6030, 0
      %v6073 = vsel %vm374, %v6031, 0
      %v6076 = vsel %vm374, %v6032, 0
      %v6079 = vsel %vm374, %v6033, 0
      %v6082 = vsel %vm374, %v6034, 0
      %v6085 = vsel %vm374, %v6035, 0
      %v6088 = vsel %vm374, %v6036, 0
      %v6091 = vsel %vm374, %v6037, 0
      %v6094 = vsel %vm374, %v6038, 0
      %v6097 = vsel %vm374, %v6039, 0
      %v6100 = vsel %vm374, %v6040, 0
      %v6103 = vsel %vm374, %v6041, 0
      %v6106 = vsel %vm374, %v6042, 0
      %6108 = vmatpush.bf16.msra.mxu0 0
      %6109 = vmatpush.bf16.msra.mxu0 0
      %6110 = vmatpush.bf16.msra.mxu0 0
      %6111 = vmatpush.bf16.msra.mxu0 0
      %6112 = vmatpush.bf16.msra.mxu0 0
      %6113 = vmatpush.bf16.msra.mxu0 0
      %6114 = vmatpush.bf16.msra.mxu0 %v6057
      %6115 = vmatpush.bf16.msra.mxu0 %v6056
      %6116 = vmatmul.bf16.gmra.mxu0 %v6061
      %v6117 = vpop.f32.mrf.mxu0
      %v6118 = vadd.f32 0.0, %v6117
      %v6119 = vpop.f32.mrf.mxu0
      %v6120 = vadd.f32 0.0, %v6119
      %6121 = vmatmul.bf16.gmra.mxu0 %v6064
      %v6122 = vpop.f32.mrf.mxu0
      %v6123 = vadd.f32 0.0, %v6122
      %v6124 = vpop.f32.mrf.mxu0
      %v6125 = vadd.f32 0.0, %v6124
      %6126 = vmatmul.bf16.gmra.mxu0 %v6067
      %v6127 = vpop.f32.mrf.mxu0
      %v6128 = vadd.f32 0.0, %v6127
      %v6129 = vpop.f32.mrf.mxu0
      %v6130 = vadd.f32 0.0, %v6129
      %6131 = vmatmul.bf16.gmra.mxu0 %v6070
      %v6132 = vpop.f32.mrf.mxu0
      %v6133 = vadd.f32 0.0, %v6132
      %v6134 = vpop.f32.mrf.mxu0
      %v6135 = vadd.f32 0.0, %v6134
      %6136 = vmatmul.bf16.gmra.mxu0 %v6073
      %v6137 = vpop.f32.mrf.mxu0
      %v6138 = vadd.f32 0.0, %v6137
      %v6139 = vpop.f32.mrf.mxu0
      %v6140 = vadd.f32 0.0, %v6139
      %6141 = vmatmul.bf16.gmra.mxu0 %v6076
      %v6142 = vpop.f32.mrf.mxu0
      %v6143 = vadd.f32 0.0, %v6142
      %v6144 = vpop.f32.mrf.mxu0
      %v6145 = vadd.f32 0.0, %v6144
      %6146 = vmatmul.bf16.gmra.mxu0 %v6079
      %v6147 = vpop.f32.mrf.mxu0
      %v6148 = vadd.f32 0.0, %v6147
      %v6149 = vpop.f32.mrf.mxu0
      %v6150 = vadd.f32 0.0, %v6149
      %6151 = vmatmul.bf16.gmra.mxu0 %v6082
      %v6152 = vpop.f32.mrf.mxu0
      %v6153 = vadd.f32 0.0, %v6152
      %v6154 = vpop.f32.mrf.mxu0
      %v6155 = vadd.f32 0.0, %v6154
      %6156 = vmatmul.bf16.gmra.mxu0 %v6085
      %v6157 = vpop.f32.mrf.mxu0
      %v6158 = vadd.f32 0.0, %v6157
      %v6159 = vpop.f32.mrf.mxu0
      %v6160 = vadd.f32 0.0, %v6159
      %6161 = vmatmul.bf16.gmra.mxu0 %v6088
      %v6162 = vpop.f32.mrf.mxu0
      %v6163 = vadd.f32 0.0, %v6162
      %v6164 = vpop.f32.mrf.mxu0
      %v6165 = vadd.f32 0.0, %v6164
      %6166 = vmatmul.bf16.gmra.mxu0 %v6091
      %v6167 = vpop.f32.mrf.mxu0
      %v6168 = vadd.f32 0.0, %v6167
      %v6169 = vpop.f32.mrf.mxu0
      %v6170 = vadd.f32 0.0, %v6169
      %6171 = vmatmul.bf16.gmra.mxu0 %v6094
      %v6172 = vpop.f32.mrf.mxu0
      %v6173 = vadd.f32 0.0, %v6172
      %v6174 = vpop.f32.mrf.mxu0
      %v6175 = vadd.f32 0.0, %v6174
      %6176 = vmatmul.bf16.gmra.mxu0 %v6097
      %v6177 = vpop.f32.mrf.mxu0
      %v6178 = vadd.f32 0.0, %v6177
      %v6179 = vpop.f32.mrf.mxu0
      %v6180 = vadd.f32 0.0, %v6179
      %6181 = vmatmul.bf16.gmra.mxu0 %v6100
      %v6182 = vpop.f32.mrf.mxu0
      %v6183 = vadd.f32 0.0, %v6182
      %v6184 = vpop.f32.mrf.mxu0
      %v6185 = vadd.f32 0.0, %v6184
      %6186 = vmatmul.bf16.gmra.mxu0 %v6103
      %v6187 = vpop.f32.mrf.mxu0
      %v6188 = vadd.f32 0.0, %v6187
      %v6189 = vpop.f32.mrf.mxu0
      %v6190 = vadd.f32 0.0, %v6189
      %6191 = vmatmul.bf16.gmra.mxu0 %v6106
      %v6192 = vpop.f32.mrf.mxu0
      %v6193 = vadd.f32 0.0, %v6192
      %v6194 = vpop.f32.mrf.mxu0
      %v6195 = vadd.f32 0.0, %v6194
      %6196 = vdwg.mxu0
      %v6197 = vadd.f32 %v5963, %v6118
      %v6198 = vadd.f32 %v5964, %v6120
      %v6199 = vadd.f32 %v5965, %v6123
      %v6200 = vadd.f32 %v5966, %v6125
      %v6201 = vadd.f32 %v5967, %v6128
      %v6202 = vadd.f32 %v5968, %v6130
      %v6203 = vadd.f32 %v5969, %v6133
      %v6204 = vadd.f32 %v5970, %v6135
      %v6205 = vadd.f32 %v5971, %v6138
      %v6206 = vadd.f32 %v5972, %v6140
      %v6207 = vadd.f32 %v5973, %v6143
      %v6208 = vadd.f32 %v5974, %v6145
      %v6209 = vadd.f32 %v5975, %v6148
      %v6210 = vadd.f32 %v5976, %v6150
      %v6211 = vadd.f32 %v5977, %v6153
      %v6212 = vadd.f32 %v5978, %v6155
      %v6213 = vadd.f32 %v5979, %v6158
      %v6214 = vadd.f32 %v5980, %v6160
      %v6215 = vadd.f32 %v5981, %v6163
      %v6216 = vadd.f32 %v5982, %v6165
      %v6217 = vadd.f32 %v5983, %v6168
      %v6218 = vadd.f32 %v5984, %v6170
      %v6219 = vadd.f32 %v5985, %v6173
      %v6220 = vadd.f32 %v5986, %v6175
      %v6221 = vadd.f32 %v5987, %v6178
      %v6222 = vadd.f32 %v5988, %v6180
      %v6223 = vadd.f32 %v5989, %v6183
      %v6224 = vadd.f32 %v5990, %v6185
      %v6225 = vadd.f32 %v5991, %v6188
      %v6226 = vadd.f32 %v5992, %v6190
      %v6227 = vadd.f32 %v5993, %v6193
      %v6228 = vadd.f32 %v5994, %v6195
      %v6229 = vld [vmem:[%s1754 + $0x8] sm:$0xff]
      %v6230 = vld [vmem:[%s1754 + $0x10] sm:$0xff]
      %v6231 = vld [vmem:[%s1754 + $0x28] sm:$0xff]
      %v6232 = vld [vmem:[%s1754 + $0x30] sm:$0xff]
      %v6233 = vld [vmem:[%s1754 + $0x48] sm:$0xff]
      %v6234 = vld [vmem:[%s1754 + $0x50] sm:$0xff]
      %v6235 = vld [vmem:[%s1754 + $0x68] sm:$0xff]
      %v6236 = vld [vmem:[%s1754 + $0x70] sm:$0xff]
      %v6237 = vld [vmem:[%s1754 + $0x88] sm:$0xff]
      %v6238 = vld [vmem:[%s1754 + $0x90] sm:$0xff]
      %v6239 = vld [vmem:[%s1754 + $0xa8] sm:$0xff]
      %v6240 = vld [vmem:[%s1754 + $0xb0] sm:$0xff]
      %v6241 = vld [vmem:[%s1754 + $0xc8] sm:$0xff]
      %v6242 = vld [vmem:[%s1754 + $0xd0] sm:$0xff]
      %v6243 = vld [vmem:[%s1754 + $0xe8] sm:$0xff]
      %v6244 = vld [vmem:[%s1754 + $0xf0] sm:$0xff]
      %v6245 = vld [vmem:[%s1754 + $0x108] sm:$0xff]
      %v6246 = vld [vmem:[%s1754 + $0x110] sm:$0xff]
      %v6247 = vld [vmem:[%s1754 + $0x128] sm:$0xff]
      %v6248 = vld [vmem:[%s1754 + $0x130] sm:$0xff]
      %v6249 = vld [vmem:[%s1754 + $0x148] sm:$0xff]
      %v6250 = vld [vmem:[%s1754 + $0x150] sm:$0xff]
      %v6251 = vld [vmem:[%s1754 + $0x168] sm:$0xff]
      %v6252 = vld [vmem:[%s1754 + $0x170] sm:$0xff]
      %v6253 = vld [vmem:[%s1754 + $0x188] sm:$0xff]
      %v6254 = vld [vmem:[%s1754 + $0x190] sm:$0xff]
      %v6255 = vld [vmem:[%s1754 + $0x1a8] sm:$0xff]
      %v6256 = vld [vmem:[%s1754 + $0x1b0] sm:$0xff]
      %v6257 = vld [vmem:[%s1754 + $0x1c8] sm:$0xff]
      %v6258 = vld [vmem:[%s1754 + $0x1d0] sm:$0xff]
      %v6259 = vld [vmem:[%s1754 + $0x1e8] sm:$0xff]
      %v6260 = vld [vmem:[%s1754 + $0x1f0] sm:$0xff]
      %v6261 = vpack.c.bf16 %v6230, %v6229
      %v6262 = vpack.c.bf16 %v6232, %v6231
      %v6263 = vpack.c.bf16 %v6234, %v6233
      %v6264 = vpack.c.bf16 %v6236, %v6235
      %v6265 = vpack.c.bf16 %v6238, %v6237
      %v6266 = vpack.c.bf16 %v6240, %v6239
      %v6267 = vpack.c.bf16 %v6242, %v6241
      %v6268 = vpack.c.bf16 %v6244, %v6243
      %v6269 = vpack.c.bf16 %v6246, %v6245
      %v6270 = vpack.c.bf16 %v6248, %v6247
      %v6271 = vpack.c.bf16 %v6250, %v6249
      %v6272 = vpack.c.bf16 %v6252, %v6251
      %v6273 = vpack.c.bf16 %v6254, %v6253
      %v6274 = vpack.c.bf16 %v6256, %v6255
      %v6275 = vpack.c.bf16 %v6258, %v6257
      %v6276 = vpack.c.bf16 %v6260, %v6259
      %s6277 = scalar_lea.vmem %s5, 112
      %v6278 = vld [vmem:[%s6277] sm:$0xf]
      %v6279 = vld [vmem:[%s6277 + $0x4] sm:$0xf]
      %v6280 = vld [vmem:[%s6277 + $0x8] sm:$0xf]
      %v6281 = vld [vmem:[%s6277 + $0xc] sm:$0xf]
      %v6286 = vunpack.c.l.b16 %v6278
      %v6287 = vunpack.c.l.b16 %v6279
      %v6288 = vunpack.c.l.b16 %v6280
      %v6289 = vunpack.c.l.b16 %v6281
      %v6290 = vpack.c.b16 %v6287, %v6286
      %v6291 = vpack.c.b16 %v6289, %v6288
      %v6295 = vsel %vm374, %v6261, 0
      %v6298 = vsel %vm374, %v6262, 0
      %v6301 = vsel %vm374, %v6263, 0
      %v6304 = vsel %vm374, %v6264, 0
      %v6307 = vsel %vm374, %v6265, 0
      %v6310 = vsel %vm374, %v6266, 0
      %v6313 = vsel %vm374, %v6267, 0
      %v6316 = vsel %vm374, %v6268, 0
      %v6319 = vsel %vm374, %v6269, 0
      %v6322 = vsel %vm374, %v6270, 0
      %v6325 = vsel %vm374, %v6271, 0
      %v6328 = vsel %vm374, %v6272, 0
      %v6331 = vsel %vm374, %v6273, 0
      %v6334 = vsel %vm374, %v6274, 0
      %v6337 = vsel %vm374, %v6275, 0
      %v6340 = vsel %vm374, %v6276, 0
      %6342 = vmatpush.bf16.msra.mxu0 0
      %6343 = vmatpush.bf16.msra.mxu0 0
      %6344 = vmatpush.bf16.msra.mxu0 0
      %6345 = vmatpush.bf16.msra.mxu0 0
      %6346 = vmatpush.bf16.msra.mxu0 0
      %6347 = vmatpush.bf16.msra.mxu0 0
      %6348 = vmatpush.bf16.msra.mxu0 %v6291
      %6349 = vmatpush.bf16.msra.mxu0 %v6290
      %6350 = vmatmul.bf16.gmra.mxu0 %v6295
      %v6351 = vpop.f32.mrf.mxu0
      %v6352 = vadd.f32 0.0, %v6351
      %v6353 = vpop.f32.mrf.mxu0
      %v6354 = vadd.f32 0.0, %v6353
      %6355 = vmatmul.bf16.gmra.mxu0 %v6298
      %v6356 = vpop.f32.mrf.mxu0
      %v6357 = vadd.f32 0.0, %v6356
      %v6358 = vpop.f32.mrf.mxu0
      %v6359 = vadd.f32 0.0, %v6358
      %6360 = vmatmul.bf16.gmra.mxu0 %v6301
      %v6361 = vpop.f32.mrf.mxu0
      %v6362 = vadd.f32 0.0, %v6361
      %v6363 = vpop.f32.mrf.mxu0
      %v6364 = vadd.f32 0.0, %v6363
      %6365 = vmatmul.bf16.gmra.mxu0 %v6304
      %v6366 = vpop.f32.mrf.mxu0
      %v6367 = vadd.f32 0.0, %v6366
      %v6368 = vpop.f32.mrf.mxu0
      %v6369 = vadd.f32 0.0, %v6368
      %6370 = vmatmul.bf16.gmra.mxu0 %v6307
      %v6371 = vpop.f32.mrf.mxu0
      %v6372 = vadd.f32 0.0, %v6371
      %v6373 = vpop.f32.mrf.mxu0
      %v6374 = vadd.f32 0.0, %v6373
      %6375 = vmatmul.bf16.gmra.mxu0 %v6310
      %v6376 = vpop.f32.mrf.mxu0
      %v6377 = vadd.f32 0.0, %v6376
      %v6378 = vpop.f32.mrf.mxu0
      %v6379 = vadd.f32 0.0, %v6378
      %6380 = vmatmul.bf16.gmra.mxu0 %v6313
      %v6381 = vpop.f32.mrf.mxu0
      %v6382 = vadd.f32 0.0, %v6381
      %v6383 = vpop.f32.mrf.mxu0
      %v6384 = vadd.f32 0.0, %v6383
      %6385 = vmatmul.bf16.gmra.mxu0 %v6316
      %v6386 = vpop.f32.mrf.mxu0
      %v6387 = vadd.f32 0.0, %v6386
      %v6388 = vpop.f32.mrf.mxu0
      %v6389 = vadd.f32 0.0, %v6388
      %6390 = vmatmul.bf16.gmra.mxu0 %v6319
      %v6391 = vpop.f32.mrf.mxu0
      %v6392 = vadd.f32 0.0, %v6391
      %v6393 = vpop.f32.mrf.mxu0
      %v6394 = vadd.f32 0.0, %v6393
      %6395 = vmatmul.bf16.gmra.mxu0 %v6322
      %v6396 = vpop.f32.mrf.mxu0
      %v6397 = vadd.f32 0.0, %v6396
      %v6398 = vpop.f32.mrf.mxu0
      %v6399 = vadd.f32 0.0, %v6398
      %6400 = vmatmul.bf16.gmra.mxu0 %v6325
      %v6401 = vpop.f32.mrf.mxu0
      %v6402 = vadd.f32 0.0, %v6401
      %v6403 = vpop.f32.mrf.mxu0
      %v6404 = vadd.f32 0.0, %v6403
      %6405 = vmatmul.bf16.gmra.mxu0 %v6328
      %v6406 = vpop.f32.mrf.mxu0
      %v6407 = vadd.f32 0.0, %v6406
      %v6408 = vpop.f32.mrf.mxu0
      %v6409 = vadd.f32 0.0, %v6408
      %6410 = vmatmul.bf16.gmra.mxu0 %v6331
      %v6411 = vpop.f32.mrf.mxu0
      %v6412 = vadd.f32 0.0, %v6411
      %v6413 = vpop.f32.mrf.mxu0
      %v6414 = vadd.f32 0.0, %v6413
      %6415 = vmatmul.bf16.gmra.mxu0 %v6334
      %v6416 = vpop.f32.mrf.mxu0
      %v6417 = vadd.f32 0.0, %v6416
      %v6418 = vpop.f32.mrf.mxu0
      %v6419 = vadd.f32 0.0, %v6418
      %6420 = vmatmul.bf16.gmra.mxu0 %v6337
      %v6421 = vpop.f32.mrf.mxu0
      %v6422 = vadd.f32 0.0, %v6421
      %v6423 = vpop.f32.mrf.mxu0
      %v6424 = vadd.f32 0.0, %v6423
      %6425 = vmatmul.bf16.gmra.mxu0 %v6340
      %v6426 = vpop.f32.mrf.mxu0
      %v6427 = vadd.f32 0.0, %v6426
      %v6428 = vpop.f32.mrf.mxu0
      %v6429 = vadd.f32 0.0, %v6428
      %6430 = vdwg.mxu0
      %v6431 = vadd.f32 %v6197, %v6352
      %v6432 = vadd.f32 %v6198, %v6354
      %v6433 = vadd.f32 %v6199, %v6357
      %v6434 = vadd.f32 %v6200, %v6359
      %v6435 = vadd.f32 %v6201, %v6362
      %v6436 = vadd.f32 %v6202, %v6364
      %v6437 = vadd.f32 %v6203, %v6367
      %v6438 = vadd.f32 %v6204, %v6369
      %v6439 = vadd.f32 %v6205, %v6372
      %v6440 = vadd.f32 %v6206, %v6374
      %v6441 = vadd.f32 %v6207, %v6377
      %v6442 = vadd.f32 %v6208, %v6379
      %v6443 = vadd.f32 %v6209, %v6382
      %v6444 = vadd.f32 %v6210, %v6384
      %v6445 = vadd.f32 %v6211, %v6387
      %v6446 = vadd.f32 %v6212, %v6389
      %v6447 = vadd.f32 %v6213, %v6392
      %v6448 = vadd.f32 %v6214, %v6394
      %v6449 = vadd.f32 %v6215, %v6397
      %v6450 = vadd.f32 %v6216, %v6399
      %v6451 = vadd.f32 %v6217, %v6402
      %v6452 = vadd.f32 %v6218, %v6404
      %v6453 = vadd.f32 %v6219, %v6407
      %v6454 = vadd.f32 %v6220, %v6409
      %v6455 = vadd.f32 %v6221, %v6412
      %v6456 = vadd.f32 %v6222, %v6414
      %v6457 = vadd.f32 %v6223, %v6417
      %v6458 = vadd.f32 %v6224, %v6419
      %v6459 = vadd.f32 %v6225, %v6422
      %v6460 = vadd.f32 %v6226, %v6424
      %v6461 = vadd.f32 %v6227, %v6427
      %v6462 = vadd.f32 %v6228, %v6429
      %v6463 = vld [vmem:[%s1754 + $0x9] sm:$0xff]
      %v6464 = vld [vmem:[%s1754 + $0x11] sm:$0xff]
      %v6465 = vld [vmem:[%s1754 + $0x29] sm:$0xff]
      %v6466 = vld [vmem:[%s1754 + $0x31] sm:$0xff]
      %v6467 = vld [vmem:[%s1754 + $0x49] sm:$0xff]
      %v6468 = vld [vmem:[%s1754 + $0x51] sm:$0xff]
      %v6469 = vld [vmem:[%s1754 + $0x69] sm:$0xff]
      %v6470 = vld [vmem:[%s1754 + $0x71] sm:$0xff]
      %v6471 = vld [vmem:[%s1754 + $0x89] sm:$0xff]
      %v6472 = vld [vmem:[%s1754 + $0x91] sm:$0xff]
      %v6473 = vld [vmem:[%s1754 + $0xa9] sm:$0xff]
      %v6474 = vld [vmem:[%s1754 + $0xb1] sm:$0xff]
      %v6475 = vld [vmem:[%s1754 + $0xc9] sm:$0xff]
      %v6476 = vld [vmem:[%s1754 + $0xd1] sm:$0xff]
      %v6477 = vld [vmem:[%s1754 + $0xe9] sm:$0xff]
      %v6478 = vld [vmem:[%s1754 + $0xf1] sm:$0xff]
      %v6479 = vld [vmem:[%s1754 + $0x109] sm:$0xff]
      %v6480 = vld [vmem:[%s1754 + $0x111] sm:$0xff]
      %v6481 = vld [vmem:[%s1754 + $0x129] sm:$0xff]
      %v6482 = vld [vmem:[%s1754 + $0x131] sm:$0xff]
      %v6483 = vld [vmem:[%s1754 + $0x149] sm:$0xff]
      %v6484 = vld [vmem:[%s1754 + $0x151] sm:$0xff]
      %v6485 = vld [vmem:[%s1754 + $0x169] sm:$0xff]
      %v6486 = vld [vmem:[%s1754 + $0x171] sm:$0xff]
      %v6487 = vld [vmem:[%s1754 + $0x189] sm:$0xff]
      %v6488 = vld [vmem:[%s1754 + $0x191] sm:$0xff]
      %v6489 = vld [vmem:[%s1754 + $0x1a9] sm:$0xff]
      %v6490 = vld [vmem:[%s1754 + $0x1b1] sm:$0xff]
      %v6491 = vld [vmem:[%s1754 + $0x1c9] sm:$0xff]
      %v6492 = vld [vmem:[%s1754 + $0x1d1] sm:$0xff]
      %v6493 = vld [vmem:[%s1754 + $0x1e9] sm:$0xff]
      %v6494 = vld [vmem:[%s1754 + $0x1f1] sm:$0xff]
      %v6495 = vpack.c.bf16 %v6464, %v6463
      %v6496 = vpack.c.bf16 %v6466, %v6465
      %v6497 = vpack.c.bf16 %v6468, %v6467
      %v6498 = vpack.c.bf16 %v6470, %v6469
      %v6499 = vpack.c.bf16 %v6472, %v6471
      %v6500 = vpack.c.bf16 %v6474, %v6473
      %v6501 = vpack.c.bf16 %v6476, %v6475
      %v6502 = vpack.c.bf16 %v6478, %v6477
      %v6503 = vpack.c.bf16 %v6480, %v6479
      %v6504 = vpack.c.bf16 %v6482, %v6481
      %v6505 = vpack.c.bf16 %v6484, %v6483
      %v6506 = vpack.c.bf16 %v6486, %v6485
      %v6507 = vpack.c.bf16 %v6488, %v6487
      %v6508 = vpack.c.bf16 %v6490, %v6489
      %v6509 = vpack.c.bf16 %v6492, %v6491
      %v6510 = vpack.c.bf16 %v6494, %v6493
      %s6511 = scalar_lea.vmem %s5, 128
      %v6512 = vld [vmem:[%s6511] sm:$0xf]
      %v6513 = vld [vmem:[%s6511 + $0x4] sm:$0xf]
      %v6514 = vld [vmem:[%s6511 + $0x8] sm:$0xf]
      %v6515 = vld [vmem:[%s6511 + $0xc] sm:$0xf]
      %v6520 = vunpack.c.l.b16 %v6512
      %v6521 = vunpack.c.l.b16 %v6513
      %v6522 = vunpack.c.l.b16 %v6514
      %v6523 = vunpack.c.l.b16 %v6515
      %v6524 = vpack.c.b16 %v6521, %v6520
      %v6525 = vpack.c.b16 %v6523, %v6522
      %v6529 = vsel %vm374, %v6495, 0
      %v6532 = vsel %vm374, %v6496, 0
      %v6535 = vsel %vm374, %v6497, 0
      %v6538 = vsel %vm374, %v6498, 0
      %v6541 = vsel %vm374, %v6499, 0
      %v6544 = vsel %vm374, %v6500, 0
      %v6547 = vsel %vm374, %v6501, 0
      %v6550 = vsel %vm374, %v6502, 0
      %v6553 = vsel %vm374, %v6503, 0
      %v6556 = vsel %vm374, %v6504, 0
      %v6559 = vsel %vm374, %v6505, 0
      %v6562 = vsel %vm374, %v6506, 0
      %v6565 = vsel %vm374, %v6507, 0
      %v6568 = vsel %vm374, %v6508, 0
      %v6571 = vsel %vm374, %v6509, 0
      %v6574 = vsel %vm374, %v6510, 0
      %6576 = vmatpush.bf16.msra.mxu0 0
      %6577 = vmatpush.bf16.msra.mxu0 0
      %6578 = vmatpush.bf16.msra.mxu0 0
      %6579 = vmatpush.bf16.msra.mxu0 0
      %6580 = vmatpush.bf16.msra.mxu0 0
      %6581 = vmatpush.bf16.msra.mxu0 0
      %6582 = vmatpush.bf16.msra.mxu0 %v6525
      %6583 = vmatpush.bf16.msra.mxu0 %v6524
      %6584 = vmatmul.bf16.gmra.mxu0 %v6529
      %v6585 = vpop.f32.mrf.mxu0
      %v6586 = vadd.f32 0.0, %v6585
      %v6587 = vpop.f32.mrf.mxu0
      %v6588 = vadd.f32 0.0, %v6587
      %6589 = vmatmul.bf16.gmra.mxu0 %v6532
      %v6590 = vpop.f32.mrf.mxu0
      %v6591 = vadd.f32 0.0, %v6590
      %v6592 = vpop.f32.mrf.mxu0
      %v6593 = vadd.f32 0.0, %v6592
      %6594 = vmatmul.bf16.gmra.mxu0 %v6535
      %v6595 = vpop.f32.mrf.mxu0
      %v6596 = vadd.f32 0.0, %v6595
      %v6597 = vpop.f32.mrf.mxu0
      %v6598 = vadd.f32 0.0, %v6597
      %6599 = vmatmul.bf16.gmra.mxu0 %v6538
      %v6600 = vpop.f32.mrf.mxu0
      %v6601 = vadd.f32 0.0, %v6600
      %v6602 = vpop.f32.mrf.mxu0
      %v6603 = vadd.f32 0.0, %v6602
      %6604 = vmatmul.bf16.gmra.mxu0 %v6541
      %v6605 = vpop.f32.mrf.mxu0
      %v6606 = vadd.f32 0.0, %v6605
      %v6607 = vpop.f32.mrf.mxu0
      %v6608 = vadd.f32 0.0, %v6607
      %6609 = vmatmul.bf16.gmra.mxu0 %v6544
      %v6610 = vpop.f32.mrf.mxu0
      %v6611 = vadd.f32 0.0, %v6610
      %v6612 = vpop.f32.mrf.mxu0
      %v6613 = vadd.f32 0.0, %v6612
      %6614 = vmatmul.bf16.gmra.mxu0 %v6547
      %v6615 = vpop.f32.mrf.mxu0
      %v6616 = vadd.f32 0.0, %v6615
      %v6617 = vpop.f32.mrf.mxu0
      %v6618 = vadd.f32 0.0, %v6617
      %6619 = vmatmul.bf16.gmra.mxu0 %v6550
      %v6620 = vpop.f32.mrf.mxu0
      %v6621 = vadd.f32 0.0, %v6620
      %v6622 = vpop.f32.mrf.mxu0
      %v6623 = vadd.f32 0.0, %v6622
      %6624 = vmatmul.bf16.gmra.mxu0 %v6553
      %v6625 = vpop.f32.mrf.mxu0
      %v6626 = vadd.f32 0.0, %v6625
      %v6627 = vpop.f32.mrf.mxu0
      %v6628 = vadd.f32 0.0, %v6627
      %6629 = vmatmul.bf16.gmra.mxu0 %v6556
      %v6630 = vpop.f32.mrf.mxu0
      %v6631 = vadd.f32 0.0, %v6630
      %v6632 = vpop.f32.mrf.mxu0
      %v6633 = vadd.f32 0.0, %v6632
      %6634 = vmatmul.bf16.gmra.mxu0 %v6559
      %v6635 = vpop.f32.mrf.mxu0
      %v6636 = vadd.f32 0.0, %v6635
      %v6637 = vpop.f32.mrf.mxu0
      %v6638 = vadd.f32 0.0, %v6637
      %6639 = vmatmul.bf16.gmra.mxu0 %v6562
      %v6640 = vpop.f32.mrf.mxu0
      %v6641 = vadd.f32 0.0, %v6640
      %v6642 = vpop.f32.mrf.mxu0
      %v6643 = vadd.f32 0.0, %v6642
      %6644 = vmatmul.bf16.gmra.mxu0 %v6565
      %v6645 = vpop.f32.mrf.mxu0
      %v6646 = vadd.f32 0.0, %v6645
      %v6647 = vpop.f32.mrf.mxu0
      %v6648 = vadd.f32 0.0, %v6647
      %6649 = vmatmul.bf16.gmra.mxu0 %v6568
      %v6650 = vpop.f32.mrf.mxu0
      %v6651 = vadd.f32 0.0, %v6650
      %v6652 = vpop.f32.mrf.mxu0
      %v6653 = vadd.f32 0.0, %v6652
      %6654 = vmatmul.bf16.gmra.mxu0 %v6571
      %v6655 = vpop.f32.mrf.mxu0
      %v6656 = vadd.f32 0.0, %v6655
      %v6657 = vpop.f32.mrf.mxu0
      %v6658 = vadd.f32 0.0, %v6657
      %6659 = vmatmul.bf16.gmra.mxu0 %v6574
      %v6660 = vpop.f32.mrf.mxu0
      %v6661 = vadd.f32 0.0, %v6660
      %v6662 = vpop.f32.mrf.mxu0
      %v6663 = vadd.f32 0.0, %v6662
      %6664 = vdwg.mxu0
      %v6665 = vadd.f32 %v6431, %v6586
      %v6666 = vadd.f32 %v6432, %v6588
      %v6667 = vadd.f32 %v6433, %v6591
      %v6668 = vadd.f32 %v6434, %v6593
      %v6669 = vadd.f32 %v6435, %v6596
      %v6670 = vadd.f32 %v6436, %v6598
      %v6671 = vadd.f32 %v6437, %v6601
      %v6672 = vadd.f32 %v6438, %v6603
      %v6673 = vadd.f32 %v6439, %v6606
      %v6674 = vadd.f32 %v6440, %v6608
      %v6675 = vadd.f32 %v6441, %v6611
      %v6676 = vadd.f32 %v6442, %v6613
      %v6677 = vadd.f32 %v6443, %v6616
      %v6678 = vadd.f32 %v6444, %v6618
      %v6679 = vadd.f32 %v6445, %v6621
      %v6680 = vadd.f32 %v6446, %v6623
      %v6681 = vadd.f32 %v6447, %v6626
      %v6682 = vadd.f32 %v6448, %v6628
      %v6683 = vadd.f32 %v6449, %v6631
      %v6684 = vadd.f32 %v6450, %v6633
      %v6685 = vadd.f32 %v6451, %v6636
      %v6686 = vadd.f32 %v6452, %v6638
      %v6687 = vadd.f32 %v6453, %v6641
      %v6688 = vadd.f32 %v6454, %v6643
      %v6689 = vadd.f32 %v6455, %v6646
      %v6690 = vadd.f32 %v6456, %v6648
      %v6691 = vadd.f32 %v6457, %v6651
      %v6692 = vadd.f32 %v6458, %v6653
      %v6693 = vadd.f32 %v6459, %v6656
      %v6694 = vadd.f32 %v6460, %v6658
      %v6695 = vadd.f32 %v6461, %v6661
      %v6696 = vadd.f32 %v6462, %v6663
      %v6697 = vld [vmem:[%s6] sm:$0x1]
      %v6699 = vperm.slane %v6697, 0
      %v6701 = vadd.f32 %v6665, %v6699
      %v6702 = vadd.f32 %v6666, %v6699
      %v6703 = vadd.f32 %v6667, %v6699
      %v6704 = vadd.f32 %v6668, %v6699
      %v6705 = vadd.f32 %v6669, %v6699
      %v6706 = vadd.f32 %v6670, %v6699
      %v6707 = vadd.f32 %v6671, %v6699
      %v6708 = vadd.f32 %v6672, %v6699
      %v6709 = vadd.f32 %v6673, %v6699
      %v6710 = vadd.f32 %v6674, %v6699
      %v6711 = vadd.f32 %v6675, %v6699
      %v6712 = vadd.f32 %v6676, %v6699
      %v6713 = vadd.f32 %v6677, %v6699
      %v6714 = vadd.f32 %v6678, %v6699
      %v6715 = vadd.f32 %v6679, %v6699
      %v6716 = vadd.f32 %v6680, %v6699
      %v6717 = vadd.f32 %v6681, %v6699
      %v6718 = vadd.f32 %v6682, %v6699
      %v6719 = vadd.f32 %v6683, %v6699
      %v6720 = vadd.f32 %v6684, %v6699
      %v6721 = vadd.f32 %v6685, %v6699
      %v6722 = vadd.f32 %v6686, %v6699
      %v6723 = vadd.f32 %v6687, %v6699
      %v6724 = vadd.f32 %v6688, %v6699
      %v6725 = vadd.f32 %v6689, %v6699
      %v6726 = vadd.f32 %v6690, %v6699
      %v6727 = vadd.f32 %v6691, %v6699
      %v6728 = vadd.f32 %v6692, %v6699
      %v6729 = vadd.f32 %v6693, %v6699
      %v6730 = vadd.f32 %v6694, %v6699
      %v6731 = vadd.f32 %v6695, %v6699
      %v6732 = vadd.f32 %v6696, %v6699
      %v6733 = vmax.f32 %v6701, 0.0
      %v6734 = vmax.f32 %v6702, 0.0
      %v6735 = vmax.f32 %v6703, 0.0
      %v6736 = vmax.f32 %v6704, 0.0
      %v6737 = vmax.f32 %v6705, 0.0
      %v6738 = vmax.f32 %v6706, 0.0
      %v6739 = vmax.f32 %v6707, 0.0
      %v6740 = vmax.f32 %v6708, 0.0
      %v6741 = vmax.f32 %v6709, 0.0
      %v6742 = vmax.f32 %v6710, 0.0
      %v6743 = vmax.f32 %v6711, 0.0
      %v6744 = vmax.f32 %v6712, 0.0
      %v6745 = vmax.f32 %v6713, 0.0
      %v6746 = vmax.f32 %v6714, 0.0
      %v6747 = vmax.f32 %v6715, 0.0
      %v6748 = vmax.f32 %v6716, 0.0
      %v6749 = vmax.f32 %v6717, 0.0
      %v6750 = vmax.f32 %v6718, 0.0
      %v6751 = vmax.f32 %v6719, 0.0
      %v6752 = vmax.f32 %v6720, 0.0
      %v6753 = vmax.f32 %v6721, 0.0
      %v6754 = vmax.f32 %v6722, 0.0
      %v6755 = vmax.f32 %v6723, 0.0
      %v6756 = vmax.f32 %v6724, 0.0
      %v6757 = vmax.f32 %v6725, 0.0
      %v6758 = vmax.f32 %v6726, 0.0
      %v6759 = vmax.f32 %v6727, 0.0
      %v6760 = vmax.f32 %v6728, 0.0
      %v6761 = vmax.f32 %v6729, 0.0
      %v6762 = vmax.f32 %v6730, 0.0
      %v6763 = vmax.f32 %v6731, 0.0
      %v6764 = vmax.f32 %v6732, 0.0
      %v6765 = vpack.c.bf16 %v6734, %v6733
      %v6766 = vpack.c.bf16 %v6736, %v6735
      %v6767 = vpack.c.bf16 %v6738, %v6737
      %v6768 = vpack.c.bf16 %v6740, %v6739
      %v6769 = vpack.c.bf16 %v6742, %v6741
      %v6770 = vpack.c.bf16 %v6744, %v6743
      %v6771 = vpack.c.bf16 %v6746, %v6745
      %v6772 = vpack.c.bf16 %v6748, %v6747
      %v6773 = vpack.c.bf16 %v6750, %v6749
      %v6774 = vpack.c.bf16 %v6752, %v6751
      %v6775 = vpack.c.bf16 %v6754, %v6753
      %v6776 = vpack.c.bf16 %v6756, %v6755
      %v6777 = vpack.c.bf16 %v6758, %v6757
      %v6778 = vpack.c.bf16 %v6760, %v6759
      %v6779 = vpack.c.bf16 %v6762, %v6761
      %v6780 = vpack.c.bf16 %v6764, %v6763
      %v6781 = vld [vmem:[%s7] sm:$0xf]
      %v6782 = vld [vmem:[%s7 + $0x4] sm:$0xf]
      %v6783 = vld [vmem:[%s7 + $0x8] sm:$0xf]
      %v6784 = vld [vmem:[%s7 + $0xc] sm:$0xf]
      %v6785 = vld [vmem:[%s8] sm:$0x1]
      %v6787 = vperm.slane %v6785, 0
      %v6793 = vunpack.c.l.b16 %v6781
      %v6794 = vunpack.c.l.b16 %v6782
      %v6795 = vunpack.c.l.b16 %v6783
      %v6796 = vunpack.c.l.b16 %v6784
      %v6797 = vpack.c.b16 %v6794, %v6793
      %v6798 = vpack.c.b16 %v6796, %v6795
      %v6802 = vsel %vm374, %v6765, 0
      %v6805 = vsel %vm374, %v6766, 0
      %v6808 = vsel %vm374, %v6767, 0
      %v6811 = vsel %vm374, %v6768, 0
      %v6814 = vsel %vm374, %v6769, 0
      %v6817 = vsel %vm374, %v6770, 0
      %v6820 = vsel %vm374, %v6771, 0
      %v6823 = vsel %vm374, %v6772, 0
      %v6826 = vsel %vm374, %v6773, 0
      %v6829 = vsel %vm374, %v6774, 0
      %v6832 = vsel %vm374, %v6775, 0
      %v6835 = vsel %vm374, %v6776, 0
      %v6838 = vsel %vm374, %v6777, 0
      %v6841 = vsel %vm374, %v6778, 0
      %v6844 = vsel %vm374, %v6779, 0
      %v6847 = vsel %vm374, %v6780, 0
      %6849 = vmatpush.bf16.msra.mxu0 0
      %6850 = vmatpush.bf16.msra.mxu0 0
      %6851 = vmatpush.bf16.msra.mxu0 0
      %6852 = vmatpush.bf16.msra.mxu0 0
      %6853 = vmatpush.bf16.msra.mxu0 0
      %6854 = vmatpush.bf16.msra.mxu0 0
      %6855 = vmatpush.bf16.msra.mxu0 %v6798
      %6856 = vmatpush.bf16.msra.mxu0 %v6797
      %6857 = vmatmul.bf16.gmra.mxu0 %v6802
      %v6858 = vpop.f32.mrf.mxu0
      %v6859 = vadd.f32 %v6787, %v6858
      %v6860 = vpop.f32.mrf.mxu0
      %v6861 = vadd.f32 %v6787, %v6860
      %6862 = vmatmul.bf16.gmra.mxu0 %v6805
      %v6863 = vpop.f32.mrf.mxu0
      %v6864 = vadd.f32 %v6787, %v6863
      %v6865 = vpop.f32.mrf.mxu0
      %v6866 = vadd.f32 %v6787, %v6865
      %6867 = vmatmul.bf16.gmra.mxu0 %v6808
      %v6868 = vpop.f32.mrf.mxu0
      %v6869 = vadd.f32 %v6787, %v6868
      %v6870 = vpop.f32.mrf.mxu0
      %v6871 = vadd.f32 %v6787, %v6870
      %6872 = vmatmul.bf16.gmra.mxu0 %v6811
      %v6873 = vpop.f32.mrf.mxu0
      %v6874 = vadd.f32 %v6787, %v6873
      %v6875 = vpop.f32.mrf.mxu0
      %v6876 = vadd.f32 %v6787, %v6875
      %6877 = vmatmul.bf16.gmra.mxu0 %v6814
      %v6878 = vpop.f32.mrf.mxu0
      %v6879 = vadd.f32 %v6787, %v6878
      %v6880 = vpop.f32.mrf.mxu0
      %v6881 = vadd.f32 %v6787, %v6880
      %6882 = vmatmul.bf16.gmra.mxu0 %v6817
      %v6883 = vpop.f32.mrf.mxu0
      %v6884 = vadd.f32 %v6787, %v6883
      %v6885 = vpop.f32.mrf.mxu0
      %v6886 = vadd.f32 %v6787, %v6885
      %6887 = vmatmul.bf16.gmra.mxu0 %v6820
      %v6888 = vpop.f32.mrf.mxu0
      %v6889 = vadd.f32 %v6787, %v6888
      %v6890 = vpop.f32.mrf.mxu0
      %v6891 = vadd.f32 %v6787, %v6890
      %6892 = vmatmul.bf16.gmra.mxu0 %v6823
      %v6893 = vpop.f32.mrf.mxu0
      %v6894 = vadd.f32 %v6787, %v6893
      %v6895 = vpop.f32.mrf.mxu0
      %v6896 = vadd.f32 %v6787, %v6895
      %6897 = vmatmul.bf16.gmra.mxu0 %v6826
      %v6898 = vpop.f32.mrf.mxu0
      %v6899 = vadd.f32 %v6787, %v6898
      %v6900 = vpop.f32.mrf.mxu0
      %v6901 = vadd.f32 %v6787, %v6900
      %6902 = vmatmul.bf16.gmra.mxu0 %v6829
      %v6903 = vpop.f32.mrf.mxu0
      %v6904 = vadd.f32 %v6787, %v6903
      %v6905 = vpop.f32.mrf.mxu0
      %v6906 = vadd.f32 %v6787, %v6905
      %6907 = vmatmul.bf16.gmra.mxu0 %v6832
      %v6908 = vpop.f32.mrf.mxu0
      %v6909 = vadd.f32 %v6787, %v6908
      %v6910 = vpop.f32.mrf.mxu0
      %v6911 = vadd.f32 %v6787, %v6910
      %6912 = vmatmul.bf16.gmra.mxu0 %v6835
      %v6913 = vpop.f32.mrf.mxu0
      %v6914 = vadd.f32 %v6787, %v6913
      %v6915 = vpop.f32.mrf.mxu0
      %v6916 = vadd.f32 %v6787, %v6915
      %6917 = vmatmul.bf16.gmra.mxu0 %v6838
      %v6918 = vpop.f32.mrf.mxu0
      %v6919 = vadd.f32 %v6787, %v6918
      %v6920 = vpop.f32.mrf.mxu0
      %v6921 = vadd.f32 %v6787, %v6920
      %6922 = vmatmul.bf16.gmra.mxu0 %v6841
      %v6923 = vpop.f32.mrf.mxu0
      %v6924 = vadd.f32 %v6787, %v6923
      %v6925 = vpop.f32.mrf.mxu0
      %v6926 = vadd.f32 %v6787, %v6925
      %6927 = vmatmul.bf16.gmra.mxu0 %v6844
      %v6928 = vpop.f32.mrf.mxu0
      %v6929 = vadd.f32 %v6787, %v6928
      %v6930 = vpop.f32.mrf.mxu0
      %v6931 = vadd.f32 %v6787, %v6930
      %6932 = vmatmul.bf16.gmra.mxu0 %v6847
      %v6933 = vpop.f32.mrf.mxu0
      %v6934 = vadd.f32 %v6787, %v6933
      %v6935 = vpop.f32.mrf.mxu0
      %v6936 = vadd.f32 %v6787, %v6935
      %6937 = vdwg.mxu0
      %v6938 = vpack.c.bf16 %v6859, %v6859
      %v6939 = vpack.c.bf16 %v6861, %v6861
      %v6940 = vpack.c.bf16 %v6864, %v6864
      %v6941 = vpack.c.bf16 %v6866, %v6866
      %v6942 = vpack.c.bf16 %v6869, %v6869
      %v6943 = vpack.c.bf16 %v6871, %v6871
      %v6944 = vpack.c.bf16 %v6874, %v6874
      %v6945 = vpack.c.bf16 %v6876, %v6876
      %v6946 = vpack.c.bf16 %v6879, %v6879
      %v6947 = vpack.c.bf16 %v6881, %v6881
      %v6948 = vpack.c.bf16 %v6884, %v6884
      %v6949 = vpack.c.bf16 %v6886, %v6886
      %v6950 = vpack.c.bf16 %v6889, %v6889
      %v6951 = vpack.c.bf16 %v6891, %v6891
      %v6952 = vpack.c.bf16 %v6894, %v6894
      %v6953 = vpack.c.bf16 %v6896, %v6896
      %v6954 = vpack.c.bf16 %v6899, %v6899
      %v6955 = vpack.c.bf16 %v6901, %v6901
      %v6956 = vpack.c.bf16 %v6904, %v6904
      %v6957 = vpack.c.bf16 %v6906, %v6906
      %v6958 = vpack.c.bf16 %v6909, %v6909
      %v6959 = vpack.c.bf16 %v6911, %v6911
      %v6960 = vpack.c.bf16 %v6914, %v6914
      %v6961 = vpack.c.bf16 %v6916, %v6916
      %v6962 = vpack.c.bf16 %v6919, %v6919
      %v6963 = vpack.c.bf16 %v6921, %v6921
      %v6964 = vpack.c.bf16 %v6924, %v6924
      %v6965 = vpack.c.bf16 %v6926, %v6926
      %v6966 = vpack.c.bf16 %v6929, %v6929
      %v6967 = vpack.c.bf16 %v6931, %v6931
      %v6968 = vpack.c.bf16 %v6934, %v6934
      %v6969 = vpack.c.bf16 %v6936, %v6936
      %6970 = vst [vmem:[%s372] sm:$0xf] %v6938
      %6971 = vst [vmem:[%s372 + $0x4] sm:$0xf] %v6939
      %6972 = vst [vmem:[%s372 + $0x8] sm:$0xf] %v6940
      %6973 = vst [vmem:[%s372 + $0xc] sm:$0xf] %v6941
      %6974 = vst [vmem:[%s372 + $0x10] sm:$0xf] %v6942
      %6975 = vst [vmem:[%s372 + $0x14] sm:$0xf] %v6943
      %6976 = vst [vmem:[%s372 + $0x18] sm:$0xf] %v6944
      %6977 = vst [vmem:[%s372 + $0x1c] sm:$0xf] %v6945
      %6978 = vst [vmem:[%s372 + $0x20] sm:$0xf] %v6946
      %6979 = vst [vmem:[%s372 + $0x24] sm:$0xf] %v6947
      %6980 = vst [vmem:[%s372 + $0x28] sm:$0xf] %v6948
      %6981 = vst [vmem:[%s372 + $0x2c] sm:$0xf] %v6949
      %6982 = vst [vmem:[%s372 + $0x30] sm:$0xf] %v6950
      %6983 = vst [vmem:[%s372 + $0x34] sm:$0xf] %v6951
      %6984 = vst [vmem:[%s372 + $0x38] sm:$0xf] %v6952
      %6985 = vst [vmem:[%s372 + $0x3c] sm:$0xf] %v6953
      %6986 = vst [vmem:[%s372 + $0x40] sm:$0xf] %v6954
      %6987 = vst [vmem:[%s372 + $0x44] sm:$0xf] %v6955
      %6988 = vst [vmem:[%s372 + $0x48] sm:$0xf] %v6956
      %6989 = vst [vmem:[%s372 + $0x4c] sm:$0xf] %v6957
      %6990 = vst [vmem:[%s372 + $0x50] sm:$0xf] %v6958
      %6991 = vst [vmem:[%s372 + $0x54] sm:$0xf] %v6959
      %6992 = vst [vmem:[%s372 + $0x58] sm:$0xf] %v6960
      %6993 = vst [vmem:[%s372 + $0x5c] sm:$0xf] %v6961
      %6994 = vst [vmem:[%s372 + $0x60] sm:$0xf] %v6962
      %6995 = vst [vmem:[%s372 + $0x64] sm:$0xf] %v6963
      %6996 = vst [vmem:[%s372 + $0x68] sm:$0xf] %v6964
      %6997 = vst [vmem:[%s372 + $0x6c] sm:$0xf] %v6965
      %6998 = vst [vmem:[%s372 + $0x70] sm:$0xf] %v6966
      %6999 = vst [vmem:[%s372 + $0x74] sm:$0xf] %v6967
      %7000 = vst [vmem:[%s372 + $0x78] sm:$0xf] %v6968
      %7001 = vst [vmem:[%s372 + $0x7c] sm:$0xf] %v6969
      %p7002 = scmp.lt.s32.totalorder %s22, 1
      %s7003 = scalar_select %p7002, %s22, 1
      %s7004 = smul.addr %s7003, 32
      %s7005 = smul.addr %s7004, 4
      %s7006 = scalar_lea.vmem %s9, %s7005
      %p7007 = scmp.lt.s32.totalorder %s22, 1
      %s7008 = scalar_select %p7007, %s22, 1
      %s7009 = smul.addr %s7008, 32
      %s7010 = smul.addr %s7009, 4
      %s7011 = scalar_lea.vmem %s10, %s7010
      // Predicated region
      $region57: #{forward.2} parent=55 // pred_check
        %p7012 = pneg %p234
      $region58: #{forward.2} parent=55 // pred_check_branch
        %7014 = sbr.rel (%p7012) target = $region60
      $region59: #{forward.2} parent=55 // pred_region
        _
      $region60: #{forward.2} parent=55 // pred_fallthru
        _
      // Predicated region
      $region61: #{forward.2} parent=55 // pred_check
        %p7015 = pneg %p260
      $region62: #{forward.2} parent=55 // pred_check_branch
        %7017 = sbr.rel (%p7015) target = $region64
      $region63: #{forward.2} parent=55 // pred_region
        _
      $region64: #{forward.2} parent=55 // pred_fallthru
        _
    $region56: #{forward.2} parent=5 // pred_fallthru
      _
    %p7018 = scmp.le.s32.totalorder 2, %s17
    // Predicated region
    $region65: #{forward.2} parent=5 // pred_check
      %p7019 = pneg %p7018
    $region66: #{forward.2} parent=5 // pred_check_branch
      %7021 = sbr.rel (%p7019) target = $region68
    $region67: #{forward.2} parent=5 // pred_region
      %s7022 = ssub.s32 %s17, 2
      // Predicated region
      $region69: #{forward.2} parent=67 // pred_check
        %p7023 = pneg %p240
      $region70: #{forward.2} parent=67 // pred_check_branch
        %7025 = sbr.rel (%p7023) target = $region72
      $region71: #{forward.2} parent=67 // pred_region
        %p7026 = scmp.lt.s32.totalorder %s23, 1
        %s7027 = scalar_select %p7026, %s23, 1
        %s7028 = smul.addr %s7027, 32
        %s7029 = smul.addr %s7028, 4
        %s7030 = scalar_lea.vmem %s9, %s7029
      $region72: #{forward.2} parent=67 // pred_fallthru
        _
      // Predicated region
      $region73: #{forward.2} parent=67 // pred_check
        %p7031 = pneg %p266
      $region74: #{forward.2} parent=67 // pred_check_branch
        %7033 = sbr.rel (%p7031) target = $region76
      $region75: #{forward.2} parent=67 // pred_region
        %p7034 = scmp.lt.s32.totalorder %s23, 1
        %s7035 = scalar_select %p7034, %s23, 1
        %s7036 = smul.addr %s7035, 32
        %s7037 = smul.addr %s7036, 4
        %s7038 = scalar_lea.vmem %s10, %s7037
      $region76: #{forward.2} parent=67 // pred_fallthru
        _
    $region68: #{forward.2} parent=5 // pred_fallthru
      _
  $region6: #{forward.2} parent=0 // loop_footer
    %s21 = sadd.s32 1, %s17
  $region7: #{forward.2} parent=0 // loop_footer_branch
    %16 = sbr.rel target = $region3
  $region8: #{forward.2} parent=0 // loop_exit
    _

</llo_original>
